<compile_context>
chip_gen: v6e
topology: v6e:2x2x1
jax: 0.10.0
libtpu: 0.0.40
codegen_flags: <defaults>
</compile_context>

<pallas_src>
import functools

import jax
import jax.numpy as jnp
import numpy as np
from jax import lax
from jax.experimental import pallas as pl
from jax.experimental.pallas import tpu as pltpu

EPS = 1e-5
LANE = 128
PADW = 8          # left halo width of the padded-image scratch (sublane aligned)


def _round_up(x, m):
    return (x + m - 1) // m * m


def _vmem_limit_bytes():
    """~half of physical VMEM: 64 MiB on v5e/v6e (128 MiB), 32 MiB on v7x."""
    try:
        cap = getattr(pltpu.get_tpu_info(), "vmem_capacity_bytes", None)
        if cap:
            return int(min(cap // 2, 96 * 1024 * 1024))
    except Exception:
        pass
    return 32 * 1024 * 1024


def _pick_bt(n, max_bt=4):
    """Images per grid step: amortize per-step overhead but keep grid >= 2."""
    for bt in range(min(max_bt, n), 0, -1):
        if n % bt == 0 and n // bt >= 2:
            return bt
    return 1


# --------------------------------------------------------------------------- #
# In-kernel helpers: halo zeroing + 3-tap im2col + 3 accumulating matmuls      #
# --------------------------------------------------------------------------- #
def _zero_halo(pad_scr, col_scr, H, W):
    """Zero only the conv halo: 2 single columns of pad_scr, 2 row bands of
    col_scr.  Interiors are fully overwritten every image, so no full clear."""
    Cp = pad_scr.shape[-1]
    zc = jnp.zeros((pad_scr.shape[0], 1, Cp), pad_scr.dtype)
    pad_scr[:, PADW - 1:PADW, :] = zc                 # column w = -1
    pad_scr[:, PADW + W:PADW + W + 1, :] = zc         # column w =  W
    zr = jnp.zeros((W, col_scr.shape[-1]), col_scr.dtype)
    col_scr[pl.ds(0, W), :] = zr                      # padded row r = 0
    col_scr[pl.ds((H + 1) * W, W), :] = zr            # padded row r = H+1


def _conv3x3(img, w_ref, pad_scr, col_scr, H, W):
    """img: (H*W, C) values.  pad_scr: (H, W+2*PADW, C) bf16 with the image
    interior at sublane offset PADW (aligned).  col_scr: ((H+2)*W, 3*C) bf16
    3-tap im2col.  w_ref: (3, 3*C, P) bf16, dy-major / dx-major / channel.
    Returns the (H*W, P) f32 conv output (padding=1)."""
    Cp = pad_scr.shape[-1]
    pad_scr[:, PADW:PADW + W, :] = img.reshape(H, W, Cp).astype(pad_scr.dtype)
    for dx in range(3):                                # static unroll
        # destination lane offset dx*Cp is a multiple of 128 and the sublane
        # start W is a multiple of 8 -> aligned, unmasked stores.
        col_scr[pl.ds(W, H * W), dx * Cp:(dx + 1) * Cp] = (
            pad_scr[:, PADW - 1 + dx:PADW - 1 + dx + W, :].reshape(H * W, Cp))
    acc = None
    for dy in range(3):                                # 3 accumulating matmuls
        part = jnp.dot(col_scr[pl.ds(dy * W, H * W), :], w_ref[dy],
                       preferred_element_type=jnp.float32)
        acc = part if acc is None else acc + part
    return acc


def _stats(y):
    return jnp.concatenate(
        [jnp.sum(y, axis=0, keepdims=True),
         jnp.sum(y * y, axis=0, keepdims=True)], axis=0)


# --------------------------------------------------------------------------- #
# Kernel 1: conv1 (3x3, pad 1) -> bf16 output + per-image BN statistics        #
# --------------------------------------------------------------------------- #
def conv3x3_stats_kernel(x_ref, w_ref, y_ref, s_ref, pad_scr, col_scr, *, H, W):
    _zero_halo(pad_scr, col_scr, H, W)
    for b in range(x_ref.shape[0]):                    # BT images per step
        y = _conv3x3(x_ref[b], w_ref, pad_scr, col_scr, H, W)
        y_ref[b] = y.astype(y_ref.dtype)
        s_ref[b] = _stats(y)


# --------------------------------------------------------------------------- #
# Kernel 2: bn1 (scale/shift) -> relu -> conv2 (3x3) -> bf16 output + stats    #
# --------------------------------------------------------------------------- #
def bn_relu_conv3x3_stats_kernel(y1_ref, sc_ref, sh_ref, w_ref,
                                 y_ref, s_ref, pad_scr, col_scr, *, H, W):
    _zero_halo(pad_scr, col_scr, H, W)
    for b in range(y1_ref.shape[0]):
        a = jnp.maximum(
            y1_ref[b].astype(jnp.float32) * sc_ref[...] + sh_ref[...], 0.0)
        y = _conv3x3(a, w_ref, pad_scr, col_scr, H, W)
        y_ref[b] = y.astype(y_ref.dtype)
        s_ref[b] = _stats(y)


# --------------------------------------------------------------------------- #
# Kernel 3: bn2 (scale/shift) -> + identity shortcut -> relu                   #
# --------------------------------------------------------------------------- #
def bn_add_relu_kernel(y2_ref, sc_ref, sh_ref, res_ref, o_ref):
    for b in range(y2_ref.shape[0]):
        o_ref[b] = jnp.maximum(
            y2_ref[b].astype(jnp.float32) * sc_ref[...] + sh_ref[...]
            + res_ref[b], 0.0).astype(o_ref.dtype)


# --------------------------------------------------------------------------- #
# Tiny per-channel epilogue: fold per-image (sum, sum_sq) into BN scale/shift. #
# The O(M) reduction already happened inside the conv kernels; this touches    #
# only (N, 2, C) floats.                                                       #
# --------------------------------------------------------------------------- #
def _bn_scale_shift(tile_stats, gamma, beta, count):
    s = jnp.sum(tile_stats, axis=0)                    # (2, Cp)
    mean = s[0] / count
    # Biased variance (PyTorch training-mode BN).  E[y^2]-mean^2 in f32 can
    # cancel when |mean| >> std; the clamp guards small negatives.
    # TODO(synk): Welford-style combine for bit-closer parity at huge N*H*W.
    var = jnp.maximum(s[1] / count - mean * mean, 0.0)
    scale = gamma * lax.rsqrt(var + EPS)
    shift = beta - mean * scale
    return scale.reshape(1, -1), shift.reshape(1, -1)


# --------------------------------------------------------------------------- #
# Wrapper                                                                      #
# --------------------------------------------------------------------------- #
@jax.jit
def basicblock_forward(x_nchw, params):
    w1, w2 = params["w1"], params["w2"]          # (9, Cin, P), (9, P, P)
    g1, b1 = params["g1"], params["b1"]
    g2, b2 = params["g2"], params["b2"]

    N, Cin, H, W = x_nchw.shape
    P = w1.shape[-1]
    assert Cin == P, "identity shortcut requires in_planes == expansion*planes"
    assert W % 8 == 0, "W must be a multiple of 8 (sublane tiling)"
    # TODO(synk): pad W to a multiple of 8 for general spatial extents.

    HW = H * W
    M = N * HW
    Cin_p = _round_up(Cin, LANE)                 # lane-dense channel padding
    P_p = _round_up(P, LANE)
    bt = _pick_bt(N)                             # images per grid step

    # ---- layout glue: NCHW -> (N, HW, C) with channels padded to 128 --------
    x = jnp.transpose(x_nchw, (0, 2, 3, 1)).reshape(N, HW, Cin)
    x = jnp.pad(x, ((0, 0), (0, 0), (0, Cin_p - Cin)))

    # ---- parameter glue: pad + regroup weights as (dy, 3*C, P), bf16 ---------
    w1p = jnp.pad(w1, ((0, 0), (0, Cin_p - Cin), (0, P_p - P)))
    w1p = w1p.reshape(3, 3 * Cin_p, P_p).astype(jnp.bfloat16)
    w2p = jnp.pad(w2, ((0, 0), (0, P_p - P), (0, P_p - P)))
    w2p = w2p.reshape(3, 3 * P_p, P_p).astype(jnp.bfloat16)
    g1p, b1p = jnp.pad(g1, (0, P_p - P)), jnp.pad(b1, (0, P_p - P))
    g2p, b2p = jnp.pad(g2, (0, P_p - P)), jnp.pad(b2, (0, P_p - P))

    cparams = pltpu.CompilerParams(
        dimension_semantics=("parallel",),        # shards tiles across v7x TCs
        vmem_limit_bytes=_vmem_limit_bytes())

    grid = (N // bt,)

    def pad_shape(c):
        return pltpu.VMEM((H, W + 2 * PADW, c), jnp.bfloat16)

    def col_shape(c):
        return pltpu.VMEM(((H + 2) * W, 3 * c), jnp.bfloat16)

    # ---- stage 1: conv1 (3x3) + per-image BN statistics ----------------------
    y1_raw, s1 = pl.pallas_call(
        functools.partial(conv3x3_stats_kernel, H=H, W=W),
        out_shape=(jax.ShapeDtypeStruct((N, HW, P_p), jnp.bfloat16),
                   jax.ShapeDtypeStruct((N, 2, P_p), jnp.float32)),
        grid=grid,
        in_specs=[
            pl.BlockSpec((bt, HW, Cin_p), lambda n: (n, 0, 0)),
            pl.BlockSpec((3, 3 * Cin_p, P_p), lambda n: (0, 0, 0)),  # once
        ],
        out_specs=(
            pl.BlockSpec((bt, HW, P_p), lambda n: (n, 0, 0)),
            pl.BlockSpec((bt, 2, P_p), lambda n: (n, 0, 0)),
        ),
        scratch_shapes=[pad_shape(Cin_p), col_shape(Cin_p)],
        compiler_params=cparams,
        cost_estimate=pl.CostEstimate(
            flops=2 * M * 9 * Cin_p * P_p, transcendentals=0,
            bytes_accessed=M * Cin_p * 4 + M * P_p * 2 + 9 * Cin_p * P_p * 2),
    )(x, w1p)

    sc1, sh1 = _bn_scale_shift(s1, g1p, b1p, M)

    # ---- stage 2: bn1 + relu + conv2 (3x3) + per-image BN statistics ---------
    y2_raw, s2 = pl.pallas_call(
        functools.partial(bn_relu_conv3x3_stats_kernel, H=H, W=W),
        out_shape=(jax.ShapeDtypeStruct((N, HW, P_p), jnp.bfloat16),
                   jax.ShapeDtypeStruct((N, 2, P_p), jnp.float32)),
        grid=grid,
        in_specs=[
            pl.BlockSpec((bt, HW, P_p), lambda n: (n, 0, 0)),
            pl.BlockSpec((1, P_p), lambda n: (0, 0)),              # bn1 scale
            pl.BlockSpec((1, P_p), lambda n: (0, 0)),              # bn1 shift
            pl.BlockSpec((3, 3 * P_p, P_p), lambda n: (0, 0, 0)),  # once
        ],
        out_specs=(
            pl.BlockSpec((bt, HW, P_p), lambda n: (n, 0, 0)),
            pl.BlockSpec((bt, 2, P_p), lambda n: (n, 0, 0)),
        ),
        scratch_shapes=[pad_shape(P_p), col_shape(P_p)],
        compiler_params=cparams,
        cost_estimate=pl.CostEstimate(
            flops=2 * M * 9 * P_p * P_p, transcendentals=0,
            bytes_accessed=2 * M * P_p * 2 + 9 * P_p * P_p * 2),
    )(y1_raw, sc1, sh1, w2p)

    sc2, sh2 = _bn_scale_shift(s2, g2p, b2p, M)

    # ---- stage 3: bn2 + identity shortcut + relu ------------------------------
    out = pl.pallas_call(
        bn_add_relu_kernel,
        out_shape=jax.ShapeDtypeStruct((N, HW, P_p), jnp.float32),
        grid=grid,
        in_specs=[
            pl.BlockSpec((bt, HW, P_p), lambda n: (n, 0, 0)),
            pl.BlockSpec((1, P_p), lambda n: (0, 0)),
            pl.BlockSpec((1, P_p), lambda n: (0, 0)),
            pl.BlockSpec((bt, HW, Cin_p), lambda n: (n, 0, 0)),    # shortcut=x
        ],
        out_specs=pl.BlockSpec((bt, HW, P_p), lambda n: (n, 0, 0)),
        compiler_params=cparams,
        cost_estimate=pl.CostEstimate(
            flops=3 * M * P_p, transcendentals=0,
            bytes_accessed=M * P_p * (2 + 4 + 4)),
    )(y2_raw, sc2, sh2, x)

    # ---- layout glue: drop channel padding, back to NCHW ---------------------
    return out[:, :, :P].reshape(N, H, W, P).transpose(0, 3, 1, 2)


# --------------------------------------------------------------------------- #
# Deterministic parameter init (kernel-format weights)                         #
#   conv.weight (out, in, 3, 3)  ->  w (9, in, out) with k = 3*dy + dx         #
#   bn.weight / bn.bias          ->  g / b of shape (out,)                     #
# --------------------------------------------------------------------------- #
def init_params(key, in_planes, planes):
    k = jax.random.split(key, 6)
    return dict(
        w1=0.1 * jax.random.normal(k[0], (9, in_planes, planes), jnp.float32),
        w2=0.1 * jax.random.normal(k[1], (9, planes, planes), jnp.float32),
        g1=1.0 + 0.1 * jax.random.normal(k[2], (planes,), jnp.float32),
        b1=0.1 * jax.random.normal(k[3], (planes,), jnp.float32),
        g2=1.0 + 0.1 * jax.random.normal(k[4], (planes,), jnp.float32),
        b2=0.1 * jax.random.normal(k[5], (planes,), jnp.float32),
    )


# --------------------------------------------------------------------------- #
# Pure-JAX (f32, lax.conv) reference for correctness                           #
# --------------------------------------------------------------------------- #
def basicblock_reference(x, params):
    def to_oihw(w):                      # (9, Ci, Co), k=3*dy+dx -> (Co,Ci,3,3)
        return jnp.transpose(w.reshape(3, 3, w.shape[1], w.shape[2]),
                             (3, 2, 0, 1))

    def conv(a, w):
        return lax.conv_general_dilated(
            a, to_oihw(w), window_strides=(1, 1), padding=((1, 1), (1, 1)),
            dimension_numbers=("NCHW", "OIHW", "NCHW"),
            precision=lax.Precision.HIGHEST)

    def bn(y, g, b):                     # training-mode BN, biased variance
        m = jnp.mean(y, axis=(0, 2, 3), keepdims=True)
        v = jnp.mean((y - m) ** 2, axis=(0, 2, 3), keepdims=True)
        return ((y - m) * lax.rsqrt(v + EPS) * g.reshape(1, -1, 1, 1)
                + b.reshape(1, -1, 1, 1))

    out = jnp.maximum(bn(conv(x, params["w1"]), params["g1"], params["b1"]), 0.0)
    out = bn(conv(out, params["w2"]), params["g2"], params["b2"])
    out = out + x                        # identity shortcut
    return jnp.maximum(out, 0.0)


if __name__ == "__main__":
    key = jax.random.PRNGKey(0)
    kx, kp = jax.random.split(key)

    # Small shapes consistent with BasicBlock(in_planes=4, planes=4, stride=1)
    N, planes, H, W = 2, 4, 16, 16
    in_planes = planes                   # identity shortcut

    x = jax.random.normal(kx, (N, in_planes, H, W), dtype=jnp.float32)
    params = init_params(kp, in_planes, planes)

    out = jax.block_until_ready(basicblock_forward(x, params))
    assert out.shape == (N, planes, H, W), out.shape

    ref = jax.block_until_ready(basicblock_reference(x, params))
    # bf16 MXU operands + bf16 inter-stage activations (f32 accumulation /
    # f32 BN statistics) -> slightly looser tolerance.
    np.testing.assert_allclose(np.asarray(out), np.asarray(ref),
                               rtol=2e-2, atol=2e-2)

    print("KERNEL_OK")
</pallas_src>

<mosaic_0001>
module attributes {stable_mosaic.version = 11 : i64} {
  func.func @conv3x3_stats_kernel(%arg0: i32, %arg1: memref<1x256x128xf32, #tpu.memory_space<vmem>>, %arg2: memref<3x384x128xbf16, #tpu.memory_space<vmem>>, %arg3: memref<1x256x128xbf16, #tpu.memory_space<vmem>>, %arg4: memref<1x2x128xf32, #tpu.memory_space<vmem>>, %arg5: memref<16x32x128xbf16, #tpu.memory_space<vmem>>, %arg6: memref<288x384xbf16, #tpu.memory_space<vmem>>) attributes {dimension_semantics = [#tpu.dimension_semantics<parallel>], iteration_bounds = array<i64: 2>, scalar_prefetch = 0 : i64, scratch_operands = 2 : i64, tpu.core_type = #tpu.core_type<tc>, window_params = [{transform_indices = @transform_0, window_bounds = array<i64: 1, 256, 128>}, {pipeline_mode = #tpu.pipeline_mode<synchronous>, transform_indices = @transform_1, window_bounds = array<i64: 3, 384, 128>}, {transform_indices = @transform_2, window_bounds = array<i64: 1, 256, 128>}, {transform_indices = @transform_3, window_bounds = array<i64: 1, 2, 128>}]} {
    %cst = arith.constant 0.000000e+00 : bf16
    %0 = vector.broadcast %cst : bf16 to vector<16x1x128xbf16>
    %c0 = arith.constant 0 : index
    %c7 = arith.constant 7 : index
    %c0_0 = arith.constant 0 : index
    %1 = vector.load %arg5[%c0, %c7, %c0_0] : memref<16x32x128xbf16, #tpu.memory_space<vmem>>, vector<16x1x128xbf16>
    tpu.vector_store %arg5[%c0, %c7, %c0_0], %0 {strides = array<i32>} : memref<16x32x128xbf16, #tpu.memory_space<vmem>>, vector<16x1x128xbf16>,
    %c0_1 = arith.constant 0 : index
    %c24 = arith.constant 24 : index
    %c0_2 = arith.constant 0 : index
    %2 = vector.load %arg5[%c0_1, %c24, %c0_2] : memref<16x32x128xbf16, #tpu.memory_space<vmem>>, vector<16x1x128xbf16>
    tpu.vector_store %arg5[%c0_1, %c24, %c0_2], %0 {strides = array<i32>} : memref<16x32x128xbf16, #tpu.memory_space<vmem>>, vector<16x1x128xbf16>,
    %cst_3 = arith.constant 0.000000e+00 : bf16
    %3 = vector.broadcast %cst_3 : bf16 to vector<16x384xbf16>
    %c0_4 = arith.constant 0 : index
    %c0_5 = arith.constant 0 : index
    %4 = vector.load %arg6[%c0_4, %c0_5] : memref<288x384xbf16, #tpu.memory_space<vmem>>, vector<16x384xbf16>
    tpu.vector_store %arg6[%c0_4, %c0_5], %3 {strides = array<i32>} : memref<288x384xbf16, #tpu.memory_space<vmem>>, vector<16x384xbf16>,
    %c272 = arith.constant 272 : index
    %c0_6 = arith.constant 0 : index
    %5 = vector.load %arg6[%c272, %c0_6] : memref<288x384xbf16, #tpu.memory_space<vmem>>, vector<16x384xbf16>
    tpu.vector_store %arg6[%c272, %c0_6], %3 {strides = array<i32>} : memref<288x384xbf16, #tpu.memory_space<vmem>>, vector<16x384xbf16>,
    %c0_7 = arith.constant 0 : index
    %c0_8 = arith.constant 0 : index
    %c0_9 = arith.constant 0 : index
    %6 = vector.load %arg1[%c0_7, %c0_8, %c0_9] : memref<1x256x128xf32, #tpu.memory_space<vmem>>, vector<1x256x128xf32>
    %7 = vector.shape_cast %6 : vector<1x256x128xf32> to vector<256x128xf32>
    %8 = vector.shape_cast %7 : vector<256x128xf32> to vector<16x16x128xf32>
    %9 = arith.truncf %8 : vector<16x16x128xf32> to vector<16x16x128xbf16>
    %c0_10 = arith.constant 0 : index
    %c8 = arith.constant 8 : index
    %c0_11 = arith.constant 0 : index
    %10 = vector.load %arg5[%c0_10, %c8, %c0_11] : memref<16x32x128xbf16, #tpu.memory_space<vmem>>, vector<16x16x128xbf16>
    tpu.vector_store %arg5[%c0_10, %c8, %c0_11], %9 {strides = array<i32>} : memref<16x32x128xbf16, #tpu.memory_space<vmem>>, vector<16x16x128xbf16>,
    %c0_12 = arith.constant 0 : index
    %c7_13 = arith.constant 7 : index
    %c0_14 = arith.constant 0 : index
    %11 = vector.load %arg5[%c0_12, %c7_13, %c0_14] : memref<16x32x128xbf16, #tpu.memory_space<vmem>>, vector<16x16x128xbf16>
    %12 = vector.shape_cast %11 : vector<16x16x128xbf16> to vector<256x128xbf16>
    %c16 = arith.constant 16 : index
    %c0_15 = arith.constant 0 : index
    %13 = vector.load %arg6[%c16, %c0_15] : memref<288x384xbf16, #tpu.memory_space<vmem>>, vector<256x128xbf16>
    tpu.vector_store %arg6[%c16, %c0_15], %12 {strides = array<i32>} : memref<288x384xbf16, #tpu.memory_space<vmem>>, vector<256x128xbf16>,
    %c0_16 = arith.constant 0 : index
    %c8_17 = arith.constant 8 : index
    %c0_18 = arith.constant 0 : index
    %14 = vector.load %arg5[%c0_16, %c8_17, %c0_18] : memref<16x32x128xbf16, #tpu.memory_space<vmem>>, vector<16x16x128xbf16>
    %15 = vector.shape_cast %14 : vector<16x16x128xbf16> to vector<256x128xbf16>
    %c16_19 = arith.constant 16 : index
    %c128 = arith.constant 128 : index
    %16 = vector.load %arg6[%c16_19, %c128] : memref<288x384xbf16, #tpu.memory_space<vmem>>, vector<256x128xbf16>
    tpu.vector_store %arg6[%c16_19, %c128], %15 {strides = array<i32>} : memref<288x384xbf16, #tpu.memory_space<vmem>>, vector<256x128xbf16>,
    %c0_20 = arith.constant 0 : index
    %c9 = arith.constant 9 : index
    %c0_21 = arith.constant 0 : index
    %17 = vector.load %arg5[%c0_20, %c9, %c0_21] : memref<16x32x128xbf16, #tpu.memory_space<vmem>>, vector<16x16x128xbf16>
    %18 = vector.shape_cast %17 : vector<16x16x128xbf16> to vector<256x128xbf16>
    %c16_22 = arith.constant 16 : index
    %c256 = arith.constant 256 : index
    %19 = vector.load %arg6[%c16_22, %c256] : memref<288x384xbf16, #tpu.memory_space<vmem>>, vector<256x128xbf16>
    tpu.vector_store %arg6[%c16_22, %c256], %18 {strides = array<i32>} : memref<288x384xbf16, #tpu.memory_space<vmem>>, vector<256x128xbf16>,
    %c0_23 = arith.constant 0 : index
    %c0_24 = arith.constant 0 : index
    %20 = vector.load %arg6[%c0_23, %c0_24] : memref<288x384xbf16, #tpu.memory_space<vmem>>, vector<256x384xbf16>
    %c0_25 = arith.constant 0 : index
    %c0_26 = arith.constant 0 : index
    %c0_27 = arith.constant 0 : index
    %21 = vector.load %arg2[%c0_25, %c0_26, %c0_27] : memref<3x384x128xbf16, #tpu.memory_space<vmem>>, vector<1x384x128xbf16>
    %22 = vector.shape_cast %21 : vector<1x384x128xbf16> to vector<384x128xbf16>
    %cst_28 = arith.constant dense<0.000000e+00> : vector<256x128xf32>
    %23 = tpu.matmul %20, %22, %cst_28 {dimension_numbers = #tpu.dot_dimension_numbers<[1], [0], [0], [1], [0, 0, 1, 1], [], []>} : vector<256x384xbf16>, vector<384x128xbf16>, vector<256x128xf32> -> vector<256x128xf32>
    %c16_29 = arith.constant 16 : index
    %c0_30 = arith.constant 0 : index
    %24 = vector.load %arg6[%c16_29, %c0_30] : memref<288x384xbf16, #tpu.memory_space<vmem>>, vector<256x384xbf16>
    %c1 = arith.constant 1 : index
    %c0_31 = arith.constant 0 : index
    %c0_32 = arith.constant 0 : index
    %25 = vector.load %arg2[%c1, %c0_31, %c0_32] : memref<3x384x128xbf16, #tpu.memory_space<vmem>>, vector<1x384x128xbf16>
    %26 = vector.shape_cast %25 : vector<1x384x128xbf16> to vector<384x128xbf16>
    %cst_33 = arith.constant dense<0.000000e+00> : vector<256x128xf32>
    %27 = tpu.matmul %24, %26, %cst_33 {dimension_numbers = #tpu.dot_dimension_numbers<[1], [0], [0], [1], [0, 0, 1, 1], [], []>} : vector<256x384xbf16>, vector<384x128xbf16>, vector<256x128xf32> -> vector<256x128xf32>
    %28 = arith.addf %23, %27 : vector<256x128xf32>
    %c32 = arith.constant 32 : index
    %c0_34 = arith.constant 0 : index
    %29 = vector.load %arg6[%c32, %c0_34] : memref<288x384xbf16, #tpu.memory_space<vmem>>, vector<256x384xbf16>
    %c2 = arith.constant 2 : index
    %c0_35 = arith.constant 0 : index
    %c0_36 = arith.constant 0 : index
    %30 = vector.load %arg2[%c2, %c0_35, %c0_36] : memref<3x384x128xbf16, #tpu.memory_space<vmem>>, vector<1x384x128xbf16>
    %31 = vector.shape_cast %30 : vector<1x384x128xbf16> to vector<384x128xbf16>
    %cst_37 = arith.constant dense<0.000000e+00> : vector<256x128xf32>
    %32 = tpu.matmul %29, %31, %cst_37 {dimension_numbers = #tpu.dot_dimension_numbers<[1], [0], [0], [1], [0, 0, 1, 1], [], []>} : vector<256x384xbf16>, vector<384x128xbf16>, vector<256x128xf32> -> vector<256x128xf32>
    %33 = arith.addf %28, %32 : vector<256x128xf32>
    %34 = arith.truncf %33 : vector<256x128xf32> to vector<256x128xbf16>
    %c0_38 = arith.constant 0 : index
    %c0_39 = arith.constant 0 : index
    %c0_40 = arith.constant 0 : index
    %35 = vector.load %arg3[%c0_38, %c0_39, %c0_40] : memref<1x256x128xbf16, #tpu.memory_space<vmem>>, vector<1x256x128xbf16>
    %36 = vector.shape_cast %35 : vector<1x256x128xbf16> to vector<256x128xbf16>
    %37 = vector.shape_cast %34 : vector<256x128xbf16> to vector<1x256x128xbf16>
    tpu.vector_store %arg3[%c0_38, %c0_39, %c0_40], %37 {strides = array<i32>} : memref<1x256x128xbf16, #tpu.memory_space<vmem>>, vector<1x256x128xbf16>,
    %cst_41 = arith.constant dense<0.000000e+00> : vector<128xf32>
    %38 = vector.multi_reduction <add>, %33, %cst_41 [0] : vector<256x128xf32> to vector<128xf32>
    %39 = vector.shape_cast %38 : vector<128xf32> to vector<1x128xf32>
    %40 = arith.mulf %33, %33 : vector<256x128xf32>
    %cst_42 = arith.constant dense<0.000000e+00> : vector<128xf32>
    %41 = vector.multi_reduction <add>, %40, %cst_42 [0] : vector<256x128xf32> to vector<128xf32>
    %42 = vector.shape_cast %41 : vector<128xf32> to vector<1x128xf32>
    %43 = tpu.concatenate %39, %42 in 0 : vector<1x128xf32>, vector<1x128xf32> -> vector<2x128xf32>
    %c0_43 = arith.constant 0 : index
    %c0_44 = arith.constant 0 : index
    %c0_45 = arith.constant 0 : index
    %44 = vector.load %arg4[%c0_43, %c0_44, %c0_45] : memref<1x2x128xf32, #tpu.memory_space<vmem>>, vector<1x2x128xf32>
    %45 = vector.shape_cast %44 : vector<1x2x128xf32> to vector<2x128xf32>
    %46 = vector.shape_cast %43 : vector<2x128xf32> to vector<1x2x128xf32>
    tpu.vector_store %arg4[%c0_43, %c0_44, %c0_45], %46 {strides = array<i32>} : memref<1x2x128xf32, #tpu.memory_space<vmem>>, vector<1x2x128xf32>,
    return
  }
  func.func @transform_0(%arg0: i32) -> (i32, i32, i32) {
    %c0_i32 = arith.constant 0 : i32
    %c0_i32_0 = arith.constant 0 : i32
    %c0_i32_1 = arith.constant 0 : i32
    return %arg0, %c0_i32, %c0_i32_0 : i32, i32, i32
  }
  func.func @transform_1(%arg0: i32) -> (i32, i32, i32) {
    %c0_i32 = arith.constant 0 : i32
    %c0_i32_0 = arith.constant 0 : i32
    %c0_i32_1 = arith.constant 0 : i32
    %c0_i32_2 = arith.constant 0 : i32
    return %c0_i32, %c0_i32_0, %c0_i32_1 : i32, i32, i32
  }
  func.func @transform_2(%arg0: i32) -> (i32, i32, i32) {
    %c0_i32 = arith.constant 0 : i32
    %c0_i32_0 = arith.constant 0 : i32
    %c0_i32_1 = arith.constant 0 : i32
    return %arg0, %c0_i32, %c0_i32_0 : i32, i32, i32
  }
  func.func @transform_3(%arg0: i32) -> (i32, i32, i32) {
    %c0_i32 = arith.constant 0 : i32
    %c0_i32_0 = arith.constant 0 : i32
    %c0_i32_1 = arith.constant 0 : i32
    return %arg0, %c0_i32, %c0_i32_0 : i32, i32, i32
  }
}

module attributes {stable_mosaic.version = 11 : i64} {
  func.func @bn_relu_conv3x3_stats_kernel(%arg0: i32, %arg1: memref<1x256x128xbf16, #tpu.memory_space<vmem>>, %arg2: memref<1x128xf32, #tpu.memory_space<vmem>>, %arg3: memref<1x128xf32, #tpu.memory_space<vmem>>, %arg4: memref<3x384x128xbf16, #tpu.memory_space<vmem>>, %arg5: memref<1x256x128xbf16, #tpu.memory_space<vmem>>, %arg6: memref<1x2x128xf32, #tpu.memory_space<vmem>>, %arg7: memref<16x32x128xbf16, #tpu.memory_space<vmem>>, %arg8: memref<288x384xbf16, #tpu.memory_space<vmem>>) attributes {dimension_semantics = [#tpu.dimension_semantics<parallel>], iteration_bounds = array<i64: 2>, scalar_prefetch = 0 : i64, scratch_operands = 2 : i64, tpu.core_type = #tpu.core_type<tc>, window_params = [{transform_indices = @transform_0, window_bounds = array<i64: 1, 256, 128>}, {pipeline_mode = #tpu.pipeline_mode<synchronous>, transform_indices = @transform_1, window_bounds = array<i64: 1, 128>}, {pipeline_mode = #tpu.pipeline_mode<synchronous>, transform_indices = @transform_2, window_bounds = array<i64: 1, 128>}, {pipeline_mode = #tpu.pipeline_mode<synchronous>, transform_indices = @transform_3, window_bounds = array<i64: 3, 384, 128>}, {transform_indices = @transform_4, window_bounds = array<i64: 1, 256, 128>}, {transform_indices = @transform_5, window_bounds = array<i64: 1, 2, 128>}]} {
    %cst = arith.constant 0.000000e+00 : bf16
    %0 = vector.broadcast %cst : bf16 to vector<16x1x128xbf16>
    %c0 = arith.constant 0 : index
    %c7 = arith.constant 7 : index
    %c0_0 = arith.constant 0 : index
    %1 = vector.load %arg7[%c0, %c7, %c0_0] : memref<16x32x128xbf16, #tpu.memory_space<vmem>>, vector<16x1x128xbf16>
    tpu.vector_store %arg7[%c0, %c7, %c0_0], %0 {strides = array<i32>} : memref<16x32x128xbf16, #tpu.memory_space<vmem>>, vector<16x1x128xbf16>,
    %c0_1 = arith.constant 0 : index
    %c24 = arith.constant 24 : index
    %c0_2 = arith.constant 0 : index
    %2 = vector.load %arg7[%c0_1, %c24, %c0_2] : memref<16x32x128xbf16, #tpu.memory_space<vmem>>, vector<16x1x128xbf16>
    tpu.vector_store %arg7[%c0_1, %c24, %c0_2], %0 {strides = array<i32>} : memref<16x32x128xbf16, #tpu.memory_space<vmem>>, vector<16x1x128xbf16>,
    %cst_3 = arith.constant 0.000000e+00 : bf16
    %3 = vector.broadcast %cst_3 : bf16 to vector<16x384xbf16>
    %c0_4 = arith.constant 0 : index
    %c0_5 = arith.constant 0 : index
    %4 = vector.load %arg8[%c0_4, %c0_5] : memref<288x384xbf16, #tpu.memory_space<vmem>>, vector<16x384xbf16>
    tpu.vector_store %arg8[%c0_4, %c0_5], %3 {strides = array<i32>} : memref<288x384xbf16, #tpu.memory_space<vmem>>, vector<16x384xbf16>,
    %c272 = arith.constant 272 : index
    %c0_6 = arith.constant 0 : index
    %5 = vector.load %arg8[%c272, %c0_6] : memref<288x384xbf16, #tpu.memory_space<vmem>>, vector<16x384xbf16>
    tpu.vector_store %arg8[%c272, %c0_6], %3 {strides = array<i32>} : memref<288x384xbf16, #tpu.memory_space<vmem>>, vector<16x384xbf16>,
    %c0_7 = arith.constant 0 : index
    %c0_8 = arith.constant 0 : index
    %c0_9 = arith.constant 0 : index
    %6 = vector.load %arg1[%c0_7, %c0_8, %c0_9] : memref<1x256x128xbf16, #tpu.memory_space<vmem>>, vector<1x256x128xbf16>
    %7 = vector.shape_cast %6 : vector<1x256x128xbf16> to vector<256x128xbf16>
    %8 = arith.extf %7 : vector<256x128xbf16> to vector<256x128xf32>
    %c0_10 = arith.constant 0 : index
    %c0_11 = arith.constant 0 : index
    %9 = vector.load %arg2[%c0_10, %c0_11] : memref<1x128xf32, #tpu.memory_space<vmem>>, vector<1x128xf32>
    %10 = vector.broadcast %9 : vector<1x128xf32> to vector<256x128xf32>
    %11 = arith.mulf %8, %10 : vector<256x128xf32>
    %c0_12 = arith.constant 0 : index
    %c0_13 = arith.constant 0 : index
    %12 = vector.load %arg3[%c0_12, %c0_13] : memref<1x128xf32, #tpu.memory_space<vmem>>, vector<1x128xf32>
    %13 = vector.broadcast %12 : vector<1x128xf32> to vector<256x128xf32>
    %14 = arith.addf %11, %13 : vector<256x128xf32>
    %cst_14 = arith.constant 0.000000e+00 : f32
    %15 = vector.broadcast %cst_14 : f32 to vector<256x128xf32>
    %16 = arith.maximumf %14, %15 : vector<256x128xf32>
    %17 = vector.shape_cast %16 : vector<256x128xf32> to vector<16x16x128xf32>
    %18 = arith.truncf %17 : vector<16x16x128xf32> to vector<16x16x128xbf16>
    %c0_15 = arith.constant 0 : index
    %c8 = arith.constant 8 : index
    %c0_16 = arith.constant 0 : index
    %19 = vector.load %arg7[%c0_15, %c8, %c0_16] : memref<16x32x128xbf16, #tpu.memory_space<vmem>>, vector<16x16x128xbf16>
    tpu.vector_store %arg7[%c0_15, %c8, %c0_16], %18 {strides = array<i32>} : memref<16x32x128xbf16, #tpu.memory_space<vmem>>, vector<16x16x128xbf16>,
    %c0_17 = arith.constant 0 : index
    %c7_18 = arith.constant 7 : index
    %c0_19 = arith.constant 0 : index
    %20 = vector.load %arg7[%c0_17, %c7_18, %c0_19] : memref<16x32x128xbf16, #tpu.memory_space<vmem>>, vector<16x16x128xbf16>
    %21 = vector.shape_cast %20 : vector<16x16x128xbf16> to vector<256x128xbf16>
    %c16 = arith.constant 16 : index
    %c0_20 = arith.constant 0 : index
    %22 = vector.load %arg8[%c16, %c0_20] : memref<288x384xbf16, #tpu.memory_space<vmem>>, vector<256x128xbf16>
    tpu.vector_store %arg8[%c16, %c0_20], %21 {strides = array<i32>} : memref<288x384xbf16, #tpu.memory_space<vmem>>, vector<256x128xbf16>,
    %c0_21 = arith.constant 0 : index
    %c8_22 = arith.constant 8 : index
    %c0_23 = arith.constant 0 : index
    %23 = vector.load %arg7[%c0_21, %c8_22, %c0_23] : memref<16x32x128xbf16, #tpu.memory_space<vmem>>, vector<16x16x128xbf16>
    %24 = vector.shape_cast %23 : vector<16x16x128xbf16> to vector<256x128xbf16>
    %c16_24 = arith.constant 16 : index
    %c128 = arith.constant 128 : index
    %25 = vector.load %arg8[%c16_24, %c128] : memref<288x384xbf16, #tpu.memory_space<vmem>>, vector<256x128xbf16>
    tpu.vector_store %arg8[%c16_24, %c128], %24 {strides = array<i32>} : memref<288x384xbf16, #tpu.memory_space<vmem>>, vector<256x128xbf16>,
    %c0_25 = arith.constant 0 : index
    %c9 = arith.constant 9 : index
    %c0_26 = arith.constant 0 : index
    %26 = vector.load %arg7[%c0_25, %c9, %c0_26] : memref<16x32x128xbf16, #tpu.memory_space<vmem>>, vector<16x16x128xbf16>
    %27 = vector.shape_cast %26 : vector<16x16x128xbf16> to vector<256x128xbf16>
    %c16_27 = arith.constant 16 : index
    %c256 = arith.constant 256 : index
    %28 = vector.load %arg8[%c16_27, %c256] : memref<288x384xbf16, #tpu.memory_space<vmem>>, vector<256x128xbf16>
    tpu.vector_store %arg8[%c16_27, %c256], %27 {strides = array<i32>} : memref<288x384xbf16, #tpu.memory_space<vmem>>, vector<256x128xbf16>,
    %c0_28 = arith.constant 0 : index
    %c0_29 = arith.constant 0 : index
    %29 = vector.load %arg8[%c0_28, %c0_29] : memref<288x384xbf16, #tpu.memory_space<vmem>>, vector<256x384xbf16>
    %c0_30 = arith.constant 0 : index
    %c0_31 = arith.constant 0 : index
    %c0_32 = arith.constant 0 : index
    %30 = vector.load %arg4[%c0_30, %c0_31, %c0_32] : memref<3x384x128xbf16, #tpu.memory_space<vmem>>, vector<1x384x128xbf16>
    %31 = vector.shape_cast %30 : vector<1x384x128xbf16> to vector<384x128xbf16>
    %cst_33 = arith.constant dense<0.000000e+00> : vector<256x128xf32>
    %32 = tpu.matmul %29, %31, %cst_33 {dimension_numbers = #tpu.dot_dimension_numbers<[1], [0], [0], [1], [0, 0, 1, 1], [], []>} : vector<256x384xbf16>, vector<384x128xbf16>, vector<256x128xf32> -> vector<256x128xf32>
    %c16_34 = arith.constant 16 : index
    %c0_35 = arith.constant 0 : index
    %33 = vector.load %arg8[%c16_34, %c0_35] : memref<288x384xbf16, #tpu.memory_space<vmem>>, vector<256x384xbf16>
    %c1 = arith.constant 1 : index
    %c0_36 = arith.constant 0 : index
    %c0_37 = arith.constant 0 : index
    %34 = vector.load %arg4[%c1, %c0_36, %c0_37] : memref<3x384x128xbf16, #tpu.memory_space<vmem>>, vector<1x384x128xbf16>
    %35 = vector.shape_cast %34 : vector<1x384x128xbf16> to vector<384x128xbf16>
    %cst_38 = arith.constant dense<0.000000e+00> : vector<256x128xf32>
    %36 = tpu.matmul %33, %35, %cst_38 {dimension_numbers = #tpu.dot_dimension_numbers<[1], [0], [0], [1], [0, 0, 1, 1], [], []>} : vector<256x384xbf16>, vector<384x128xbf16>, vector<256x128xf32> -> vector<256x128xf32>
    %37 = arith.addf %32, %36 : vector<256x128xf32>
    %c32 = arith.constant 32 : index
    %c0_39 = arith.constant 0 : index
    %38 = vector.load %arg8[%c32, %c0_39] : memref<288x384xbf16, #tpu.memory_space<vmem>>, vector<256x384xbf16>
    %c2 = arith.constant 2 : index
    %c0_40 = arith.constant 0 : index
    %c0_41 = arith.constant 0 : index
    %39 = vector.load %arg4[%c2, %c0_40, %c0_41] : memref<3x384x128xbf16, #tpu.memory_space<vmem>>, vector<1x384x128xbf16>
    %40 = vector.shape_cast %39 : vector<1x384x128xbf16> to vector<384x128xbf16>
    %cst_42 = arith.constant dense<0.000000e+00> : vector<256x128xf32>
    %41 = tpu.matmul %38, %40, %cst_42 {dimension_numbers = #tpu.dot_dimension_numbers<[1], [0], [0], [1], [0, 0, 1, 1], [], []>} : vector<256x384xbf16>, vector<384x128xbf16>, vector<256x128xf32> -> vector<256x128xf32>
    %42 = arith.addf %37, %41 : vector<256x128xf32>
    %43 = arith.truncf %42 : vector<256x128xf32> to vector<256x128xbf16>
    %c0_43 = arith.constant 0 : index
    %c0_44 = arith.constant 0 : index
    %c0_45 = arith.constant 0 : index
    %44 = vector.load %arg5[%c0_43, %c0_44, %c0_45] : memref<1x256x128xbf16, #tpu.memory_space<vmem>>, vector<1x256x128xbf16>
    %45 = vector.shape_cast %44 : vector<1x256x128xbf16> to vector<256x128xbf16>
    %46 = vector.shape_cast %43 : vector<256x128xbf16> to vector<1x256x128xbf16>
    tpu.vector_store %arg5[%c0_43, %c0_44, %c0_45], %46 {strides = array<i32>} : memref<1x256x128xbf16, #tpu.memory_space<vmem>>, vector<1x256x128xbf16>,
    %cst_46 = arith.constant dense<0.000000e+00> : vector<128xf32>
    %47 = vector.multi_reduction <add>, %42, %cst_46 [0] : vector<256x128xf32> to vector<128xf32>
    %48 = vector.shape_cast %47 : vector<128xf32> to vector<1x128xf32>
    %49 = arith.mulf %42, %42 : vector<256x128xf32>
    %cst_47 = arith.constant dense<0.000000e+00> : vector<128xf32>
    %50 = vector.multi_reduction <add>, %49, %cst_47 [0] : vector<256x128xf32> to vector<128xf32>
    %51 = vector.shape_cast %50 : vector<128xf32> to vector<1x128xf32>
    %52 = tpu.concatenate %48, %51 in 0 : vector<1x128xf32>, vector<1x128xf32> -> vector<2x128xf32>
    %c0_48 = arith.constant 0 : index
    %c0_49 = arith.constant 0 : index
    %c0_50 = arith.constant 0 : index
    %53 = vector.load %arg6[%c0_48, %c0_49, %c0_50] : memref<1x2x128xf32, #tpu.memory_space<vmem>>, vector<1x2x128xf32>
    %54 = vector.shape_cast %53 : vector<1x2x128xf32> to vector<2x128xf32>
    %55 = vector.shape_cast %52 : vector<2x128xf32> to vector<1x2x128xf32>
    tpu.vector_store %arg6[%c0_48, %c0_49, %c0_50], %55 {strides = array<i32>} : memref<1x2x128xf32, #tpu.memory_space<vmem>>, vector<1x2x128xf32>,
    return
  }
  func.func @transform_0(%arg0: i32) -> (i32, i32, i32) {
    %c0_i32 = arith.constant 0 : i32
    %c0_i32_0 = arith.constant 0 : i32
    %c0_i32_1 = arith.constant 0 : i32
    return %arg0, %c0_i32, %c0_i32_0 : i32, i32, i32
  }
  func.func @transform_1(%arg0: i32) -> (i32, i32) {
    %c0_i32 = arith.constant 0 : i32
    %c0_i32_0 = arith.constant 0 : i32
    %c0_i32_1 = arith.constant 0 : i32
    return %c0_i32, %c0_i32_0 : i32, i32
  }
  func.func @transform_2(%arg0: i32) -> (i32, i32) {
    %c0_i32 = arith.constant 0 : i32
    %c0_i32_0 = arith.constant 0 : i32
    %c0_i32_1 = arith.constant 0 : i32
    return %c0_i32, %c0_i32_0 : i32, i32
  }
  func.func @transform_3(%arg0: i32) -> (i32, i32, i32) {
    %c0_i32 = arith.constant 0 : i32
    %c0_i32_0 = arith.constant 0 : i32
    %c0_i32_1 = arith.constant 0 : i32
    %c0_i32_2 = arith.constant 0 : i32
    return %c0_i32, %c0_i32_0, %c0_i32_1 : i32, i32, i32
  }
  func.func @transform_4(%arg0: i32) -> (i32, i32, i32) {
    %c0_i32 = arith.constant 0 : i32
    %c0_i32_0 = arith.constant 0 : i32
    %c0_i32_1 = arith.constant 0 : i32
    return %arg0, %c0_i32, %c0_i32_0 : i32, i32, i32
  }
  func.func @transform_5(%arg0: i32) -> (i32, i32, i32) {
    %c0_i32 = arith.constant 0 : i32
    %c0_i32_0 = arith.constant 0 : i32
    %c0_i32_1 = arith.constant 0 : i32
    return %arg0, %c0_i32, %c0_i32_0 : i32, i32, i32
  }
}

module attributes {stable_mosaic.version = 11 : i64} {
  func.func @bn_add_relu_kernel(%arg0: i32, %arg1: memref<1x256x128xbf16, #tpu.memory_space<vmem>>, %arg2: memref<1x128xf32, #tpu.memory_space<vmem>>, %arg3: memref<1x128xf32, #tpu.memory_space<vmem>>, %arg4: memref<1x256x128xf32, #tpu.memory_space<vmem>>, %arg5: memref<1x256x128xf32, #tpu.memory_space<vmem>>) attributes {dimension_semantics = [#tpu.dimension_semantics<parallel>], iteration_bounds = array<i64: 2>, scalar_prefetch = 0 : i64, scratch_operands = 0 : i64, tpu.core_type = #tpu.core_type<tc>, window_params = [{transform_indices = @transform_0, window_bounds = array<i64: 1, 256, 128>}, {pipeline_mode = #tpu.pipeline_mode<synchronous>, transform_indices = @transform_1, window_bounds = array<i64: 1, 128>}, {pipeline_mode = #tpu.pipeline_mode<synchronous>, transform_indices = @transform_2, window_bounds = array<i64: 1, 128>}, {transform_indices = @transform_3, window_bounds = array<i64: 1, 256, 128>}, {transform_indices = @transform_4, window_bounds = array<i64: 1, 256, 128>}]} {
    %c0 = arith.constant 0 : index
    %c0_0 = arith.constant 0 : index
    %c0_1 = arith.constant 0 : index
    %0 = vector.load %arg1[%c0, %c0_0, %c0_1] : memref<1x256x128xbf16, #tpu.memory_space<vmem>>, vector<1x256x128xbf16>
    %1 = vector.shape_cast %0 : vector<1x256x128xbf16> to vector<256x128xbf16>
    %2 = arith.extf %1 : vector<256x128xbf16> to vector<256x128xf32>
    %c0_2 = arith.constant 0 : index
    %c0_3 = arith.constant 0 : index
    %3 = vector.load %arg2[%c0_2, %c0_3] : memref<1x128xf32, #tpu.memory_space<vmem>>, vector<1x128xf32>
    %4 = vector.broadcast %3 : vector<1x128xf32> to vector<256x128xf32>
    %5 = arith.mulf %2, %4 : vector<256x128xf32>
    %c0_4 = arith.constant 0 : index
    %c0_5 = arith.constant 0 : index
    %6 = vector.load %arg3[%c0_4, %c0_5] : memref<1x128xf32, #tpu.memory_space<vmem>>, vector<1x128xf32>
    %7 = vector.broadcast %6 : vector<1x128xf32> to vector<256x128xf32>
    %8 = arith.addf %5, %7 : vector<256x128xf32>
    %c0_6 = arith.constant 0 : index
    %c0_7 = arith.constant 0 : index
    %c0_8 = arith.constant 0 : index
    %9 = vector.load %arg4[%c0_6, %c0_7, %c0_8] : memref<1x256x128xf32, #tpu.memory_space<vmem>>, vector<1x256x128xf32>
    %10 = vector.shape_cast %9 : vector<1x256x128xf32> to vector<256x128xf32>
    %11 = arith.addf %8, %10 : vector<256x128xf32>
    %cst = arith.constant 0.000000e+00 : f32
    %12 = vector.broadcast %cst : f32 to vector<256x128xf32>
    %13 = arith.maximumf %11, %12 : vector<256x128xf32>
    %c0_9 = arith.constant 0 : index
    %c0_10 = arith.constant 0 : index
    %c0_11 = arith.constant 0 : index
    %14 = vector.load %arg5[%c0_9, %c0_10, %c0_11] : memref<1x256x128xf32, #tpu.memory_space<vmem>>, vector<1x256x128xf32>
    %15 = vector.shape_cast %14 : vector<1x256x128xf32> to vector<256x128xf32>
    %16 = vector.shape_cast %13 : vector<256x128xf32> to vector<1x256x128xf32>
    tpu.vector_store %arg5[%c0_9, %c0_10, %c0_11], %16 {strides = array<i32>} : memref<1x256x128xf32, #tpu.memory_space<vmem>>, vector<1x256x128xf32>,
    return
  }
  func.func @transform_0(%arg0: i32) -> (i32, i32, i32) {
    %c0_i32 = arith.constant 0 : i32
    %c0_i32_0 = arith.constant 0 : i32
    %c0_i32_1 = arith.constant 0 : i32
    return %arg0, %c0_i32, %c0_i32_0 : i32, i32, i32
  }
  func.func @transform_1(%arg0: i32) -> (i32, i32) {
    %c0_i32 = arith.constant 0 : i32
    %c0_i32_0 = arith.constant 0 : i32
    %c0_i32_1 = arith.constant 0 : i32
    return %c0_i32, %c0_i32_0 : i32, i32
  }
  func.func @transform_2(%arg0: i32) -> (i32, i32) {
    %c0_i32 = arith.constant 0 : i32
    %c0_i32_0 = arith.constant 0 : i32
    %c0_i32_1 = arith.constant 0 : i32
    return %c0_i32, %c0_i32_0 : i32, i32
  }
  func.func @transform_3(%arg0: i32) -> (i32, i32, i32) {
    %c0_i32 = arith.constant 0 : i32
    %c0_i32_0 = arith.constant 0 : i32
    %c0_i32_1 = arith.constant 0 : i32
    return %arg0, %c0_i32, %c0_i32_0 : i32, i32, i32
  }
  func.func @transform_4(%arg0: i32) -> (i32, i32, i32) {
    %c0_i32 = arith.constant 0 : i32
    %c0_i32_0 = arith.constant 0 : i32
    %c0_i32_1 = arith.constant 0 : i32
    return %arg0, %c0_i32, %c0_i32_0 : i32, i32, i32
  }
}

</mosaic_0001>

<llo_original>
// kernel: basicblock_forward.5
$region0: #{basicblock_forward.5}
  #allocation0 [shape = 'u32[]', space=smem, size = 0x4, offset = 0x4, fixed_abs, tag = 'smem constant byte address 0x4 - core index']
  #allocation1 [shape = 'u32[144,128]{1,0:T(1,128)}', space=vmem, size = 0x12000, scoped, tag = 'internal scratch']
  %s0 = inlined_call_operand.vmem [shape: bf16[2,256,128], index: 0, kind: input, shape index: {}]
  %s1 = inlined_call_operand.vmem [shape: f32[1,128], index: 1, kind: input, shape index: {}]
  %s2 = inlined_call_operand.vmem [shape: f32[1,128], index: 2, kind: input, shape index: {}]
  %s3 = inlined_call_operand.vmem [shape: f32[2,256,128], index: 3, kind: input, shape index: {}]
  %s4 = inlined_call_operand.vmem [shape: f32[2,256,128], index: 4, kind: output, shape index: {}]
  %s5 = sld [smem:[#allocation0]]
  $region49: #{basicblock_forward.5} parent=0
    _
  %s7 = ssub.s32 1, %s5
  %s8 = scalar_select 0, %s7, %s5
  loop: start=0, step=1, limit=4
  $region2: #{basicblock_forward.5} parent=0 // loop_pre_header
    _
  $region3: #{basicblock_forward.5} parent=0 // loop_header
    %s10 = sphi 0, %s14
    %p11 = scmp.ge.s32.totalorder %s10, 4
    %s20 = sphi 0, %s22
    %s23 = sphi 0, %s20
    %s24 = sphi 0, %s23
    %s40 = sphi 0, %s24
    %s44 = sphi 0, %s44
    %s46 = sphi 0, %s44
    %s47 = sphi 0, %s46
    %s61 = sphi 0, %s47
    %s65 = sphi 0, %s65
    %s67 = sphi 0, %s65
    %s68 = sphi 0, %s67
    %s82 = sphi 0, %s68
    %s88 = sphi 0, %s90
    %s91 = sphi 0, %s88
    %s92 = sphi 0, %s91
    %s108 = sphi 0, %s92
    %s114 = sphi 0, %s116
    %s117 = sphi 0, %s114
    %s118 = sphi 0, %s117
    %s134 = sphi 0, %s118
  $region4: #{basicblock_forward.5} parent=0 // loop_header_branch
    %13 = sbr.rel (%p11) target = $region8
  $region5: #{basicblock_forward.5} parent=0 // loop_body
    %s15 = ssub.s32 %s10, 1
    %s16 = ssub.s32 %s10, 2
    %s17 = sadd.s32 %s10, 1
    %s18 = ssub.s32 %s10, %s17
    %p19 = scmp.eq.s32.totalorder %s18, 0
    %s21 = sadd.s32 %s20, 1
    %s22 = scalar_select %p19, %s20, %s21
    %p25 = pneg %p19
    %p26 = scmp.eq.s32.totalorder %s10, 1
    %p27 = por %p25, %p26
    %p28 = scmp.ne.s32.totalorder %s20, %s23
    %p29 = scmp.eq.s32.totalorder %s10, 0
    %p30 = por %p28, %p29
    %p31 = scmp.ne.s32.totalorder %s20, %s23
    %p32 = scmp.eq.s32.totalorder %s15, 1
    %p33 = por %p31, %p32
    %p34 = scmp.ne.s32.totalorder %s23, %s24
    %p35 = scmp.eq.s32.totalorder %s15, 0
    %p36 = por %p34, %p35
    %p37 = scmp.ne.s32.totalorder %s23, %s24
    %p38 = scmp.eq.s32.totalorder %s16, 1
    %p39 = por %p37, %p38
    %p41 = scmp.ne.s32.totalorder %s24, %s40
    %p42 = scmp.eq.s32.totalorder %s16, 0
    %p43 = por %p41, %p42
    %s45 = sadd.s32 %s44, 1
    %p48 = scmp.eq.s32.totalorder %s10, 1
    %p49 = scmp.ne.s32.totalorder %s44, %s46
    %p50 = scmp.eq.s32.totalorder %s10, 0
    %p51 = por %p49, %p50
    %p52 = scmp.ne.s32.totalorder %s44, %s46
    %p53 = scmp.eq.s32.totalorder %s15, 1
    %p54 = por %p52, %p53
    %p55 = scmp.ne.s32.totalorder %s46, %s47
    %p56 = scmp.eq.s32.totalorder %s15, 0
    %p57 = por %p55, %p56
    %p58 = scmp.ne.s32.totalorder %s46, %s47
    %p59 = scmp.eq.s32.totalorder %s16, 1
    %p60 = por %p58, %p59
    %p62 = scmp.ne.s32.totalorder %s47, %s61
    %p63 = scmp.eq.s32.totalorder %s16, 0
    %p64 = por %p62, %p63
    %s66 = sadd.s32 %s65, 1
    %p69 = scmp.eq.s32.totalorder %s10, 1
    %p70 = scmp.ne.s32.totalorder %s65, %s67
    %p71 = scmp.eq.s32.totalorder %s10, 0
    %p72 = por %p70, %p71
    %p73 = scmp.ne.s32.totalorder %s65, %s67
    %p74 = scmp.eq.s32.totalorder %s15, 1
    %p75 = por %p73, %p74
    %p76 = scmp.ne.s32.totalorder %s67, %s68
    %p77 = scmp.eq.s32.totalorder %s15, 0
    %p78 = por %p76, %p77
    %p79 = scmp.ne.s32.totalorder %s67, %s68
    %p80 = scmp.eq.s32.totalorder %s16, 1
    %p81 = por %p79, %p80
    %p83 = scmp.ne.s32.totalorder %s68, %s82
    %p84 = scmp.eq.s32.totalorder %s16, 0
    %p85 = por %p83, %p84
    %s86 = ssub.s32 %s10, %s17
    %p87 = scmp.eq.s32.totalorder %s86, 0
    %s89 = sadd.s32 %s88, 1
    %s90 = scalar_select %p87, %s88, %s89
    %p93 = pneg %p87
    %p94 = scmp.eq.s32.totalorder %s10, 1
    %p95 = por %p93, %p94
    %p96 = scmp.ne.s32.totalorder %s88, %s91
    %p97 = scmp.eq.s32.totalorder %s10, 0
    %p98 = por %p96, %p97
    %p99 = scmp.ne.s32.totalorder %s88, %s91
    %p100 = scmp.eq.s32.totalorder %s15, 1
    %p101 = por %p99, %p100
    %p102 = scmp.ne.s32.totalorder %s91, %s92
    %p103 = scmp.eq.s32.totalorder %s15, 0
    %p104 = por %p102, %p103
    %p105 = scmp.ne.s32.totalorder %s91, %s92
    %p106 = scmp.eq.s32.totalorder %s16, 1
    %p107 = por %p105, %p106
    %p109 = scmp.ne.s32.totalorder %s92, %s108
    %p110 = scmp.eq.s32.totalorder %s16, 0
    %p111 = por %p109, %p110
    %s112 = ssub.s32 %s10, %s17
    %p113 = scmp.eq.s32.totalorder %s112, 0
    %s115 = sadd.s32 %s114, 1
    %s116 = scalar_select %p113, %s114, %s115
    %p119 = pneg %p113
    %p120 = scmp.eq.s32.totalorder %s10, 1
    %p121 = por %p119, %p120
    %p122 = scmp.ne.s32.totalorder %s114, %s117
    %p123 = scmp.eq.s32.totalorder %s10, 0
    %p124 = por %p122, %p123
    %p125 = scmp.ne.s32.totalorder %s114, %s117
    %p126 = scmp.eq.s32.totalorder %s15, 1
    %p127 = por %p125, %p126
    %p128 = scmp.ne.s32.totalorder %s117, %s118
    %p129 = scmp.eq.s32.totalorder %s15, 0
    %p130 = por %p128, %p129
    %p131 = scmp.ne.s32.totalorder %s117, %s118
    %p132 = scmp.eq.s32.totalorder %s16, 1
    %p133 = por %p131, %p132
    %p135 = scmp.ne.s32.totalorder %s118, %s134
    %p136 = scmp.eq.s32.totalorder %s16, 0
    %p137 = por %p135, %p136
    %p138 = scmp.le.s32.totalorder 1, %s10
    %p139 = scmp.lt.s32.totalorder %s10, 3
    %p140 = pnand %p138, %p139
    %p141 = pneg %p140
    // Predicated region
    $region9: #{basicblock_forward.5} parent=5 // pred_check
      _
    $region10: #{basicblock_forward.5} parent=5 // pred_check_branch
      %143 = sbr.rel (%p140) target = $region12
    $region11: #{basicblock_forward.5} parent=5 // pred_region
      %s144 = ssub.s32 %s10, 1
      // Predicated region
      $region13: #{basicblock_forward.5} parent=11 // pred_check
        %p145 = pneg %p57
      $region14: #{basicblock_forward.5} parent=11 // pred_check_branch
        %147 = sbr.rel (%p145) target = $region16
      $region15: #{basicblock_forward.5} parent=11 // pred_region
        _
      $region16: #{basicblock_forward.5} parent=11 // pred_fallthru
        _
      // Predicated region
      $region17: #{basicblock_forward.5} parent=11 // pred_check
        %p148 = pneg %p78
      $region18: #{basicblock_forward.5} parent=11 // pred_check_branch
        %150 = sbr.rel (%p148) target = $region20
      $region19: #{basicblock_forward.5} parent=11 // pred_region
        _
      $region20: #{basicblock_forward.5} parent=11 // pred_fallthru
        _
    $region12: #{basicblock_forward.5} parent=5 // pred_fallthru
      _
    %p151 = scmp.lt.s32.totalorder %s10, 2
    // Predicated region
    $region21: #{basicblock_forward.5} parent=5 // pred_check
      %p152 = pneg %p151
    $region22: #{basicblock_forward.5} parent=5 // pred_check_branch
      %154 = sbr.rel (%p152) target = $region24
    $region23: #{basicblock_forward.5} parent=5 // pred_region
      // Predicated region
      $region25: #{basicblock_forward.5} parent=23 // pred_check
        %p155 = pneg %p30
      $region26: #{basicblock_forward.5} parent=23 // pred_check_branch
        %157 = sbr.rel (%p155) target = $region28
      $region27: #{basicblock_forward.5} parent=23 // pred_region
        %p158 = scmp.lt.s32.totalorder %s10, 1
        %s159 = scalar_select %p158, %s10, 1
        %s160 = smul.addr %s159, 32
        %s161 = smul.addr %s160, 4
        %s162 = scalar_lea.vmem %s0, %s161
      $region28: #{basicblock_forward.5} parent=23 // pred_fallthru
        _
      // Predicated region
      $region29: #{basicblock_forward.5} parent=23 // pred_check
        %p163 = pneg %p98
      $region30: #{basicblock_forward.5} parent=23 // pred_check_branch
        %165 = sbr.rel (%p163) target = $region32
      $region31: #{basicblock_forward.5} parent=23 // pred_region
        %p166 = scmp.lt.s32.totalorder %s10, 1
        %s167 = scalar_select %p166, %s10, 1
        %s168 = smul.addr %s167, 32
        %s169 = smul.addr %s168, 8
        %s170 = scalar_lea.vmem %s3, %s169
      $region32: #{basicblock_forward.5} parent=23 // pred_fallthru
        _
    $region24: #{basicblock_forward.5} parent=5 // pred_fallthru
      _
    %p171 = scmp.le.s32.totalorder 1, %s10
    %p172 = scmp.lt.s32.totalorder %s10, 3
    %p173 = pnand %p171, %p172
    %p174 = pneg %p173
    // Predicated region
    $region33: #{basicblock_forward.5} parent=5 // pred_check
      _
    $region34: #{basicblock_forward.5} parent=5 // pred_check_branch
      %176 = sbr.rel (%p173) target = $region36
    $region35: #{basicblock_forward.5} parent=5 // pred_region
      %s177 = ssub.s32 %s10, 1
      %p178 = scmp.lt.s32.totalorder %s15, 1
      %s179 = scalar_select %p178, %s15, 1
      %s180 = smul.addr %s179, 32
      %s181 = smul.addr %s180, 4
      %s182 = scalar_lea.vmem %s0, %s181
      %p183 = pneg %p36
      %p184 = pneg %p33
      %p185 = pneg %p57
      %p186 = pneg %p54
      %p187 = pneg %p78
      %p188 = pneg %p75
      %p189 = scmp.lt.s32.totalorder %s15, 1
      %s190 = scalar_select %p189, %s15, 1
      %s191 = smul.addr %s190, 32
      %s192 = smul.addr %s191, 8
      %s193 = scalar_lea.vmem %s3, %s192
      %p194 = pneg %p104
      %p195 = pneg %p101
      %p196 = pneg %p130
      %p197 = pneg %p127
      %p198 = scmp.lt.s32.totalorder %s15, 1
      %s199 = scalar_select %p198, %s15, 1
      %s200 = smul.addr %s199, 32
      %s201 = smul.addr %s200, 8
      %s202 = scalar_lea.vmem %s4, %s201
      %p203 = scmp.lt.s32.totalorder %s15, 1
      %s204 = scalar_select %p203, %s15, 1
      %s205 = smul.addr %s204, 32
      %s206 = smul.addr %s205, 4
      %s207 = scalar_lea.vmem %s0, %s206
      %p208 = scmp.lt.s32.totalorder %s15, 1
      %s209 = scalar_select %p208, %s15, 1
      %s210 = smul.addr %s209, 32
      %s211 = smul.addr %s210, 8
      %s212 = scalar_lea.vmem %s3, %s211
      %p213 = scmp.lt.s32.totalorder %s15, 1
      %s214 = scalar_select %p213, %s15, 1
      %s215 = smul.addr %s214, 32
      %s216 = smul.addr %s215, 8
      %s217 = scalar_lea.vmem %s4, %s216
      %v218 = vld [vmem:[%s207] sm:$0xf]
      %v219 = vld [vmem:[%s207 + $0x4] sm:$0xf]
      %v220 = vld [vmem:[%s207 + $0x8] sm:$0xf]
      %v221 = vld [vmem:[%s207 + $0xc] sm:$0xf]
      %v222 = vld [vmem:[%s207 + $0x10] sm:$0xf]
      %v223 = vld [vmem:[%s207 + $0x14] sm:$0xf]
      %v224 = vld [vmem:[%s207 + $0x18] sm:$0xf]
      %v225 = vld [vmem:[%s207 + $0x1c] sm:$0xf]
      %v226 = vld [vmem:[%s207 + $0x20] sm:$0xf]
      %v227 = vld [vmem:[%s207 + $0x24] sm:$0xf]
      %v228 = vld [vmem:[%s207 + $0x28] sm:$0xf]
      %v229 = vld [vmem:[%s207 + $0x2c] sm:$0xf]
      %v230 = vld [vmem:[%s207 + $0x30] sm:$0xf]
      %v231 = vld [vmem:[%s207 + $0x34] sm:$0xf]
      %v232 = vld [vmem:[%s207 + $0x38] sm:$0xf]
      %v233 = vld [vmem:[%s207 + $0x3c] sm:$0xf]
      %v234 = vld [vmem:[%s207 + $0x40] sm:$0xf]
      %v235 = vld [vmem:[%s207 + $0x44] sm:$0xf]
      %v236 = vld [vmem:[%s207 + $0x48] sm:$0xf]
      %v237 = vld [vmem:[%s207 + $0x4c] sm:$0xf]
      %v238 = vld [vmem:[%s207 + $0x50] sm:$0xf]
      %v239 = vld [vmem:[%s207 + $0x54] sm:$0xf]
      %v240 = vld [vmem:[%s207 + $0x58] sm:$0xf]
      %v241 = vld [vmem:[%s207 + $0x5c] sm:$0xf]
      %v242 = vld [vmem:[%s207 + $0x60] sm:$0xf]
      %v243 = vld [vmem:[%s207 + $0x64] sm:$0xf]
      %v244 = vld [vmem:[%s207 + $0x68] sm:$0xf]
      %v245 = vld [vmem:[%s207 + $0x6c] sm:$0xf]
      %v246 = vld [vmem:[%s207 + $0x70] sm:$0xf]
      %v247 = vld [vmem:[%s207 + $0x74] sm:$0xf]
      %v248 = vld [vmem:[%s207 + $0x78] sm:$0xf]
      %v249 = vld [vmem:[%s207 + $0x7c] sm:$0xf]
      %v250 = vunpack.c.l.bf16 %v218
      %v251 = vunpack.c.l.bf16 %v219
      %v252 = vunpack.c.l.bf16 %v220
      %v253 = vunpack.c.l.bf16 %v221
      %v254 = vunpack.c.l.bf16 %v222
      %v255 = vunpack.c.l.bf16 %v223
      %v256 = vunpack.c.l.bf16 %v224
      %v257 = vunpack.c.l.bf16 %v225
      %v258 = vunpack.c.l.bf16 %v226
      %v259 = vunpack.c.l.bf16 %v227
      %v260 = vunpack.c.l.bf16 %v228
      %v261 = vunpack.c.l.bf16 %v229
      %v262 = vunpack.c.l.bf16 %v230
      %v263 = vunpack.c.l.bf16 %v231
      %v264 = vunpack.c.l.bf16 %v232
      %v265 = vunpack.c.l.bf16 %v233
      %v266 = vunpack.c.l.bf16 %v234
      %v267 = vunpack.c.l.bf16 %v235
      %v268 = vunpack.c.l.bf16 %v236
      %v269 = vunpack.c.l.bf16 %v237
      %v270 = vunpack.c.l.bf16 %v238
      %v271 = vunpack.c.l.bf16 %v239
      %v272 = vunpack.c.l.bf16 %v240
      %v273 = vunpack.c.l.bf16 %v241
      %v274 = vunpack.c.l.bf16 %v242
      %v275 = vunpack.c.l.bf16 %v243
      %v276 = vunpack.c.l.bf16 %v244
      %v277 = vunpack.c.l.bf16 %v245
      %v278 = vunpack.c.l.bf16 %v246
      %v279 = vunpack.c.l.bf16 %v247
      %v280 = vunpack.c.l.bf16 %v248
      %v281 = vunpack.c.l.bf16 %v249
      %v282 = vld [vmem:[%s1] sm:$0x1]
      %v284 = vlaneseq
      %v285 = vshrl.u32 %v284, 7
      %v286 = vsub.s32 0, %v285
      %v287 = vrot.slane %v282, %v286
      %v289 = vmul.f32 %v250, %v287
      %v290 = vmul.f32 %v251, %v287
      %v291 = vmul.f32 %v252, %v287
      %v292 = vmul.f32 %v253, %v287
      %v293 = vmul.f32 %v254, %v287
      %v294 = vmul.f32 %v255, %v287
      %v295 = vmul.f32 %v256, %v287
      %v296 = vmul.f32 %v257, %v287
      %v297 = vmul.f32 %v258, %v287
      %v298 = vmul.f32 %v259, %v287
      %v299 = vmul.f32 %v260, %v287
      %v300 = vmul.f32 %v261, %v287
      %v301 = vmul.f32 %v262, %v287
      %v302 = vmul.f32 %v263, %v287
      %v303 = vmul.f32 %v264, %v287
      %v304 = vmul.f32 %v265, %v287
      %v305 = vmul.f32 %v266, %v287
      %v306 = vmul.f32 %v267, %v287
      %v307 = vmul.f32 %v268, %v287
      %v308 = vmul.f32 %v269, %v287
      %v309 = vmul.f32 %v270, %v287
      %v310 = vmul.f32 %v271, %v287
      %v311 = vmul.f32 %v272, %v287
      %v312 = vmul.f32 %v273, %v287
      %v313 = vmul.f32 %v274, %v287
      %v314 = vmul.f32 %v275, %v287
      %v315 = vmul.f32 %v276, %v287
      %v316 = vmul.f32 %v277, %v287
      %v317 = vmul.f32 %v278, %v287
      %v318 = vmul.f32 %v279, %v287
      %v319 = vmul.f32 %v280, %v287
      %v320 = vmul.f32 %v281, %v287
      %v321 = vld [vmem:[%s2] sm:$0x1]
      %v323 = vlaneseq
      %v324 = vshrl.u32 %v323, 7
      %v325 = vsub.s32 0, %v324
      %v326 = vrot.slane %v321, %v325
      %v328 = vadd.f32 %v289, %v326
      %v329 = vadd.f32 %v290, %v326
      %v330 = vadd.f32 %v291, %v326
      %v331 = vadd.f32 %v292, %v326
      %v332 = vadd.f32 %v293, %v326
      %v333 = vadd.f32 %v294, %v326
      %v334 = vadd.f32 %v295, %v326
      %v335 = vadd.f32 %v296, %v326
      %v336 = vadd.f32 %v297, %v326
      %v337 = vadd.f32 %v298, %v326
      %v338 = vadd.f32 %v299, %v326
      %v339 = vadd.f32 %v300, %v326
      %v340 = vadd.f32 %v301, %v326
      %v341 = vadd.f32 %v302, %v326
      %v342 = vadd.f32 %v303, %v326
      %v343 = vadd.f32 %v304, %v326
      %v344 = vadd.f32 %v305, %v326
      %v345 = vadd.f32 %v306, %v326
      %v346 = vadd.f32 %v307, %v326
      %v347 = vadd.f32 %v308, %v326
      %v348 = vadd.f32 %v309, %v326
      %v349 = vadd.f32 %v310, %v326
      %v350 = vadd.f32 %v311, %v326
      %v351 = vadd.f32 %v312, %v326
      %v352 = vadd.f32 %v313, %v326
      %v353 = vadd.f32 %v314, %v326
      %v354 = vadd.f32 %v315, %v326
      %v355 = vadd.f32 %v316, %v326
      %v356 = vadd.f32 %v317, %v326
      %v357 = vadd.f32 %v318, %v326
      %v358 = vadd.f32 %v319, %v326
      %v359 = vadd.f32 %v320, %v326
      %v360 = vld [vmem:[%s212] sm:$0xff]
      %v361 = vld [vmem:[%s212 + $0x8] sm:$0xff]
      %v362 = vld [vmem:[%s212 + $0x10] sm:$0xff]
      %v363 = vld [vmem:[%s212 + $0x18] sm:$0xff]
      %v364 = vld [vmem:[%s212 + $0x20] sm:$0xff]
      %v365 = vld [vmem:[%s212 + $0x28] sm:$0xff]
      %v366 = vld [vmem:[%s212 + $0x30] sm:$0xff]
      %v367 = vld [vmem:[%s212 + $0x38] sm:$0xff]
      %v368 = vld [vmem:[%s212 + $0x40] sm:$0xff]
      %v369 = vld [vmem:[%s212 + $0x48] sm:$0xff]
      %v370 = vld [vmem:[%s212 + $0x50] sm:$0xff]
      %v371 = vld [vmem:[%s212 + $0x58] sm:$0xff]
      %v372 = vld [vmem:[%s212 + $0x60] sm:$0xff]
      %v373 = vld [vmem:[%s212 + $0x68] sm:$0xff]
      %v374 = vld [vmem:[%s212 + $0x70] sm:$0xff]
      %v375 = vld [vmem:[%s212 + $0x78] sm:$0xff]
      %v376 = vld [vmem:[%s212 + $0x80] sm:$0xff]
      %v377 = vld [vmem:[%s212 + $0x88] sm:$0xff]
      %v378 = vld [vmem:[%s212 + $0x90] sm:$0xff]
      %v379 = vld [vmem:[%s212 + $0x98] sm:$0xff]
      %v380 = vld [vmem:[%s212 + $0xa0] sm:$0xff]
      %v381 = vld [vmem:[%s212 + $0xa8] sm:$0xff]
      %v382 = vld [vmem:[%s212 + $0xb0] sm:$0xff]
      %v383 = vld [vmem:[%s212 + $0xb8] sm:$0xff]
      %v384 = vld [vmem:[%s212 + $0xc0] sm:$0xff]
      %v385 = vld [vmem:[%s212 + $0xc8] sm:$0xff]
      %v386 = vld [vmem:[%s212 + $0xd0] sm:$0xff]
      %v387 = vld [vmem:[%s212 + $0xd8] sm:$0xff]
      %v388 = vld [vmem:[%s212 + $0xe0] sm:$0xff]
      %v389 = vld [vmem:[%s212 + $0xe8] sm:$0xff]
      %v390 = vld [vmem:[%s212 + $0xf0] sm:$0xff]
      %v391 = vld [vmem:[%s212 + $0xf8] sm:$0xff]
      %v392 = vadd.f32 %v328, %v360
      %v393 = vadd.f32 %v329, %v361
      %v394 = vadd.f32 %v330, %v362
      %v395 = vadd.f32 %v331, %v363
      %v396 = vadd.f32 %v332, %v364
      %v397 = vadd.f32 %v333, %v365
      %v398 = vadd.f32 %v334, %v366
      %v399 = vadd.f32 %v335, %v367
      %v400 = vadd.f32 %v336, %v368
      %v401 = vadd.f32 %v337, %v369
      %v402 = vadd.f32 %v338, %v370
      %v403 = vadd.f32 %v339, %v371
      %v404 = vadd.f32 %v340, %v372
      %v405 = vadd.f32 %v341, %v373
      %v406 = vadd.f32 %v342, %v374
      %v407 = vadd.f32 %v343, %v375
      %v408 = vadd.f32 %v344, %v376
      %v409 = vadd.f32 %v345, %v377
      %v410 = vadd.f32 %v346, %v378
      %v411 = vadd.f32 %v347, %v379
      %v412 = vadd.f32 %v348, %v380
      %v413 = vadd.f32 %v349, %v381
      %v414 = vadd.f32 %v350, %v382
      %v415 = vadd.f32 %v351, %v383
      %v416 = vadd.f32 %v352, %v384
      %v417 = vadd.f32 %v353, %v385
      %v418 = vadd.f32 %v354, %v386
      %v419 = vadd.f32 %v355, %v387
      %v420 = vadd.f32 %v356, %v388
      %v421 = vadd.f32 %v357, %v389
      %v422 = vadd.f32 %v358, %v390
      %v423 = vadd.f32 %v359, %v391
      %v424 = vmax.f32 %v392, 0.0
      %v425 = vmax.f32 %v393, 0.0
      %v426 = vmax.f32 %v394, 0.0
      %v427 = vmax.f32 %v395, 0.0
      %v428 = vmax.f32 %v396, 0.0
      %v429 = vmax.f32 %v397, 0.0
      %v430 = vmax.f32 %v398, 0.0
      %v431 = vmax.f32 %v399, 0.0
      %v432 = vmax.f32 %v400, 0.0
      %v433 = vmax.f32 %v401, 0.0
      %v434 = vmax.f32 %v402, 0.0
      %v435 = vmax.f32 %v403, 0.0
      %v436 = vmax.f32 %v404, 0.0
      %v437 = vmax.f32 %v405, 0.0
      %v438 = vmax.f32 %v406, 0.0
      %v439 = vmax.f32 %v407, 0.0
      %v440 = vmax.f32 %v408, 0.0
      %v441 = vmax.f32 %v409, 0.0
      %v442 = vmax.f32 %v410, 0.0
      %v443 = vmax.f32 %v411, 0.0
      %v444 = vmax.f32 %v412, 0.0
      %v445 = vmax.f32 %v413, 0.0
      %v446 = vmax.f32 %v414, 0.0
      %v447 = vmax.f32 %v415, 0.0
      %v448 = vmax.f32 %v416, 0.0
      %v449 = vmax.f32 %v417, 0.0
      %v450 = vmax.f32 %v418, 0.0
      %v451 = vmax.f32 %v419, 0.0
      %v452 = vmax.f32 %v420, 0.0
      %v453 = vmax.f32 %v421, 0.0
      %v454 = vmax.f32 %v422, 0.0
      %v455 = vmax.f32 %v423, 0.0
      %456 = vst [vmem:[%s217] sm:$0xff] %v424
      %457 = vst [vmem:[%s217 + $0x8] sm:$0xff] %v425
      %458 = vst [vmem:[%s217 + $0x10] sm:$0xff] %v426
      %459 = vst [vmem:[%s217 + $0x18] sm:$0xff] %v427
      %460 = vst [vmem:[%s217 + $0x20] sm:$0xff] %v428
      %461 = vst [vmem:[%s217 + $0x28] sm:$0xff] %v429
      %462 = vst [vmem:[%s217 + $0x30] sm:$0xff] %v430
      %463 = vst [vmem:[%s217 + $0x38] sm:$0xff] %v431
      %464 = vst [vmem:[%s217 + $0x40] sm:$0xff] %v432
      %465 = vst [vmem:[%s217 + $0x48] sm:$0xff] %v433
      %466 = vst [vmem:[%s217 + $0x50] sm:$0xff] %v434
      %467 = vst [vmem:[%s217 + $0x58] sm:$0xff] %v435
      %468 = vst [vmem:[%s217 + $0x60] sm:$0xff] %v436
      %469 = vst [vmem:[%s217 + $0x68] sm:$0xff] %v437
      %470 = vst [vmem:[%s217 + $0x70] sm:$0xff] %v438
      %471 = vst [vmem:[%s217 + $0x78] sm:$0xff] %v439
      %472 = vst [vmem:[%s217 + $0x80] sm:$0xff] %v440
      %473 = vst [vmem:[%s217 + $0x88] sm:$0xff] %v441
      %474 = vst [vmem:[%s217 + $0x90] sm:$0xff] %v442
      %475 = vst [vmem:[%s217 + $0x98] sm:$0xff] %v443
      %476 = vst [vmem:[%s217 + $0xa0] sm:$0xff] %v444
      %477 = vst [vmem:[%s217 + $0xa8] sm:$0xff] %v445
      %478 = vst [vmem:[%s217 + $0xb0] sm:$0xff] %v446
      %479 = vst [vmem:[%s217 + $0xb8] sm:$0xff] %v447
      %480 = vst [vmem:[%s217 + $0xc0] sm:$0xff] %v448
      %481 = vst [vmem:[%s217 + $0xc8] sm:$0xff] %v449
      %482 = vst [vmem:[%s217 + $0xd0] sm:$0xff] %v450
      %483 = vst [vmem:[%s217 + $0xd8] sm:$0xff] %v451
      %484 = vst [vmem:[%s217 + $0xe0] sm:$0xff] %v452
      %485 = vst [vmem:[%s217 + $0xe8] sm:$0xff] %v453
      %486 = vst [vmem:[%s217 + $0xf0] sm:$0xff] %v454
      %487 = vst [vmem:[%s217 + $0xf8] sm:$0xff] %v455
      %p488 = scmp.lt.s32.totalorder %s15, 1
      %s489 = scalar_select %p488, %s15, 1
      %s490 = smul.addr %s489, 32
      %s491 = smul.addr %s490, 8
      %s492 = scalar_lea.vmem %s4, %s491
      // Predicated region
      $region37: #{basicblock_forward.5} parent=35 // pred_check
        %p493 = pneg %p127
      $region38: #{basicblock_forward.5} parent=35 // pred_check_branch
        %495 = sbr.rel (%p493) target = $region40
      $region39: #{basicblock_forward.5} parent=35 // pred_region
        _
      $region40: #{basicblock_forward.5} parent=35 // pred_fallthru
        _
    $region36: #{basicblock_forward.5} parent=5 // pred_fallthru
      _
    %p496 = scmp.le.s32.totalorder 2, %s10
    // Predicated region
    $region41: #{basicblock_forward.5} parent=5 // pred_check
      %p497 = pneg %p496
    $region42: #{basicblock_forward.5} parent=5 // pred_check_branch
      %499 = sbr.rel (%p497) target = $region44
    $region43: #{basicblock_forward.5} parent=5 // pred_region
      %s500 = ssub.s32 %s10, 2
      // Predicated region
      $region45: #{basicblock_forward.5} parent=43 // pred_check
        %p501 = pneg %p133
      $region46: #{basicblock_forward.5} parent=43 // pred_check_branch
        %503 = sbr.rel (%p501) target = $region48
      $region47: #{basicblock_forward.5} parent=43 // pred_region
        %p504 = scmp.lt.s32.totalorder %s16, 1
        %s505 = scalar_select %p504, %s16, 1
        %s506 = smul.addr %s505, 32
        %s507 = smul.addr %s506, 8
        %s508 = scalar_lea.vmem %s4, %s507
      $region48: #{basicblock_forward.5} parent=43 // pred_fallthru
        _
    $region44: #{basicblock_forward.5} parent=5 // pred_fallthru
      _
  $region6: #{basicblock_forward.5} parent=0 // loop_footer
    %s14 = sadd.s32 1, %s10
  $region7: #{basicblock_forward.5} parent=0 // loop_footer_branch
    %9 = sbr.rel target = $region3
  $region8: #{basicblock_forward.5} parent=0 // loop_exit
    _

// kernel: basicblock_forward.4
$region0: #{basicblock_forward.4}
  #allocation0 [shape = 'u32[]', space=smem, size = 0x4, offset = 0x4, fixed_abs, tag = 'smem constant byte address 0x4 - core index']
  #allocation1 [shape = 'u32[144,128]{1,0:T(1,128)}', space=vmem, size = 0x12000, scoped, tag = 'internal scratch']
  #allocation2 [shape = 'bf16[16,32,128]{2,1,0:T(8,128)(2,1)}', space=vmem, size = 0x20000, scoped, tag = 'scratch operand']
  #allocation3 [shape = 'bf16[288,384]{1,0:T(8,128)(2,1)}', space=vmem, size = 0x36000, scoped, tag = 'scratch operand']
  %s0 = inlined_call_operand.vmem [shape: bf16[2,256,128], index: 0, kind: input, shape index: {}]
  %s1 = inlined_call_operand.vmem [shape: f32[1,128], index: 1, kind: input, shape index: {}]
  %s2 = inlined_call_operand.vmem [shape: f32[1,128], index: 2, kind: input, shape index: {}]
  %s3 = inlined_call_operand.vmem [shape: bf16[3,384,128], index: 3, kind: input, shape index: {}]
  %s4 = inlined_call_operand.vmem [shape: bf16[2,256,128], index: 4, kind: output, shape index: {0}]
  %s5 = inlined_call_operand.vmem [shape: f32[2,2,128], index: 5, kind: output, shape index: {1}]
  %6 = xla_tuple %s4, %s5
  %s7 = sld [smem:[#allocation0]]
  $region57: #{basicblock_forward.4} parent=0
    _
  %s9 = ssub.s32 1, %s7
  %s10 = scalar_select 0, %s9, %s7
  loop: start=0, step=1, limit=4
  $region2: #{basicblock_forward.4} parent=0 // loop_pre_header
    _
  $region3: #{basicblock_forward.4} parent=0 // loop_header
    %s12 = sphi 0, %s16
    %p13 = scmp.ge.s32.totalorder %s12, 4
    %s22 = sphi 0, %s24
    %s25 = sphi 0, %s22
    %s26 = sphi 0, %s25
    %s42 = sphi 0, %s26
    %s46 = sphi 0, %s46
    %s48 = sphi 0, %s46
    %s49 = sphi 0, %s48
    %s63 = sphi 0, %s49
    %s67 = sphi 0, %s67
    %s69 = sphi 0, %s67
    %s70 = sphi 0, %s69
    %s84 = sphi 0, %s70
    %s88 = sphi 0, %s88
    %s90 = sphi 0, %s88
    %s91 = sphi 0, %s90
    %s105 = sphi 0, %s91
    %s111 = sphi 0, %s113
    %s114 = sphi 0, %s111
    %s115 = sphi 0, %s114
    %s131 = sphi 0, %s115
    %s137 = sphi 0, %s139
    %s140 = sphi 0, %s137
    %s141 = sphi 0, %s140
    %s157 = sphi 0, %s141
  $region4: #{basicblock_forward.4} parent=0 // loop_header_branch
    %15 = sbr.rel (%p13) target = $region8
  $region5: #{basicblock_forward.4} parent=0 // loop_body
    %s17 = ssub.s32 %s12, 1
    %s18 = ssub.s32 %s12, 2
    %s19 = sadd.s32 %s12, 1
    %s20 = ssub.s32 %s12, %s19
    %p21 = scmp.eq.s32.totalorder %s20, 0
    %s23 = sadd.s32 %s22, 1
    %s24 = scalar_select %p21, %s22, %s23
    %p27 = pneg %p21
    %p28 = scmp.eq.s32.totalorder %s12, 1
    %p29 = por %p27, %p28
    %p30 = scmp.ne.s32.totalorder %s22, %s25
    %p31 = scmp.eq.s32.totalorder %s12, 0
    %p32 = por %p30, %p31
    %p33 = scmp.ne.s32.totalorder %s22, %s25
    %p34 = scmp.eq.s32.totalorder %s17, 1
    %p35 = por %p33, %p34
    %p36 = scmp.ne.s32.totalorder %s25, %s26
    %p37 = scmp.eq.s32.totalorder %s17, 0
    %p38 = por %p36, %p37
    %p39 = scmp.ne.s32.totalorder %s25, %s26
    %p40 = scmp.eq.s32.totalorder %s18, 1
    %p41 = por %p39, %p40
    %p43 = scmp.ne.s32.totalorder %s26, %s42
    %p44 = scmp.eq.s32.totalorder %s18, 0
    %p45 = por %p43, %p44
    %s47 = sadd.s32 %s46, 1
    %p50 = scmp.eq.s32.totalorder %s12, 1
    %p51 = scmp.ne.s32.totalorder %s46, %s48
    %p52 = scmp.eq.s32.totalorder %s12, 0
    %p53 = por %p51, %p52
    %p54 = scmp.ne.s32.totalorder %s46, %s48
    %p55 = scmp.eq.s32.totalorder %s17, 1
    %p56 = por %p54, %p55
    %p57 = scmp.ne.s32.totalorder %s48, %s49
    %p58 = scmp.eq.s32.totalorder %s17, 0
    %p59 = por %p57, %p58
    %p60 = scmp.ne.s32.totalorder %s48, %s49
    %p61 = scmp.eq.s32.totalorder %s18, 1
    %p62 = por %p60, %p61
    %p64 = scmp.ne.s32.totalorder %s49, %s63
    %p65 = scmp.eq.s32.totalorder %s18, 0
    %p66 = por %p64, %p65
    %s68 = sadd.s32 %s67, 1
    %p71 = scmp.eq.s32.totalorder %s12, 1
    %p72 = scmp.ne.s32.totalorder %s67, %s69
    %p73 = scmp.eq.s32.totalorder %s12, 0
    %p74 = por %p72, %p73
    %p75 = scmp.ne.s32.totalorder %s67, %s69
    %p76 = scmp.eq.s32.totalorder %s17, 1
    %p77 = por %p75, %p76
    %p78 = scmp.ne.s32.totalorder %s69, %s70
    %p79 = scmp.eq.s32.totalorder %s17, 0
    %p80 = por %p78, %p79
    %p81 = scmp.ne.s32.totalorder %s69, %s70
    %p82 = scmp.eq.s32.totalorder %s18, 1
    %p83 = por %p81, %p82
    %p85 = scmp.ne.s32.totalorder %s70, %s84
    %p86 = scmp.eq.s32.totalorder %s18, 0
    %p87 = por %p85, %p86
    %s89 = sadd.s32 %s88, 1
    %p92 = scmp.eq.s32.totalorder %s12, 1
    %p93 = scmp.ne.s32.totalorder %s88, %s90
    %p94 = scmp.eq.s32.totalorder %s12, 0
    %p95 = por %p93, %p94
    %p96 = scmp.ne.s32.totalorder %s88, %s90
    %p97 = scmp.eq.s32.totalorder %s17, 1
    %p98 = por %p96, %p97
    %p99 = scmp.ne.s32.totalorder %s90, %s91
    %p100 = scmp.eq.s32.totalorder %s17, 0
    %p101 = por %p99, %p100
    %p102 = scmp.ne.s32.totalorder %s90, %s91
    %p103 = scmp.eq.s32.totalorder %s18, 1
    %p104 = por %p102, %p103
    %p106 = scmp.ne.s32.totalorder %s91, %s105
    %p107 = scmp.eq.s32.totalorder %s18, 0
    %p108 = por %p106, %p107
    %s109 = ssub.s32 %s12, %s19
    %p110 = scmp.eq.s32.totalorder %s109, 0
    %s112 = sadd.s32 %s111, 1
    %s113 = scalar_select %p110, %s111, %s112
    %p116 = pneg %p110
    %p117 = scmp.eq.s32.totalorder %s12, 1
    %p118 = por %p116, %p117
    %p119 = scmp.ne.s32.totalorder %s111, %s114
    %p120 = scmp.eq.s32.totalorder %s12, 0
    %p121 = por %p119, %p120
    %p122 = scmp.ne.s32.totalorder %s111, %s114
    %p123 = scmp.eq.s32.totalorder %s17, 1
    %p124 = por %p122, %p123
    %p125 = scmp.ne.s32.totalorder %s114, %s115
    %p126 = scmp.eq.s32.totalorder %s17, 0
    %p127 = por %p125, %p126
    %p128 = scmp.ne.s32.totalorder %s114, %s115
    %p129 = scmp.eq.s32.totalorder %s18, 1
    %p130 = por %p128, %p129
    %p132 = scmp.ne.s32.totalorder %s115, %s131
    %p133 = scmp.eq.s32.totalorder %s18, 0
    %p134 = por %p132, %p133
    %s135 = ssub.s32 %s12, %s19
    %p136 = scmp.eq.s32.totalorder %s135, 0
    %s138 = sadd.s32 %s137, 1
    %s139 = scalar_select %p136, %s137, %s138
    %p142 = pneg %p136
    %p143 = scmp.eq.s32.totalorder %s12, 1
    %p144 = por %p142, %p143
    %p145 = scmp.ne.s32.totalorder %s137, %s140
    %p146 = scmp.eq.s32.totalorder %s12, 0
    %p147 = por %p145, %p146
    %p148 = scmp.ne.s32.totalorder %s137, %s140
    %p149 = scmp.eq.s32.totalorder %s17, 1
    %p150 = por %p148, %p149
    %p151 = scmp.ne.s32.totalorder %s140, %s141
    %p152 = scmp.eq.s32.totalorder %s17, 0
    %p153 = por %p151, %p152
    %p154 = scmp.ne.s32.totalorder %s140, %s141
    %p155 = scmp.eq.s32.totalorder %s18, 1
    %p156 = por %p154, %p155
    %p158 = scmp.ne.s32.totalorder %s141, %s157
    %p159 = scmp.eq.s32.totalorder %s18, 0
    %p160 = por %p158, %p159
    %p161 = scmp.le.s32.totalorder 1, %s12
    %p162 = scmp.lt.s32.totalorder %s12, 3
    %p163 = pnand %p161, %p162
    %p164 = pneg %p163
    // Predicated region
    $region9: #{basicblock_forward.4} parent=5 // pred_check
      _
    $region10: #{basicblock_forward.4} parent=5 // pred_check_branch
      %166 = sbr.rel (%p163) target = $region12
    $region11: #{basicblock_forward.4} parent=5 // pred_region
      %s167 = ssub.s32 %s12, 1
      // Predicated region
      $region13: #{basicblock_forward.4} parent=11 // pred_check
        %p168 = pneg %p59
      $region14: #{basicblock_forward.4} parent=11 // pred_check_branch
        %170 = sbr.rel (%p168) target = $region16
      $region15: #{basicblock_forward.4} parent=11 // pred_region
        _
      $region16: #{basicblock_forward.4} parent=11 // pred_fallthru
        _
      // Predicated region
      $region17: #{basicblock_forward.4} parent=11 // pred_check
        %p171 = pneg %p80
      $region18: #{basicblock_forward.4} parent=11 // pred_check_branch
        %173 = sbr.rel (%p171) target = $region20
      $region19: #{basicblock_forward.4} parent=11 // pred_region
        _
      $region20: #{basicblock_forward.4} parent=11 // pred_fallthru
        _
      // Predicated region
      $region21: #{basicblock_forward.4} parent=11 // pred_check
        %p174 = pneg %p101
      $region22: #{basicblock_forward.4} parent=11 // pred_check_branch
        %176 = sbr.rel (%p174) target = $region24
      $region23: #{basicblock_forward.4} parent=11 // pred_region
        _
      $region24: #{basicblock_forward.4} parent=11 // pred_fallthru
        _
    $region12: #{basicblock_forward.4} parent=5 // pred_fallthru
      _
    %p177 = scmp.lt.s32.totalorder %s12, 2
    // Predicated region
    $region25: #{basicblock_forward.4} parent=5 // pred_check
      %p178 = pneg %p177
    $region26: #{basicblock_forward.4} parent=5 // pred_check_branch
      %180 = sbr.rel (%p178) target = $region28
    $region27: #{basicblock_forward.4} parent=5 // pred_region
      // Predicated region
      $region29: #{basicblock_forward.4} parent=27 // pred_check
        %p181 = pneg %p32
      $region30: #{basicblock_forward.4} parent=27 // pred_check_branch
        %183 = sbr.rel (%p181) target = $region32
      $region31: #{basicblock_forward.4} parent=27 // pred_region
        %p184 = scmp.lt.s32.totalorder %s12, 1
        %s185 = scalar_select %p184, %s12, 1
        %s186 = smul.addr %s185, 32
        %s187 = smul.addr %s186, 4
        %s188 = scalar_lea.vmem %s0, %s187
      $region32: #{basicblock_forward.4} parent=27 // pred_fallthru
        _
    $region28: #{basicblock_forward.4} parent=5 // pred_fallthru
      _
    %p189 = scmp.le.s32.totalorder 1, %s12
    %p190 = scmp.lt.s32.totalorder %s12, 3
    %p191 = pnand %p189, %p190
    %p192 = pneg %p191
    // Predicated region
    $region33: #{basicblock_forward.4} parent=5 // pred_check
      _
    $region34: #{basicblock_forward.4} parent=5 // pred_check_branch
      %194 = sbr.rel (%p191) target = $region36
    $region35: #{basicblock_forward.4} parent=5 // pred_region
      %s195 = ssub.s32 %s12, 1
      %p196 = scmp.lt.s32.totalorder %s17, 1
      %s197 = scalar_select %p196, %s17, 1
      %s198 = smul.addr %s197, 32
      %s199 = smul.addr %s198, 4
      %s200 = scalar_lea.vmem %s0, %s199
      %p201 = pneg %p38
      %p202 = pneg %p35
      %p203 = pneg %p59
      %p204 = pneg %p56
      %p205 = pneg %p80
      %p206 = pneg %p77
      %p207 = pneg %p101
      %p208 = pneg %p98
      %p209 = pneg %p127
      %p210 = pneg %p124
      %p211 = scmp.lt.s32.totalorder %s17, 1
      %s212 = scalar_select %p211, %s17, 1
      %s213 = smul.addr %s212, 32
      %s214 = smul.addr %s213, 4
      %s215 = scalar_lea.vmem %s4, %s214
      %p216 = pneg %p153
      %p217 = pneg %p150
      %p218 = scmp.lt.s32.totalorder %s17, 1
      %s219 = scalar_select %p218, %s17, 1
      %s220 = smul.addr %s219, 2
      %s221 = scalar_lea.vmem %s5, %s220
      %p222 = scmp.lt.s32.totalorder %s17, 1
      %s223 = scalar_select %p222, %s17, 1
      %s224 = smul.addr %s223, 32
      %s225 = smul.addr %s224, 4
      %s226 = scalar_lea.vmem %s0, %s225
      %p227 = scmp.lt.s32.totalorder %s17, 1
      %s228 = scalar_select %p227, %s17, 1
      %s229 = smul.addr %s228, 32
      %s230 = smul.addr %s229, 4
      %s231 = scalar_lea.vmem %s4, %s230
      %p232 = scmp.lt.s32.totalorder %s17, 1
      %s233 = scalar_select %p232, %s17, 1
      %s234 = smul.addr %s233, 2
      %s235 = scalar_lea.vmem %s5, %s234
      %vm237 = vcmask 1043459
      %vm238 = vsmask.f32 7950
      %vm239 = vmand %vm237, %vm238
      %v240 = vld [vmem:[#allocation2] sm:$0x8]
      %v241 = vsel %vm239, 0, %v240
      %242 = vst [vmem:[#allocation2] sm:$0x8] %v241
      %v243 = vld [vmem:[#allocation2 + $0x10] sm:$0x8]
      %v244 = vsel %vm239, 0, %v243
      %245 = vst [vmem:[#allocation2 + $0x10] sm:$0x8] %v244
      %v246 = vld [vmem:[#allocation2 + $0x20] sm:$0x8]
      %v247 = vsel %vm239, 0, %v246
      %248 = vst [vmem:[#allocation2 + $0x20] sm:$0x8] %v247
      %v249 = vld [vmem:[#allocation2 + $0x30] sm:$0x8]
      %v250 = vsel %vm239, 0, %v249
      %251 = vst [vmem:[#allocation2 + $0x30] sm:$0x8] %v250
      %v252 = vld [vmem:[#allocation2 + $0x40] sm:$0x8]
      %v253 = vsel %vm239, 0, %v252
      %254 = vst [vmem:[#allocation2 + $0x40] sm:$0x8] %v253
      %v255 = vld [vmem:[#allocation2 + $0x50] sm:$0x8]
      %v256 = vsel %vm239, 0, %v255
      %257 = vst [vmem:[#allocation2 + $0x50] sm:$0x8] %v256
      %v258 = vld [vmem:[#allocation2 + $0x60] sm:$0x8]
      %v259 = vsel %vm239, 0, %v258
      %260 = vst [vmem:[#allocation2 + $0x60] sm:$0x8] %v259
      %v261 = vld [vmem:[#allocation2 + $0x70] sm:$0x8]
      %v262 = vsel %vm239, 0, %v261
      %263 = vst [vmem:[#allocation2 + $0x70] sm:$0x8] %v262
      %v264 = vld [vmem:[#allocation2 + $0x80] sm:$0x8]
      %v265 = vsel %vm239, 0, %v264
      %266 = vst [vmem:[#allocation2 + $0x80] sm:$0x8] %v265
      %v267 = vld [vmem:[#allocation2 + $0x90] sm:$0x8]
      %v268 = vsel %vm239, 0, %v267
      %269 = vst [vmem:[#allocation2 + $0x90] sm:$0x8] %v268
      %v270 = vld [vmem:[#allocation2 + $0xa0] sm:$0x8]
      %v271 = vsel %vm239, 0, %v270
      %272 = vst [vmem:[#allocation2 + $0xa0] sm:$0x8] %v271
      %v273 = vld [vmem:[#allocation2 + $0xb0] sm:$0x8]
      %v274 = vsel %vm239, 0, %v273
      %275 = vst [vmem:[#allocation2 + $0xb0] sm:$0x8] %v274
      %v276 = vld [vmem:[#allocation2 + $0xc0] sm:$0x8]
      %v277 = vsel %vm239, 0, %v276
      %278 = vst [vmem:[#allocation2 + $0xc0] sm:$0x8] %v277
      %v279 = vld [vmem:[#allocation2 + $0xd0] sm:$0x8]
      %v280 = vsel %vm239, 0, %v279
      %281 = vst [vmem:[#allocation2 + $0xd0] sm:$0x8] %v280
      %v282 = vld [vmem:[#allocation2 + $0xe0] sm:$0x8]
      %v283 = vsel %vm239, 0, %v282
      %284 = vst [vmem:[#allocation2 + $0xe0] sm:$0x8] %v283
      %v285 = vld [vmem:[#allocation2 + $0xf0] sm:$0x8]
      %v286 = vsel %vm239, 0, %v285
      %287 = vst [vmem:[#allocation2 + $0xf0] sm:$0x8] %v286
      %vm288 = vcmask 1040384
      %vm289 = vsmask.f32 256
      %vm290 = vmand %vm288, %vm289
      %v291 = vld [vmem:[#allocation2 + $0xc] sm:$0x1]
      %v292 = vsel %vm290, 0, %v291
      %293 = vst [vmem:[#allocation2 + $0xc] sm:$0x1] %v292
      %v294 = vld [vmem:[#allocation2 + $0x1c] sm:$0x1]
      %v295 = vsel %vm290, 0, %v294
      %296 = vst [vmem:[#allocation2 + $0x1c] sm:$0x1] %v295
      %v297 = vld [vmem:[#allocation2 + $0x2c] sm:$0x1]
      %v298 = vsel %vm290, 0, %v297
      %299 = vst [vmem:[#allocation2 + $0x2c] sm:$0x1] %v298
      %v300 = vld [vmem:[#allocation2 + $0x3c] sm:$0x1]
      %v301 = vsel %vm290, 0, %v300
      %302 = vst [vmem:[#allocation2 + $0x3c] sm:$0x1] %v301
      %v303 = vld [vmem:[#allocation2 + $0x4c] sm:$0x1]
      %v304 = vsel %vm290, 0, %v303
      %305 = vst [vmem:[#allocation2 + $0x4c] sm:$0x1] %v304
      %v306 = vld [vmem:[#allocation2 + $0x5c] sm:$0x1]
      %v307 = vsel %vm290, 0, %v306
      %308 = vst [vmem:[#allocation2 + $0x5c] sm:$0x1] %v307
      %v309 = vld [vmem:[#allocation2 + $0x6c] sm:$0x1]
      %v310 = vsel %vm290, 0, %v309
      %311 = vst [vmem:[#allocation2 + $0x6c] sm:$0x1] %v310
      %v312 = vld [vmem:[#allocation2 + $0x7c] sm:$0x1]
      %v313 = vsel %vm290, 0, %v312
      %314 = vst [vmem:[#allocation2 + $0x7c] sm:$0x1] %v313
      %v315 = vld [vmem:[#allocation2 + $0x8c] sm:$0x1]
      %v316 = vsel %vm290, 0, %v315
      %317 = vst [vmem:[#allocation2 + $0x8c] sm:$0x1] %v316
      %v318 = vld [vmem:[#allocation2 + $0x9c] sm:$0x1]
      %v319 = vsel %vm290, 0, %v318
      %320 = vst [vmem:[#allocation2 + $0x9c] sm:$0x1] %v319
      %v321 = vld [vmem:[#allocation2 + $0xac] sm:$0x1]
      %v322 = vsel %vm290, 0, %v321
      %323 = vst [vmem:[#allocation2 + $0xac] sm:$0x1] %v322
      %v324 = vld [vmem:[#allocation2 + $0xbc] sm:$0x1]
      %v325 = vsel %vm290, 0, %v324
      %326 = vst [vmem:[#allocation2 + $0xbc] sm:$0x1] %v325
      %v327 = vld [vmem:[#allocation2 + $0xcc] sm:$0x1]
      %v328 = vsel %vm290, 0, %v327
      %329 = vst [vmem:[#allocation2 + $0xcc] sm:$0x1] %v328
      %v330 = vld [vmem:[#allocation2 + $0xdc] sm:$0x1]
      %v331 = vsel %vm290, 0, %v330
      %332 = vst [vmem:[#allocation2 + $0xdc] sm:$0x1] %v331
      %v333 = vld [vmem:[#allocation2 + $0xec] sm:$0x1]
      %v334 = vsel %vm290, 0, %v333
      %335 = vst [vmem:[#allocation2 + $0xec] sm:$0x1] %v334
      %v336 = vld [vmem:[#allocation2 + $0xfc] sm:$0x1]
      %v337 = vsel %vm290, 0, %v336
      %338 = vst [vmem:[#allocation2 + $0xfc] sm:$0x1] %v337
      %339 = vst [vmem:[#allocation3] sm:$0xff] 0
      %340 = vst [vmem:[#allocation3 + $0x8] sm:$0xf] 0
      %341 = vst [vmem:[#allocation3 + $0xc] sm:$0xff] 0
      %342 = vst [vmem:[#allocation3 + $0x14] sm:$0xf] 0
      %343 = vst [vmem:[#allocation3 + $0x198] sm:$0xff] 0
      %344 = vst [vmem:[#allocation3 + $0x1a0] sm:$0xf] 0
      %345 = vst [vmem:[#allocation3 + $0x1a4] sm:$0xff] 0
      %346 = vst [vmem:[#allocation3 + $0x1ac] sm:$0xf] 0
      %v347 = vld [vmem:[%s226] sm:$0xf]
      %v348 = vld [vmem:[%s226 + $0x4] sm:$0xf]
      %v349 = vld [vmem:[%s226 + $0x8] sm:$0xf]
      %v350 = vld [vmem:[%s226 + $0xc] sm:$0xf]
      %v351 = vld [vmem:[%s226 + $0x10] sm:$0xf]
      %v352 = vld [vmem:[%s226 + $0x14] sm:$0xf]
      %v353 = vld [vmem:[%s226 + $0x18] sm:$0xf]
      %v354 = vld [vmem:[%s226 + $0x1c] sm:$0xf]
      %v355 = vld [vmem:[%s226 + $0x20] sm:$0xf]
      %v356 = vld [vmem:[%s226 + $0x24] sm:$0xf]
      %v357 = vld [vmem:[%s226 + $0x28] sm:$0xf]
      %v358 = vld [vmem:[%s226 + $0x2c] sm:$0xf]
      %v359 = vld [vmem:[%s226 + $0x30] sm:$0xf]
      %v360 = vld [vmem:[%s226 + $0x34] sm:$0xf]
      %v361 = vld [vmem:[%s226 + $0x38] sm:$0xf]
      %v362 = vld [vmem:[%s226 + $0x3c] sm:$0xf]
      %v363 = vld [vmem:[%s226 + $0x40] sm:$0xf]
      %v364 = vld [vmem:[%s226 + $0x44] sm:$0xf]
      %v365 = vld [vmem:[%s226 + $0x48] sm:$0xf]
      %v366 = vld [vmem:[%s226 + $0x4c] sm:$0xf]
      %v367 = vld [vmem:[%s226 + $0x50] sm:$0xf]
      %v368 = vld [vmem:[%s226 + $0x54] sm:$0xf]
      %v369 = vld [vmem:[%s226 + $0x58] sm:$0xf]
      %v370 = vld [vmem:[%s226 + $0x5c] sm:$0xf]
      %v371 = vld [vmem:[%s226 + $0x60] sm:$0xf]
      %v372 = vld [vmem:[%s226 + $0x64] sm:$0xf]
      %v373 = vld [vmem:[%s226 + $0x68] sm:$0xf]
      %v374 = vld [vmem:[%s226 + $0x6c] sm:$0xf]
      %v375 = vld [vmem:[%s226 + $0x70] sm:$0xf]
      %v376 = vld [vmem:[%s226 + $0x74] sm:$0xf]
      %v377 = vld [vmem:[%s226 + $0x78] sm:$0xf]
      %v378 = vld [vmem:[%s226 + $0x7c] sm:$0xf]
      %v379 = vunpack.c.l.bf16 %v347
      %v380 = vunpack.c.l.bf16 %v348
      %v381 = vunpack.c.l.bf16 %v349
      %v382 = vunpack.c.l.bf16 %v350
      %v383 = vunpack.c.l.bf16 %v351
      %v384 = vunpack.c.l.bf16 %v352
      %v385 = vunpack.c.l.bf16 %v353
      %v386 = vunpack.c.l.bf16 %v354
      %v387 = vunpack.c.l.bf16 %v355
      %v388 = vunpack.c.l.bf16 %v356
      %v389 = vunpack.c.l.bf16 %v357
      %v390 = vunpack.c.l.bf16 %v358
      %v391 = vunpack.c.l.bf16 %v359
      %v392 = vunpack.c.l.bf16 %v360
      %v393 = vunpack.c.l.bf16 %v361
      %v394 = vunpack.c.l.bf16 %v362
      %v395 = vunpack.c.l.bf16 %v363
      %v396 = vunpack.c.l.bf16 %v364
      %v397 = vunpack.c.l.bf16 %v365
      %v398 = vunpack.c.l.bf16 %v366
      %v399 = vunpack.c.l.bf16 %v367
      %v400 = vunpack.c.l.bf16 %v368
      %v401 = vunpack.c.l.bf16 %v369
      %v402 = vunpack.c.l.bf16 %v370
      %v403 = vunpack.c.l.bf16 %v371
      %v404 = vunpack.c.l.bf16 %v372
      %v405 = vunpack.c.l.bf16 %v373
      %v406 = vunpack.c.l.bf16 %v374
      %v407 = vunpack.c.l.bf16 %v375
      %v408 = vunpack.c.l.bf16 %v376
      %v409 = vunpack.c.l.bf16 %v377
      %v410 = vunpack.c.l.bf16 %v378
      %v411 = vld [vmem:[%s1] sm:$0x1]
      %v413 = vlaneseq
      %v414 = vshrl.u32 %v413, 7
      %v415 = vsub.s32 0, %v414
      %v416 = vrot.slane %v411, %v415
      %v418 = vmul.f32 %v379, %v416
      %v419 = vmul.f32 %v380, %v416
      %v420 = vmul.f32 %v381, %v416
      %v421 = vmul.f32 %v382, %v416
      %v422 = vmul.f32 %v383, %v416
      %v423 = vmul.f32 %v384, %v416
      %v424 = vmul.f32 %v385, %v416
      %v425 = vmul.f32 %v386, %v416
      %v426 = vmul.f32 %v387, %v416
      %v427 = vmul.f32 %v388, %v416
      %v428 = vmul.f32 %v389, %v416
      %v429 = vmul.f32 %v390, %v416
      %v430 = vmul.f32 %v391, %v416
      %v431 = vmul.f32 %v392, %v416
      %v432 = vmul.f32 %v393, %v416
      %v433 = vmul.f32 %v394, %v416
      %v434 = vmul.f32 %v395, %v416
      %v435 = vmul.f32 %v396, %v416
      %v436 = vmul.f32 %v397, %v416
      %v437 = vmul.f32 %v398, %v416
      %v438 = vmul.f32 %v399, %v416
      %v439 = vmul.f32 %v400, %v416
      %v440 = vmul.f32 %v401, %v416
      %v441 = vmul.f32 %v402, %v416
      %v442 = vmul.f32 %v403, %v416
      %v443 = vmul.f32 %v404, %v416
      %v444 = vmul.f32 %v405, %v416
      %v445 = vmul.f32 %v406, %v416
      %v446 = vmul.f32 %v407, %v416
      %v447 = vmul.f32 %v408, %v416
      %v448 = vmul.f32 %v409, %v416
      %v449 = vmul.f32 %v410, %v416
      %v450 = vld [vmem:[%s2] sm:$0x1]
      %v452 = vlaneseq
      %v453 = vshrl.u32 %v452, 7
      %v454 = vsub.s32 0, %v453
      %v455 = vrot.slane %v450, %v454
      %v457 = vadd.f32 %v418, %v455
      %v458 = vadd.f32 %v419, %v455
      %v459 = vadd.f32 %v420, %v455
      %v460 = vadd.f32 %v421, %v455
      %v461 = vadd.f32 %v422, %v455
      %v462 = vadd.f32 %v423, %v455
      %v463 = vadd.f32 %v424, %v455
      %v464 = vadd.f32 %v425, %v455
      %v465 = vadd.f32 %v426, %v455
      %v466 = vadd.f32 %v427, %v455
      %v467 = vadd.f32 %v428, %v455
      %v468 = vadd.f32 %v429, %v455
      %v469 = vadd.f32 %v430, %v455
      %v470 = vadd.f32 %v431, %v455
      %v471 = vadd.f32 %v432, %v455
      %v472 = vadd.f32 %v433, %v455
      %v473 = vadd.f32 %v434, %v455
      %v474 = vadd.f32 %v435, %v455
      %v475 = vadd.f32 %v436, %v455
      %v476 = vadd.f32 %v437, %v455
      %v477 = vadd.f32 %v438, %v455
      %v478 = vadd.f32 %v439, %v455
      %v479 = vadd.f32 %v440, %v455
      %v480 = vadd.f32 %v441, %v455
      %v481 = vadd.f32 %v442, %v455
      %v482 = vadd.f32 %v443, %v455
      %v483 = vadd.f32 %v444, %v455
      %v484 = vadd.f32 %v445, %v455
      %v485 = vadd.f32 %v446, %v455
      %v486 = vadd.f32 %v447, %v455
      %v487 = vadd.f32 %v448, %v455
      %v488 = vadd.f32 %v449, %v455
      %v489 = vmax.f32 %v457, 0.0
      %v490 = vmax.f32 %v458, 0.0
      %v491 = vmax.f32 %v459, 0.0
      %v492 = vmax.f32 %v460, 0.0
      %v493 = vmax.f32 %v461, 0.0
      %v494 = vmax.f32 %v462, 0.0
      %v495 = vmax.f32 %v463, 0.0
      %v496 = vmax.f32 %v464, 0.0
      %v497 = vmax.f32 %v465, 0.0
      %v498 = vmax.f32 %v466, 0.0
      %v499 = vmax.f32 %v467, 0.0
      %v500 = vmax.f32 %v468, 0.0
      %v501 = vmax.f32 %v469, 0.0
      %v502 = vmax.f32 %v470, 0.0
      %v503 = vmax.f32 %v471, 0.0
      %v504 = vmax.f32 %v472, 0.0
      %v505 = vmax.f32 %v473, 0.0
      %v506 = vmax.f32 %v474, 0.0
      %v507 = vmax.f32 %v475, 0.0
      %v508 = vmax.f32 %v476, 0.0
      %v509 = vmax.f32 %v477, 0.0
      %v510 = vmax.f32 %v478, 0.0
      %v511 = vmax.f32 %v479, 0.0
      %v512 = vmax.f32 %v480, 0.0
      %v513 = vmax.f32 %v481, 0.0
      %v514 = vmax.f32 %v482, 0.0
      %v515 = vmax.f32 %v483, 0.0
      %v516 = vmax.f32 %v484, 0.0
      %v517 = vmax.f32 %v485, 0.0
      %v518 = vmax.f32 %v486, 0.0
      %v519 = vmax.f32 %v487, 0.0
      %v520 = vmax.f32 %v488, 0.0
      %v521 = vpack.c.bf16 %v490, %v489
      %v522 = vpack.c.bf16 %v492, %v491
      %v523 = vpack.c.bf16 %v494, %v493
      %v524 = vpack.c.bf16 %v496, %v495
      %v525 = vpack.c.bf16 %v498, %v497
      %v526 = vpack.c.bf16 %v500, %v499
      %v527 = vpack.c.bf16 %v502, %v501
      %v528 = vpack.c.bf16 %v504, %v503
      %v529 = vpack.c.bf16 %v506, %v505
      %v530 = vpack.c.bf16 %v508, %v507
      %v531 = vpack.c.bf16 %v510, %v509
      %v532 = vpack.c.bf16 %v512, %v511
      %v533 = vpack.c.bf16 %v514, %v513
      %v534 = vpack.c.bf16 %v516, %v515
      %v535 = vpack.c.bf16 %v518, %v517
      %v536 = vpack.c.bf16 %v520, %v519
      %v553 = vunpack.c.l.b16 %v521
      %v554 = vunpack.c.h.b16 %v521
      %v555 = vunpack.c.l.b16 %v522
      %v556 = vunpack.c.h.b16 %v522
      %v557 = vunpack.c.l.b16 %v523
      %v558 = vunpack.c.h.b16 %v523
      %v559 = vunpack.c.l.b16 %v524
      %v560 = vunpack.c.h.b16 %v524
      %v561 = vunpack.c.l.b16 %v525
      %v562 = vunpack.c.h.b16 %v525
      %v563 = vunpack.c.l.b16 %v526
      %v564 = vunpack.c.h.b16 %v526
      %v565 = vunpack.c.l.b16 %v527
      %v566 = vunpack.c.h.b16 %v527
      %v567 = vunpack.c.l.b16 %v528
      %v568 = vunpack.c.h.b16 %v528
      %v569 = vunpack.c.l.b16 %v529
      %v570 = vunpack.c.h.b16 %v529
      %v571 = vunpack.c.l.b16 %v530
      %v572 = vunpack.c.h.b16 %v530
      %v573 = vunpack.c.l.b16 %v531
      %v574 = vunpack.c.h.b16 %v531
      %v575 = vunpack.c.l.b16 %v532
      %v576 = vunpack.c.h.b16 %v532
      %v577 = vunpack.c.l.b16 %v533
      %v578 = vunpack.c.h.b16 %v533
      %v579 = vunpack.c.l.b16 %v534
      %v580 = vunpack.c.h.b16 %v534
      %v581 = vunpack.c.l.b16 %v535
      %v582 = vunpack.c.h.b16 %v535
      %v583 = vunpack.c.l.b16 %v536
      %v584 = vunpack.c.h.b16 %v536
      %v585 = vpack.c.b16 %v553, %v553
      %v586 = vpack.c.b16 %v554, %v554
      %v587 = vpack.c.b16 %v555, %v555
      %v588 = vpack.c.b16 %v556, %v556
      %v589 = vpack.c.b16 %v557, %v557
      %v590 = vpack.c.b16 %v558, %v558
      %v591 = vpack.c.b16 %v559, %v559
      %v592 = vpack.c.b16 %v560, %v560
      %v593 = vpack.c.b16 %v561, %v561
      %v594 = vpack.c.b16 %v562, %v562
      %v595 = vpack.c.b16 %v563, %v563
      %v596 = vpack.c.b16 %v564, %v564
      %v597 = vpack.c.b16 %v565, %v565
      %v598 = vpack.c.b16 %v566, %v566
      %v599 = vpack.c.b16 %v567, %v567
      %v600 = vpack.c.b16 %v568, %v568
      %v601 = vpack.c.b16 %v569, %v569
      %v602 = vpack.c.b16 %v570, %v570
      %v603 = vpack.c.b16 %v571, %v571
      %v604 = vpack.c.b16 %v572, %v572
      %v605 = vpack.c.b16 %v573, %v573
      %v606 = vpack.c.b16 %v574, %v574
      %v607 = vpack.c.b16 %v575, %v575
      %v608 = vpack.c.b16 %v576, %v576
      %v609 = vpack.c.b16 %v577, %v577
      %v610 = vpack.c.b16 %v578, %v578
      %v611 = vpack.c.b16 %v579, %v579
      %v612 = vpack.c.b16 %v580, %v580
      %v613 = vpack.c.b16 %v581, %v581
      %v614 = vpack.c.b16 %v582, %v582
      %v615 = vpack.c.b16 %v583, %v583
      %v616 = vpack.c.b16 %v584, %v584
      %649 = vst [vmem:[#allocation2 + $0x4] sm:$0xf] %v585
      %650 = vst [vmem:[#allocation2 + $0x8] sm:$0xf] %v586
      %651 = vst [vmem:[#allocation2 + $0x14] sm:$0xf] %v587
      %652 = vst [vmem:[#allocation2 + $0x18] sm:$0xf] %v588
      %653 = vst [vmem:[#allocation2 + $0x24] sm:$0xf] %v589
      %654 = vst [vmem:[#allocation2 + $0x28] sm:$0xf] %v590
      %655 = vst [vmem:[#allocation2 + $0x34] sm:$0xf] %v591
      %656 = vst [vmem:[#allocation2 + $0x38] sm:$0xf] %v592
      %657 = vst [vmem:[#allocation2 + $0x44] sm:$0xf] %v593
      %658 = vst [vmem:[#allocation2 + $0x48] sm:$0xf] %v594
      %659 = vst [vmem:[#allocation2 + $0x54] sm:$0xf] %v595
      %660 = vst [vmem:[#allocation2 + $0x58] sm:$0xf] %v596
      %661 = vst [vmem:[#allocation2 + $0x64] sm:$0xf] %v597
      %662 = vst [vmem:[#allocation2 + $0x68] sm:$0xf] %v598
      %663 = vst [vmem:[#allocation2 + $0x74] sm:$0xf] %v599
      %664 = vst [vmem:[#allocation2 + $0x78] sm:$0xf] %v600
      %665 = vst [vmem:[#allocation2 + $0x84] sm:$0xf] %v601
      %666 = vst [vmem:[#allocation2 + $0x88] sm:$0xf] %v602
      %667 = vst [vmem:[#allocation2 + $0x94] sm:$0xf] %v603
      %668 = vst [vmem:[#allocation2 + $0x98] sm:$0xf] %v604
      %669 = vst [vmem:[#allocation2 + $0xa4] sm:$0xf] %v605
      %670 = vst [vmem:[#allocation2 + $0xa8] sm:$0xf] %v606
      %671 = vst [vmem:[#allocation2 + $0xb4] sm:$0xf] %v607
      %672 = vst [vmem:[#allocation2 + $0xb8] sm:$0xf] %v608
      %673 = vst [vmem:[#allocation2 + $0xc4] sm:$0xf] %v609
      %674 = vst [vmem:[#allocation2 + $0xc8] sm:$0xf] %v610
      %675 = vst [vmem:[#allocation2 + $0xd4] sm:$0xf] %v611
      %676 = vst [vmem:[#allocation2 + $0xd8] sm:$0xf] %v612
      %677 = vst [vmem:[#allocation2 + $0xe4] sm:$0xf] %v613
      %678 = vst [vmem:[#allocation2 + $0xe8] sm:$0xf] %v614
      %679 = vst [vmem:[#allocation2 + $0xf4] sm:$0xf] %v615
      %680 = vst [vmem:[#allocation2 + $0xf8] sm:$0xf] %v616
      %v681 = vld [vmem:[#allocation2] sm:$0x8]
      %v682 = vld [vmem:[#allocation2 + $0x4] sm:$0xf]
      %v683 = vld [vmem:[#allocation2 + $0x8] sm:$0xf]
      %v684 = vld [vmem:[#allocation2 + $0x10] sm:$0x8]
      %v685 = vld [vmem:[#allocation2 + $0x14] sm:$0xf]
      %v686 = vld [vmem:[#allocation2 + $0x18] sm:$0xf]
      %v687 = vld [vmem:[#allocation2 + $0x20] sm:$0x8]
      %v688 = vld [vmem:[#allocation2 + $0x24] sm:$0xf]
      %v689 = vld [vmem:[#allocation2 + $0x28] sm:$0xf]
      %v690 = vld [vmem:[#allocation2 + $0x30] sm:$0x8]
      %v691 = vld [vmem:[#allocation2 + $0x34] sm:$0xf]
      %v692 = vld [vmem:[#allocation2 + $0x38] sm:$0xf]
      %v693 = vld [vmem:[#allocation2 + $0x40] sm:$0x8]
      %v694 = vld [vmem:[#allocation2 + $0x44] sm:$0xf]
      %v695 = vld [vmem:[#allocation2 + $0x48] sm:$0xf]
      %v696 = vld [vmem:[#allocation2 + $0x50] sm:$0x8]
      %v697 = vld [vmem:[#allocation2 + $0x54] sm:$0xf]
      %v698 = vld [vmem:[#allocation2 + $0x58] sm:$0xf]
      %v699 = vld [vmem:[#allocation2 + $0x60] sm:$0x8]
      %v700 = vld [vmem:[#allocation2 + $0x64] sm:$0xf]
      %v701 = vld [vmem:[#allocation2 + $0x68] sm:$0xf]
      %v702 = vld [vmem:[#allocation2 + $0x70] sm:$0x8]
      %v703 = vld [vmem:[#allocation2 + $0x74] sm:$0xf]
      %v704 = vld [vmem:[#allocation2 + $0x78] sm:$0xf]
      %v705 = vld [vmem:[#allocation2 + $0x80] sm:$0x8]
      %v706 = vld [vmem:[#allocation2 + $0x84] sm:$0xf]
      %v707 = vld [vmem:[#allocation2 + $0x88] sm:$0xf]
      %v708 = vld [vmem:[#allocation2 + $0x90] sm:$0x8]
      %v709 = vld [vmem:[#allocation2 + $0x94] sm:$0xf]
      %v710 = vld [vmem:[#allocation2 + $0x98] sm:$0xf]
      %v711 = vld [vmem:[#allocation2 + $0xa0] sm:$0x8]
      %v712 = vld [vmem:[#allocation2 + $0xa4] sm:$0xf]
      %v713 = vld [vmem:[#allocation2 + $0xa8] sm:$0xf]
      %v714 = vld [vmem:[#allocation2 + $0xb0] sm:$0x8]
      %v715 = vld [vmem:[#allocation2 + $0xb4] sm:$0xf]
      %v716 = vld [vmem:[#allocation2 + $0xb8] sm:$0xf]
      %v717 = vld [vmem:[#allocation2 + $0xc0] sm:$0x8]
      %v718 = vld [vmem:[#allocation2 + $0xc4] sm:$0xf]
      %v719 = vld [vmem:[#allocation2 + $0xc8] sm:$0xf]
      %v720 = vld [vmem:[#allocation2 + $0xd0] sm:$0x8]
      %v721 = vld [vmem:[#allocation2 + $0xd4] sm:$0xf]
      %v722 = vld [vmem:[#allocation2 + $0xd8] sm:$0xf]
      %v723 = vld [vmem:[#allocation2 + $0xe0] sm:$0x8]
      %v724 = vld [vmem:[#allocation2 + $0xe4] sm:$0xf]
      %v725 = vld [vmem:[#allocation2 + $0xe8] sm:$0xf]
      %v726 = vld [vmem:[#allocation2 + $0xf0] sm:$0x8]
      %v727 = vld [vmem:[#allocation2 + $0xf4] sm:$0xf]
      %v728 = vld [vmem:[#allocation2 + $0xf8] sm:$0xf]
      %vm729 = vsmask.f32 4368
      %vm730 = vmor %vm289, %vm729
      %v732 = vshrl.u32 %v681, 16
      %v734 = vrot.slane %v732, 7
      %v735 = vrot.slane %v734, 4
      %v737 = vshrl.u32 %v682, 16
      %v739 = vrot.slane %v737, 7
      %v740 = vshll.u32 %v682, 16
      %v742 = vor.u32 %v739, %v740
      %v743 = vsel %vm730, %v735, %v742
      %v744 = vrot.slane %v739, 4
      %v746 = vshrl.u32 %v683, 16
      %v748 = vrot.slane %v746, 7
      %v749 = vshll.u32 %v683, 16
      %v751 = vor.u32 %v748, %v749
      %v752 = vsel %vm730, %v744, %v751
      %v754 = vshrl.u32 %v684, 16
      %v756 = vrot.slane %v754, 7
      %v757 = vrot.slane %v756, 4
      %v759 = vshrl.u32 %v685, 16
      %v761 = vrot.slane %v759, 7
      %v762 = vshll.u32 %v685, 16
      %v764 = vor.u32 %v761, %v762
      %v765 = vsel %vm730, %v757, %v764
      %v766 = vrot.slane %v761, 4
      %v768 = vshrl.u32 %v686, 16
      %v770 = vrot.slane %v768, 7
      %v771 = vshll.u32 %v686, 16
      %v773 = vor.u32 %v770, %v771
      %v774 = vsel %vm730, %v766, %v773
      %v776 = vshrl.u32 %v687, 16
      %v778 = vrot.slane %v776, 7
      %v779 = vrot.slane %v778, 4
      %v781 = vshrl.u32 %v688, 16
      %v783 = vrot.slane %v781, 7
      %v784 = vshll.u32 %v688, 16
      %v786 = vor.u32 %v783, %v784
      %v787 = vsel %vm730, %v779, %v786
      %v788 = vrot.slane %v783, 4
      %v790 = vshrl.u32 %v689, 16
      %v792 = vrot.slane %v790, 7
      %v793 = vshll.u32 %v689, 16
      %v795 = vor.u32 %v792, %v793
      %v796 = vsel %vm730, %v788, %v795
      %v798 = vshrl.u32 %v690, 16
      %v800 = vrot.slane %v798, 7
      %v801 = vrot.slane %v800, 4
      %v803 = vshrl.u32 %v691, 16
      %v805 = vrot.slane %v803, 7
      %v806 = vshll.u32 %v691, 16
      %v808 = vor.u32 %v805, %v806
      %v809 = vsel %vm730, %v801, %v808
      %v810 = vrot.slane %v805, 4
      %v812 = vshrl.u32 %v692, 16
      %v814 = vrot.slane %v812, 7
      %v815 = vshll.u32 %v692, 16
      %v817 = vor.u32 %v814, %v815
      %v818 = vsel %vm730, %v810, %v817
      %v820 = vshrl.u32 %v693, 16
      %v822 = vrot.slane %v820, 7
      %v823 = vrot.slane %v822, 4
      %v825 = vshrl.u32 %v694, 16
      %v827 = vrot.slane %v825, 7
      %v828 = vshll.u32 %v694, 16
      %v830 = vor.u32 %v827, %v828
      %v831 = vsel %vm730, %v823, %v830
      %v832 = vrot.slane %v827, 4
      %v834 = vshrl.u32 %v695, 16
      %v836 = vrot.slane %v834, 7
      %v837 = vshll.u32 %v695, 16
      %v839 = vor.u32 %v836, %v837
      %v840 = vsel %vm730, %v832, %v839
      %v842 = vshrl.u32 %v696, 16
      %v844 = vrot.slane %v842, 7
      %v845 = vrot.slane %v844, 4
      %v847 = vshrl.u32 %v697, 16
      %v849 = vrot.slane %v847, 7
      %v850 = vshll.u32 %v697, 16
      %v852 = vor.u32 %v849, %v850
      %v853 = vsel %vm730, %v845, %v852
      %v854 = vrot.slane %v849, 4
      %v856 = vshrl.u32 %v698, 16
      %v858 = vrot.slane %v856, 7
      %v859 = vshll.u32 %v698, 16
      %v861 = vor.u32 %v858, %v859
      %v862 = vsel %vm730, %v854, %v861
      %v864 = vshrl.u32 %v699, 16
      %v866 = vrot.slane %v864, 7
      %v867 = vrot.slane %v866, 4
      %v869 = vshrl.u32 %v700, 16
      %v871 = vrot.slane %v869, 7
      %v872 = vshll.u32 %v700, 16
      %v874 = vor.u32 %v871, %v872
      %v875 = vsel %vm730, %v867, %v874
      %v876 = vrot.slane %v871, 4
      %v878 = vshrl.u32 %v701, 16
      %v880 = vrot.slane %v878, 7
      %v881 = vshll.u32 %v701, 16
      %v883 = vor.u32 %v880, %v881
      %v884 = vsel %vm730, %v876, %v883
      %v886 = vshrl.u32 %v702, 16
      %v888 = vrot.slane %v886, 7
      %v889 = vrot.slane %v888, 4
      %v891 = vshrl.u32 %v703, 16
      %v893 = vrot.slane %v891, 7
      %v894 = vshll.u32 %v703, 16
      %v896 = vor.u32 %v893, %v894
      %v897 = vsel %vm730, %v889, %v896
      %v898 = vrot.slane %v893, 4
      %v900 = vshrl.u32 %v704, 16
      %v902 = vrot.slane %v900, 7
      %v903 = vshll.u32 %v704, 16
      %v905 = vor.u32 %v902, %v903
      %v906 = vsel %vm730, %v898, %v905
      %v908 = vshrl.u32 %v705, 16
      %v910 = vrot.slane %v908, 7
      %v911 = vrot.slane %v910, 4
      %v913 = vshrl.u32 %v706, 16
      %v915 = vrot.slane %v913, 7
      %v916 = vshll.u32 %v706, 16
      %v918 = vor.u32 %v915, %v916
      %v919 = vsel %vm730, %v911, %v918
      %v920 = vrot.slane %v915, 4
      %v922 = vshrl.u32 %v707, 16
      %v924 = vrot.slane %v922, 7
      %v925 = vshll.u32 %v707, 16
      %v927 = vor.u32 %v924, %v925
      %v928 = vsel %vm730, %v920, %v927
      %v930 = vshrl.u32 %v708, 16
      %v932 = vrot.slane %v930, 7
      %v933 = vrot.slane %v932, 4
      %v935 = vshrl.u32 %v709, 16
      %v937 = vrot.slane %v935, 7
      %v938 = vshll.u32 %v709, 16
      %v940 = vor.u32 %v937, %v938
      %v941 = vsel %vm730, %v933, %v940
      %v942 = vrot.slane %v937, 4
      %v944 = vshrl.u32 %v710, 16
      %v946 = vrot.slane %v944, 7
      %v947 = vshll.u32 %v710, 16
      %v949 = vor.u32 %v946, %v947
      %v950 = vsel %vm730, %v942, %v949
      %v952 = vshrl.u32 %v711, 16
      %v954 = vrot.slane %v952, 7
      %v955 = vrot.slane %v954, 4
      %v957 = vshrl.u32 %v712, 16
      %v959 = vrot.slane %v957, 7
      %v960 = vshll.u32 %v712, 16
      %v962 = vor.u32 %v959, %v960
      %v963 = vsel %vm730, %v955, %v962
      %v964 = vrot.slane %v959, 4
      %v966 = vshrl.u32 %v713, 16
      %v968 = vrot.slane %v966, 7
      %v969 = vshll.u32 %v713, 16
      %v971 = vor.u32 %v968, %v969
      %v972 = vsel %vm730, %v964, %v971
      %v974 = vshrl.u32 %v714, 16
      %v976 = vrot.slane %v974, 7
      %v977 = vrot.slane %v976, 4
      %v979 = vshrl.u32 %v715, 16
      %v981 = vrot.slane %v979, 7
      %v982 = vshll.u32 %v715, 16
      %v984 = vor.u32 %v981, %v982
      %v985 = vsel %vm730, %v977, %v984
      %v986 = vrot.slane %v981, 4
      %v988 = vshrl.u32 %v716, 16
      %v990 = vrot.slane %v988, 7
      %v991 = vshll.u32 %v716, 16
      %v993 = vor.u32 %v990, %v991
      %v994 = vsel %vm730, %v986, %v993
      %v996 = vshrl.u32 %v717, 16
      %v998 = vrot.slane %v996, 7
      %v999 = vrot.slane %v998, 4
      %v1001 = vshrl.u32 %v718, 16
      %v1003 = vrot.slane %v1001, 7
      %v1004 = vshll.u32 %v718, 16
      %v1006 = vor.u32 %v1003, %v1004
      %v1007 = vsel %vm730, %v999, %v1006
      %v1008 = vrot.slane %v1003, 4
      %v1010 = vshrl.u32 %v719, 16
      %v1012 = vrot.slane %v1010, 7
      %v1013 = vshll.u32 %v719, 16
      %v1015 = vor.u32 %v1012, %v1013
      %v1016 = vsel %vm730, %v1008, %v1015
      %v1018 = vshrl.u32 %v720, 16
      %v1020 = vrot.slane %v1018, 7
      %v1021 = vrot.slane %v1020, 4
      %v1023 = vshrl.u32 %v721, 16
      %v1025 = vrot.slane %v1023, 7
      %v1026 = vshll.u32 %v721, 16
      %v1028 = vor.u32 %v1025, %v1026
      %v1029 = vsel %vm730, %v1021, %v1028
      %v1030 = vrot.slane %v1025, 4
      %v1032 = vshrl.u32 %v722, 16
      %v1034 = vrot.slane %v1032, 7
      %v1035 = vshll.u32 %v722, 16
      %v1037 = vor.u32 %v1034, %v1035
      %v1038 = vsel %vm730, %v1030, %v1037
      %v1040 = vshrl.u32 %v723, 16
      %v1042 = vrot.slane %v1040, 7
      %v1043 = vrot.slane %v1042, 4
      %v1045 = vshrl.u32 %v724, 16
      %v1047 = vrot.slane %v1045, 7
      %v1048 = vshll.u32 %v724, 16
      %v1050 = vor.u32 %v1047, %v1048
      %v1051 = vsel %vm730, %v1043, %v1050
      %v1052 = vrot.slane %v1047, 4
      %v1054 = vshrl.u32 %v725, 16
      %v1056 = vrot.slane %v1054, 7
      %v1057 = vshll.u32 %v725, 16
      %v1059 = vor.u32 %v1056, %v1057
      %v1060 = vsel %vm730, %v1052, %v1059
      %v1062 = vshrl.u32 %v726, 16
      %v1064 = vrot.slane %v1062, 7
      %v1065 = vrot.slane %v1064, 4
      %v1067 = vshrl.u32 %v727, 16
      %v1069 = vrot.slane %v1067, 7
      %v1070 = vshll.u32 %v727, 16
      %v1072 = vor.u32 %v1069, %v1070
      %v1073 = vsel %vm730, %v1065, %v1072
      %v1074 = vrot.slane %v1069, 4
      %v1076 = vshrl.u32 %v728, 16
      %v1078 = vrot.slane %v1076, 7
      %v1079 = vshll.u32 %v728, 16
      %v1081 = vor.u32 %v1078, %v1079
      %v1082 = vsel %vm730, %v1074, %v1081
      %1115 = vst [vmem:[#allocation3 + $0x18] sm:$0xf] %v743
      %1116 = vst [vmem:[#allocation3 + $0x24] sm:$0xf] %v752
      %1117 = vst [vmem:[#allocation3 + $0x30] sm:$0xf] %v765
      %1118 = vst [vmem:[#allocation3 + $0x3c] sm:$0xf] %v774
      %1119 = vst [vmem:[#allocation3 + $0x48] sm:$0xf] %v787
      %1120 = vst [vmem:[#allocation3 + $0x54] sm:$0xf] %v796
      %1121 = vst [vmem:[#allocation3 + $0x60] sm:$0xf] %v809
      %1122 = vst [vmem:[#allocation3 + $0x6c] sm:$0xf] %v818
      %1123 = vst [vmem:[#allocation3 + $0x78] sm:$0xf] %v831
      %1124 = vst [vmem:[#allocation3 + $0x84] sm:$0xf] %v840
      %1125 = vst [vmem:[#allocation3 + $0x90] sm:$0xf] %v853
      %1126 = vst [vmem:[#allocation3 + $0x9c] sm:$0xf] %v862
      %1127 = vst [vmem:[#allocation3 + $0xa8] sm:$0xf] %v875
      %1128 = vst [vmem:[#allocation3 + $0xb4] sm:$0xf] %v884
      %1129 = vst [vmem:[#allocation3 + $0xc0] sm:$0xf] %v897
      %1130 = vst [vmem:[#allocation3 + $0xcc] sm:$0xf] %v906
      %1131 = vst [vmem:[#allocation3 + $0xd8] sm:$0xf] %v919
      %1132 = vst [vmem:[#allocation3 + $0xe4] sm:$0xf] %v928
      %1133 = vst [vmem:[#allocation3 + $0xf0] sm:$0xf] %v941
      %1134 = vst [vmem:[#allocation3 + $0xfc] sm:$0xf] %v950
      %1135 = vst [vmem:[#allocation3 + $0x108] sm:$0xf] %v963
      %1136 = vst [vmem:[#allocation3 + $0x114] sm:$0xf] %v972
      %1137 = vst [vmem:[#allocation3 + $0x120] sm:$0xf] %v985
      %1138 = vst [vmem:[#allocation3 + $0x12c] sm:$0xf] %v994
      %1139 = vst [vmem:[#allocation3 + $0x138] sm:$0xf] %v1007
      %1140 = vst [vmem:[#allocation3 + $0x144] sm:$0xf] %v1016
      %1141 = vst [vmem:[#allocation3 + $0x150] sm:$0xf] %v1029
      %1142 = vst [vmem:[#allocation3 + $0x15c] sm:$0xf] %v1038
      %1143 = vst [vmem:[#allocation3 + $0x168] sm:$0xf] %v1051
      %1144 = vst [vmem:[#allocation3 + $0x174] sm:$0xf] %v1060
      %1145 = vst [vmem:[#allocation3 + $0x180] sm:$0xf] %v1073
      %1146 = vst [vmem:[#allocation3 + $0x18c] sm:$0xf] %v1082
      %v1147 = vld [vmem:[#allocation2 + $0x4] sm:$0xf]
      %v1148 = vld [vmem:[#allocation2 + $0x8] sm:$0xf]
      %v1149 = vld [vmem:[#allocation2 + $0x14] sm:$0xf]
      %v1150 = vld [vmem:[#allocation2 + $0x18] sm:$0xf]
      %v1151 = vld [vmem:[#allocation2 + $0x24] sm:$0xf]
      %v1152 = vld [vmem:[#allocation2 + $0x28] sm:$0xf]
      %v1153 = vld [vmem:[#allocation2 + $0x34] sm:$0xf]
      %v1154 = vld [vmem:[#allocation2 + $0x38] sm:$0xf]
      %v1155 = vld [vmem:[#allocation2 + $0x44] sm:$0xf]
      %v1156 = vld [vmem:[#allocation2 + $0x48] sm:$0xf]
      %v1157 = vld [vmem:[#allocation2 + $0x54] sm:$0xf]
      %v1158 = vld [vmem:[#allocation2 + $0x58] sm:$0xf]
      %v1159 = vld [vmem:[#allocation2 + $0x64] sm:$0xf]
      %v1160 = vld [vmem:[#allocation2 + $0x68] sm:$0xf]
      %v1161 = vld [vmem:[#allocation2 + $0x74] sm:$0xf]
      %v1162 = vld [vmem:[#allocation2 + $0x78] sm:$0xf]
      %v1163 = vld [vmem:[#allocation2 + $0x84] sm:$0xf]
      %v1164 = vld [vmem:[#allocation2 + $0x88] sm:$0xf]
      %v1165 = vld [vmem:[#allocation2 + $0x94] sm:$0xf]
      %v1166 = vld [vmem:[#allocation2 + $0x98] sm:$0xf]
      %v1167 = vld [vmem:[#allocation2 + $0xa4] sm:$0xf]
      %v1168 = vld [vmem:[#allocation2 + $0xa8] sm:$0xf]
      %v1169 = vld [vmem:[#allocation2 + $0xb4] sm:$0xf]
      %v1170 = vld [vmem:[#allocation2 + $0xb8] sm:$0xf]
      %v1171 = vld [vmem:[#allocation2 + $0xc4] sm:$0xf]
      %v1172 = vld [vmem:[#allocation2 + $0xc8] sm:$0xf]
      %v1173 = vld [vmem:[#allocation2 + $0xd4] sm:$0xf]
      %v1174 = vld [vmem:[#allocation2 + $0xd8] sm:$0xf]
      %v1175 = vld [vmem:[#allocation2 + $0xe4] sm:$0xf]
      %v1176 = vld [vmem:[#allocation2 + $0xe8] sm:$0xf]
      %v1177 = vld [vmem:[#allocation2 + $0xf4] sm:$0xf]
      %v1178 = vld [vmem:[#allocation2 + $0xf8] sm:$0xf]
      %1179 = vst [vmem:[#allocation3 + $0x1c] sm:$0xf] %v1147
      %1180 = vst [vmem:[#allocation3 + $0x28] sm:$0xf] %v1148
      %1181 = vst [vmem:[#allocation3 + $0x34] sm:$0xf] %v1149
      %1182 = vst [vmem:[#allocation3 + $0x40] sm:$0xf] %v1150
      %1183 = vst [vmem:[#allocation3 + $0x4c] sm:$0xf] %v1151
      %1184 = vst [vmem:[#allocation3 + $0x58] sm:$0xf] %v1152
      %1185 = vst [vmem:[#allocation3 + $0x64] sm:$0xf] %v1153
      %1186 = vst [vmem:[#allocation3 + $0x70] sm:$0xf] %v1154
      %1187 = vst [vmem:[#allocation3 + $0x7c] sm:$0xf] %v1155
      %1188 = vst [vmem:[#allocation3 + $0x88] sm:$0xf] %v1156
      %1189 = vst [vmem:[#allocation3 + $0x94] sm:$0xf] %v1157
      %1190 = vst [vmem:[#allocation3 + $0xa0] sm:$0xf] %v1158
      %1191 = vst [vmem:[#allocation3 + $0xac] sm:$0xf] %v1159
      %1192 = vst [vmem:[#allocation3 + $0xb8] sm:$0xf] %v1160
      %1193 = vst [vmem:[#allocation3 + $0xc4] sm:$0xf] %v1161
      %1194 = vst [vmem:[#allocation3 + $0xd0] sm:$0xf] %v1162
      %1195 = vst [vmem:[#allocation3 + $0xdc] sm:$0xf] %v1163
      %1196 = vst [vmem:[#allocation3 + $0xe8] sm:$0xf] %v1164
      %1197 = vst [vmem:[#allocation3 + $0xf4] sm:$0xf] %v1165
      %1198 = vst [vmem:[#allocation3 + $0x100] sm:$0xf] %v1166
      %1199 = vst [vmem:[#allocation3 + $0x10c] sm:$0xf] %v1167
      %1200 = vst [vmem:[#allocation3 + $0x118] sm:$0xf] %v1168
      %1201 = vst [vmem:[#allocation3 + $0x124] sm:$0xf] %v1169
      %1202 = vst [vmem:[#allocation3 + $0x130] sm:$0xf] %v1170
      %1203 = vst [vmem:[#allocation3 + $0x13c] sm:$0xf] %v1171
      %1204 = vst [vmem:[#allocation3 + $0x148] sm:$0xf] %v1172
      %1205 = vst [vmem:[#allocation3 + $0x154] sm:$0xf] %v1173
      %1206 = vst [vmem:[#allocation3 + $0x160] sm:$0xf] %v1174
      %1207 = vst [vmem:[#allocation3 + $0x16c] sm:$0xf] %v1175
      %1208 = vst [vmem:[#allocation3 + $0x178] sm:$0xf] %v1176
      %1209 = vst [vmem:[#allocation3 + $0x184] sm:$0xf] %v1177
      %1210 = vst [vmem:[#allocation3 + $0x190] sm:$0xf] %v1178
      %v1211 = vld [vmem:[#allocation2 + $0x4] sm:$0xf]
      %v1212 = vld [vmem:[#allocation2 + $0x8] sm:$0xf]
      %v1213 = vld [vmem:[#allocation2 + $0xc] sm:$0x1]
      %v1214 = vld [vmem:[#allocation2 + $0x14] sm:$0xf]
      %v1215 = vld [vmem:[#allocation2 + $0x18] sm:$0xf]
      %v1216 = vld [vmem:[#allocation2 + $0x1c] sm:$0x1]
      %v1217 = vld [vmem:[#allocation2 + $0x24] sm:$0xf]
      %v1218 = vld [vmem:[#allocation2 + $0x28] sm:$0xf]
      %v1219 = vld [vmem:[#allocation2 + $0x2c] sm:$0x1]
      %v1220 = vld [vmem:[#allocation2 + $0x34] sm:$0xf]
      %v1221 = vld [vmem:[#allocation2 + $0x38] sm:$0xf]
      %v1222 = vld [vmem:[#allocation2 + $0x3c] sm:$0x1]
      %v1223 = vld [vmem:[#allocation2 + $0x44] sm:$0xf]
      %v1224 = vld [vmem:[#allocation2 + $0x48] sm:$0xf]
      %v1225 = vld [vmem:[#allocation2 + $0x4c] sm:$0x1]
      %v1226 = vld [vmem:[#allocation2 + $0x54] sm:$0xf]
      %v1227 = vld [vmem:[#allocation2 + $0x58] sm:$0xf]
      %v1228 = vld [vmem:[#allocation2 + $0x5c] sm:$0x1]
      %v1229 = vld [vmem:[#allocation2 + $0x64] sm:$0xf]
      %v1230 = vld [vmem:[#allocation2 + $0x68] sm:$0xf]
      %v1231 = vld [vmem:[#allocation2 + $0x6c] sm:$0x1]
      %v1232 = vld [vmem:[#allocation2 + $0x74] sm:$0xf]
      %v1233 = vld [vmem:[#allocation2 + $0x78] sm:$0xf]
      %v1234 = vld [vmem:[#allocation2 + $0x7c] sm:$0x1]
      %v1235 = vld [vmem:[#allocation2 + $0x84] sm:$0xf]
      %v1236 = vld [vmem:[#allocation2 + $0x88] sm:$0xf]
      %v1237 = vld [vmem:[#allocation2 + $0x8c] sm:$0x1]
      %v1238 = vld [vmem:[#allocation2 + $0x94] sm:$0xf]
      %v1239 = vld [vmem:[#allocation2 + $0x98] sm:$0xf]
      %v1240 = vld [vmem:[#allocation2 + $0x9c] sm:$0x1]
      %v1241 = vld [vmem:[#allocation2 + $0xa4] sm:$0xf]
      %v1242 = vld [vmem:[#allocation2 + $0xa8] sm:$0xf]
      %v1243 = vld [vmem:[#allocation2 + $0xac] sm:$0x1]
      %v1244 = vld [vmem:[#allocation2 + $0xb4] sm:$0xf]
      %v1245 = vld [vmem:[#allocation2 + $0xb8] sm:$0xf]
      %v1246 = vld [vmem:[#allocation2 + $0xbc] sm:$0x1]
      %v1247 = vld [vmem:[#allocation2 + $0xc4] sm:$0xf]
      %v1248 = vld [vmem:[#allocation2 + $0xc8] sm:$0xf]
      %v1249 = vld [vmem:[#allocation2 + $0xcc] sm:$0x1]
      %v1250 = vld [vmem:[#allocation2 + $0xd4] sm:$0xf]
      %v1251 = vld [vmem:[#allocation2 + $0xd8] sm:$0xf]
      %v1252 = vld [vmem:[#allocation2 + $0xdc] sm:$0x1]
      %v1253 = vld [vmem:[#allocation2 + $0xe4] sm:$0xf]
      %v1254 = vld [vmem:[#allocation2 + $0xe8] sm:$0xf]
      %v1255 = vld [vmem:[#allocation2 + $0xec] sm:$0x1]
      %v1256 = vld [vmem:[#allocation2 + $0xf4] sm:$0xf]
      %v1257 = vld [vmem:[#allocation2 + $0xf8] sm:$0xf]
      %v1258 = vld [vmem:[#allocation2 + $0xfc] sm:$0x1]
      %vm1259 = vsmask.f32 3328
      %vm1260 = vsmask.f32 7440
      %vm1261 = vmor %vm1259, %vm1260
      %v1263 = vshrl.u32 %v1211, 16
      %v1265 = vrot.slane %v1263, 4
      %v1266 = vshll.u32 %v1211, 16
      %v1268 = vrot.slane %v1266, 5
      %v1269 = vor.u32 %v1265, %v1268
      %v1270 = vrot.slane %v1269, 4
      %v1272 = vshll.u32 %v1212, 16
      %v1274 = vrot.slane %v1272, 5
      %v1275 = vsel %vm1261, %v1270, %v1274
      %v1276 = vshrl.u32 %v1212, 16
      %v1278 = vrot.slane %v1276, 4
      %v1279 = vor.u32 %v1278, %v1274
      %v1280 = vrot.slane %v1279, 4
      %v1282 = vshll.u32 %v1213, 16
      %v1284 = vrot.slane %v1282, 5
      %v1285 = vsel %vm1261, %v1280, %v1284
      %v1287 = vshrl.u32 %v1214, 16
      %v1289 = vrot.slane %v1287, 4
      %v1290 = vshll.u32 %v1214, 16
      %v1292 = vrot.slane %v1290, 5
      %v1293 = vor.u32 %v1289, %v1292
      %v1294 = vrot.slane %v1293, 4
      %v1296 = vshll.u32 %v1215, 16
      %v1298 = vrot.slane %v1296, 5
      %v1299 = vsel %vm1261, %v1294, %v1298
      %v1300 = vshrl.u32 %v1215, 16
      %v1302 = vrot.slane %v1300, 4
      %v1303 = vor.u32 %v1302, %v1298
      %v1304 = vrot.slane %v1303, 4
      %v1306 = vshll.u32 %v1216, 16
      %v1308 = vrot.slane %v1306, 5
      %v1309 = vsel %vm1261, %v1304, %v1308
      %v1311 = vshrl.u32 %v1217, 16
      %v1313 = vrot.slane %v1311, 4
      %v1314 = vshll.u32 %v1217, 16
      %v1316 = vrot.slane %v1314, 5
      %v1317 = vor.u32 %v1313, %v1316
      %v1318 = vrot.slane %v1317, 4
      %v1320 = vshll.u32 %v1218, 16
      %v1322 = vrot.slane %v1320, 5
      %v1323 = vsel %vm1261, %v1318, %v1322
      %v1324 = vshrl.u32 %v1218, 16
      %v1326 = vrot.slane %v1324, 4
      %v1327 = vor.u32 %v1326, %v1322
      %v1328 = vrot.slane %v1327, 4
      %v1330 = vshll.u32 %v1219, 16
      %v1332 = vrot.slane %v1330, 5
      %v1333 = vsel %vm1261, %v1328, %v1332
      %v1335 = vshrl.u32 %v1220, 16
      %v1337 = vrot.slane %v1335, 4
      %v1338 = vshll.u32 %v1220, 16
      %v1340 = vrot.slane %v1338, 5
      %v1341 = vor.u32 %v1337, %v1340
      %v1342 = vrot.slane %v1341, 4
      %v1344 = vshll.u32 %v1221, 16
      %v1346 = vrot.slane %v1344, 5
      %v1347 = vsel %vm1261, %v1342, %v1346
      %v1348 = vshrl.u32 %v1221, 16
      %v1350 = vrot.slane %v1348, 4
      %v1351 = vor.u32 %v1350, %v1346
      %v1352 = vrot.slane %v1351, 4
      %v1354 = vshll.u32 %v1222, 16
      %v1356 = vrot.slane %v1354, 5
      %v1357 = vsel %vm1261, %v1352, %v1356
      %v1359 = vshrl.u32 %v1223, 16
      %v1361 = vrot.slane %v1359, 4
      %v1362 = vshll.u32 %v1223, 16
      %v1364 = vrot.slane %v1362, 5
      %v1365 = vor.u32 %v1361, %v1364
      %v1366 = vrot.slane %v1365, 4
      %v1368 = vshll.u32 %v1224, 16
      %v1370 = vrot.slane %v1368, 5
      %v1371 = vsel %vm1261, %v1366, %v1370
      %v1372 = vshrl.u32 %v1224, 16
      %v1374 = vrot.slane %v1372, 4
      %v1375 = vor.u32 %v1374, %v1370
      %v1376 = vrot.slane %v1375, 4
      %v1378 = vshll.u32 %v1225, 16
      %v1380 = vrot.slane %v1378, 5
      %v1381 = vsel %vm1261, %v1376, %v1380
      %v1383 = vshrl.u32 %v1226, 16
      %v1385 = vrot.slane %v1383, 4
      %v1386 = vshll.u32 %v1226, 16
      %v1388 = vrot.slane %v1386, 5
      %v1389 = vor.u32 %v1385, %v1388
      %v1390 = vrot.slane %v1389, 4
      %v1392 = vshll.u32 %v1227, 16
      %v1394 = vrot.slane %v1392, 5
      %v1395 = vsel %vm1261, %v1390, %v1394
      %v1396 = vshrl.u32 %v1227, 16
      %v1398 = vrot.slane %v1396, 4
      %v1399 = vor.u32 %v1398, %v1394
      %v1400 = vrot.slane %v1399, 4
      %v1402 = vshll.u32 %v1228, 16
      %v1404 = vrot.slane %v1402, 5
      %v1405 = vsel %vm1261, %v1400, %v1404
      %v1407 = vshrl.u32 %v1229, 16
      %v1409 = vrot.slane %v1407, 4
      %v1410 = vshll.u32 %v1229, 16
      %v1412 = vrot.slane %v1410, 5
      %v1413 = vor.u32 %v1409, %v1412
      %v1414 = vrot.slane %v1413, 4
      %v1416 = vshll.u32 %v1230, 16
      %v1418 = vrot.slane %v1416, 5
      %v1419 = vsel %vm1261, %v1414, %v1418
      %v1420 = vshrl.u32 %v1230, 16
      %v1422 = vrot.slane %v1420, 4
      %v1423 = vor.u32 %v1422, %v1418
      %v1424 = vrot.slane %v1423, 4
      %v1426 = vshll.u32 %v1231, 16
      %v1428 = vrot.slane %v1426, 5
      %v1429 = vsel %vm1261, %v1424, %v1428
      %v1431 = vshrl.u32 %v1232, 16
      %v1433 = vrot.slane %v1431, 4
      %v1434 = vshll.u32 %v1232, 16
      %v1436 = vrot.slane %v1434, 5
      %v1437 = vor.u32 %v1433, %v1436
      %v1438 = vrot.slane %v1437, 4
      %v1440 = vshll.u32 %v1233, 16
      %v1442 = vrot.slane %v1440, 5
      %v1443 = vsel %vm1261, %v1438, %v1442
      %v1444 = vshrl.u32 %v1233, 16
      %v1446 = vrot.slane %v1444, 4
      %v1447 = vor.u32 %v1446, %v1442
      %v1448 = vrot.slane %v1447, 4
      %v1450 = vshll.u32 %v1234, 16
      %v1452 = vrot.slane %v1450, 5
      %v1453 = vsel %vm1261, %v1448, %v1452
      %v1455 = vshrl.u32 %v1235, 16
      %v1457 = vrot.slane %v1455, 4
      %v1458 = vshll.u32 %v1235, 16
      %v1460 = vrot.slane %v1458, 5
      %v1461 = vor.u32 %v1457, %v1460
      %v1462 = vrot.slane %v1461, 4
      %v1464 = vshll.u32 %v1236, 16
      %v1466 = vrot.slane %v1464, 5
      %v1467 = vsel %vm1261, %v1462, %v1466
      %v1468 = vshrl.u32 %v1236, 16
      %v1470 = vrot.slane %v1468, 4
      %v1471 = vor.u32 %v1470, %v1466
      %v1472 = vrot.slane %v1471, 4
      %v1474 = vshll.u32 %v1237, 16
      %v1476 = vrot.slane %v1474, 5
      %v1477 = vsel %vm1261, %v1472, %v1476
      %v1479 = vshrl.u32 %v1238, 16
      %v1481 = vrot.slane %v1479, 4
      %v1482 = vshll.u32 %v1238, 16
      %v1484 = vrot.slane %v1482, 5
      %v1485 = vor.u32 %v1481, %v1484
      %v1486 = vrot.slane %v1485, 4
      %v1488 = vshll.u32 %v1239, 16
      %v1490 = vrot.slane %v1488, 5
      %v1491 = vsel %vm1261, %v1486, %v1490
      %v1492 = vshrl.u32 %v1239, 16
      %v1494 = vrot.slane %v1492, 4
      %v1495 = vor.u32 %v1494, %v1490
      %v1496 = vrot.slane %v1495, 4
      %v1498 = vshll.u32 %v1240, 16
      %v1500 = vrot.slane %v1498, 5
      %v1501 = vsel %vm1261, %v1496, %v1500
      %v1503 = vshrl.u32 %v1241, 16
      %v1505 = vrot.slane %v1503, 4
      %v1506 = vshll.u32 %v1241, 16
      %v1508 = vrot.slane %v1506, 5
      %v1509 = vor.u32 %v1505, %v1508
      %v1510 = vrot.slane %v1509, 4
      %v1512 = vshll.u32 %v1242, 16
      %v1514 = vrot.slane %v1512, 5
      %v1515 = vsel %vm1261, %v1510, %v1514
      %v1516 = vshrl.u32 %v1242, 16
      %v1518 = vrot.slane %v1516, 4
      %v1519 = vor.u32 %v1518, %v1514
      %v1520 = vrot.slane %v1519, 4
      %v1522 = vshll.u32 %v1243, 16
      %v1524 = vrot.slane %v1522, 5
      %v1525 = vsel %vm1261, %v1520, %v1524
      %v1527 = vshrl.u32 %v1244, 16
      %v1529 = vrot.slane %v1527, 4
      %v1530 = vshll.u32 %v1244, 16
      %v1532 = vrot.slane %v1530, 5
      %v1533 = vor.u32 %v1529, %v1532
      %v1534 = vrot.slane %v1533, 4
      %v1536 = vshll.u32 %v1245, 16
      %v1538 = vrot.slane %v1536, 5
      %v1539 = vsel %vm1261, %v1534, %v1538
      %v1540 = vshrl.u32 %v1245, 16
      %v1542 = vrot.slane %v1540, 4
      %v1543 = vor.u32 %v1542, %v1538
      %v1544 = vrot.slane %v1543, 4
      %v1546 = vshll.u32 %v1246, 16
      %v1548 = vrot.slane %v1546, 5
      %v1549 = vsel %vm1261, %v1544, %v1548
      %v1551 = vshrl.u32 %v1247, 16
      %v1553 = vrot.slane %v1551, 4
      %v1554 = vshll.u32 %v1247, 16
      %v1556 = vrot.slane %v1554, 5
      %v1557 = vor.u32 %v1553, %v1556
      %v1558 = vrot.slane %v1557, 4
      %v1560 = vshll.u32 %v1248, 16
      %v1562 = vrot.slane %v1560, 5
      %v1563 = vsel %vm1261, %v1558, %v1562
      %v1564 = vshrl.u32 %v1248, 16
      %v1566 = vrot.slane %v1564, 4
      %v1567 = vor.u32 %v1566, %v1562
      %v1568 = vrot.slane %v1567, 4
      %v1570 = vshll.u32 %v1249, 16
      %v1572 = vrot.slane %v1570, 5
      %v1573 = vsel %vm1261, %v1568, %v1572
      %v1575 = vshrl.u32 %v1250, 16
      %v1577 = vrot.slane %v1575, 4
      %v1578 = vshll.u32 %v1250, 16
      %v1580 = vrot.slane %v1578, 5
      %v1581 = vor.u32 %v1577, %v1580
      %v1582 = vrot.slane %v1581, 4
      %v1584 = vshll.u32 %v1251, 16
      %v1586 = vrot.slane %v1584, 5
      %v1587 = vsel %vm1261, %v1582, %v1586
      %v1588 = vshrl.u32 %v1251, 16
      %v1590 = vrot.slane %v1588, 4
      %v1591 = vor.u32 %v1590, %v1586
      %v1592 = vrot.slane %v1591, 4
      %v1594 = vshll.u32 %v1252, 16
      %v1596 = vrot.slane %v1594, 5
      %v1597 = vsel %vm1261, %v1592, %v1596
      %v1599 = vshrl.u32 %v1253, 16
      %v1601 = vrot.slane %v1599, 4
      %v1602 = vshll.u32 %v1253, 16
      %v1604 = vrot.slane %v1602, 5
      %v1605 = vor.u32 %v1601, %v1604
      %v1606 = vrot.slane %v1605, 4
      %v1608 = vshll.u32 %v1254, 16
      %v1610 = vrot.slane %v1608, 5
      %v1611 = vsel %vm1261, %v1606, %v1610
      %v1612 = vshrl.u32 %v1254, 16
      %v1614 = vrot.slane %v1612, 4
      %v1615 = vor.u32 %v1614, %v1610
      %v1616 = vrot.slane %v1615, 4
      %v1618 = vshll.u32 %v1255, 16
      %v1620 = vrot.slane %v1618, 5
      %v1621 = vsel %vm1261, %v1616, %v1620
      %v1623 = vshrl.u32 %v1256, 16
      %v1625 = vrot.slane %v1623, 4
      %v1626 = vshll.u32 %v1256, 16
      %v1628 = vrot.slane %v1626, 5
      %v1629 = vor.u32 %v1625, %v1628
      %v1630 = vrot.slane %v1629, 4
      %v1632 = vshll.u32 %v1257, 16
      %v1634 = vrot.slane %v1632, 5
      %v1635 = vsel %vm1261, %v1630, %v1634
      %v1636 = vshrl.u32 %v1257, 16
      %v1638 = vrot.slane %v1636, 4
      %v1639 = vor.u32 %v1638, %v1634
      %v1640 = vrot.slane %v1639, 4
      %v1642 = vshll.u32 %v1258, 16
      %v1644 = vrot.slane %v1642, 5
      %v1645 = vsel %vm1261, %v1640, %v1644
      %1678 = vst [vmem:[#allocation3 + $0x20] sm:$0xf] %v1275
      %1679 = vst [vmem:[#allocation3 + $0x2c] sm:$0xf] %v1285
      %1680 = vst [vmem:[#allocation3 + $0x38] sm:$0xf] %v1299
      %1681 = vst [vmem:[#allocation3 + $0x44] sm:$0xf] %v1309
      %1682 = vst [vmem:[#allocation3 + $0x50] sm:$0xf] %v1323
      %1683 = vst [vmem:[#allocation3 + $0x5c] sm:$0xf] %v1333
      %1684 = vst [vmem:[#allocation3 + $0x68] sm:$0xf] %v1347
      %1685 = vst [vmem:[#allocation3 + $0x74] sm:$0xf] %v1357
      %1686 = vst [vmem:[#allocation3 + $0x80] sm:$0xf] %v1371
      %1687 = vst [vmem:[#allocation3 + $0x8c] sm:$0xf] %v1381
      %1688 = vst [vmem:[#allocation3 + $0x98] sm:$0xf] %v1395
      %1689 = vst [vmem:[#allocation3 + $0xa4] sm:$0xf] %v1405
      %1690 = vst [vmem:[#allocation3 + $0xb0] sm:$0xf] %v1419
      %1691 = vst [vmem:[#allocation3 + $0xbc] sm:$0xf] %v1429
      %1692 = vst [vmem:[#allocation3 + $0xc8] sm:$0xf] %v1443
      %1693 = vst [vmem:[#allocation3 + $0xd4] sm:$0xf] %v1453
      %1694 = vst [vmem:[#allocation3 + $0xe0] sm:$0xf] %v1467
      %1695 = vst [vmem:[#allocation3 + $0xec] sm:$0xf] %v1477
      %1696 = vst [vmem:[#allocation3 + $0xf8] sm:$0xf] %v1491
      %1697 = vst [vmem:[#allocation3 + $0x104] sm:$0xf] %v1501
      %1698 = vst [vmem:[#allocation3 + $0x110] sm:$0xf] %v1515
      %1699 = vst [vmem:[#allocation3 + $0x11c] sm:$0xf] %v1525
      %1700 = vst [vmem:[#allocation3 + $0x128] sm:$0xf] %v1539
      %1701 = vst [vmem:[#allocation3 + $0x134] sm:$0xf] %v1549
      %1702 = vst [vmem:[#allocation3 + $0x140] sm:$0xf] %v1563
      %1703 = vst [vmem:[#allocation3 + $0x14c] sm:$0xf] %v1573
      %1704 = vst [vmem:[#allocation3 + $0x158] sm:$0xf] %v1587
      %1705 = vst [vmem:[#allocation3 + $0x164] sm:$0xf] %v1597
      %1706 = vst [vmem:[#allocation3 + $0x170] sm:$0xf] %v1611
      %1707 = vst [vmem:[#allocation3 + $0x17c] sm:$0xf] %v1621
      %1708 = vst [vmem:[#allocation3 + $0x188] sm:$0xf] %v1635
      %1709 = vst [vmem:[#allocation3 + $0x194] sm:$0xf] %v1645
      %v1710 = vld [vmem:[#allocation3] sm:$0xff]
      %v1711 = vld [vmem:[#allocation3 + $0x8] sm:$0xf]
      %v1712 = vld [vmem:[#allocation3 + $0xc] sm:$0xff]
      %v1713 = vld [vmem:[#allocation3 + $0x14] sm:$0xf]
      %v1714 = vld [vmem:[#allocation3 + $0x18] sm:$0xff]
      %v1715 = vld [vmem:[#allocation3 + $0x20] sm:$0xf]
      %v1716 = vld [vmem:[#allocation3 + $0x24] sm:$0xff]
      %v1717 = vld [vmem:[#allocation3 + $0x2c] sm:$0xf]
      %v1718 = vld [vmem:[#allocation3 + $0x30] sm:$0xff]
      %v1719 = vld [vmem:[#allocation3 + $0x38] sm:$0xf]
      %v1720 = vld [vmem:[#allocation3 + $0x3c] sm:$0xff]
      %v1721 = vld [vmem:[#allocation3 + $0x44] sm:$0xf]
      %v1722 = vld [vmem:[#allocation3 + $0x48] sm:$0xff]
      %v1723 = vld [vmem:[#allocation3 + $0x50] sm:$0xf]
      %v1724 = vld [vmem:[#allocation3 + $0x54] sm:$0xff]
      %v1725 = vld [vmem:[#allocation3 + $0x5c] sm:$0xf]
      %v1726 = vld [vmem:[#allocation3 + $0x60] sm:$0xff]
      %v1727 = vld [vmem:[#allocation3 + $0x68] sm:$0xf]
      %v1728 = vld [vmem:[#allocation3 + $0x6c] sm:$0xff]
      %v1729 = vld [vmem:[#allocation3 + $0x74] sm:$0xf]
      %v1730 = vld [vmem:[#allocation3 + $0x78] sm:$0xff]
      %v1731 = vld [vmem:[#allocation3 + $0x80] sm:$0xf]
      %v1732 = vld [vmem:[#allocation3 + $0x84] sm:$0xff]
      %v1733 = vld [vmem:[#allocation3 + $0x8c] sm:$0xf]
      %v1734 = vld [vmem:[#allocation3 + $0x90] sm:$0xff]
      %v1735 = vld [vmem:[#allocation3 + $0x98] sm:$0xf]
      %v1736 = vld [vmem:[#allocation3 + $0x9c] sm:$0xff]
      %v1737 = vld [vmem:[#allocation3 + $0xa4] sm:$0xf]
      %v1738 = vld [vmem:[#allocation3 + $0xa8] sm:$0xff]
      %v1739 = vld [vmem:[#allocation3 + $0xb0] sm:$0xf]
      %v1740 = vld [vmem:[#allocation3 + $0xb4] sm:$0xff]
      %v1741 = vld [vmem:[#allocation3 + $0xbc] sm:$0xf]
      %v1742 = vld [vmem:[#allocation3 + $0xc0] sm:$0xff]
      %v1743 = vld [vmem:[#allocation3 + $0xc8] sm:$0xf]
      %v1744 = vld [vmem:[#allocation3 + $0xcc] sm:$0xff]
      %v1745 = vld [vmem:[#allocation3 + $0xd4] sm:$0xf]
      %v1746 = vld [vmem:[#allocation3 + $0xd8] sm:$0xff]
      %v1747 = vld [vmem:[#allocation3 + $0xe0] sm:$0xf]
      %v1748 = vld [vmem:[#allocation3 + $0xe4] sm:$0xff]
      %v1749 = vld [vmem:[#allocation3 + $0xec] sm:$0xf]
      %v1750 = vld [vmem:[#allocation3 + $0xf0] sm:$0xff]
      %v1751 = vld [vmem:[#allocation3 + $0xf8] sm:$0xf]
      %v1752 = vld [vmem:[#allocation3 + $0xfc] sm:$0xff]
      %v1753 = vld [vmem:[#allocation3 + $0x104] sm:$0xf]
      %v1754 = vld [vmem:[#allocation3 + $0x108] sm:$0xff]
      %v1755 = vld [vmem:[#allocation3 + $0x110] sm:$0xf]
      %v1756 = vld [vmem:[#allocation3 + $0x114] sm:$0xff]
      %v1757 = vld [vmem:[#allocation3 + $0x11c] sm:$0xf]
      %v1758 = vld [vmem:[#allocation3 + $0x120] sm:$0xff]
      %v1759 = vld [vmem:[#allocation3 + $0x128] sm:$0xf]
      %v1760 = vld [vmem:[#allocation3 + $0x12c] sm:$0xff]
      %v1761 = vld [vmem:[#allocation3 + $0x134] sm:$0xf]
      %v1762 = vld [vmem:[#allocation3 + $0x138] sm:$0xff]
      %v1763 = vld [vmem:[#allocation3 + $0x140] sm:$0xf]
      %v1764 = vld [vmem:[#allocation3 + $0x144] sm:$0xff]
      %v1765 = vld [vmem:[#allocation3 + $0x14c] sm:$0xf]
      %v1766 = vld [vmem:[#allocation3 + $0x150] sm:$0xff]
      %v1767 = vld [vmem:[#allocation3 + $0x158] sm:$0xf]
      %v1768 = vld [vmem:[#allocation3 + $0x15c] sm:$0xff]
      %v1769 = vld [vmem:[#allocation3 + $0x164] sm:$0xf]
      %v1770 = vld [vmem:[#allocation3 + $0x168] sm:$0xff]
      %v1771 = vld [vmem:[#allocation3 + $0x170] sm:$0xf]
      %v1772 = vld [vmem:[#allocation3 + $0x174] sm:$0xff]
      %v1773 = vld [vmem:[#allocation3 + $0x17c] sm:$0xf]
      %v1774 = vld [vmem:[%s3] sm:$0xf]
      %v1775 = vld [vmem:[%s3 + $0x4] sm:$0xf]
      %v1776 = vld [vmem:[%s3 + $0x8] sm:$0xf]
      %v1777 = vld [vmem:[%s3 + $0xc] sm:$0xf]
      %v1778 = vld [vmem:[%s3 + $0x10] sm:$0xf]
      %v1779 = vld [vmem:[%s3 + $0x14] sm:$0xf]
      %v1780 = vld [vmem:[%s3 + $0x18] sm:$0xf]
      %v1781 = vld [vmem:[%s3 + $0x1c] sm:$0xf]
      %v1782 = vld [vmem:[%s3 + $0x20] sm:$0xf]
      %v1783 = vld [vmem:[%s3 + $0x24] sm:$0xf]
      %v1784 = vld [vmem:[%s3 + $0x28] sm:$0xf]
      %v1785 = vld [vmem:[%s3 + $0x2c] sm:$0xf]
      %v1786 = vld [vmem:[%s3 + $0x30] sm:$0xf]
      %v1787 = vld [vmem:[%s3 + $0x34] sm:$0xf]
      %v1788 = vld [vmem:[%s3 + $0x38] sm:$0xf]
      %v1789 = vld [vmem:[%s3 + $0x3c] sm:$0xf]
      %v1790 = vld [vmem:[%s3 + $0x40] sm:$0xf]
      %v1791 = vld [vmem:[%s3 + $0x44] sm:$0xf]
      %v1792 = vld [vmem:[%s3 + $0x48] sm:$0xf]
      %v1793 = vld [vmem:[%s3 + $0x4c] sm:$0xf]
      %v1794 = vld [vmem:[%s3 + $0x50] sm:$0xf]
      %v1795 = vld [vmem:[%s3 + $0x54] sm:$0xf]
      %v1796 = vld [vmem:[%s3 + $0x58] sm:$0xf]
      %v1797 = vld [vmem:[%s3 + $0x5c] sm:$0xf]
      %v1798 = vld [vmem:[%s3 + $0x60] sm:$0xf]
      %v1799 = vld [vmem:[%s3 + $0x64] sm:$0xf]
      %v1800 = vld [vmem:[%s3 + $0x68] sm:$0xf]
      %v1801 = vld [vmem:[%s3 + $0x6c] sm:$0xf]
      %v1802 = vld [vmem:[%s3 + $0x70] sm:$0xf]
      %v1803 = vld [vmem:[%s3 + $0x74] sm:$0xf]
      %v1804 = vld [vmem:[%s3 + $0x78] sm:$0xf]
      %v1805 = vld [vmem:[%s3 + $0x7c] sm:$0xf]
      %v1806 = vld [vmem:[%s3 + $0x80] sm:$0xf]
      %v1807 = vld [vmem:[%s3 + $0x84] sm:$0xf]
      %v1808 = vld [vmem:[%s3 + $0x88] sm:$0xf]
      %v1809 = vld [vmem:[%s3 + $0x8c] sm:$0xf]
      %v1810 = vld [vmem:[%s3 + $0x90] sm:$0xf]
      %v1811 = vld [vmem:[%s3 + $0x94] sm:$0xf]
      %v1812 = vld [vmem:[%s3 + $0x98] sm:$0xf]
      %v1813 = vld [vmem:[%s3 + $0x9c] sm:$0xf]
      %v1814 = vld [vmem:[%s3 + $0xa0] sm:$0xf]
      %v1815 = vld [vmem:[%s3 + $0xa4] sm:$0xf]
      %v1816 = vld [vmem:[%s3 + $0xa8] sm:$0xf]
      %v1817 = vld [vmem:[%s3 + $0xac] sm:$0xf]
      %v1818 = vld [vmem:[%s3 + $0xb0] sm:$0xf]
      %v1819 = vld [vmem:[%s3 + $0xb4] sm:$0xf]
      %v1820 = vld [vmem:[%s3 + $0xb8] sm:$0xf]
      %v1821 = vld [vmem:[%s3 + $0xbc] sm:$0xf]
      %v1822 = vld [vmem:[#allocation3 + $0x180] sm:$0xff]
      %v1823 = vld [vmem:[#allocation3 + $0x188] sm:$0xf]
      %v1824 = vld [vmem:[#allocation3 + $0x18c] sm:$0xff]
      %v1825 = vld [vmem:[#allocation3 + $0x194] sm:$0xf]
      %s1826 = scalar_lea.vmem %s3, 192
      %v1827 = vld [vmem:[%s1826] sm:$0xf]
      %v1828 = vld [vmem:[%s1826 + $0x4] sm:$0xf]
      %v1829 = vld [vmem:[%s1826 + $0x8] sm:$0xf]
      %v1830 = vld [vmem:[%s1826 + $0xc] sm:$0xf]
      %v1831 = vld [vmem:[%s1826 + $0x10] sm:$0xf]
      %v1832 = vld [vmem:[%s1826 + $0x14] sm:$0xf]
      %v1833 = vld [vmem:[%s1826 + $0x18] sm:$0xf]
      %v1834 = vld [vmem:[%s1826 + $0x1c] sm:$0xf]
      %v1835 = vld [vmem:[%s1826 + $0x20] sm:$0xf]
      %v1836 = vld [vmem:[%s1826 + $0x24] sm:$0xf]
      %v1837 = vld [vmem:[%s1826 + $0x28] sm:$0xf]
      %v1838 = vld [vmem:[%s1826 + $0x2c] sm:$0xf]
      %v1839 = vld [vmem:[%s1826 + $0x30] sm:$0xf]
      %v1840 = vld [vmem:[%s1826 + $0x34] sm:$0xf]
      %v1841 = vld [vmem:[%s1826 + $0x38] sm:$0xf]
      %v1842 = vld [vmem:[%s1826 + $0x3c] sm:$0xf]
      %v1843 = vld [vmem:[%s1826 + $0x40] sm:$0xf]
      %v1844 = vld [vmem:[%s1826 + $0x44] sm:$0xf]
      %v1845 = vld [vmem:[%s1826 + $0x48] sm:$0xf]
      %v1846 = vld [vmem:[%s1826 + $0x4c] sm:$0xf]
      %v1847 = vld [vmem:[%s1826 + $0x50] sm:$0xf]
      %v1848 = vld [vmem:[%s1826 + $0x54] sm:$0xf]
      %v1849 = vld [vmem:[%s1826 + $0x58] sm:$0xf]
      %v1850 = vld [vmem:[%s1826 + $0x5c] sm:$0xf]
      %v1851 = vld [vmem:[%s1826 + $0x60] sm:$0xf]
      %v1852 = vld [vmem:[%s1826 + $0x64] sm:$0xf]
      %v1853 = vld [vmem:[%s1826 + $0x68] sm:$0xf]
      %v1854 = vld [vmem:[%s1826 + $0x6c] sm:$0xf]
      %v1855 = vld [vmem:[%s1826 + $0x70] sm:$0xf]
      %v1856 = vld [vmem:[%s1826 + $0x74] sm:$0xf]
      %v1857 = vld [vmem:[%s1826 + $0x78] sm:$0xf]
      %v1858 = vld [vmem:[%s1826 + $0x7c] sm:$0xf]
      %v1859 = vld [vmem:[%s1826 + $0x80] sm:$0xf]
      %v1860 = vld [vmem:[%s1826 + $0x84] sm:$0xf]
      %v1861 = vld [vmem:[%s1826 + $0x88] sm:$0xf]
      %v1862 = vld [vmem:[%s1826 + $0x8c] sm:$0xf]
      %v1863 = vld [vmem:[%s1826 + $0x90] sm:$0xf]
      %v1864 = vld [vmem:[%s1826 + $0x94] sm:$0xf]
      %v1865 = vld [vmem:[%s1826 + $0x98] sm:$0xf]
      %v1866 = vld [vmem:[%s1826 + $0x9c] sm:$0xf]
      %v1867 = vld [vmem:[%s1826 + $0xa0] sm:$0xf]
      %v1868 = vld [vmem:[%s1826 + $0xa4] sm:$0xf]
      %v1869 = vld [vmem:[%s1826 + $0xa8] sm:$0xf]
      %v1870 = vld [vmem:[%s1826 + $0xac] sm:$0xf]
      %v1871 = vld [vmem:[%s1826 + $0xb0] sm:$0xf]
      %v1872 = vld [vmem:[%s1826 + $0xb4] sm:$0xf]
      %v1873 = vld [vmem:[%s1826 + $0xb8] sm:$0xf]
      %v1874 = vld [vmem:[%s1826 + $0xbc] sm:$0xf]
      %v1939 = vunpack.c.l.b16 %v1714
      %v1940 = vunpack.c.h.b16 %v1714
      %v1941 = vunpack.c.l.b16 %v1715
      %v1942 = vunpack.c.l.b16 %v1716
      %v1943 = vunpack.c.h.b16 %v1716
      %v1944 = vunpack.c.l.b16 %v1717
      %v1945 = vunpack.c.l.b16 %v1718
      %v1946 = vunpack.c.h.b16 %v1718
      %v1947 = vunpack.c.l.b16 %v1719
      %v1948 = vunpack.c.l.b16 %v1720
      %v1949 = vunpack.c.h.b16 %v1720
      %v1950 = vunpack.c.l.b16 %v1721
      %v1951 = vunpack.c.l.b16 %v1722
      %v1952 = vunpack.c.h.b16 %v1722
      %v1953 = vunpack.c.l.b16 %v1723
      %v1954 = vunpack.c.l.b16 %v1724
      %v1955 = vunpack.c.h.b16 %v1724
      %v1956 = vunpack.c.l.b16 %v1725
      %v1957 = vunpack.c.l.b16 %v1726
      %v1958 = vunpack.c.h.b16 %v1726
      %v1959 = vunpack.c.l.b16 %v1727
      %v1960 = vunpack.c.l.b16 %v1728
      %v1961 = vunpack.c.h.b16 %v1728
      %v1962 = vunpack.c.l.b16 %v1729
      %v1963 = vunpack.c.l.b16 %v1730
      %v1964 = vunpack.c.h.b16 %v1730
      %v1965 = vunpack.c.l.b16 %v1731
      %v1966 = vunpack.c.l.b16 %v1732
      %v1967 = vunpack.c.h.b16 %v1732
      %v1968 = vunpack.c.l.b16 %v1733
      %v1969 = vunpack.c.l.b16 %v1734
      %v1970 = vunpack.c.h.b16 %v1734
      %v1971 = vunpack.c.l.b16 %v1735
      %v1972 = vunpack.c.l.b16 %v1736
      %v1973 = vunpack.c.h.b16 %v1736
      %v1974 = vunpack.c.l.b16 %v1737
      %v1975 = vunpack.c.l.b16 %v1738
      %v1976 = vunpack.c.h.b16 %v1738
      %v1977 = vunpack.c.l.b16 %v1739
      %v1978 = vunpack.c.l.b16 %v1740
      %v1979 = vunpack.c.h.b16 %v1740
      %v1980 = vunpack.c.l.b16 %v1741
      %v1981 = vunpack.c.l.b16 %v1742
      %v1982 = vunpack.c.h.b16 %v1742
      %v1983 = vunpack.c.l.b16 %v1743
      %v1984 = vunpack.c.l.b16 %v1744
      %v1985 = vunpack.c.h.b16 %v1744
      %v1986 = vunpack.c.l.b16 %v1745
      %v1987 = vunpack.c.l.b16 %v1746
      %v1988 = vunpack.c.h.b16 %v1746
      %v1989 = vunpack.c.l.b16 %v1747
      %v1990 = vunpack.c.l.b16 %v1748
      %v1991 = vunpack.c.h.b16 %v1748
      %v1992 = vunpack.c.l.b16 %v1749
      %v1993 = vunpack.c.l.b16 %v1750
      %v1994 = vunpack.c.h.b16 %v1750
      %v1995 = vunpack.c.l.b16 %v1751
      %v1996 = vunpack.c.l.b16 %v1752
      %v1997 = vunpack.c.h.b16 %v1752
      %v1998 = vunpack.c.l.b16 %v1753
      %v1999 = vunpack.c.l.b16 %v1754
      %v2000 = vunpack.c.h.b16 %v1754
      %v2001 = vunpack.c.l.b16 %v1755
      %v2002 = vunpack.c.l.b16 %v1756
      %v2003 = vunpack.c.h.b16 %v1756
      %v2004 = vunpack.c.l.b16 %v1757
      %v2005 = vunpack.c.l.b16 %v1758
      %v2006 = vunpack.c.h.b16 %v1758
      %v2007 = vunpack.c.l.b16 %v1759
      %v2008 = vunpack.c.l.b16 %v1760
      %v2009 = vunpack.c.h.b16 %v1760
      %v2010 = vunpack.c.l.b16 %v1761
      %v2011 = vunpack.c.l.b16 %v1762
      %v2012 = vunpack.c.h.b16 %v1762
      %v2013 = vunpack.c.l.b16 %v1763
      %v2014 = vunpack.c.l.b16 %v1764
      %v2015 = vunpack.c.h.b16 %v1764
      %v2016 = vunpack.c.l.b16 %v1765
      %v2017 = vunpack.c.l.b16 %v1766
      %v2018 = vunpack.c.h.b16 %v1766
      %v2019 = vunpack.c.l.b16 %v1767
      %v2020 = vunpack.c.l.b16 %v1768
      %v2021 = vunpack.c.h.b16 %v1768
      %v2022 = vunpack.c.l.b16 %v1769
      %v2023 = vunpack.c.l.b16 %v1770
      %v2024 = vunpack.c.h.b16 %v1770
      %v2025 = vunpack.c.l.b16 %v1771
      %v2026 = vunpack.c.l.b16 %v1772
      %v2027 = vunpack.c.h.b16 %v1772
      %v2028 = vunpack.c.l.b16 %v1773
      %v2029 = vunpack.c.l.b16 %v1822
      %v2030 = vunpack.c.h.b16 %v1822
      %v2031 = vunpack.c.l.b16 %v1823
      %v2032 = vunpack.c.l.b16 %v1824
      %v2033 = vunpack.c.h.b16 %v1824
      %v2034 = vunpack.c.l.b16 %v1825
      %v2035 = vpack.c.b16 %v1942, %v1939
      %v2036 = vpack.c.b16 %v1943, %v1940
      %v2037 = vpack.c.b16 %v1944, %v1941
      %v2038 = vpack.c.b16 %v1948, %v1945
      %v2039 = vpack.c.b16 %v1949, %v1946
      %v2040 = vpack.c.b16 %v1950, %v1947
      %v2041 = vpack.c.b16 %v1954, %v1951
      %v2042 = vpack.c.b16 %v1955, %v1952
      %v2043 = vpack.c.b16 %v1956, %v1953
      %v2044 = vpack.c.b16 %v1960, %v1957
      %v2045 = vpack.c.b16 %v1961, %v1958
      %v2046 = vpack.c.b16 %v1962, %v1959
      %v2047 = vpack.c.b16 %v1966, %v1963
      %v2048 = vpack.c.b16 %v1967, %v1964
      %v2049 = vpack.c.b16 %v1968, %v1965
      %v2050 = vpack.c.b16 %v1972, %v1969
      %v2051 = vpack.c.b16 %v1973, %v1970
      %v2052 = vpack.c.b16 %v1974, %v1971
      %v2053 = vpack.c.b16 %v1978, %v1975
      %v2054 = vpack.c.b16 %v1979, %v1976
      %v2055 = vpack.c.b16 %v1980, %v1977
      %v2056 = vpack.c.b16 %v1984, %v1981
      %v2057 = vpack.c.b16 %v1985, %v1982
      %v2058 = vpack.c.b16 %v1986, %v1983
      %v2059 = vpack.c.b16 %v1990, %v1987
      %v2060 = vpack.c.b16 %v1991, %v1988
      %v2061 = vpack.c.b16 %v1992, %v1989
      %v2062 = vpack.c.b16 %v1996, %v1993
      %v2063 = vpack.c.b16 %v1997, %v1994
      %v2064 = vpack.c.b16 %v1998, %v1995
      %v2065 = vpack.c.b16 %v2002, %v1999
      %v2066 = vpack.c.b16 %v2003, %v2000
      %v2067 = vpack.c.b16 %v2004, %v2001
      %v2068 = vpack.c.b16 %v2008, %v2005
      %v2069 = vpack.c.b16 %v2009, %v2006
      %v2070 = vpack.c.b16 %v2010, %v2007
      %v2071 = vpack.c.b16 %v2014, %v2011
      %v2072 = vpack.c.b16 %v2015, %v2012
      %v2073 = vpack.c.b16 %v2016, %v2013
      %v2074 = vpack.c.b16 %v2020, %v2017
      %v2075 = vpack.c.b16 %v2021, %v2018
      %v2076 = vpack.c.b16 %v2022, %v2019
      %v2077 = vpack.c.b16 %v2026, %v2023
      %v2078 = vpack.c.b16 %v2027, %v2024
      %v2079 = vpack.c.b16 %v2028, %v2025
      %v2080 = vpack.c.b16 %v2032, %v2029
      %v2081 = vpack.c.b16 %v2033, %v2030
      %v2082 = vpack.c.b16 %v2034, %v2031
      %v2179 = vunpack.c.l.b16 %v1827
      %v2180 = vunpack.c.l.b16 %v1828
      %v2181 = vunpack.c.l.b16 %v1829
      %v2182 = vunpack.c.l.b16 %v1830
      %v2183 = vunpack.c.l.b16 %v1831
      %v2184 = vunpack.c.l.b16 %v1832
      %v2185 = vunpack.c.l.b16 %v1833
      %v2186 = vunpack.c.l.b16 %v1834
      %v2187 = vunpack.c.l.b16 %v1835
      %v2188 = vunpack.c.l.b16 %v1836
      %v2189 = vunpack.c.l.b16 %v1837
      %v2190 = vunpack.c.l.b16 %v1838
      %v2191 = vunpack.c.l.b16 %v1839
      %v2192 = vunpack.c.l.b16 %v1840
      %v2193 = vunpack.c.l.b16 %v1841
      %v2194 = vunpack.c.l.b16 %v1842
      %v2195 = vunpack.c.l.b16 %v1843
      %v2196 = vunpack.c.l.b16 %v1844
      %v2197 = vunpack.c.l.b16 %v1845
      %v2198 = vunpack.c.l.b16 %v1846
      %v2199 = vunpack.c.l.b16 %v1847
      %v2200 = vunpack.c.l.b16 %v1848
      %v2201 = vunpack.c.l.b16 %v1849
      %v2202 = vunpack.c.l.b16 %v1850
      %v2203 = vunpack.c.l.b16 %v1851
      %v2204 = vunpack.c.l.b16 %v1852
      %v2205 = vunpack.c.l.b16 %v1853
      %v2206 = vunpack.c.l.b16 %v1854
      %v2207 = vunpack.c.l.b16 %v1855
      %v2208 = vunpack.c.l.b16 %v1856
      %v2209 = vunpack.c.l.b16 %v1857
      %v2210 = vunpack.c.l.b16 %v1858
      %v2211 = vunpack.c.l.b16 %v1859
      %v2212 = vunpack.c.l.b16 %v1860
      %v2213 = vunpack.c.l.b16 %v1861
      %v2214 = vunpack.c.l.b16 %v1862
      %v2215 = vunpack.c.l.b16 %v1863
      %v2216 = vunpack.c.l.b16 %v1864
      %v2217 = vunpack.c.l.b16 %v1865
      %v2218 = vunpack.c.l.b16 %v1866
      %v2219 = vunpack.c.l.b16 %v1867
      %v2220 = vunpack.c.l.b16 %v1868
      %v2221 = vunpack.c.l.b16 %v1869
      %v2222 = vunpack.c.l.b16 %v1870
      %v2223 = vunpack.c.l.b16 %v1871
      %v2224 = vunpack.c.l.b16 %v1872
      %v2225 = vunpack.c.l.b16 %v1873
      %v2226 = vunpack.c.l.b16 %v1874
      %v2227 = vpack.c.b16 %v2180, %v2179
      %v2228 = vpack.c.b16 %v2182, %v2181
      %v2229 = vpack.c.b16 %v2184, %v2183
      %v2230 = vpack.c.b16 %v2186, %v2185
      %v2231 = vpack.c.b16 %v2188, %v2187
      %v2232 = vpack.c.b16 %v2190, %v2189
      %v2233 = vpack.c.b16 %v2192, %v2191
      %v2234 = vpack.c.b16 %v2194, %v2193
      %v2235 = vpack.c.b16 %v2196, %v2195
      %v2236 = vpack.c.b16 %v2198, %v2197
      %v2237 = vpack.c.b16 %v2200, %v2199
      %v2238 = vpack.c.b16 %v2202, %v2201
      %v2239 = vpack.c.b16 %v2204, %v2203
      %v2240 = vpack.c.b16 %v2206, %v2205
      %v2241 = vpack.c.b16 %v2208, %v2207
      %v2242 = vpack.c.b16 %v2210, %v2209
      %v2243 = vpack.c.b16 %v2212, %v2211
      %v2244 = vpack.c.b16 %v2214, %v2213
      %v2245 = vpack.c.b16 %v2216, %v2215
      %v2246 = vpack.c.b16 %v2218, %v2217
      %v2247 = vpack.c.b16 %v2220, %v2219
      %v2248 = vpack.c.b16 %v2222, %v2221
      %v2249 = vpack.c.b16 %v2224, %v2223
      %v2250 = vpack.c.b16 %v2226, %v2225
      %2275 = vmatprep.subr.bf16.mxu0 0
      %2276 = vmatpush1.bf16.msra.mxu0 %v2234
      %2277 = vmatprep.subr.bf16.mxu0 0
      %2278 = vmatpush1.bf16.msra.mxu0 %v2233
      %2279 = vmatprep.subr.bf16.mxu0 0
      %2280 = vmatpush1.bf16.msra.mxu0 %v2232
      %2281 = vmatprep.subr.bf16.mxu0 0
      %2282 = vmatpush1.bf16.msra.mxu0 %v2231
      %2283 = vmatprep.subr.bf16.mxu0 0
      %2284 = vmatpush1.bf16.msra.mxu0 %v2230
      %2285 = vmatprep.subr.bf16.mxu0 0
      %2286 = vmatpush1.bf16.msra.mxu0 %v2229
      %2287 = vmatprep.subr.bf16.mxu0 0
      %2288 = vmatpush1.bf16.msra.mxu0 %v2228
      %2289 = vmatprep.subr.bf16.mxu0 0
      %2290 = vmatpush1.bf16.msra.mxu0 %v2227
      %2291 = vmatprep.subr.bf16.mxu0 0
      %2292 = vmatpush2.bf16.msra.mxu0 %v2242
      %2293 = vmatprep.subr.bf16.mxu0 0
      %2294 = vmatpush2.bf16.msra.mxu0 %v2241
      %2295 = vmatprep.subr.bf16.mxu0 0
      %2296 = vmatpush2.bf16.msra.mxu0 %v2240
      %2297 = vmatprep.subr.bf16.mxu0 0
      %2298 = vmatpush2.bf16.msra.mxu0 %v2239
      %2299 = vmatprep.subr.bf16.mxu0 0
      %2300 = vmatpush2.bf16.msra.mxu0 %v2238
      %2301 = vmatprep.subr.bf16.mxu0 0
      %2302 = vmatpush2.bf16.msra.mxu0 %v2237
      %2303 = vmatprep.subr.bf16.mxu0 0
      %2304 = vmatpush2.bf16.msra.mxu0 %v2236
      %2305 = vmatprep.subr.bf16.mxu0 0
      %2306 = vmatpush2.bf16.msra.mxu0 %v2235
      %2307 = vmatprep.mubr.bf16.mxu0 %v2036
      %2308 = vmatmul.mubr.bf16.gmra.mxu0 %v2035
      %v2309 = vpop.f32.mrf.mxu0
      %v2310 = vadd.f32 0.0, %v2309
      %v2311 = vpop.f32.mrf.mxu0
      %v2312 = vpop.f32.mrf.mxu0
      %v2313 = vadd.f32 0.0, %v2312
      %v2314 = vpop.f32.mrf.mxu0
      %2315 = vmatprep.mubr.bf16.mxu0 %v2039
      %2316 = vmatmul.mubr.bf16.gmra.mxu0 %v2038
      %v2317 = vpop.f32.mrf.mxu0
      %v2318 = vadd.f32 0.0, %v2317
      %v2319 = vpop.f32.mrf.mxu0
      %v2320 = vpop.f32.mrf.mxu0
      %v2321 = vadd.f32 0.0, %v2320
      %v2322 = vpop.f32.mrf.mxu0
      %2323 = vmatprep.mubr.bf16.mxu0 %v2042
      %2324 = vmatmul.mubr.bf16.gmra.mxu0 %v2041
      %v2325 = vpop.f32.mrf.mxu0
      %v2326 = vadd.f32 0.0, %v2325
      %v2327 = vpop.f32.mrf.mxu0
      %v2328 = vpop.f32.mrf.mxu0
      %v2329 = vadd.f32 0.0, %v2328
      %v2330 = vpop.f32.mrf.mxu0
      %2331 = vmatprep.mubr.bf16.mxu0 %v2045
      %2332 = vmatmul.mubr.bf16.gmra.mxu0 %v2044
      %v2333 = vpop.f32.mrf.mxu0
      %v2334 = vadd.f32 0.0, %v2333
      %v2335 = vpop.f32.mrf.mxu0
      %v2336 = vpop.f32.mrf.mxu0
      %v2337 = vadd.f32 0.0, %v2336
      %v2338 = vpop.f32.mrf.mxu0
      %2339 = vmatprep.mubr.bf16.mxu0 %v2048
      %2340 = vmatmul.mubr.bf16.gmra.mxu0 %v2047
      %v2341 = vpop.f32.mrf.mxu0
      %v2342 = vadd.f32 0.0, %v2341
      %v2343 = vpop.f32.mrf.mxu0
      %v2344 = vpop.f32.mrf.mxu0
      %v2345 = vadd.f32 0.0, %v2344
      %v2346 = vpop.f32.mrf.mxu0
      %2347 = vmatprep.mubr.bf16.mxu0 %v2051
      %2348 = vmatmul.mubr.bf16.gmra.mxu0 %v2050
      %v2349 = vpop.f32.mrf.mxu0
      %v2350 = vadd.f32 0.0, %v2349
      %v2351 = vpop.f32.mrf.mxu0
      %v2352 = vpop.f32.mrf.mxu0
      %v2353 = vadd.f32 0.0, %v2352
      %v2354 = vpop.f32.mrf.mxu0
      %2355 = vmatprep.mubr.bf16.mxu0 %v2054
      %2356 = vmatmul.mubr.bf16.gmra.mxu0 %v2053
      %v2357 = vpop.f32.mrf.mxu0
      %v2358 = vadd.f32 0.0, %v2357
      %v2359 = vpop.f32.mrf.mxu0
      %v2360 = vpop.f32.mrf.mxu0
      %v2361 = vadd.f32 0.0, %v2360
      %v2362 = vpop.f32.mrf.mxu0
      %2363 = vmatprep.mubr.bf16.mxu0 %v2057
      %2364 = vmatmul.mubr.bf16.gmra.mxu0 %v2056
      %v2365 = vpop.f32.mrf.mxu0
      %v2366 = vadd.f32 0.0, %v2365
      %v2367 = vpop.f32.mrf.mxu0
      %v2368 = vpop.f32.mrf.mxu0
      %v2369 = vadd.f32 0.0, %v2368
      %v2370 = vpop.f32.mrf.mxu0
      %2371 = vmatprep.mubr.bf16.mxu0 %v2060
      %2372 = vmatmul.mubr.bf16.gmra.mxu0 %v2059
      %v2373 = vpop.f32.mrf.mxu0
      %v2374 = vadd.f32 0.0, %v2373
      %v2375 = vpop.f32.mrf.mxu0
      %v2376 = vpop.f32.mrf.mxu0
      %v2377 = vadd.f32 0.0, %v2376
      %v2378 = vpop.f32.mrf.mxu0
      %2379 = vmatprep.mubr.bf16.mxu0 %v2063
      %2380 = vmatmul.mubr.bf16.gmra.mxu0 %v2062
      %v2381 = vpop.f32.mrf.mxu0
      %v2382 = vadd.f32 0.0, %v2381
      %v2383 = vpop.f32.mrf.mxu0
      %v2384 = vpop.f32.mrf.mxu0
      %v2385 = vadd.f32 0.0, %v2384
      %v2386 = vpop.f32.mrf.mxu0
      %2387 = vmatprep.mubr.bf16.mxu0 %v2066
      %2388 = vmatmul.mubr.bf16.gmra.mxu0 %v2065
      %v2389 = vpop.f32.mrf.mxu0
      %v2390 = vadd.f32 0.0, %v2389
      %v2391 = vpop.f32.mrf.mxu0
      %v2392 = vpop.f32.mrf.mxu0
      %v2393 = vadd.f32 0.0, %v2392
      %v2394 = vpop.f32.mrf.mxu0
      %2395 = vmatprep.mubr.bf16.mxu0 %v2069
      %2396 = vmatmul.mubr.bf16.gmra.mxu0 %v2068
      %v2397 = vpop.f32.mrf.mxu0
      %v2398 = vadd.f32 0.0, %v2397
      %v2399 = vpop.f32.mrf.mxu0
      %v2400 = vpop.f32.mrf.mxu0
      %v2401 = vadd.f32 0.0, %v2400
      %v2402 = vpop.f32.mrf.mxu0
      %2403 = vmatprep.mubr.bf16.mxu0 %v2072
      %2404 = vmatmul.mubr.bf16.gmra.mxu0 %v2071
      %v2405 = vpop.f32.mrf.mxu0
      %v2406 = vadd.f32 0.0, %v2405
      %v2407 = vpop.f32.mrf.mxu0
      %v2408 = vpop.f32.mrf.mxu0
      %v2409 = vadd.f32 0.0, %v2408
      %v2410 = vpop.f32.mrf.mxu0
      %2411 = vmatprep.mubr.bf16.mxu0 %v2075
      %2412 = vmatmul.mubr.bf16.gmra.mxu0 %v2074
      %v2413 = vpop.f32.mrf.mxu0
      %v2414 = vadd.f32 0.0, %v2413
      %v2415 = vpop.f32.mrf.mxu0
      %v2416 = vpop.f32.mrf.mxu0
      %v2417 = vadd.f32 0.0, %v2416
      %v2418 = vpop.f32.mrf.mxu0
      %2419 = vmatprep.mubr.bf16.mxu0 %v2078
      %2420 = vmatmul.mubr.bf16.gmra.mxu0 %v2077
      %v2421 = vpop.f32.mrf.mxu0
      %v2422 = vadd.f32 0.0, %v2421
      %v2423 = vpop.f32.mrf.mxu0
      %v2424 = vpop.f32.mrf.mxu0
      %v2425 = vadd.f32 0.0, %v2424
      %v2426 = vpop.f32.mrf.mxu0
      %2427 = vmatprep.mubr.bf16.mxu0 %v2081
      %2428 = vmatmul.mubr.bf16.gmra.mxu0 %v2080
      %v2429 = vpop.f32.mrf.mxu0
      %v2430 = vadd.f32 0.0, %v2429
      %v2431 = vpop.f32.mrf.mxu0
      %v2432 = vpop.f32.mrf.mxu0
      %v2433 = vadd.f32 0.0, %v2432
      %v2434 = vpop.f32.mrf.mxu0
      %2435 = vdwg.mxu0
      %2436 = vmatprep.subr.bf16.mxu0 0
      %2437 = vmatpush1.bf16.msra.mxu0 %v2250
      %2438 = vmatprep.subr.bf16.mxu0 0
      %2439 = vmatpush1.bf16.msra.mxu0 %v2249
      %2440 = vmatprep.subr.bf16.mxu0 0
      %2441 = vmatpush1.bf16.msra.mxu0 %v2248
      %2442 = vmatprep.subr.bf16.mxu0 0
      %2443 = vmatpush1.bf16.msra.mxu0 %v2247
      %2444 = vmatprep.subr.bf16.mxu0 0
      %2445 = vmatpush1.bf16.msra.mxu0 %v2246
      %2446 = vmatprep.subr.bf16.mxu0 0
      %2447 = vmatpush1.bf16.msra.mxu0 %v2245
      %2448 = vmatprep.subr.bf16.mxu0 0
      %2449 = vmatpush1.bf16.msra.mxu0 %v2244
      %2450 = vmatprep.subr.bf16.mxu0 0
      %2451 = vmatpush1.bf16.msra.mxu0 %v2243
      %2452 = vmatprep.subr.bf16.mxu0 0
      %2453 = vmatpush2.bf16.msra.mxu0 0
      %2454 = vmatprep.subr.bf16.mxu0 0
      %2455 = vmatpush2.bf16.msra.mxu0 0
      %2456 = vmatprep.subr.bf16.mxu0 0
      %2457 = vmatpush2.bf16.msra.mxu0 0
      %2458 = vmatprep.subr.bf16.mxu0 0
      %2459 = vmatpush2.bf16.msra.mxu0 0
      %2460 = vmatprep.subr.bf16.mxu0 0
      %2461 = vmatpush2.bf16.msra.mxu0 0
      %2462 = vmatprep.subr.bf16.mxu0 0
      %2463 = vmatpush2.bf16.msra.mxu0 0
      %2464 = vmatprep.subr.bf16.mxu0 0
      %2465 = vmatpush2.bf16.msra.mxu0 0
      %2466 = vmatprep.subr.bf16.mxu0 0
      %2467 = vmatpush2.bf16.msra.mxu0 0
      %2468 = vmatprep.mubr.bf16.mxu0 0
      %2469 = vmatmul.mubr.bf16.gmra.mxu0 %v2037
      %v2470 = vpop.f32.mrf.mxu0
      %v2471 = vadd.f32 %v2310, %v2470
      %v2472 = vpop.f32.mrf.mxu0
      %v2473 = vpop.f32.mrf.mxu0
      %v2474 = vadd.f32 %v2313, %v2473
      %v2475 = vpop.f32.mrf.mxu0
      %2476 = vmatprep.mubr.bf16.mxu0 0
      %2477 = vmatmul.mubr.bf16.gmra.mxu0 %v2040
      %v2478 = vpop.f32.mrf.mxu0
      %v2479 = vadd.f32 %v2318, %v2478
      %v2480 = vpop.f32.mrf.mxu0
      %v2481 = vpop.f32.mrf.mxu0
      %v2482 = vadd.f32 %v2321, %v2481
      %v2483 = vpop.f32.mrf.mxu0
      %2484 = vmatprep.mubr.bf16.mxu0 0
      %2485 = vmatmul.mubr.bf16.gmra.mxu0 %v2043
      %v2486 = vpop.f32.mrf.mxu0
      %v2487 = vadd.f32 %v2326, %v2486
      %v2488 = vpop.f32.mrf.mxu0
      %v2489 = vpop.f32.mrf.mxu0
      %v2490 = vadd.f32 %v2329, %v2489
      %v2491 = vpop.f32.mrf.mxu0
      %2492 = vmatprep.mubr.bf16.mxu0 0
      %2493 = vmatmul.mubr.bf16.gmra.mxu0 %v2046
      %v2494 = vpop.f32.mrf.mxu0
      %v2495 = vadd.f32 %v2334, %v2494
      %v2496 = vpop.f32.mrf.mxu0
      %v2497 = vpop.f32.mrf.mxu0
      %v2498 = vadd.f32 %v2337, %v2497
      %v2499 = vpop.f32.mrf.mxu0
      %2500 = vmatprep.mubr.bf16.mxu0 0
      %2501 = vmatmul.mubr.bf16.gmra.mxu0 %v2049
      %v2502 = vpop.f32.mrf.mxu0
      %v2503 = vadd.f32 %v2342, %v2502
      %v2504 = vpop.f32.mrf.mxu0
      %v2505 = vpop.f32.mrf.mxu0
      %v2506 = vadd.f32 %v2345, %v2505
      %v2507 = vpop.f32.mrf.mxu0
      %2508 = vmatprep.mubr.bf16.mxu0 0
      %2509 = vmatmul.mubr.bf16.gmra.mxu0 %v2052
      %v2510 = vpop.f32.mrf.mxu0
      %v2511 = vadd.f32 %v2350, %v2510
      %v2512 = vpop.f32.mrf.mxu0
      %v2513 = vpop.f32.mrf.mxu0
      %v2514 = vadd.f32 %v2353, %v2513
      %v2515 = vpop.f32.mrf.mxu0
      %2516 = vmatprep.mubr.bf16.mxu0 0
      %2517 = vmatmul.mubr.bf16.gmra.mxu0 %v2055
      %v2518 = vpop.f32.mrf.mxu0
      %v2519 = vadd.f32 %v2358, %v2518
      %v2520 = vpop.f32.mrf.mxu0
      %v2521 = vpop.f32.mrf.mxu0
      %v2522 = vadd.f32 %v2361, %v2521
      %v2523 = vpop.f32.mrf.mxu0
      %2524 = vmatprep.mubr.bf16.mxu0 0
      %2525 = vmatmul.mubr.bf16.gmra.mxu0 %v2058
      %v2526 = vpop.f32.mrf.mxu0
      %v2527 = vadd.f32 %v2366, %v2526
      %v2528 = vpop.f32.mrf.mxu0
      %v2529 = vpop.f32.mrf.mxu0
      %v2530 = vadd.f32 %v2369, %v2529
      %v2531 = vpop.f32.mrf.mxu0
      %2532 = vmatprep.mubr.bf16.mxu0 0
      %2533 = vmatmul.mubr.bf16.gmra.mxu0 %v2061
      %v2534 = vpop.f32.mrf.mxu0
      %v2535 = vadd.f32 %v2374, %v2534
      %v2536 = vpop.f32.mrf.mxu0
      %v2537 = vpop.f32.mrf.mxu0
      %v2538 = vadd.f32 %v2377, %v2537
      %v2539 = vpop.f32.mrf.mxu0
      %2540 = vmatprep.mubr.bf16.mxu0 0
      %2541 = vmatmul.mubr.bf16.gmra.mxu0 %v2064
      %v2542 = vpop.f32.mrf.mxu0
      %v2543 = vadd.f32 %v2382, %v2542
      %v2544 = vpop.f32.mrf.mxu0
      %v2545 = vpop.f32.mrf.mxu0
      %v2546 = vadd.f32 %v2385, %v2545
      %v2547 = vpop.f32.mrf.mxu0
      %2548 = vmatprep.mubr.bf16.mxu0 0
      %2549 = vmatmul.mubr.bf16.gmra.mxu0 %v2067
      %v2550 = vpop.f32.mrf.mxu0
      %v2551 = vadd.f32 %v2390, %v2550
      %v2552 = vpop.f32.mrf.mxu0
      %v2553 = vpop.f32.mrf.mxu0
      %v2554 = vadd.f32 %v2393, %v2553
      %v2555 = vpop.f32.mrf.mxu0
      %2556 = vmatprep.mubr.bf16.mxu0 0
      %2557 = vmatmul.mubr.bf16.gmra.mxu0 %v2070
      %v2558 = vpop.f32.mrf.mxu0
      %v2559 = vadd.f32 %v2398, %v2558
      %v2560 = vpop.f32.mrf.mxu0
      %v2561 = vpop.f32.mrf.mxu0
      %v2562 = vadd.f32 %v2401, %v2561
      %v2563 = vpop.f32.mrf.mxu0
      %2564 = vmatprep.mubr.bf16.mxu0 0
      %2565 = vmatmul.mubr.bf16.gmra.mxu0 %v2073
      %v2566 = vpop.f32.mrf.mxu0
      %v2567 = vadd.f32 %v2406, %v2566
      %v2568 = vpop.f32.mrf.mxu0
      %v2569 = vpop.f32.mrf.mxu0
      %v2570 = vadd.f32 %v2409, %v2569
      %v2571 = vpop.f32.mrf.mxu0
      %2572 = vmatprep.mubr.bf16.mxu0 0
      %2573 = vmatmul.mubr.bf16.gmra.mxu0 %v2076
      %v2574 = vpop.f32.mrf.mxu0
      %v2575 = vadd.f32 %v2414, %v2574
      %v2576 = vpop.f32.mrf.mxu0
      %v2577 = vpop.f32.mrf.mxu0
      %v2578 = vadd.f32 %v2417, %v2577
      %v2579 = vpop.f32.mrf.mxu0
      %2580 = vmatprep.mubr.bf16.mxu0 0
      %2581 = vmatmul.mubr.bf16.gmra.mxu0 %v2079
      %v2582 = vpop.f32.mrf.mxu0
      %v2583 = vadd.f32 %v2422, %v2582
      %v2584 = vpop.f32.mrf.mxu0
      %v2585 = vpop.f32.mrf.mxu0
      %v2586 = vadd.f32 %v2425, %v2585
      %v2587 = vpop.f32.mrf.mxu0
      %2588 = vmatprep.mubr.bf16.mxu0 0
      %2589 = vmatmul.mubr.bf16.gmra.mxu0 %v2082
      %v2590 = vpop.f32.mrf.mxu0
      %v2591 = vadd.f32 %v2430, %v2590
      %v2592 = vpop.f32.mrf.mxu0
      %v2593 = vpop.f32.mrf.mxu0
      %v2594 = vadd.f32 %v2433, %v2593
      %v2595 = vpop.f32.mrf.mxu0
      %2596 = vdwg.mxu0
      %v2601 = vunpack.c.l.b16 %v1710
      %v2602 = vunpack.c.h.b16 %v1710
      %v2603 = vunpack.c.l.b16 %v1711
      %v2604 = vunpack.c.l.b16 %v1712
      %v2605 = vunpack.c.h.b16 %v1712
      %v2606 = vunpack.c.l.b16 %v1713
      %v2607 = vpack.c.b16 %v2604, %v2601
      %v2608 = vpack.c.b16 %v2605, %v2602
      %v2609 = vpack.c.b16 %v2606, %v2603
      %v2661 = vunpack.c.l.b16 %v1774
      %v2662 = vunpack.c.l.b16 %v1775
      %v2663 = vunpack.c.l.b16 %v1776
      %v2664 = vunpack.c.l.b16 %v1777
      %v2665 = vunpack.c.l.b16 %v1778
      %v2666 = vunpack.c.l.b16 %v1779
      %v2667 = vunpack.c.l.b16 %v1780
      %v2668 = vunpack.c.l.b16 %v1781
      %v2669 = vunpack.c.l.b16 %v1782
      %v2670 = vunpack.c.l.b16 %v1783
      %v2671 = vunpack.c.l.b16 %v1784
      %v2672 = vunpack.c.l.b16 %v1785
      %v2673 = vunpack.c.l.b16 %v1786
      %v2674 = vunpack.c.l.b16 %v1787
      %v2675 = vunpack.c.l.b16 %v1788
      %v2676 = vunpack.c.l.b16 %v1789
      %v2677 = vunpack.c.l.b16 %v1790
      %v2678 = vunpack.c.l.b16 %v1791
      %v2679 = vunpack.c.l.b16 %v1792
      %v2680 = vunpack.c.l.b16 %v1793
      %v2681 = vunpack.c.l.b16 %v1794
      %v2682 = vunpack.c.l.b16 %v1795
      %v2683 = vunpack.c.l.b16 %v1796
      %v2684 = vunpack.c.l.b16 %v1797
      %v2685 = vunpack.c.l.b16 %v1798
      %v2686 = vunpack.c.l.b16 %v1799
      %v2687 = vunpack.c.l.b16 %v1800
      %v2688 = vunpack.c.l.b16 %v1801
      %v2689 = vunpack.c.l.b16 %v1802
      %v2690 = vunpack.c.l.b16 %v1803
      %v2691 = vunpack.c.l.b16 %v1804
      %v2692 = vunpack.c.l.b16 %v1805
      %v2693 = vunpack.c.l.b16 %v1806
      %v2694 = vunpack.c.l.b16 %v1807
      %v2695 = vunpack.c.l.b16 %v1808
      %v2696 = vunpack.c.l.b16 %v1809
      %v2697 = vunpack.c.l.b16 %v1810
      %v2698 = vunpack.c.l.b16 %v1811
      %v2699 = vunpack.c.l.b16 %v1812
      %v2700 = vunpack.c.l.b16 %v1813
      %v2701 = vunpack.c.l.b16 %v1814
      %v2702 = vunpack.c.l.b16 %v1815
      %v2703 = vunpack.c.l.b16 %v1816
      %v2704 = vunpack.c.l.b16 %v1817
      %v2705 = vunpack.c.l.b16 %v1818
      %v2706 = vunpack.c.l.b16 %v1819
      %v2707 = vunpack.c.l.b16 %v1820
      %v2708 = vunpack.c.l.b16 %v1821
      %v2709 = vpack.c.b16 %v2662, %v2661
      %v2710 = vpack.c.b16 %v2664, %v2663
      %v2711 = vpack.c.b16 %v2666, %v2665
      %v2712 = vpack.c.b16 %v2668, %v2667
      %v2713 = vpack.c.b16 %v2670, %v2669
      %v2714 = vpack.c.b16 %v2672, %v2671
      %v2715 = vpack.c.b16 %v2674, %v2673
      %v2716 = vpack.c.b16 %v2676, %v2675
      %v2717 = vpack.c.b16 %v2678, %v2677
      %v2718 = vpack.c.b16 %v2680, %v2679
      %v2719 = vpack.c.b16 %v2682, %v2681
      %v2720 = vpack.c.b16 %v2684, %v2683
      %v2721 = vpack.c.b16 %v2686, %v2685
      %v2722 = vpack.c.b16 %v2688, %v2687
      %v2723 = vpack.c.b16 %v2690, %v2689
      %v2724 = vpack.c.b16 %v2692, %v2691
      %v2725 = vpack.c.b16 %v2694, %v2693
      %v2726 = vpack.c.b16 %v2696, %v2695
      %v2727 = vpack.c.b16 %v2698, %v2697
      %v2728 = vpack.c.b16 %v2700, %v2699
      %v2729 = vpack.c.b16 %v2702, %v2701
      %v2730 = vpack.c.b16 %v2704, %v2703
      %v2731 = vpack.c.b16 %v2706, %v2705
      %v2732 = vpack.c.b16 %v2708, %v2707
      %2757 = vmatprep.subr.bf16.mxu0 0
      %2758 = vmatpush1.bf16.msra.mxu0 %v2716
      %2759 = vmatprep.subr.bf16.mxu0 0
      %2760 = vmatpush1.bf16.msra.mxu0 %v2715
      %2761 = vmatprep.subr.bf16.mxu0 0
      %2762 = vmatpush1.bf16.msra.mxu0 %v2714
      %2763 = vmatprep.subr.bf16.mxu0 0
      %2764 = vmatpush1.bf16.msra.mxu0 %v2713
      %2765 = vmatprep.subr.bf16.mxu0 0
      %2766 = vmatpush1.bf16.msra.mxu0 %v2712
      %2767 = vmatprep.subr.bf16.mxu0 0
      %2768 = vmatpush1.bf16.msra.mxu0 %v2711
      %2769 = vmatprep.subr.bf16.mxu0 0
      %2770 = vmatpush1.bf16.msra.mxu0 %v2710
      %2771 = vmatprep.subr.bf16.mxu0 0
      %2772 = vmatpush1.bf16.msra.mxu0 %v2709
      %2773 = vmatprep.subr.bf16.mxu0 0
      %2774 = vmatpush2.bf16.msra.mxu0 %v2724
      %2775 = vmatprep.subr.bf16.mxu0 0
      %2776 = vmatpush2.bf16.msra.mxu0 %v2723
      %2777 = vmatprep.subr.bf16.mxu0 0
      %2778 = vmatpush2.bf16.msra.mxu0 %v2722
      %2779 = vmatprep.subr.bf16.mxu0 0
      %2780 = vmatpush2.bf16.msra.mxu0 %v2721
      %2781 = vmatprep.subr.bf16.mxu0 0
      %2782 = vmatpush2.bf16.msra.mxu0 %v2720
      %2783 = vmatprep.subr.bf16.mxu0 0
      %2784 = vmatpush2.bf16.msra.mxu0 %v2719
      %2785 = vmatprep.subr.bf16.mxu0 0
      %2786 = vmatpush2.bf16.msra.mxu0 %v2718
      %2787 = vmatprep.subr.bf16.mxu0 0
      %2788 = vmatpush2.bf16.msra.mxu0 %v2717
      %2789 = vmatprep.mubr.bf16.mxu0 %v2608
      %2790 = vmatmul.mubr.bf16.gmra.mxu0 %v2607
      %v2791 = vpop.f32.mrf.mxu0
      %v2792 = vadd.f32 %v2471, %v2791
      %v2793 = vpop.f32.mrf.mxu0
      %v2794 = vpop.f32.mrf.mxu0
      %v2795 = vadd.f32 %v2474, %v2794
      %v2796 = vpop.f32.mrf.mxu0
      %2797 = vmatprep.mubr.bf16.mxu0 %v2036
      %2798 = vmatmul.mubr.bf16.gmra.mxu0 %v2035
      %v2799 = vpop.f32.mrf.mxu0
      %v2800 = vadd.f32 %v2479, %v2799
      %v2801 = vpop.f32.mrf.mxu0
      %v2802 = vpop.f32.mrf.mxu0
      %v2803 = vadd.f32 %v2482, %v2802
      %v2804 = vpop.f32.mrf.mxu0
      %2805 = vmatprep.mubr.bf16.mxu0 %v2039
      %2806 = vmatmul.mubr.bf16.gmra.mxu0 %v2038
      %v2807 = vpop.f32.mrf.mxu0
      %v2808 = vadd.f32 %v2487, %v2807
      %v2809 = vpop.f32.mrf.mxu0
      %v2810 = vpop.f32.mrf.mxu0
      %v2811 = vadd.f32 %v2490, %v2810
      %v2812 = vpop.f32.mrf.mxu0
      %2813 = vmatprep.mubr.bf16.mxu0 %v2042
      %2814 = vmatmul.mubr.bf16.gmra.mxu0 %v2041
      %v2815 = vpop.f32.mrf.mxu0
      %v2816 = vadd.f32 %v2495, %v2815
      %v2817 = vpop.f32.mrf.mxu0
      %v2818 = vpop.f32.mrf.mxu0
      %v2819 = vadd.f32 %v2498, %v2818
      %v2820 = vpop.f32.mrf.mxu0
      %2821 = vmatprep.mubr.bf16.mxu0 %v2045
      %2822 = vmatmul.mubr.bf16.gmra.mxu0 %v2044
      %v2823 = vpop.f32.mrf.mxu0
      %v2824 = vadd.f32 %v2503, %v2823
      %v2825 = vpop.f32.mrf.mxu0
      %v2826 = vpop.f32.mrf.mxu0
      %v2827 = vadd.f32 %v2506, %v2826
      %v2828 = vpop.f32.mrf.mxu0
      %2829 = vmatprep.mubr.bf16.mxu0 %v2048
      %2830 = vmatmul.mubr.bf16.gmra.mxu0 %v2047
      %v2831 = vpop.f32.mrf.mxu0
      %v2832 = vadd.f32 %v2511, %v2831
      %v2833 = vpop.f32.mrf.mxu0
      %v2834 = vpop.f32.mrf.mxu0
      %v2835 = vadd.f32 %v2514, %v2834
      %v2836 = vpop.f32.mrf.mxu0
      %2837 = vmatprep.mubr.bf16.mxu0 %v2051
      %2838 = vmatmul.mubr.bf16.gmra.mxu0 %v2050
      %v2839 = vpop.f32.mrf.mxu0
      %v2840 = vadd.f32 %v2519, %v2839
      %v2841 = vpop.f32.mrf.mxu0
      %v2842 = vpop.f32.mrf.mxu0
      %v2843 = vadd.f32 %v2522, %v2842
      %v2844 = vpop.f32.mrf.mxu0
      %2845 = vmatprep.mubr.bf16.mxu0 %v2054
      %2846 = vmatmul.mubr.bf16.gmra.mxu0 %v2053
      %v2847 = vpop.f32.mrf.mxu0
      %v2848 = vadd.f32 %v2527, %v2847
      %v2849 = vpop.f32.mrf.mxu0
      %v2850 = vpop.f32.mrf.mxu0
      %v2851 = vadd.f32 %v2530, %v2850
      %v2852 = vpop.f32.mrf.mxu0
      %2853 = vmatprep.mubr.bf16.mxu0 %v2057
      %2854 = vmatmul.mubr.bf16.gmra.mxu0 %v2056
      %v2855 = vpop.f32.mrf.mxu0
      %v2856 = vadd.f32 %v2535, %v2855
      %v2857 = vpop.f32.mrf.mxu0
      %v2858 = vpop.f32.mrf.mxu0
      %v2859 = vadd.f32 %v2538, %v2858
      %v2860 = vpop.f32.mrf.mxu0
      %2861 = vmatprep.mubr.bf16.mxu0 %v2060
      %2862 = vmatmul.mubr.bf16.gmra.mxu0 %v2059
      %v2863 = vpop.f32.mrf.mxu0
      %v2864 = vadd.f32 %v2543, %v2863
      %v2865 = vpop.f32.mrf.mxu0
      %v2866 = vpop.f32.mrf.mxu0
      %v2867 = vadd.f32 %v2546, %v2866
      %v2868 = vpop.f32.mrf.mxu0
      %2869 = vmatprep.mubr.bf16.mxu0 %v2063
      %2870 = vmatmul.mubr.bf16.gmra.mxu0 %v2062
      %v2871 = vpop.f32.mrf.mxu0
      %v2872 = vadd.f32 %v2551, %v2871
      %v2873 = vpop.f32.mrf.mxu0
      %v2874 = vpop.f32.mrf.mxu0
      %v2875 = vadd.f32 %v2554, %v2874
      %v2876 = vpop.f32.mrf.mxu0
      %2877 = vmatprep.mubr.bf16.mxu0 %v2066
      %2878 = vmatmul.mubr.bf16.gmra.mxu0 %v2065
      %v2879 = vpop.f32.mrf.mxu0
      %v2880 = vadd.f32 %v2559, %v2879
      %v2881 = vpop.f32.mrf.mxu0
      %v2882 = vpop.f32.mrf.mxu0
      %v2883 = vadd.f32 %v2562, %v2882
      %v2884 = vpop.f32.mrf.mxu0
      %2885 = vmatprep.mubr.bf16.mxu0 %v2069
      %2886 = vmatmul.mubr.bf16.gmra.mxu0 %v2068
      %v2887 = vpop.f32.mrf.mxu0
      %v2888 = vadd.f32 %v2567, %v2887
      %v2889 = vpop.f32.mrf.mxu0
      %v2890 = vpop.f32.mrf.mxu0
      %v2891 = vadd.f32 %v2570, %v2890
      %v2892 = vpop.f32.mrf.mxu0
      %2893 = vmatprep.mubr.bf16.mxu0 %v2072
      %2894 = vmatmul.mubr.bf16.gmra.mxu0 %v2071
      %v2895 = vpop.f32.mrf.mxu0
      %v2896 = vadd.f32 %v2575, %v2895
      %v2897 = vpop.f32.mrf.mxu0
      %v2898 = vpop.f32.mrf.mxu0
      %v2899 = vadd.f32 %v2578, %v2898
      %v2900 = vpop.f32.mrf.mxu0
      %2901 = vmatprep.mubr.bf16.mxu0 %v2075
      %2902 = vmatmul.mubr.bf16.gmra.mxu0 %v2074
      %v2903 = vpop.f32.mrf.mxu0
      %v2904 = vadd.f32 %v2583, %v2903
      %v2905 = vpop.f32.mrf.mxu0
      %v2906 = vpop.f32.mrf.mxu0
      %v2907 = vadd.f32 %v2586, %v2906
      %v2908 = vpop.f32.mrf.mxu0
      %2909 = vmatprep.mubr.bf16.mxu0 %v2078
      %2910 = vmatmul.mubr.bf16.gmra.mxu0 %v2077
      %v2911 = vpop.f32.mrf.mxu0
      %v2912 = vadd.f32 %v2591, %v2911
      %v2913 = vpop.f32.mrf.mxu0
      %v2914 = vpop.f32.mrf.mxu0
      %v2915 = vadd.f32 %v2594, %v2914
      %v2916 = vpop.f32.mrf.mxu0
      %2917 = vdwg.mxu0
      %2918 = vmatprep.subr.bf16.mxu0 0
      %2919 = vmatpush1.bf16.msra.mxu0 %v2732
      %2920 = vmatprep.subr.bf16.mxu0 0
      %2921 = vmatpush1.bf16.msra.mxu0 %v2731
      %2922 = vmatprep.subr.bf16.mxu0 0
      %2923 = vmatpush1.bf16.msra.mxu0 %v2730
      %2924 = vmatprep.subr.bf16.mxu0 0
      %2925 = vmatpush1.bf16.msra.mxu0 %v2729
      %2926 = vmatprep.subr.bf16.mxu0 0
      %2927 = vmatpush1.bf16.msra.mxu0 %v2728
      %2928 = vmatprep.subr.bf16.mxu0 0
      %2929 = vmatpush1.bf16.msra.mxu0 %v2727
      %2930 = vmatprep.subr.bf16.mxu0 0
      %2931 = vmatpush1.bf16.msra.mxu0 %v2726
      %2932 = vmatprep.subr.bf16.mxu0 0
      %2933 = vmatpush1.bf16.msra.mxu0 %v2725
      %2934 = vmatprep.subr.bf16.mxu0 0
      %2935 = vmatpush2.bf16.msra.mxu0 0
      %2936 = vmatprep.subr.bf16.mxu0 0
      %2937 = vmatpush2.bf16.msra.mxu0 0
      %2938 = vmatprep.subr.bf16.mxu0 0
      %2939 = vmatpush2.bf16.msra.mxu0 0
      %2940 = vmatprep.subr.bf16.mxu0 0
      %2941 = vmatpush2.bf16.msra.mxu0 0
      %2942 = vmatprep.subr.bf16.mxu0 0
      %2943 = vmatpush2.bf16.msra.mxu0 0
      %2944 = vmatprep.subr.bf16.mxu0 0
      %2945 = vmatpush2.bf16.msra.mxu0 0
      %2946 = vmatprep.subr.bf16.mxu0 0
      %2947 = vmatpush2.bf16.msra.mxu0 0
      %2948 = vmatprep.subr.bf16.mxu0 0
      %2949 = vmatpush2.bf16.msra.mxu0 0
      %2950 = vmatprep.mubr.bf16.mxu0 0
      %2951 = vmatmul.mubr.bf16.gmra.mxu0 %v2609
      %v2952 = vpop.f32.mrf.mxu0
      %v2953 = vadd.f32 %v2792, %v2952
      %v2954 = vpop.f32.mrf.mxu0
      %v2955 = vpop.f32.mrf.mxu0
      %v2956 = vadd.f32 %v2795, %v2955
      %v2957 = vpop.f32.mrf.mxu0
      %2958 = vmatprep.mubr.bf16.mxu0 0
      %2959 = vmatmul.mubr.bf16.gmra.mxu0 %v2037
      %v2960 = vpop.f32.mrf.mxu0
      %v2961 = vadd.f32 %v2800, %v2960
      %v2962 = vpop.f32.mrf.mxu0
      %v2963 = vpop.f32.mrf.mxu0
      %v2964 = vadd.f32 %v2803, %v2963
      %v2965 = vpop.f32.mrf.mxu0
      %2966 = vmatprep.mubr.bf16.mxu0 0
      %2967 = vmatmul.mubr.bf16.gmra.mxu0 %v2040
      %v2968 = vpop.f32.mrf.mxu0
      %v2969 = vadd.f32 %v2808, %v2968
      %v2970 = vpop.f32.mrf.mxu0
      %v2971 = vpop.f32.mrf.mxu0
      %v2972 = vadd.f32 %v2811, %v2971
      %v2973 = vpop.f32.mrf.mxu0
      %2974 = vmatprep.mubr.bf16.mxu0 0
      %2975 = vmatmul.mubr.bf16.gmra.mxu0 %v2043
      %v2976 = vpop.f32.mrf.mxu0
      %v2977 = vadd.f32 %v2816, %v2976
      %v2978 = vpop.f32.mrf.mxu0
      %v2979 = vpop.f32.mrf.mxu0
      %v2980 = vadd.f32 %v2819, %v2979
      %v2981 = vpop.f32.mrf.mxu0
      %2982 = vmatprep.mubr.bf16.mxu0 0
      %2983 = vmatmul.mubr.bf16.gmra.mxu0 %v2046
      %v2984 = vpop.f32.mrf.mxu0
      %v2985 = vadd.f32 %v2824, %v2984
      %v2986 = vpop.f32.mrf.mxu0
      %v2987 = vpop.f32.mrf.mxu0
      %v2988 = vadd.f32 %v2827, %v2987
      %v2989 = vpop.f32.mrf.mxu0
      %2990 = vmatprep.mubr.bf16.mxu0 0
      %2991 = vmatmul.mubr.bf16.gmra.mxu0 %v2049
      %v2992 = vpop.f32.mrf.mxu0
      %v2993 = vadd.f32 %v2832, %v2992
      %v2994 = vpop.f32.mrf.mxu0
      %v2995 = vpop.f32.mrf.mxu0
      %v2996 = vadd.f32 %v2835, %v2995
      %v2997 = vpop.f32.mrf.mxu0
      %2998 = vmatprep.mubr.bf16.mxu0 0
      %2999 = vmatmul.mubr.bf16.gmra.mxu0 %v2052
      %v3000 = vpop.f32.mrf.mxu0
      %v3001 = vadd.f32 %v2840, %v3000
      %v3002 = vpop.f32.mrf.mxu0
      %v3003 = vpop.f32.mrf.mxu0
      %v3004 = vadd.f32 %v2843, %v3003
      %v3005 = vpop.f32.mrf.mxu0
      %3006 = vmatprep.mubr.bf16.mxu0 0
      %3007 = vmatmul.mubr.bf16.gmra.mxu0 %v2055
      %v3008 = vpop.f32.mrf.mxu0
      %v3009 = vadd.f32 %v2848, %v3008
      %v3010 = vpop.f32.mrf.mxu0
      %v3011 = vpop.f32.mrf.mxu0
      %v3012 = vadd.f32 %v2851, %v3011
      %v3013 = vpop.f32.mrf.mxu0
      %3014 = vmatprep.mubr.bf16.mxu0 0
      %3015 = vmatmul.mubr.bf16.gmra.mxu0 %v2058
      %v3016 = vpop.f32.mrf.mxu0
      %v3017 = vadd.f32 %v2856, %v3016
      %v3018 = vpop.f32.mrf.mxu0
      %v3019 = vpop.f32.mrf.mxu0
      %v3020 = vadd.f32 %v2859, %v3019
      %v3021 = vpop.f32.mrf.mxu0
      %3022 = vmatprep.mubr.bf16.mxu0 0
      %3023 = vmatmul.mubr.bf16.gmra.mxu0 %v2061
      %v3024 = vpop.f32.mrf.mxu0
      %v3025 = vadd.f32 %v2864, %v3024
      %v3026 = vpop.f32.mrf.mxu0
      %v3027 = vpop.f32.mrf.mxu0
      %v3028 = vadd.f32 %v2867, %v3027
      %v3029 = vpop.f32.mrf.mxu0
      %3030 = vmatprep.mubr.bf16.mxu0 0
      %3031 = vmatmul.mubr.bf16.gmra.mxu0 %v2064
      %v3032 = vpop.f32.mrf.mxu0
      %v3033 = vadd.f32 %v2872, %v3032
      %v3034 = vpop.f32.mrf.mxu0
      %v3035 = vpop.f32.mrf.mxu0
      %v3036 = vadd.f32 %v2875, %v3035
      %v3037 = vpop.f32.mrf.mxu0
      %3038 = vmatprep.mubr.bf16.mxu0 0
      %3039 = vmatmul.mubr.bf16.gmra.mxu0 %v2067
      %v3040 = vpop.f32.mrf.mxu0
      %v3041 = vadd.f32 %v2880, %v3040
      %v3042 = vpop.f32.mrf.mxu0
      %v3043 = vpop.f32.mrf.mxu0
      %v3044 = vadd.f32 %v2883, %v3043
      %v3045 = vpop.f32.mrf.mxu0
      %3046 = vmatprep.mubr.bf16.mxu0 0
      %3047 = vmatmul.mubr.bf16.gmra.mxu0 %v2070
      %v3048 = vpop.f32.mrf.mxu0
      %v3049 = vadd.f32 %v2888, %v3048
      %v3050 = vpop.f32.mrf.mxu0
      %v3051 = vpop.f32.mrf.mxu0
      %v3052 = vadd.f32 %v2891, %v3051
      %v3053 = vpop.f32.mrf.mxu0
      %3054 = vmatprep.mubr.bf16.mxu0 0
      %3055 = vmatmul.mubr.bf16.gmra.mxu0 %v2073
      %v3056 = vpop.f32.mrf.mxu0
      %v3057 = vadd.f32 %v2896, %v3056
      %v3058 = vpop.f32.mrf.mxu0
      %v3059 = vpop.f32.mrf.mxu0
      %v3060 = vadd.f32 %v2899, %v3059
      %v3061 = vpop.f32.mrf.mxu0
      %3062 = vmatprep.mubr.bf16.mxu0 0
      %3063 = vmatmul.mubr.bf16.gmra.mxu0 %v2076
      %v3064 = vpop.f32.mrf.mxu0
      %v3065 = vadd.f32 %v2904, %v3064
      %v3066 = vpop.f32.mrf.mxu0
      %v3067 = vpop.f32.mrf.mxu0
      %v3068 = vadd.f32 %v2907, %v3067
      %v3069 = vpop.f32.mrf.mxu0
      %3070 = vmatprep.mubr.bf16.mxu0 0
      %3071 = vmatmul.mubr.bf16.gmra.mxu0 %v2079
      %v3072 = vpop.f32.mrf.mxu0
      %v3073 = vadd.f32 %v2912, %v3072
      %v3074 = vpop.f32.mrf.mxu0
      %v3075 = vpop.f32.mrf.mxu0
      %v3076 = vadd.f32 %v2915, %v3075
      %v3077 = vpop.f32.mrf.mxu0
      %3078 = vdwg.mxu0
      %v3079 = vld [vmem:[#allocation3 + $0x30] sm:$0xff]
      %v3080 = vld [vmem:[#allocation3 + $0x38] sm:$0xf]
      %v3081 = vld [vmem:[#allocation3 + $0x3c] sm:$0xff]
      %v3082 = vld [vmem:[#allocation3 + $0x44] sm:$0xf]
      %v3083 = vld [vmem:[#allocation3 + $0x48] sm:$0xff]
      %v3084 = vld [vmem:[#allocation3 + $0x50] sm:$0xf]
      %v3085 = vld [vmem:[#allocation3 + $0x54] sm:$0xff]
      %v3086 = vld [vmem:[#allocation3 + $0x5c] sm:$0xf]
      %v3087 = vld [vmem:[#allocation3 + $0x60] sm:$0xff]
      %v3088 = vld [vmem:[#allocation3 + $0x68] sm:$0xf]
      %v3089 = vld [vmem:[#allocation3 + $0x6c] sm:$0xff]
      %v3090 = vld [vmem:[#allocation3 + $0x74] sm:$0xf]
      %v3091 = vld [vmem:[#allocation3 + $0x78] sm:$0xff]
      %v3092 = vld [vmem:[#allocation3 + $0x80] sm:$0xf]
      %v3093 = vld [vmem:[#allocation3 + $0x84] sm:$0xff]
      %v3094 = vld [vmem:[#allocation3 + $0x8c] sm:$0xf]
      %v3095 = vld [vmem:[#allocation3 + $0x90] sm:$0xff]
      %v3096 = vld [vmem:[#allocation3 + $0x98] sm:$0xf]
      %v3097 = vld [vmem:[#allocation3 + $0x9c] sm:$0xff]
      %v3098 = vld [vmem:[#allocation3 + $0xa4] sm:$0xf]
      %v3099 = vld [vmem:[#allocation3 + $0xa8] sm:$0xff]
      %v3100 = vld [vmem:[#allocation3 + $0xb0] sm:$0xf]
      %v3101 = vld [vmem:[#allocation3 + $0xb4] sm:$0xff]
      %v3102 = vld [vmem:[#allocation3 + $0xbc] sm:$0xf]
      %v3103 = vld [vmem:[#allocation3 + $0xc0] sm:$0xff]
      %v3104 = vld [vmem:[#allocation3 + $0xc8] sm:$0xf]
      %v3105 = vld [vmem:[#allocation3 + $0xcc] sm:$0xff]
      %v3106 = vld [vmem:[#allocation3 + $0xd4] sm:$0xf]
      %v3107 = vld [vmem:[#allocation3 + $0xd8] sm:$0xff]
      %v3108 = vld [vmem:[#allocation3 + $0xe0] sm:$0xf]
      %v3109 = vld [vmem:[#allocation3 + $0xe4] sm:$0xff]
      %v3110 = vld [vmem:[#allocation3 + $0xec] sm:$0xf]
      %v3111 = vld [vmem:[#allocation3 + $0xf0] sm:$0xff]
      %v3112 = vld [vmem:[#allocation3 + $0xf8] sm:$0xf]
      %v3113 = vld [vmem:[#allocation3 + $0xfc] sm:$0xff]
      %v3114 = vld [vmem:[#allocation3 + $0x104] sm:$0xf]
      %v3115 = vld [vmem:[#allocation3 + $0x108] sm:$0xff]
      %v3116 = vld [vmem:[#allocation3 + $0x110] sm:$0xf]
      %v3117 = vld [vmem:[#allocation3 + $0x114] sm:$0xff]
      %v3118 = vld [vmem:[#allocation3 + $0x11c] sm:$0xf]
      %v3119 = vld [vmem:[#allocation3 + $0x120] sm:$0xff]
      %v3120 = vld [vmem:[#allocation3 + $0x128] sm:$0xf]
      %v3121 = vld [vmem:[#allocation3 + $0x12c] sm:$0xff]
      %v3122 = vld [vmem:[#allocation3 + $0x134] sm:$0xf]
      %v3123 = vld [vmem:[#allocation3 + $0x138] sm:$0xff]
      %v3124 = vld [vmem:[#allocation3 + $0x140] sm:$0xf]
      %v3125 = vld [vmem:[#allocation3 + $0x144] sm:$0xff]
      %v3126 = vld [vmem:[#allocation3 + $0x14c] sm:$0xf]
      %v3127 = vld [vmem:[#allocation3 + $0x150] sm:$0xff]
      %v3128 = vld [vmem:[#allocation3 + $0x158] sm:$0xf]
      %v3129 = vld [vmem:[#allocation3 + $0x15c] sm:$0xff]
      %v3130 = vld [vmem:[#allocation3 + $0x164] sm:$0xf]
      %v3131 = vld [vmem:[#allocation3 + $0x168] sm:$0xff]
      %v3132 = vld [vmem:[#allocation3 + $0x170] sm:$0xf]
      %v3133 = vld [vmem:[#allocation3 + $0x174] sm:$0xff]
      %v3134 = vld [vmem:[#allocation3 + $0x17c] sm:$0xf]
      %v3135 = vld [vmem:[#allocation3 + $0x180] sm:$0xff]
      %v3136 = vld [vmem:[#allocation3 + $0x188] sm:$0xf]
      %v3137 = vld [vmem:[#allocation3 + $0x18c] sm:$0xff]
      %v3138 = vld [vmem:[#allocation3 + $0x194] sm:$0xf]
      %v3139 = vld [vmem:[#allocation3 + $0x198] sm:$0xff]
      %v3140 = vld [vmem:[#allocation3 + $0x1a0] sm:$0xf]
      %v3141 = vld [vmem:[#allocation3 + $0x1a4] sm:$0xff]
      %v3142 = vld [vmem:[#allocation3 + $0x1ac] sm:$0xf]
      %s3143 = scalar_lea.vmem %s3, 384
      %v3144 = vld [vmem:[%s3143] sm:$0xf]
      %v3145 = vld [vmem:[%s3143 + $0x4] sm:$0xf]
      %v3146 = vld [vmem:[%s3143 + $0x8] sm:$0xf]
      %v3147 = vld [vmem:[%s3143 + $0xc] sm:$0xf]
      %v3148 = vld [vmem:[%s3143 + $0x10] sm:$0xf]
      %v3149 = vld [vmem:[%s3143 + $0x14] sm:$0xf]
      %v3150 = vld [vmem:[%s3143 + $0x18] sm:$0xf]
      %v3151 = vld [vmem:[%s3143 + $0x1c] sm:$0xf]
      %v3152 = vld [vmem:[%s3143 + $0x20] sm:$0xf]
      %v3153 = vld [vmem:[%s3143 + $0x24] sm:$0xf]
      %v3154 = vld [vmem:[%s3143 + $0x28] sm:$0xf]
      %v3155 = vld [vmem:[%s3143 + $0x2c] sm:$0xf]
      %v3156 = vld [vmem:[%s3143 + $0x30] sm:$0xf]
      %v3157 = vld [vmem:[%s3143 + $0x34] sm:$0xf]
      %v3158 = vld [vmem:[%s3143 + $0x38] sm:$0xf]
      %v3159 = vld [vmem:[%s3143 + $0x3c] sm:$0xf]
      %v3160 = vld [vmem:[%s3143 + $0x40] sm:$0xf]
      %v3161 = vld [vmem:[%s3143 + $0x44] sm:$0xf]
      %v3162 = vld [vmem:[%s3143 + $0x48] sm:$0xf]
      %v3163 = vld [vmem:[%s3143 + $0x4c] sm:$0xf]
      %v3164 = vld [vmem:[%s3143 + $0x50] sm:$0xf]
      %v3165 = vld [vmem:[%s3143 + $0x54] sm:$0xf]
      %v3166 = vld [vmem:[%s3143 + $0x58] sm:$0xf]
      %v3167 = vld [vmem:[%s3143 + $0x5c] sm:$0xf]
      %v3168 = vld [vmem:[%s3143 + $0x60] sm:$0xf]
      %v3169 = vld [vmem:[%s3143 + $0x64] sm:$0xf]
      %v3170 = vld [vmem:[%s3143 + $0x68] sm:$0xf]
      %v3171 = vld [vmem:[%s3143 + $0x6c] sm:$0xf]
      %v3172 = vld [vmem:[%s3143 + $0x70] sm:$0xf]
      %v3173 = vld [vmem:[%s3143 + $0x74] sm:$0xf]
      %v3174 = vld [vmem:[%s3143 + $0x78] sm:$0xf]
      %v3175 = vld [vmem:[%s3143 + $0x7c] sm:$0xf]
      %v3176 = vld [vmem:[%s3143 + $0x80] sm:$0xf]
      %v3177 = vld [vmem:[%s3143 + $0x84] sm:$0xf]
      %v3178 = vld [vmem:[%s3143 + $0x88] sm:$0xf]
      %v3179 = vld [vmem:[%s3143 + $0x8c] sm:$0xf]
      %v3180 = vld [vmem:[%s3143 + $0x90] sm:$0xf]
      %v3181 = vld [vmem:[%s3143 + $0x94] sm:$0xf]
      %v3182 = vld [vmem:[%s3143 + $0x98] sm:$0xf]
      %v3183 = vld [vmem:[%s3143 + $0x9c] sm:$0xf]
      %v3184 = vld [vmem:[%s3143 + $0xa0] sm:$0xf]
      %v3185 = vld [vmem:[%s3143 + $0xa4] sm:$0xf]
      %v3186 = vld [vmem:[%s3143 + $0xa8] sm:$0xf]
      %v3187 = vld [vmem:[%s3143 + $0xac] sm:$0xf]
      %v3188 = vld [vmem:[%s3143 + $0xb0] sm:$0xf]
      %v3189 = vld [vmem:[%s3143 + $0xb4] sm:$0xf]
      %v3190 = vld [vmem:[%s3143 + $0xb8] sm:$0xf]
      %v3191 = vld [vmem:[%s3143 + $0xbc] sm:$0xf]
      %v3256 = vunpack.c.l.b16 %v3079
      %v3257 = vunpack.c.h.b16 %v3079
      %v3258 = vunpack.c.l.b16 %v3080
      %v3259 = vunpack.c.l.b16 %v3081
      %v3260 = vunpack.c.h.b16 %v3081
      %v3261 = vunpack.c.l.b16 %v3082
      %v3262 = vunpack.c.l.b16 %v3083
      %v3263 = vunpack.c.h.b16 %v3083
      %v3264 = vunpack.c.l.b16 %v3084
      %v3265 = vunpack.c.l.b16 %v3085
      %v3266 = vunpack.c.h.b16 %v3085
      %v3267 = vunpack.c.l.b16 %v3086
      %v3268 = vunpack.c.l.b16 %v3087
      %v3269 = vunpack.c.h.b16 %v3087
      %v3270 = vunpack.c.l.b16 %v3088
      %v3271 = vunpack.c.l.b16 %v3089
      %v3272 = vunpack.c.h.b16 %v3089
      %v3273 = vunpack.c.l.b16 %v3090
      %v3274 = vunpack.c.l.b16 %v3091
      %v3275 = vunpack.c.h.b16 %v3091
      %v3276 = vunpack.c.l.b16 %v3092
      %v3277 = vunpack.c.l.b16 %v3093
      %v3278 = vunpack.c.h.b16 %v3093
      %v3279 = vunpack.c.l.b16 %v3094
      %v3280 = vunpack.c.l.b16 %v3095
      %v3281 = vunpack.c.h.b16 %v3095
      %v3282 = vunpack.c.l.b16 %v3096
      %v3283 = vunpack.c.l.b16 %v3097
      %v3284 = vunpack.c.h.b16 %v3097
      %v3285 = vunpack.c.l.b16 %v3098
      %v3286 = vunpack.c.l.b16 %v3099
      %v3287 = vunpack.c.h.b16 %v3099
      %v3288 = vunpack.c.l.b16 %v3100
      %v3289 = vunpack.c.l.b16 %v3101
      %v3290 = vunpack.c.h.b16 %v3101
      %v3291 = vunpack.c.l.b16 %v3102
      %v3292 = vunpack.c.l.b16 %v3103
      %v3293 = vunpack.c.h.b16 %v3103
      %v3294 = vunpack.c.l.b16 %v3104
      %v3295 = vunpack.c.l.b16 %v3105
      %v3296 = vunpack.c.h.b16 %v3105
      %v3297 = vunpack.c.l.b16 %v3106
      %v3298 = vunpack.c.l.b16 %v3107
      %v3299 = vunpack.c.h.b16 %v3107
      %v3300 = vunpack.c.l.b16 %v3108
      %v3301 = vunpack.c.l.b16 %v3109
      %v3302 = vunpack.c.h.b16 %v3109
      %v3303 = vunpack.c.l.b16 %v3110
      %v3304 = vunpack.c.l.b16 %v3111
      %v3305 = vunpack.c.h.b16 %v3111
      %v3306 = vunpack.c.l.b16 %v3112
      %v3307 = vunpack.c.l.b16 %v3113
      %v3308 = vunpack.c.h.b16 %v3113
      %v3309 = vunpack.c.l.b16 %v3114
      %v3310 = vunpack.c.l.b16 %v3115
      %v3311 = vunpack.c.h.b16 %v3115
      %v3312 = vunpack.c.l.b16 %v3116
      %v3313 = vunpack.c.l.b16 %v3117
      %v3314 = vunpack.c.h.b16 %v3117
      %v3315 = vunpack.c.l.b16 %v3118
      %v3316 = vunpack.c.l.b16 %v3119
      %v3317 = vunpack.c.h.b16 %v3119
      %v3318 = vunpack.c.l.b16 %v3120
      %v3319 = vunpack.c.l.b16 %v3121
      %v3320 = vunpack.c.h.b16 %v3121
      %v3321 = vunpack.c.l.b16 %v3122
      %v3322 = vunpack.c.l.b16 %v3123
      %v3323 = vunpack.c.h.b16 %v3123
      %v3324 = vunpack.c.l.b16 %v3124
      %v3325 = vunpack.c.l.b16 %v3125
      %v3326 = vunpack.c.h.b16 %v3125
      %v3327 = vunpack.c.l.b16 %v3126
      %v3328 = vunpack.c.l.b16 %v3127
      %v3329 = vunpack.c.h.b16 %v3127
      %v3330 = vunpack.c.l.b16 %v3128
      %v3331 = vunpack.c.l.b16 %v3129
      %v3332 = vunpack.c.h.b16 %v3129
      %v3333 = vunpack.c.l.b16 %v3130
      %v3334 = vunpack.c.l.b16 %v3131
      %v3335 = vunpack.c.h.b16 %v3131
      %v3336 = vunpack.c.l.b16 %v3132
      %v3337 = vunpack.c.l.b16 %v3133
      %v3338 = vunpack.c.h.b16 %v3133
      %v3339 = vunpack.c.l.b16 %v3134
      %v3340 = vunpack.c.l.b16 %v3135
      %v3341 = vunpack.c.h.b16 %v3135
      %v3342 = vunpack.c.l.b16 %v3136
      %v3343 = vunpack.c.l.b16 %v3137
      %v3344 = vunpack.c.h.b16 %v3137
      %v3345 = vunpack.c.l.b16 %v3138
      %v3346 = vunpack.c.l.b16 %v3139
      %v3347 = vunpack.c.h.b16 %v3139
      %v3348 = vunpack.c.l.b16 %v3140
      %v3349 = vunpack.c.l.b16 %v3141
      %v3350 = vunpack.c.h.b16 %v3141
      %v3351 = vunpack.c.l.b16 %v3142
      %v3352 = vpack.c.b16 %v3259, %v3256
      %v3353 = vpack.c.b16 %v3260, %v3257
      %v3354 = vpack.c.b16 %v3261, %v3258
      %v3355 = vpack.c.b16 %v3265, %v3262
      %v3356 = vpack.c.b16 %v3266, %v3263
      %v3357 = vpack.c.b16 %v3267, %v3264
      %v3358 = vpack.c.b16 %v3271, %v3268
      %v3359 = vpack.c.b16 %v3272, %v3269
      %v3360 = vpack.c.b16 %v3273, %v3270
      %v3361 = vpack.c.b16 %v3277, %v3274
      %v3362 = vpack.c.b16 %v3278, %v3275
      %v3363 = vpack.c.b16 %v3279, %v3276
      %v3364 = vpack.c.b16 %v3283, %v3280
      %v3365 = vpack.c.b16 %v3284, %v3281
      %v3366 = vpack.c.b16 %v3285, %v3282
      %v3367 = vpack.c.b16 %v3289, %v3286
      %v3368 = vpack.c.b16 %v3290, %v3287
      %v3369 = vpack.c.b16 %v3291, %v3288
      %v3370 = vpack.c.b16 %v3295, %v3292
      %v3371 = vpack.c.b16 %v3296, %v3293
      %v3372 = vpack.c.b16 %v3297, %v3294
      %v3373 = vpack.c.b16 %v3301, %v3298
      %v3374 = vpack.c.b16 %v3302, %v3299
      %v3375 = vpack.c.b16 %v3303, %v3300
      %v3376 = vpack.c.b16 %v3307, %v3304
      %v3377 = vpack.c.b16 %v3308, %v3305
      %v3378 = vpack.c.b16 %v3309, %v3306
      %v3379 = vpack.c.b16 %v3313, %v3310
      %v3380 = vpack.c.b16 %v3314, %v3311
      %v3381 = vpack.c.b16 %v3315, %v3312
      %v3382 = vpack.c.b16 %v3319, %v3316
      %v3383 = vpack.c.b16 %v3320, %v3317
      %v3384 = vpack.c.b16 %v3321, %v3318
      %v3385 = vpack.c.b16 %v3325, %v3322
      %v3386 = vpack.c.b16 %v3326, %v3323
      %v3387 = vpack.c.b16 %v3327, %v3324
      %v3388 = vpack.c.b16 %v3331, %v3328
      %v3389 = vpack.c.b16 %v3332, %v3329
      %v3390 = vpack.c.b16 %v3333, %v3330
      %v3391 = vpack.c.b16 %v3337, %v3334
      %v3392 = vpack.c.b16 %v3338, %v3335
      %v3393 = vpack.c.b16 %v3339, %v3336
      %v3394 = vpack.c.b16 %v3343, %v3340
      %v3395 = vpack.c.b16 %v3344, %v3341
      %v3396 = vpack.c.b16 %v3345, %v3342
      %v3397 = vpack.c.b16 %v3349, %v3346
      %v3398 = vpack.c.b16 %v3350, %v3347
      %v3399 = vpack.c.b16 %v3351, %v3348
      %v3496 = vunpack.c.l.b16 %v3144
      %v3497 = vunpack.c.l.b16 %v3145
      %v3498 = vunpack.c.l.b16 %v3146
      %v3499 = vunpack.c.l.b16 %v3147
      %v3500 = vunpack.c.l.b16 %v3148
      %v3501 = vunpack.c.l.b16 %v3149
      %v3502 = vunpack.c.l.b16 %v3150
      %v3503 = vunpack.c.l.b16 %v3151
      %v3504 = vunpack.c.l.b16 %v3152
      %v3505 = vunpack.c.l.b16 %v3153
      %v3506 = vunpack.c.l.b16 %v3154
      %v3507 = vunpack.c.l.b16 %v3155
      %v3508 = vunpack.c.l.b16 %v3156
      %v3509 = vunpack.c.l.b16 %v3157
      %v3510 = vunpack.c.l.b16 %v3158
      %v3511 = vunpack.c.l.b16 %v3159
      %v3512 = vunpack.c.l.b16 %v3160
      %v3513 = vunpack.c.l.b16 %v3161
      %v3514 = vunpack.c.l.b16 %v3162
      %v3515 = vunpack.c.l.b16 %v3163
      %v3516 = vunpack.c.l.b16 %v3164
      %v3517 = vunpack.c.l.b16 %v3165
      %v3518 = vunpack.c.l.b16 %v3166
      %v3519 = vunpack.c.l.b16 %v3167
      %v3520 = vunpack.c.l.b16 %v3168
      %v3521 = vunpack.c.l.b16 %v3169
      %v3522 = vunpack.c.l.b16 %v3170
      %v3523 = vunpack.c.l.b16 %v3171
      %v3524 = vunpack.c.l.b16 %v3172
      %v3525 = vunpack.c.l.b16 %v3173
      %v3526 = vunpack.c.l.b16 %v3174
      %v3527 = vunpack.c.l.b16 %v3175
      %v3528 = vunpack.c.l.b16 %v3176
      %v3529 = vunpack.c.l.b16 %v3177
      %v3530 = vunpack.c.l.b16 %v3178
      %v3531 = vunpack.c.l.b16 %v3179
      %v3532 = vunpack.c.l.b16 %v3180
      %v3533 = vunpack.c.l.b16 %v3181
      %v3534 = vunpack.c.l.b16 %v3182
      %v3535 = vunpack.c.l.b16 %v3183
      %v3536 = vunpack.c.l.b16 %v3184
      %v3537 = vunpack.c.l.b16 %v3185
      %v3538 = vunpack.c.l.b16 %v3186
      %v3539 = vunpack.c.l.b16 %v3187
      %v3540 = vunpack.c.l.b16 %v3188
      %v3541 = vunpack.c.l.b16 %v3189
      %v3542 = vunpack.c.l.b16 %v3190
      %v3543 = vunpack.c.l.b16 %v3191
      %v3544 = vpack.c.b16 %v3497, %v3496
      %v3545 = vpack.c.b16 %v3499, %v3498
      %v3546 = vpack.c.b16 %v3501, %v3500
      %v3547 = vpack.c.b16 %v3503, %v3502
      %v3548 = vpack.c.b16 %v3505, %v3504
      %v3549 = vpack.c.b16 %v3507, %v3506
      %v3550 = vpack.c.b16 %v3509, %v3508
      %v3551 = vpack.c.b16 %v3511, %v3510
      %v3552 = vpack.c.b16 %v3513, %v3512
      %v3553 = vpack.c.b16 %v3515, %v3514
      %v3554 = vpack.c.b16 %v3517, %v3516
      %v3555 = vpack.c.b16 %v3519, %v3518
      %v3556 = vpack.c.b16 %v3521, %v3520
      %v3557 = vpack.c.b16 %v3523, %v3522
      %v3558 = vpack.c.b16 %v3525, %v3524
      %v3559 = vpack.c.b16 %v3527, %v3526
      %v3560 = vpack.c.b16 %v3529, %v3528
      %v3561 = vpack.c.b16 %v3531, %v3530
      %v3562 = vpack.c.b16 %v3533, %v3532
      %v3563 = vpack.c.b16 %v3535, %v3534
      %v3564 = vpack.c.b16 %v3537, %v3536
      %v3565 = vpack.c.b16 %v3539, %v3538
      %v3566 = vpack.c.b16 %v3541, %v3540
      %v3567 = vpack.c.b16 %v3543, %v3542
      %3592 = vmatprep.subr.bf16.mxu0 0
      %3593 = vmatpush1.bf16.msra.mxu0 %v3551
      %3594 = vmatprep.subr.bf16.mxu0 0
      %3595 = vmatpush1.bf16.msra.mxu0 %v3550
      %3596 = vmatprep.subr.bf16.mxu0 0
      %3597 = vmatpush1.bf16.msra.mxu0 %v3549
      %3598 = vmatprep.subr.bf16.mxu0 0
      %3599 = vmatpush1.bf16.msra.mxu0 %v3548
      %3600 = vmatprep.subr.bf16.mxu0 0
      %3601 = vmatpush1.bf16.msra.mxu0 %v3547
      %3602 = vmatprep.subr.bf16.mxu0 0
      %3603 = vmatpush1.bf16.msra.mxu0 %v3546
      %3604 = vmatprep.subr.bf16.mxu0 0
      %3605 = vmatpush1.bf16.msra.mxu0 %v3545
      %3606 = vmatprep.subr.bf16.mxu0 0
      %3607 = vmatpush1.bf16.msra.mxu0 %v3544
      %3608 = vmatprep.subr.bf16.mxu0 0
      %3609 = vmatpush2.bf16.msra.mxu0 %v3559
      %3610 = vmatprep.subr.bf16.mxu0 0
      %3611 = vmatpush2.bf16.msra.mxu0 %v3558
      %3612 = vmatprep.subr.bf16.mxu0 0
      %3613 = vmatpush2.bf16.msra.mxu0 %v3557
      %3614 = vmatprep.subr.bf16.mxu0 0
      %3615 = vmatpush2.bf16.msra.mxu0 %v3556
      %3616 = vmatprep.subr.bf16.mxu0 0
      %3617 = vmatpush2.bf16.msra.mxu0 %v3555
      %3618 = vmatprep.subr.bf16.mxu0 0
      %3619 = vmatpush2.bf16.msra.mxu0 %v3554
      %3620 = vmatprep.subr.bf16.mxu0 0
      %3621 = vmatpush2.bf16.msra.mxu0 %v3553
      %3622 = vmatprep.subr.bf16.mxu0 0
      %3623 = vmatpush2.bf16.msra.mxu0 %v3552
      %3624 = vmatprep.mubr.bf16.mxu0 %v3353
      %3625 = vmatmul.mubr.bf16.gmra.mxu0 %v3352
      %v3626 = vpop.f32.mrf.mxu0
      %v3627 = vadd.f32 0.0, %v3626
      %v3628 = vpop.f32.mrf.mxu0
      %v3629 = vpop.f32.mrf.mxu0
      %v3630 = vadd.f32 0.0, %v3629
      %v3631 = vpop.f32.mrf.mxu0
      %3632 = vmatprep.mubr.bf16.mxu0 %v3356
      %3633 = vmatmul.mubr.bf16.gmra.mxu0 %v3355
      %v3634 = vpop.f32.mrf.mxu0
      %v3635 = vadd.f32 0.0, %v3634
      %v3636 = vpop.f32.mrf.mxu0
      %v3637 = vpop.f32.mrf.mxu0
      %v3638 = vadd.f32 0.0, %v3637
      %v3639 = vpop.f32.mrf.mxu0
      %3640 = vmatprep.mubr.bf16.mxu0 %v3359
      %3641 = vmatmul.mubr.bf16.gmra.mxu0 %v3358
      %v3642 = vpop.f32.mrf.mxu0
      %v3643 = vadd.f32 0.0, %v3642
      %v3644 = vpop.f32.mrf.mxu0
      %v3645 = vpop.f32.mrf.mxu0
      %v3646 = vadd.f32 0.0, %v3645
      %v3647 = vpop.f32.mrf.mxu0
      %3648 = vmatprep.mubr.bf16.mxu0 %v3362
      %3649 = vmatmul.mubr.bf16.gmra.mxu0 %v3361
      %v3650 = vpop.f32.mrf.mxu0
      %v3651 = vadd.f32 0.0, %v3650
      %v3652 = vpop.f32.mrf.mxu0
      %v3653 = vpop.f32.mrf.mxu0
      %v3654 = vadd.f32 0.0, %v3653
      %v3655 = vpop.f32.mrf.mxu0
      %3656 = vmatprep.mubr.bf16.mxu0 %v3365
      %3657 = vmatmul.mubr.bf16.gmra.mxu0 %v3364
      %v3658 = vpop.f32.mrf.mxu0
      %v3659 = vadd.f32 0.0, %v3658
      %v3660 = vpop.f32.mrf.mxu0
      %v3661 = vpop.f32.mrf.mxu0
      %v3662 = vadd.f32 0.0, %v3661
      %v3663 = vpop.f32.mrf.mxu0
      %3664 = vmatprep.mubr.bf16.mxu0 %v3368
      %3665 = vmatmul.mubr.bf16.gmra.mxu0 %v3367
      %v3666 = vpop.f32.mrf.mxu0
      %v3667 = vadd.f32 0.0, %v3666
      %v3668 = vpop.f32.mrf.mxu0
      %v3669 = vpop.f32.mrf.mxu0
      %v3670 = vadd.f32 0.0, %v3669
      %v3671 = vpop.f32.mrf.mxu0
      %3672 = vmatprep.mubr.bf16.mxu0 %v3371
      %3673 = vmatmul.mubr.bf16.gmra.mxu0 %v3370
      %v3674 = vpop.f32.mrf.mxu0
      %v3675 = vadd.f32 0.0, %v3674
      %v3676 = vpop.f32.mrf.mxu0
      %v3677 = vpop.f32.mrf.mxu0
      %v3678 = vadd.f32 0.0, %v3677
      %v3679 = vpop.f32.mrf.mxu0
      %3680 = vmatprep.mubr.bf16.mxu0 %v3374
      %3681 = vmatmul.mubr.bf16.gmra.mxu0 %v3373
      %v3682 = vpop.f32.mrf.mxu0
      %v3683 = vadd.f32 0.0, %v3682
      %v3684 = vpop.f32.mrf.mxu0
      %v3685 = vpop.f32.mrf.mxu0
      %v3686 = vadd.f32 0.0, %v3685
      %v3687 = vpop.f32.mrf.mxu0
      %3688 = vmatprep.mubr.bf16.mxu0 %v3377
      %3689 = vmatmul.mubr.bf16.gmra.mxu0 %v3376
      %v3690 = vpop.f32.mrf.mxu0
      %v3691 = vadd.f32 0.0, %v3690
      %v3692 = vpop.f32.mrf.mxu0
      %v3693 = vpop.f32.mrf.mxu0
      %v3694 = vadd.f32 0.0, %v3693
      %v3695 = vpop.f32.mrf.mxu0
      %3696 = vmatprep.mubr.bf16.mxu0 %v3380
      %3697 = vmatmul.mubr.bf16.gmra.mxu0 %v3379
      %v3698 = vpop.f32.mrf.mxu0
      %v3699 = vadd.f32 0.0, %v3698
      %v3700 = vpop.f32.mrf.mxu0
      %v3701 = vpop.f32.mrf.mxu0
      %v3702 = vadd.f32 0.0, %v3701
      %v3703 = vpop.f32.mrf.mxu0
      %3704 = vmatprep.mubr.bf16.mxu0 %v3383
      %3705 = vmatmul.mubr.bf16.gmra.mxu0 %v3382
      %v3706 = vpop.f32.mrf.mxu0
      %v3707 = vadd.f32 0.0, %v3706
      %v3708 = vpop.f32.mrf.mxu0
      %v3709 = vpop.f32.mrf.mxu0
      %v3710 = vadd.f32 0.0, %v3709
      %v3711 = vpop.f32.mrf.mxu0
      %3712 = vmatprep.mubr.bf16.mxu0 %v3386
      %3713 = vmatmul.mubr.bf16.gmra.mxu0 %v3385
      %v3714 = vpop.f32.mrf.mxu0
      %v3715 = vadd.f32 0.0, %v3714
      %v3716 = vpop.f32.mrf.mxu0
      %v3717 = vpop.f32.mrf.mxu0
      %v3718 = vadd.f32 0.0, %v3717
      %v3719 = vpop.f32.mrf.mxu0
      %3720 = vmatprep.mubr.bf16.mxu0 %v3389
      %3721 = vmatmul.mubr.bf16.gmra.mxu0 %v3388
      %v3722 = vpop.f32.mrf.mxu0
      %v3723 = vadd.f32 0.0, %v3722
      %v3724 = vpop.f32.mrf.mxu0
      %v3725 = vpop.f32.mrf.mxu0
      %v3726 = vadd.f32 0.0, %v3725
      %v3727 = vpop.f32.mrf.mxu0
      %3728 = vmatprep.mubr.bf16.mxu0 %v3392
      %3729 = vmatmul.mubr.bf16.gmra.mxu0 %v3391
      %v3730 = vpop.f32.mrf.mxu0
      %v3731 = vadd.f32 0.0, %v3730
      %v3732 = vpop.f32.mrf.mxu0
      %v3733 = vpop.f32.mrf.mxu0
      %v3734 = vadd.f32 0.0, %v3733
      %v3735 = vpop.f32.mrf.mxu0
      %3736 = vmatprep.mubr.bf16.mxu0 %v3395
      %3737 = vmatmul.mubr.bf16.gmra.mxu0 %v3394
      %v3738 = vpop.f32.mrf.mxu0
      %v3739 = vadd.f32 0.0, %v3738
      %v3740 = vpop.f32.mrf.mxu0
      %v3741 = vpop.f32.mrf.mxu0
      %v3742 = vadd.f32 0.0, %v3741
      %v3743 = vpop.f32.mrf.mxu0
      %3744 = vmatprep.mubr.bf16.mxu0 %v3398
      %3745 = vmatmul.mubr.bf16.gmra.mxu0 %v3397
      %v3746 = vpop.f32.mrf.mxu0
      %v3747 = vadd.f32 0.0, %v3746
      %v3748 = vpop.f32.mrf.mxu0
      %v3749 = vpop.f32.mrf.mxu0
      %v3750 = vadd.f32 0.0, %v3749
      %v3751 = vpop.f32.mrf.mxu0
      %3752 = vdwg.mxu0
      %3753 = vmatprep.subr.bf16.mxu0 0
      %3754 = vmatpush1.bf16.msra.mxu0 %v3567
      %3755 = vmatprep.subr.bf16.mxu0 0
      %3756 = vmatpush1.bf16.msra.mxu0 %v3566
      %3757 = vmatprep.subr.bf16.mxu0 0
      %3758 = vmatpush1.bf16.msra.mxu0 %v3565
      %3759 = vmatprep.subr.bf16.mxu0 0
      %3760 = vmatpush1.bf16.msra.mxu0 %v3564
      %3761 = vmatprep.subr.bf16.mxu0 0
      %3762 = vmatpush1.bf16.msra.mxu0 %v3563
      %3763 = vmatprep.subr.bf16.mxu0 0
      %3764 = vmatpush1.bf16.msra.mxu0 %v3562
      %3765 = vmatprep.subr.bf16.mxu0 0
      %3766 = vmatpush1.bf16.msra.mxu0 %v3561
      %3767 = vmatprep.subr.bf16.mxu0 0
      %3768 = vmatpush1.bf16.msra.mxu0 %v3560
      %3769 = vmatprep.subr.bf16.mxu0 0
      %3770 = vmatpush2.bf16.msra.mxu0 0
      %3771 = vmatprep.subr.bf16.mxu0 0
      %3772 = vmatpush2.bf16.msra.mxu0 0
      %3773 = vmatprep.subr.bf16.mxu0 0
      %3774 = vmatpush2.bf16.msra.mxu0 0
      %3775 = vmatprep.subr.bf16.mxu0 0
      %3776 = vmatpush2.bf16.msra.mxu0 0
      %3777 = vmatprep.subr.bf16.mxu0 0
      %3778 = vmatpush2.bf16.msra.mxu0 0
      %3779 = vmatprep.subr.bf16.mxu0 0
      %3780 = vmatpush2.bf16.msra.mxu0 0
      %3781 = vmatprep.subr.bf16.mxu0 0
      %3782 = vmatpush2.bf16.msra.mxu0 0
      %3783 = vmatprep.subr.bf16.mxu0 0
      %3784 = vmatpush2.bf16.msra.mxu0 0
      %3785 = vmatprep.mubr.bf16.mxu0 0
      %3786 = vmatmul.mubr.bf16.gmra.mxu0 %v3354
      %v3787 = vpop.f32.mrf.mxu0
      %v3788 = vadd.f32 %v3627, %v3787
      %v3789 = vpop.f32.mrf.mxu0
      %v3790 = vpop.f32.mrf.mxu0
      %v3791 = vadd.f32 %v3630, %v3790
      %v3792 = vpop.f32.mrf.mxu0
      %3793 = vmatprep.mubr.bf16.mxu0 0
      %3794 = vmatmul.mubr.bf16.gmra.mxu0 %v3357
      %v3795 = vpop.f32.mrf.mxu0
      %v3796 = vadd.f32 %v3635, %v3795
      %v3797 = vpop.f32.mrf.mxu0
      %v3798 = vpop.f32.mrf.mxu0
      %v3799 = vadd.f32 %v3638, %v3798
      %v3800 = vpop.f32.mrf.mxu0
      %3801 = vmatprep.mubr.bf16.mxu0 0
      %3802 = vmatmul.mubr.bf16.gmra.mxu0 %v3360
      %v3803 = vpop.f32.mrf.mxu0
      %v3804 = vadd.f32 %v3643, %v3803
      %v3805 = vpop.f32.mrf.mxu0
      %v3806 = vpop.f32.mrf.mxu0
      %v3807 = vadd.f32 %v3646, %v3806
      %v3808 = vpop.f32.mrf.mxu0
      %3809 = vmatprep.mubr.bf16.mxu0 0
      %3810 = vmatmul.mubr.bf16.gmra.mxu0 %v3363
      %v3811 = vpop.f32.mrf.mxu0
      %v3812 = vadd.f32 %v3651, %v3811
      %v3813 = vpop.f32.mrf.mxu0
      %v3814 = vpop.f32.mrf.mxu0
      %v3815 = vadd.f32 %v3654, %v3814
      %v3816 = vpop.f32.mrf.mxu0
      %3817 = vmatprep.mubr.bf16.mxu0 0
      %3818 = vmatmul.mubr.bf16.gmra.mxu0 %v3366
      %v3819 = vpop.f32.mrf.mxu0
      %v3820 = vadd.f32 %v3659, %v3819
      %v3821 = vpop.f32.mrf.mxu0
      %v3822 = vpop.f32.mrf.mxu0
      %v3823 = vadd.f32 %v3662, %v3822
      %v3824 = vpop.f32.mrf.mxu0
      %3825 = vmatprep.mubr.bf16.mxu0 0
      %3826 = vmatmul.mubr.bf16.gmra.mxu0 %v3369
      %v3827 = vpop.f32.mrf.mxu0
      %v3828 = vadd.f32 %v3667, %v3827
      %v3829 = vpop.f32.mrf.mxu0
      %v3830 = vpop.f32.mrf.mxu0
      %v3831 = vadd.f32 %v3670, %v3830
      %v3832 = vpop.f32.mrf.mxu0
      %3833 = vmatprep.mubr.bf16.mxu0 0
      %3834 = vmatmul.mubr.bf16.gmra.mxu0 %v3372
      %v3835 = vpop.f32.mrf.mxu0
      %v3836 = vadd.f32 %v3675, %v3835
      %v3837 = vpop.f32.mrf.mxu0
      %v3838 = vpop.f32.mrf.mxu0
      %v3839 = vadd.f32 %v3678, %v3838
      %v3840 = vpop.f32.mrf.mxu0
      %3841 = vmatprep.mubr.bf16.mxu0 0
      %3842 = vmatmul.mubr.bf16.gmra.mxu0 %v3375
      %v3843 = vpop.f32.mrf.mxu0
      %v3844 = vadd.f32 %v3683, %v3843
      %v3845 = vpop.f32.mrf.mxu0
      %v3846 = vpop.f32.mrf.mxu0
      %v3847 = vadd.f32 %v3686, %v3846
      %v3848 = vpop.f32.mrf.mxu0
      %3849 = vmatprep.mubr.bf16.mxu0 0
      %3850 = vmatmul.mubr.bf16.gmra.mxu0 %v3378
      %v3851 = vpop.f32.mrf.mxu0
      %v3852 = vadd.f32 %v3691, %v3851
      %v3853 = vpop.f32.mrf.mxu0
      %v3854 = vpop.f32.mrf.mxu0
      %v3855 = vadd.f32 %v3694, %v3854
      %v3856 = vpop.f32.mrf.mxu0
      %3857 = vmatprep.mubr.bf16.mxu0 0
      %3858 = vmatmul.mubr.bf16.gmra.mxu0 %v3381
      %v3859 = vpop.f32.mrf.mxu0
      %v3860 = vadd.f32 %v3699, %v3859
      %v3861 = vpop.f32.mrf.mxu0
      %v3862 = vpop.f32.mrf.mxu0
      %v3863 = vadd.f32 %v3702, %v3862
      %v3864 = vpop.f32.mrf.mxu0
      %3865 = vmatprep.mubr.bf16.mxu0 0
      %3866 = vmatmul.mubr.bf16.gmra.mxu0 %v3384
      %v3867 = vpop.f32.mrf.mxu0
      %v3868 = vadd.f32 %v3707, %v3867
      %v3869 = vpop.f32.mrf.mxu0
      %v3870 = vpop.f32.mrf.mxu0
      %v3871 = vadd.f32 %v3710, %v3870
      %v3872 = vpop.f32.mrf.mxu0
      %3873 = vmatprep.mubr.bf16.mxu0 0
      %3874 = vmatmul.mubr.bf16.gmra.mxu0 %v3387
      %v3875 = vpop.f32.mrf.mxu0
      %v3876 = vadd.f32 %v3715, %v3875
      %v3877 = vpop.f32.mrf.mxu0
      %v3878 = vpop.f32.mrf.mxu0
      %v3879 = vadd.f32 %v3718, %v3878
      %v3880 = vpop.f32.mrf.mxu0
      %3881 = vmatprep.mubr.bf16.mxu0 0
      %3882 = vmatmul.mubr.bf16.gmra.mxu0 %v3390
      %v3883 = vpop.f32.mrf.mxu0
      %v3884 = vadd.f32 %v3723, %v3883
      %v3885 = vpop.f32.mrf.mxu0
      %v3886 = vpop.f32.mrf.mxu0
      %v3887 = vadd.f32 %v3726, %v3886
      %v3888 = vpop.f32.mrf.mxu0
      %3889 = vmatprep.mubr.bf16.mxu0 0
      %3890 = vmatmul.mubr.bf16.gmra.mxu0 %v3393
      %v3891 = vpop.f32.mrf.mxu0
      %v3892 = vadd.f32 %v3731, %v3891
      %v3893 = vpop.f32.mrf.mxu0
      %v3894 = vpop.f32.mrf.mxu0
      %v3895 = vadd.f32 %v3734, %v3894
      %v3896 = vpop.f32.mrf.mxu0
      %3897 = vmatprep.mubr.bf16.mxu0 0
      %3898 = vmatmul.mubr.bf16.gmra.mxu0 %v3396
      %v3899 = vpop.f32.mrf.mxu0
      %v3900 = vadd.f32 %v3739, %v3899
      %v3901 = vpop.f32.mrf.mxu0
      %v3902 = vpop.f32.mrf.mxu0
      %v3903 = vadd.f32 %v3742, %v3902
      %v3904 = vpop.f32.mrf.mxu0
      %3905 = vmatprep.mubr.bf16.mxu0 0
      %3906 = vmatmul.mubr.bf16.gmra.mxu0 %v3399
      %v3907 = vpop.f32.mrf.mxu0
      %v3908 = vadd.f32 %v3747, %v3907
      %v3909 = vpop.f32.mrf.mxu0
      %v3910 = vpop.f32.mrf.mxu0
      %v3911 = vadd.f32 %v3750, %v3910
      %v3912 = vpop.f32.mrf.mxu0
      %3913 = vdwg.mxu0
      %v3914 = vadd.f32 %v2953, %v3788
      %v3915 = vadd.f32 %v2956, %v3791
      %v3916 = vadd.f32 %v2961, %v3796
      %v3917 = vadd.f32 %v2964, %v3799
      %v3918 = vadd.f32 %v2969, %v3804
      %v3919 = vadd.f32 %v2972, %v3807
      %v3920 = vadd.f32 %v2977, %v3812
      %v3921 = vadd.f32 %v2980, %v3815
      %v3922 = vadd.f32 %v2985, %v3820
      %v3923 = vadd.f32 %v2988, %v3823
      %v3924 = vadd.f32 %v2993, %v3828
      %v3925 = vadd.f32 %v2996, %v3831
      %v3926 = vadd.f32 %v3001, %v3836
      %v3927 = vadd.f32 %v3004, %v3839
      %v3928 = vadd.f32 %v3009, %v3844
      %v3929 = vadd.f32 %v3012, %v3847
      %v3930 = vadd.f32 %v3017, %v3852
      %v3931 = vadd.f32 %v3020, %v3855
      %v3932 = vadd.f32 %v3025, %v3860
      %v3933 = vadd.f32 %v3028, %v3863
      %v3934 = vadd.f32 %v3033, %v3868
      %v3935 = vadd.f32 %v3036, %v3871
      %v3936 = vadd.f32 %v3041, %v3876
      %v3937 = vadd.f32 %v3044, %v3879
      %v3938 = vadd.f32 %v3049, %v3884
      %v3939 = vadd.f32 %v3052, %v3887
      %v3940 = vadd.f32 %v3057, %v3892
      %v3941 = vadd.f32 %v3060, %v3895
      %v3942 = vadd.f32 %v3065, %v3900
      %v3943 = vadd.f32 %v3068, %v3903
      %v3944 = vadd.f32 %v3073, %v3908
      %v3945 = vadd.f32 %v3076, %v3911
      %v3946 = vpack.c.bf16 %v3915, %v3914
      %v3947 = vpack.c.bf16 %v3917, %v3916
      %v3948 = vpack.c.bf16 %v3919, %v3918
      %v3949 = vpack.c.bf16 %v3921, %v3920
      %v3950 = vpack.c.bf16 %v3923, %v3922
      %v3951 = vpack.c.bf16 %v3925, %v3924
      %v3952 = vpack.c.bf16 %v3927, %v3926
      %v3953 = vpack.c.bf16 %v3929, %v3928
      %v3954 = vpack.c.bf16 %v3931, %v3930
      %v3955 = vpack.c.bf16 %v3933, %v3932
      %v3956 = vpack.c.bf16 %v3935, %v3934
      %v3957 = vpack.c.bf16 %v3937, %v3936
      %v3958 = vpack.c.bf16 %v3939, %v3938
      %v3959 = vpack.c.bf16 %v3941, %v3940
      %v3960 = vpack.c.bf16 %v3943, %v3942
      %v3961 = vpack.c.bf16 %v3945, %v3944
      %v3978 = vunpack.c.l.b16 %v3946
      %v3979 = vunpack.c.h.b16 %v3946
      %v3980 = vunpack.c.l.b16 %v3947
      %v3981 = vunpack.c.h.b16 %v3947
      %v3982 = vunpack.c.l.b16 %v3948
      %v3983 = vunpack.c.h.b16 %v3948
      %v3984 = vunpack.c.l.b16 %v3949
      %v3985 = vunpack.c.h.b16 %v3949
      %v3986 = vunpack.c.l.b16 %v3950
      %v3987 = vunpack.c.h.b16 %v3950
      %v3988 = vunpack.c.l.b16 %v3951
      %v3989 = vunpack.c.h.b16 %v3951
      %v3990 = vunpack.c.l.b16 %v3952
      %v3991 = vunpack.c.h.b16 %v3952
      %v3992 = vunpack.c.l.b16 %v3953
      %v3993 = vunpack.c.h.b16 %v3953
      %v3994 = vunpack.c.l.b16 %v3954
      %v3995 = vunpack.c.h.b16 %v3954
      %v3996 = vunpack.c.l.b16 %v3955
      %v3997 = vunpack.c.h.b16 %v3955
      %v3998 = vunpack.c.l.b16 %v3956
      %v3999 = vunpack.c.h.b16 %v3956
      %v4000 = vunpack.c.l.b16 %v3957
      %v4001 = vunpack.c.h.b16 %v3957
      %v4002 = vunpack.c.l.b16 %v3958
      %v4003 = vunpack.c.h.b16 %v3958
      %v4004 = vunpack.c.l.b16 %v3959
      %v4005 = vunpack.c.h.b16 %v3959
      %v4006 = vunpack.c.l.b16 %v3960
      %v4007 = vunpack.c.h.b16 %v3960
      %v4008 = vunpack.c.l.b16 %v3961
      %v4009 = vunpack.c.h.b16 %v3961
      %v4010 = vpack.c.b16 %v3978, %v3978
      %v4011 = vpack.c.b16 %v3979, %v3979
      %v4012 = vpack.c.b16 %v3980, %v3980
      %v4013 = vpack.c.b16 %v3981, %v3981
      %v4014 = vpack.c.b16 %v3982, %v3982
      %v4015 = vpack.c.b16 %v3983, %v3983
      %v4016 = vpack.c.b16 %v3984, %v3984
      %v4017 = vpack.c.b16 %v3985, %v3985
      %v4018 = vpack.c.b16 %v3986, %v3986
      %v4019 = vpack.c.b16 %v3987, %v3987
      %v4020 = vpack.c.b16 %v3988, %v3988
      %v4021 = vpack.c.b16 %v3989, %v3989
      %v4022 = vpack.c.b16 %v3990, %v3990
      %v4023 = vpack.c.b16 %v3991, %v3991
      %v4024 = vpack.c.b16 %v3992, %v3992
      %v4025 = vpack.c.b16 %v3993, %v3993
      %v4026 = vpack.c.b16 %v3994, %v3994
      %v4027 = vpack.c.b16 %v3995, %v3995
      %v4028 = vpack.c.b16 %v3996, %v3996
      %v4029 = vpack.c.b16 %v3997, %v3997
      %v4030 = vpack.c.b16 %v3998, %v3998
      %v4031 = vpack.c.b16 %v3999, %v3999
      %v4032 = vpack.c.b16 %v4000, %v4000
      %v4033 = vpack.c.b16 %v4001, %v4001
      %v4034 = vpack.c.b16 %v4002, %v4002
      %v4035 = vpack.c.b16 %v4003, %v4003
      %v4036 = vpack.c.b16 %v4004, %v4004
      %v4037 = vpack.c.b16 %v4005, %v4005
      %v4038 = vpack.c.b16 %v4006, %v4006
      %v4039 = vpack.c.b16 %v4007, %v4007
      %v4040 = vpack.c.b16 %v4008, %v4008
      %v4041 = vpack.c.b16 %v4009, %v4009
      %4074 = vst [vmem:[%s231] sm:$0xf] %v4010
      %4075 = vst [vmem:[%s231 + $0x4] sm:$0xf] %v4011
      %4076 = vst [vmem:[%s231 + $0x8] sm:$0xf] %v4012
      %4077 = vst [vmem:[%s231 + $0xc] sm:$0xf] %v4013
      %4078 = vst [vmem:[%s231 + $0x10] sm:$0xf] %v4014
      %4079 = vst [vmem:[%s231 + $0x14] sm:$0xf] %v4015
      %4080 = vst [vmem:[%s231 + $0x18] sm:$0xf] %v4016
      %4081 = vst [vmem:[%s231 + $0x1c] sm:$0xf] %v4017
      %4082 = vst [vmem:[%s231 + $0x20] sm:$0xf] %v4018
      %4083 = vst [vmem:[%s231 + $0x24] sm:$0xf] %v4019
      %4084 = vst [vmem:[%s231 + $0x28] sm:$0xf] %v4020
      %4085 = vst [vmem:[%s231 + $0x2c] sm:$0xf] %v4021
      %4086 = vst [vmem:[%s231 + $0x30] sm:$0xf] %v4022
      %4087 = vst [vmem:[%s231 + $0x34] sm:$0xf] %v4023
      %4088 = vst [vmem:[%s231 + $0x38] sm:$0xf] %v4024
      %4089 = vst [vmem:[%s231 + $0x3c] sm:$0xf] %v4025
      %4090 = vst [vmem:[%s231 + $0x40] sm:$0xf] %v4026
      %4091 = vst [vmem:[%s231 + $0x44] sm:$0xf] %v4027
      %4092 = vst [vmem:[%s231 + $0x48] sm:$0xf] %v4028
      %4093 = vst [vmem:[%s231 + $0x4c] sm:$0xf] %v4029
      %4094 = vst [vmem:[%s231 + $0x50] sm:$0xf] %v4030
      %4095 = vst [vmem:[%s231 + $0x54] sm:$0xf] %v4031
      %4096 = vst [vmem:[%s231 + $0x58] sm:$0xf] %v4032
      %4097 = vst [vmem:[%s231 + $0x5c] sm:$0xf] %v4033
      %4098 = vst [vmem:[%s231 + $0x60] sm:$0xf] %v4034
      %4099 = vst [vmem:[%s231 + $0x64] sm:$0xf] %v4035
      %4100 = vst [vmem:[%s231 + $0x68] sm:$0xf] %v4036
      %4101 = vst [vmem:[%s231 + $0x6c] sm:$0xf] %v4037
      %4102 = vst [vmem:[%s231 + $0x70] sm:$0xf] %v4038
      %4103 = vst [vmem:[%s231 + $0x74] sm:$0xf] %v4039
      %4104 = vst [vmem:[%s231 + $0x78] sm:$0xf] %v4040
      %4105 = vst [vmem:[%s231 + $0x7c] sm:$0xf] %v4041
      %v4106 = vadd.f32 %v3914, %v3915
      %v4107 = vadd.f32 %v4106, %v3916
      %v4108 = vadd.f32 %v4107, %v3917
      %v4109 = vadd.f32 %v4108, %v3918
      %v4110 = vadd.f32 %v4109, %v3919
      %v4111 = vadd.f32 %v4110, %v3920
      %v4112 = vadd.f32 %v4111, %v3921
      %v4113 = vadd.f32 %v4112, %v3922
      %v4114 = vadd.f32 %v4113, %v3923
      %v4115 = vadd.f32 %v4114, %v3924
      %v4116 = vadd.f32 %v4115, %v3925
      %v4117 = vadd.f32 %v4116, %v3926
      %v4118 = vadd.f32 %v4117, %v3927
      %v4119 = vadd.f32 %v4118, %v3928
      %v4120 = vadd.f32 %v4119, %v3929
      %v4121 = vadd.f32 %v4120, %v3930
      %v4122 = vadd.f32 %v4121, %v3931
      %v4123 = vadd.f32 %v4122, %v3932
      %v4124 = vadd.f32 %v4123, %v3933
      %v4125 = vadd.f32 %v4124, %v3934
      %v4126 = vadd.f32 %v4125, %v3935
      %v4127 = vadd.f32 %v4126, %v3936
      %v4128 = vadd.f32 %v4127, %v3937
      %v4129 = vadd.f32 %v4128, %v3938
      %v4130 = vadd.f32 %v4129, %v3939
      %v4131 = vadd.f32 %v4130, %v3940
      %v4132 = vadd.f32 %v4131, %v3941
      %v4133 = vadd.f32 %v4132, %v3942
      %v4134 = vadd.f32 %v4133, %v3943
      %v4135 = vadd.f32 %v4134, %v3944
      %v4136 = vadd.f32 %v4135, %v3945
      %v4137 = vrot.slane %v4136, 4
      %v4138 = vadd.f32 %v4136, %v4137
      %v4139 = vrot.slane %v4138, 2
      %v4140 = vadd.f32 %v4138, %v4139
      %v4141 = vrot.slane %v4140, 1
      %v4142 = vadd.f32 %v4140, %v4141
      %v4143 = vmul.f32 %v3914, %v3914
      %v4144 = vmul.f32 %v3915, %v3915
      %v4145 = vmul.f32 %v3916, %v3916
      %v4146 = vmul.f32 %v3917, %v3917
      %v4147 = vmul.f32 %v3918, %v3918
      %v4148 = vmul.f32 %v3919, %v3919
      %v4149 = vmul.f32 %v3920, %v3920
      %v4150 = vmul.f32 %v3921, %v3921
      %v4151 = vmul.f32 %v3922, %v3922
      %v4152 = vmul.f32 %v3923, %v3923
      %v4153 = vmul.f32 %v3924, %v3924
      %v4154 = vmul.f32 %v3925, %v3925
      %v4155 = vmul.f32 %v3926, %v3926
      %v4156 = vmul.f32 %v3927, %v3927
      %v4157 = vmul.f32 %v3928, %v3928
      %v4158 = vmul.f32 %v3929, %v3929
      %v4159 = vmul.f32 %v3930, %v3930
      %v4160 = vmul.f32 %v3931, %v3931
      %v4161 = vmul.f32 %v3932, %v3932
      %v4162 = vmul.f32 %v3933, %v3933
      %v4163 = vmul.f32 %v3934, %v3934
      %v4164 = vmul.f32 %v3935, %v3935
      %v4165 = vmul.f32 %v3936, %v3936
      %v4166 = vmul.f32 %v3937, %v3937
      %v4167 = vmul.f32 %v3938, %v3938
      %v4168 = vmul.f32 %v3939, %v3939
      %v4169 = vmul.f32 %v3940, %v3940
      %v4170 = vmul.f32 %v3941, %v3941
      %v4171 = vmul.f32 %v3942, %v3942
      %v4172 = vmul.f32 %v3943, %v3943
      %v4173 = vmul.f32 %v3944, %v3944
      %v4174 = vmul.f32 %v3945, %v3945
      %v4175 = vadd.f32 %v4143, %v4144
      %v4176 = vadd.f32 %v4175, %v4145
      %v4177 = vadd.f32 %v4176, %v4146
      %v4178 = vadd.f32 %v4177, %v4147
      %v4179 = vadd.f32 %v4178, %v4148
      %v4180 = vadd.f32 %v4179, %v4149
      %v4181 = vadd.f32 %v4180, %v4150
      %v4182 = vadd.f32 %v4181, %v4151
      %v4183 = vadd.f32 %v4182, %v4152
      %v4184 = vadd.f32 %v4183, %v4153
      %v4185 = vadd.f32 %v4184, %v4154
      %v4186 = vadd.f32 %v4185, %v4155
      %v4187 = vadd.f32 %v4186, %v4156
      %v4188 = vadd.f32 %v4187, %v4157
      %v4189 = vadd.f32 %v4188, %v4158
      %v4190 = vadd.f32 %v4189, %v4159
      %v4191 = vadd.f32 %v4190, %v4160
      %v4192 = vadd.f32 %v4191, %v4161
      %v4193 = vadd.f32 %v4192, %v4162
      %v4194 = vadd.f32 %v4193, %v4163
      %v4195 = vadd.f32 %v4194, %v4164
      %v4196 = vadd.f32 %v4195, %v4165
      %v4197 = vadd.f32 %v4196, %v4166
      %v4198 = vadd.f32 %v4197, %v4167
      %v4199 = vadd.f32 %v4198, %v4168
      %v4200 = vadd.f32 %v4199, %v4169
      %v4201 = vadd.f32 %v4200, %v4170
      %v4202 = vadd.f32 %v4201, %v4171
      %v4203 = vadd.f32 %v4202, %v4172
      %v4204 = vadd.f32 %v4203, %v4173
      %v4205 = vadd.f32 %v4204, %v4174
      %v4206 = vrot.slane %v4205, 4
      %v4207 = vadd.f32 %v4205, %v4206
      %v4208 = vrot.slane %v4207, 2
      %v4209 = vadd.f32 %v4207, %v4208
      %v4210 = vrot.slane %v4209, 1
      %v4211 = vadd.f32 %v4209, %v4210
      %vm4212 = vcmask 1040384
      %v4213 = vsel %vm4212, %v4142, %v4211
      %4214 = vst [vmem:[%s235] sm:$0x3] %v4213
      %p4215 = scmp.lt.s32.totalorder %s17, 1
      %s4216 = scalar_select %p4215, %s17, 1
      %s4217 = smul.addr %s4216, 32
      %s4218 = smul.addr %s4217, 4
      %s4219 = scalar_lea.vmem %s4, %s4218
      %p4220 = scmp.lt.s32.totalorder %s17, 1
      %s4221 = scalar_select %p4220, %s17, 1
      %s4222 = smul.addr %s4221, 2
      %s4223 = scalar_lea.vmem %s5, %s4222
      // Predicated region
      $region37: #{basicblock_forward.4} parent=35 // pred_check
        %p4224 = pneg %p124
      $region38: #{basicblock_forward.4} parent=35 // pred_check_branch
        %4226 = sbr.rel (%p4224) target = $region40
      $region39: #{basicblock_forward.4} parent=35 // pred_region
        _
      $region40: #{basicblock_forward.4} parent=35 // pred_fallthru
        _
      // Predicated region
      $region41: #{basicblock_forward.4} parent=35 // pred_check
        %p4227 = pneg %p150
      $region42: #{basicblock_forward.4} parent=35 // pred_check_branch
        %4229 = sbr.rel (%p4227) target = $region44
      $region43: #{basicblock_forward.4} parent=35 // pred_region
        _
      $region44: #{basicblock_forward.4} parent=35 // pred_fallthru
        _
    $region36: #{basicblock_forward.4} parent=5 // pred_fallthru
      _
    %p4230 = scmp.le.s32.totalorder 2, %s12
    // Predicated region
    $region45: #{basicblock_forward.4} parent=5 // pred_check
      %p4231 = pneg %p4230
    $region46: #{basicblock_forward.4} parent=5 // pred_check_branch
      %4233 = sbr.rel (%p4231) target = $region48
    $region47: #{basicblock_forward.4} parent=5 // pred_region
      %s4234 = ssub.s32 %s12, 2
      // Predicated region
      $region49: #{basicblock_forward.4} parent=47 // pred_check
        %p4235 = pneg %p130
      $region50: #{basicblock_forward.4} parent=47 // pred_check_branch
        %4237 = sbr.rel (%p4235) target = $region52
      $region51: #{basicblock_forward.4} parent=47 // pred_region
        %p4238 = scmp.lt.s32.totalorder %s18, 1
        %s4239 = scalar_select %p4238, %s18, 1
        %s4240 = smul.addr %s4239, 32
        %s4241 = smul.addr %s4240, 4
        %s4242 = scalar_lea.vmem %s4, %s4241
      $region52: #{basicblock_forward.4} parent=47 // pred_fallthru
        _
      // Predicated region
      $region53: #{basicblock_forward.4} parent=47 // pred_check
        %p4243 = pneg %p156
      $region54: #{basicblock_forward.4} parent=47 // pred_check_branch
        %4245 = sbr.rel (%p4243) target = $region56
      $region55: #{basicblock_forward.4} parent=47 // pred_region
        %p4246 = scmp.lt.s32.totalorder %s18, 1
        %s4247 = scalar_select %p4246, %s18, 1
        %s4248 = smul.addr %s4247, 2
        %s4249 = scalar_lea.vmem %s5, %s4248
      $region56: #{basicblock_forward.4} parent=47 // pred_fallthru
        _
    $region48: #{basicblock_forward.4} parent=5 // pred_fallthru
      _
  $region6: #{basicblock_forward.4} parent=0 // loop_footer
    %s16 = sadd.s32 1, %s12
  $region7: #{basicblock_forward.4} parent=0 // loop_footer_branch
    %11 = sbr.rel target = $region3
  $region8: #{basicblock_forward.4} parent=0 // loop_exit
    _

// kernel: basicblock_forward.3
$region0: #{basicblock_forward.3}
  #allocation0 [shape = 'u32[]', space=smem, size = 0x4, offset = 0x4, fixed_abs, tag = 'smem constant byte address 0x4 - core index']
  #allocation1 [shape = 'u32[144,128]{1,0:T(1,128)}', space=vmem, size = 0x12000, scoped, tag = 'internal scratch']
  #allocation2 [shape = 'bf16[16,32,128]{2,1,0:T(8,128)(2,1)}', space=vmem, size = 0x20000, scoped, tag = 'scratch operand']
  #allocation3 [shape = 'bf16[288,384]{1,0:T(8,128)(2,1)}', space=vmem, size = 0x36000, scoped, tag = 'scratch operand']
  %s0 = inlined_call_operand.vmem [shape: f32[2,256,128], index: 0, kind: input, shape index: {}]
  %s1 = inlined_call_operand.vmem [shape: bf16[3,384,128], index: 1, kind: input, shape index: {}]
  %s2 = inlined_call_operand.vmem [shape: bf16[2,256,128], index: 2, kind: output, shape index: {0}]
  %s3 = inlined_call_operand.vmem [shape: f32[2,2,128], index: 3, kind: output, shape index: {1}]
  %4 = xla_tuple %s2, %s3
  %s5 = sld [smem:[#allocation0]]
  $region49: #{basicblock_forward.3} parent=0
    _
  %s7 = ssub.s32 1, %s5
  %s8 = scalar_select 0, %s7, %s5
  loop: start=0, step=1, limit=4
  $region2: #{basicblock_forward.3} parent=0 // loop_pre_header
    _
  $region3: #{basicblock_forward.3} parent=0 // loop_header
    %s10 = sphi 0, %s14
    %p11 = scmp.ge.s32.totalorder %s10, 4
    %s20 = sphi 0, %s22
    %s23 = sphi 0, %s20
    %s24 = sphi 0, %s23
    %s40 = sphi 0, %s24
    %s44 = sphi 0, %s44
    %s46 = sphi 0, %s44
    %s47 = sphi 0, %s46
    %s61 = sphi 0, %s47
    %s67 = sphi 0, %s69
    %s70 = sphi 0, %s67
    %s71 = sphi 0, %s70
    %s87 = sphi 0, %s71
    %s93 = sphi 0, %s95
    %s96 = sphi 0, %s93
    %s97 = sphi 0, %s96
    %s113 = sphi 0, %s97
  $region4: #{basicblock_forward.3} parent=0 // loop_header_branch
    %13 = sbr.rel (%p11) target = $region8
  $region5: #{basicblock_forward.3} parent=0 // loop_body
    %s15 = ssub.s32 %s10, 1
    %s16 = ssub.s32 %s10, 2
    %s17 = sadd.s32 %s10, 1
    %s18 = ssub.s32 %s10, %s17
    %p19 = scmp.eq.s32.totalorder %s18, 0
    %s21 = sadd.s32 %s20, 1
    %s22 = scalar_select %p19, %s20, %s21
    %p25 = pneg %p19
    %p26 = scmp.eq.s32.totalorder %s10, 1
    %p27 = por %p25, %p26
    %p28 = scmp.ne.s32.totalorder %s20, %s23
    %p29 = scmp.eq.s32.totalorder %s10, 0
    %p30 = por %p28, %p29
    %p31 = scmp.ne.s32.totalorder %s20, %s23
    %p32 = scmp.eq.s32.totalorder %s15, 1
    %p33 = por %p31, %p32
    %p34 = scmp.ne.s32.totalorder %s23, %s24
    %p35 = scmp.eq.s32.totalorder %s15, 0
    %p36 = por %p34, %p35
    %p37 = scmp.ne.s32.totalorder %s23, %s24
    %p38 = scmp.eq.s32.totalorder %s16, 1
    %p39 = por %p37, %p38
    %p41 = scmp.ne.s32.totalorder %s24, %s40
    %p42 = scmp.eq.s32.totalorder %s16, 0
    %p43 = por %p41, %p42
    %s45 = sadd.s32 %s44, 1
    %p48 = scmp.eq.s32.totalorder %s10, 1
    %p49 = scmp.ne.s32.totalorder %s44, %s46
    %p50 = scmp.eq.s32.totalorder %s10, 0
    %p51 = por %p49, %p50
    %p52 = scmp.ne.s32.totalorder %s44, %s46
    %p53 = scmp.eq.s32.totalorder %s15, 1
    %p54 = por %p52, %p53
    %p55 = scmp.ne.s32.totalorder %s46, %s47
    %p56 = scmp.eq.s32.totalorder %s15, 0
    %p57 = por %p55, %p56
    %p58 = scmp.ne.s32.totalorder %s46, %s47
    %p59 = scmp.eq.s32.totalorder %s16, 1
    %p60 = por %p58, %p59
    %p62 = scmp.ne.s32.totalorder %s47, %s61
    %p63 = scmp.eq.s32.totalorder %s16, 0
    %p64 = por %p62, %p63
    %s65 = ssub.s32 %s10, %s17
    %p66 = scmp.eq.s32.totalorder %s65, 0
    %s68 = sadd.s32 %s67, 1
    %s69 = scalar_select %p66, %s67, %s68
    %p72 = pneg %p66
    %p73 = scmp.eq.s32.totalorder %s10, 1
    %p74 = por %p72, %p73
    %p75 = scmp.ne.s32.totalorder %s67, %s70
    %p76 = scmp.eq.s32.totalorder %s10, 0
    %p77 = por %p75, %p76
    %p78 = scmp.ne.s32.totalorder %s67, %s70
    %p79 = scmp.eq.s32.totalorder %s15, 1
    %p80 = por %p78, %p79
    %p81 = scmp.ne.s32.totalorder %s70, %s71
    %p82 = scmp.eq.s32.totalorder %s15, 0
    %p83 = por %p81, %p82
    %p84 = scmp.ne.s32.totalorder %s70, %s71
    %p85 = scmp.eq.s32.totalorder %s16, 1
    %p86 = por %p84, %p85
    %p88 = scmp.ne.s32.totalorder %s71, %s87
    %p89 = scmp.eq.s32.totalorder %s16, 0
    %p90 = por %p88, %p89
    %s91 = ssub.s32 %s10, %s17
    %p92 = scmp.eq.s32.totalorder %s91, 0
    %s94 = sadd.s32 %s93, 1
    %s95 = scalar_select %p92, %s93, %s94
    %p98 = pneg %p92
    %p99 = scmp.eq.s32.totalorder %s10, 1
    %p100 = por %p98, %p99
    %p101 = scmp.ne.s32.totalorder %s93, %s96
    %p102 = scmp.eq.s32.totalorder %s10, 0
    %p103 = por %p101, %p102
    %p104 = scmp.ne.s32.totalorder %s93, %s96
    %p105 = scmp.eq.s32.totalorder %s15, 1
    %p106 = por %p104, %p105
    %p107 = scmp.ne.s32.totalorder %s96, %s97
    %p108 = scmp.eq.s32.totalorder %s15, 0
    %p109 = por %p107, %p108
    %p110 = scmp.ne.s32.totalorder %s96, %s97
    %p111 = scmp.eq.s32.totalorder %s16, 1
    %p112 = por %p110, %p111
    %p114 = scmp.ne.s32.totalorder %s97, %s113
    %p115 = scmp.eq.s32.totalorder %s16, 0
    %p116 = por %p114, %p115
    %p117 = scmp.le.s32.totalorder 1, %s10
    %p118 = scmp.lt.s32.totalorder %s10, 3
    %p119 = pnand %p117, %p118
    %p120 = pneg %p119
    // Predicated region
    $region9: #{basicblock_forward.3} parent=5 // pred_check
      _
    $region10: #{basicblock_forward.3} parent=5 // pred_check_branch
      %122 = sbr.rel (%p119) target = $region12
    $region11: #{basicblock_forward.3} parent=5 // pred_region
      %s123 = ssub.s32 %s10, 1
      // Predicated region
      $region13: #{basicblock_forward.3} parent=11 // pred_check
        %p124 = pneg %p57
      $region14: #{basicblock_forward.3} parent=11 // pred_check_branch
        %126 = sbr.rel (%p124) target = $region16
      $region15: #{basicblock_forward.3} parent=11 // pred_region
        _
      $region16: #{basicblock_forward.3} parent=11 // pred_fallthru
        _
    $region12: #{basicblock_forward.3} parent=5 // pred_fallthru
      _
    %p127 = scmp.lt.s32.totalorder %s10, 2
    // Predicated region
    $region17: #{basicblock_forward.3} parent=5 // pred_check
      %p128 = pneg %p127
    $region18: #{basicblock_forward.3} parent=5 // pred_check_branch
      %130 = sbr.rel (%p128) target = $region20
    $region19: #{basicblock_forward.3} parent=5 // pred_region
      // Predicated region
      $region21: #{basicblock_forward.3} parent=19 // pred_check
        %p131 = pneg %p30
      $region22: #{basicblock_forward.3} parent=19 // pred_check_branch
        %133 = sbr.rel (%p131) target = $region24
      $region23: #{basicblock_forward.3} parent=19 // pred_region
        %p134 = scmp.lt.s32.totalorder %s10, 1
        %s135 = scalar_select %p134, %s10, 1
        %s136 = smul.addr %s135, 32
        %s137 = smul.addr %s136, 8
        %s138 = scalar_lea.vmem %s0, %s137
      $region24: #{basicblock_forward.3} parent=19 // pred_fallthru
        _
    $region20: #{basicblock_forward.3} parent=5 // pred_fallthru
      _
    %p139 = scmp.le.s32.totalorder 1, %s10
    %p140 = scmp.lt.s32.totalorder %s10, 3
    %p141 = pnand %p139, %p140
    %p142 = pneg %p141
    // Predicated region
    $region25: #{basicblock_forward.3} parent=5 // pred_check
      _
    $region26: #{basicblock_forward.3} parent=5 // pred_check_branch
      %144 = sbr.rel (%p141) target = $region28
    $region27: #{basicblock_forward.3} parent=5 // pred_region
      %s145 = ssub.s32 %s10, 1
      %p146 = scmp.lt.s32.totalorder %s15, 1
      %s147 = scalar_select %p146, %s15, 1
      %s148 = smul.addr %s147, 32
      %s149 = smul.addr %s148, 8
      %s150 = scalar_lea.vmem %s0, %s149
      %p151 = pneg %p36
      %p152 = pneg %p33
      %p153 = pneg %p57
      %p154 = pneg %p54
      %p155 = pneg %p83
      %p156 = pneg %p80
      %p157 = scmp.lt.s32.totalorder %s15, 1
      %s158 = scalar_select %p157, %s15, 1
      %s159 = smul.addr %s158, 32
      %s160 = smul.addr %s159, 4
      %s161 = scalar_lea.vmem %s2, %s160
      %p162 = pneg %p109
      %p163 = pneg %p106
      %p164 = scmp.lt.s32.totalorder %s15, 1
      %s165 = scalar_select %p164, %s15, 1
      %s166 = smul.addr %s165, 2
      %s167 = scalar_lea.vmem %s3, %s166
      %p168 = scmp.lt.s32.totalorder %s15, 1
      %s169 = scalar_select %p168, %s15, 1
      %s170 = smul.addr %s169, 32
      %s171 = smul.addr %s170, 8
      %s172 = scalar_lea.vmem %s0, %s171
      %p173 = scmp.lt.s32.totalorder %s15, 1
      %s174 = scalar_select %p173, %s15, 1
      %s175 = smul.addr %s174, 32
      %s176 = smul.addr %s175, 4
      %s177 = scalar_lea.vmem %s2, %s176
      %p178 = scmp.lt.s32.totalorder %s15, 1
      %s179 = scalar_select %p178, %s15, 1
      %s180 = smul.addr %s179, 2
      %s181 = scalar_lea.vmem %s3, %s180
      %vm183 = vcmask 1043459
      %vm184 = vsmask.f32 7950
      %vm185 = vmand %vm183, %vm184
      %v186 = vld [vmem:[#allocation2] sm:$0x8]
      %v187 = vsel %vm185, 0, %v186
      %188 = vst [vmem:[#allocation2] sm:$0x8] %v187
      %v189 = vld [vmem:[#allocation2 + $0x10] sm:$0x8]
      %v190 = vsel %vm185, 0, %v189
      %191 = vst [vmem:[#allocation2 + $0x10] sm:$0x8] %v190
      %v192 = vld [vmem:[#allocation2 + $0x20] sm:$0x8]
      %v193 = vsel %vm185, 0, %v192
      %194 = vst [vmem:[#allocation2 + $0x20] sm:$0x8] %v193
      %v195 = vld [vmem:[#allocation2 + $0x30] sm:$0x8]
      %v196 = vsel %vm185, 0, %v195
      %197 = vst [vmem:[#allocation2 + $0x30] sm:$0x8] %v196
      %v198 = vld [vmem:[#allocation2 + $0x40] sm:$0x8]
      %v199 = vsel %vm185, 0, %v198
      %200 = vst [vmem:[#allocation2 + $0x40] sm:$0x8] %v199
      %v201 = vld [vmem:[#allocation2 + $0x50] sm:$0x8]
      %v202 = vsel %vm185, 0, %v201
      %203 = vst [vmem:[#allocation2 + $0x50] sm:$0x8] %v202
      %v204 = vld [vmem:[#allocation2 + $0x60] sm:$0x8]
      %v205 = vsel %vm185, 0, %v204
      %206 = vst [vmem:[#allocation2 + $0x60] sm:$0x8] %v205
      %v207 = vld [vmem:[#allocation2 + $0x70] sm:$0x8]
      %v208 = vsel %vm185, 0, %v207
      %209 = vst [vmem:[#allocation2 + $0x70] sm:$0x8] %v208
      %v210 = vld [vmem:[#allocation2 + $0x80] sm:$0x8]
      %v211 = vsel %vm185, 0, %v210
      %212 = vst [vmem:[#allocation2 + $0x80] sm:$0x8] %v211
      %v213 = vld [vmem:[#allocation2 + $0x90] sm:$0x8]
      %v214 = vsel %vm185, 0, %v213
      %215 = vst [vmem:[#allocation2 + $0x90] sm:$0x8] %v214
      %v216 = vld [vmem:[#allocation2 + $0xa0] sm:$0x8]
      %v217 = vsel %vm185, 0, %v216
      %218 = vst [vmem:[#allocation2 + $0xa0] sm:$0x8] %v217
      %v219 = vld [vmem:[#allocation2 + $0xb0] sm:$0x8]
      %v220 = vsel %vm185, 0, %v219
      %221 = vst [vmem:[#allocation2 + $0xb0] sm:$0x8] %v220
      %v222 = vld [vmem:[#allocation2 + $0xc0] sm:$0x8]
      %v223 = vsel %vm185, 0, %v222
      %224 = vst [vmem:[#allocation2 + $0xc0] sm:$0x8] %v223
      %v225 = vld [vmem:[#allocation2 + $0xd0] sm:$0x8]
      %v226 = vsel %vm185, 0, %v225
      %227 = vst [vmem:[#allocation2 + $0xd0] sm:$0x8] %v226
      %v228 = vld [vmem:[#allocation2 + $0xe0] sm:$0x8]
      %v229 = vsel %vm185, 0, %v228
      %230 = vst [vmem:[#allocation2 + $0xe0] sm:$0x8] %v229
      %v231 = vld [vmem:[#allocation2 + $0xf0] sm:$0x8]
      %v232 = vsel %vm185, 0, %v231
      %233 = vst [vmem:[#allocation2 + $0xf0] sm:$0x8] %v232
      %vm234 = vcmask 1040384
      %vm235 = vsmask.f32 256
      %vm236 = vmand %vm234, %vm235
      %v237 = vld [vmem:[#allocation2 + $0xc] sm:$0x1]
      %v238 = vsel %vm236, 0, %v237
      %239 = vst [vmem:[#allocation2 + $0xc] sm:$0x1] %v238
      %v240 = vld [vmem:[#allocation2 + $0x1c] sm:$0x1]
      %v241 = vsel %vm236, 0, %v240
      %242 = vst [vmem:[#allocation2 + $0x1c] sm:$0x1] %v241
      %v243 = vld [vmem:[#allocation2 + $0x2c] sm:$0x1]
      %v244 = vsel %vm236, 0, %v243
      %245 = vst [vmem:[#allocation2 + $0x2c] sm:$0x1] %v244
      %v246 = vld [vmem:[#allocation2 + $0x3c] sm:$0x1]
      %v247 = vsel %vm236, 0, %v246
      %248 = vst [vmem:[#allocation2 + $0x3c] sm:$0x1] %v247
      %v249 = vld [vmem:[#allocation2 + $0x4c] sm:$0x1]
      %v250 = vsel %vm236, 0, %v249
      %251 = vst [vmem:[#allocation2 + $0x4c] sm:$0x1] %v250
      %v252 = vld [vmem:[#allocation2 + $0x5c] sm:$0x1]
      %v253 = vsel %vm236, 0, %v252
      %254 = vst [vmem:[#allocation2 + $0x5c] sm:$0x1] %v253
      %v255 = vld [vmem:[#allocation2 + $0x6c] sm:$0x1]
      %v256 = vsel %vm236, 0, %v255
      %257 = vst [vmem:[#allocation2 + $0x6c] sm:$0x1] %v256
      %v258 = vld [vmem:[#allocation2 + $0x7c] sm:$0x1]
      %v259 = vsel %vm236, 0, %v258
      %260 = vst [vmem:[#allocation2 + $0x7c] sm:$0x1] %v259
      %v261 = vld [vmem:[#allocation2 + $0x8c] sm:$0x1]
      %v262 = vsel %vm236, 0, %v261
      %263 = vst [vmem:[#allocation2 + $0x8c] sm:$0x1] %v262
      %v264 = vld [vmem:[#allocation2 + $0x9c] sm:$0x1]
      %v265 = vsel %vm236, 0, %v264
      %266 = vst [vmem:[#allocation2 + $0x9c] sm:$0x1] %v265
      %v267 = vld [vmem:[#allocation2 + $0xac] sm:$0x1]
      %v268 = vsel %vm236, 0, %v267
      %269 = vst [vmem:[#allocation2 + $0xac] sm:$0x1] %v268
      %v270 = vld [vmem:[#allocation2 + $0xbc] sm:$0x1]
      %v271 = vsel %vm236, 0, %v270
      %272 = vst [vmem:[#allocation2 + $0xbc] sm:$0x1] %v271
      %v273 = vld [vmem:[#allocation2 + $0xcc] sm:$0x1]
      %v274 = vsel %vm236, 0, %v273
      %275 = vst [vmem:[#allocation2 + $0xcc] sm:$0x1] %v274
      %v276 = vld [vmem:[#allocation2 + $0xdc] sm:$0x1]
      %v277 = vsel %vm236, 0, %v276
      %278 = vst [vmem:[#allocation2 + $0xdc] sm:$0x1] %v277
      %v279 = vld [vmem:[#allocation2 + $0xec] sm:$0x1]
      %v280 = vsel %vm236, 0, %v279
      %281 = vst [vmem:[#allocation2 + $0xec] sm:$0x1] %v280
      %v282 = vld [vmem:[#allocation2 + $0xfc] sm:$0x1]
      %v283 = vsel %vm236, 0, %v282
      %284 = vst [vmem:[#allocation2 + $0xfc] sm:$0x1] %v283
      %285 = vst [vmem:[#allocation3] sm:$0xff] 0
      %286 = vst [vmem:[#allocation3 + $0x8] sm:$0xf] 0
      %287 = vst [vmem:[#allocation3 + $0xc] sm:$0xff] 0
      %288 = vst [vmem:[#allocation3 + $0x14] sm:$0xf] 0
      %289 = vst [vmem:[#allocation3 + $0x198] sm:$0xff] 0
      %290 = vst [vmem:[#allocation3 + $0x1a0] sm:$0xf] 0
      %291 = vst [vmem:[#allocation3 + $0x1a4] sm:$0xff] 0
      %292 = vst [vmem:[#allocation3 + $0x1ac] sm:$0xf] 0
      %v293 = vld [vmem:[%s172] sm:$0xff]
      %v294 = vld [vmem:[%s172 + $0x8] sm:$0xff]
      %v295 = vld [vmem:[%s172 + $0x10] sm:$0xff]
      %v296 = vld [vmem:[%s172 + $0x18] sm:$0xff]
      %v297 = vld [vmem:[%s172 + $0x20] sm:$0xff]
      %v298 = vld [vmem:[%s172 + $0x28] sm:$0xff]
      %v299 = vld [vmem:[%s172 + $0x30] sm:$0xff]
      %v300 = vld [vmem:[%s172 + $0x38] sm:$0xff]
      %v301 = vld [vmem:[%s172 + $0x40] sm:$0xff]
      %v302 = vld [vmem:[%s172 + $0x48] sm:$0xff]
      %v303 = vld [vmem:[%s172 + $0x50] sm:$0xff]
      %v304 = vld [vmem:[%s172 + $0x58] sm:$0xff]
      %v305 = vld [vmem:[%s172 + $0x60] sm:$0xff]
      %v306 = vld [vmem:[%s172 + $0x68] sm:$0xff]
      %v307 = vld [vmem:[%s172 + $0x70] sm:$0xff]
      %v308 = vld [vmem:[%s172 + $0x78] sm:$0xff]
      %v309 = vld [vmem:[%s172 + $0x80] sm:$0xff]
      %v310 = vld [vmem:[%s172 + $0x88] sm:$0xff]
      %v311 = vld [vmem:[%s172 + $0x90] sm:$0xff]
      %v312 = vld [vmem:[%s172 + $0x98] sm:$0xff]
      %v313 = vld [vmem:[%s172 + $0xa0] sm:$0xff]
      %v314 = vld [vmem:[%s172 + $0xa8] sm:$0xff]
      %v315 = vld [vmem:[%s172 + $0xb0] sm:$0xff]
      %v316 = vld [vmem:[%s172 + $0xb8] sm:$0xff]
      %v317 = vld [vmem:[%s172 + $0xc0] sm:$0xff]
      %v318 = vld [vmem:[%s172 + $0xc8] sm:$0xff]
      %v319 = vld [vmem:[%s172 + $0xd0] sm:$0xff]
      %v320 = vld [vmem:[%s172 + $0xd8] sm:$0xff]
      %v321 = vld [vmem:[%s172 + $0xe0] sm:$0xff]
      %v322 = vld [vmem:[%s172 + $0xe8] sm:$0xff]
      %v323 = vld [vmem:[%s172 + $0xf0] sm:$0xff]
      %v324 = vld [vmem:[%s172 + $0xf8] sm:$0xff]
      %v325 = vpack.c.bf16 %v294, %v293
      %v326 = vpack.c.bf16 %v296, %v295
      %v327 = vpack.c.bf16 %v298, %v297
      %v328 = vpack.c.bf16 %v300, %v299
      %v329 = vpack.c.bf16 %v302, %v301
      %v330 = vpack.c.bf16 %v304, %v303
      %v331 = vpack.c.bf16 %v306, %v305
      %v332 = vpack.c.bf16 %v308, %v307
      %v333 = vpack.c.bf16 %v310, %v309
      %v334 = vpack.c.bf16 %v312, %v311
      %v335 = vpack.c.bf16 %v314, %v313
      %v336 = vpack.c.bf16 %v316, %v315
      %v337 = vpack.c.bf16 %v318, %v317
      %v338 = vpack.c.bf16 %v320, %v319
      %v339 = vpack.c.bf16 %v322, %v321
      %v340 = vpack.c.bf16 %v324, %v323
      %v357 = vunpack.c.l.b16 %v325
      %v358 = vunpack.c.h.b16 %v325
      %v359 = vunpack.c.l.b16 %v326
      %v360 = vunpack.c.h.b16 %v326
      %v361 = vunpack.c.l.b16 %v327
      %v362 = vunpack.c.h.b16 %v327
      %v363 = vunpack.c.l.b16 %v328
      %v364 = vunpack.c.h.b16 %v328
      %v365 = vunpack.c.l.b16 %v329
      %v366 = vunpack.c.h.b16 %v329
      %v367 = vunpack.c.l.b16 %v330
      %v368 = vunpack.c.h.b16 %v330
      %v369 = vunpack.c.l.b16 %v331
      %v370 = vunpack.c.h.b16 %v331
      %v371 = vunpack.c.l.b16 %v332
      %v372 = vunpack.c.h.b16 %v332
      %v373 = vunpack.c.l.b16 %v333
      %v374 = vunpack.c.h.b16 %v333
      %v375 = vunpack.c.l.b16 %v334
      %v376 = vunpack.c.h.b16 %v334
      %v377 = vunpack.c.l.b16 %v335
      %v378 = vunpack.c.h.b16 %v335
      %v379 = vunpack.c.l.b16 %v336
      %v380 = vunpack.c.h.b16 %v336
      %v381 = vunpack.c.l.b16 %v337
      %v382 = vunpack.c.h.b16 %v337
      %v383 = vunpack.c.l.b16 %v338
      %v384 = vunpack.c.h.b16 %v338
      %v385 = vunpack.c.l.b16 %v339
      %v386 = vunpack.c.h.b16 %v339
      %v387 = vunpack.c.l.b16 %v340
      %v388 = vunpack.c.h.b16 %v340
      %v389 = vpack.c.b16 %v357, %v357
      %v390 = vpack.c.b16 %v358, %v358
      %v391 = vpack.c.b16 %v359, %v359
      %v392 = vpack.c.b16 %v360, %v360
      %v393 = vpack.c.b16 %v361, %v361
      %v394 = vpack.c.b16 %v362, %v362
      %v395 = vpack.c.b16 %v363, %v363
      %v396 = vpack.c.b16 %v364, %v364
      %v397 = vpack.c.b16 %v365, %v365
      %v398 = vpack.c.b16 %v366, %v366
      %v399 = vpack.c.b16 %v367, %v367
      %v400 = vpack.c.b16 %v368, %v368
      %v401 = vpack.c.b16 %v369, %v369
      %v402 = vpack.c.b16 %v370, %v370
      %v403 = vpack.c.b16 %v371, %v371
      %v404 = vpack.c.b16 %v372, %v372
      %v405 = vpack.c.b16 %v373, %v373
      %v406 = vpack.c.b16 %v374, %v374
      %v407 = vpack.c.b16 %v375, %v375
      %v408 = vpack.c.b16 %v376, %v376
      %v409 = vpack.c.b16 %v377, %v377
      %v410 = vpack.c.b16 %v378, %v378
      %v411 = vpack.c.b16 %v379, %v379
      %v412 = vpack.c.b16 %v380, %v380
      %v413 = vpack.c.b16 %v381, %v381
      %v414 = vpack.c.b16 %v382, %v382
      %v415 = vpack.c.b16 %v383, %v383
      %v416 = vpack.c.b16 %v384, %v384
      %v417 = vpack.c.b16 %v385, %v385
      %v418 = vpack.c.b16 %v386, %v386
      %v419 = vpack.c.b16 %v387, %v387
      %v420 = vpack.c.b16 %v388, %v388
      %453 = vst [vmem:[#allocation2 + $0x4] sm:$0xf] %v389
      %454 = vst [vmem:[#allocation2 + $0x8] sm:$0xf] %v390
      %455 = vst [vmem:[#allocation2 + $0x14] sm:$0xf] %v391
      %456 = vst [vmem:[#allocation2 + $0x18] sm:$0xf] %v392
      %457 = vst [vmem:[#allocation2 + $0x24] sm:$0xf] %v393
      %458 = vst [vmem:[#allocation2 + $0x28] sm:$0xf] %v394
      %459 = vst [vmem:[#allocation2 + $0x34] sm:$0xf] %v395
      %460 = vst [vmem:[#allocation2 + $0x38] sm:$0xf] %v396
      %461 = vst [vmem:[#allocation2 + $0x44] sm:$0xf] %v397
      %462 = vst [vmem:[#allocation2 + $0x48] sm:$0xf] %v398
      %463 = vst [vmem:[#allocation2 + $0x54] sm:$0xf] %v399
      %464 = vst [vmem:[#allocation2 + $0x58] sm:$0xf] %v400
      %465 = vst [vmem:[#allocation2 + $0x64] sm:$0xf] %v401
      %466 = vst [vmem:[#allocation2 + $0x68] sm:$0xf] %v402
      %467 = vst [vmem:[#allocation2 + $0x74] sm:$0xf] %v403
      %468 = vst [vmem:[#allocation2 + $0x78] sm:$0xf] %v404
      %469 = vst [vmem:[#allocation2 + $0x84] sm:$0xf] %v405
      %470 = vst [vmem:[#allocation2 + $0x88] sm:$0xf] %v406
      %471 = vst [vmem:[#allocation2 + $0x94] sm:$0xf] %v407
      %472 = vst [vmem:[#allocation2 + $0x98] sm:$0xf] %v408
      %473 = vst [vmem:[#allocation2 + $0xa4] sm:$0xf] %v409
      %474 = vst [vmem:[#allocation2 + $0xa8] sm:$0xf] %v410
      %475 = vst [vmem:[#allocation2 + $0xb4] sm:$0xf] %v411
      %476 = vst [vmem:[#allocation2 + $0xb8] sm:$0xf] %v412
      %477 = vst [vmem:[#allocation2 + $0xc4] sm:$0xf] %v413
      %478 = vst [vmem:[#allocation2 + $0xc8] sm:$0xf] %v414
      %479 = vst [vmem:[#allocation2 + $0xd4] sm:$0xf] %v415
      %480 = vst [vmem:[#allocation2 + $0xd8] sm:$0xf] %v416
      %481 = vst [vmem:[#allocation2 + $0xe4] sm:$0xf] %v417
      %482 = vst [vmem:[#allocation2 + $0xe8] sm:$0xf] %v418
      %483 = vst [vmem:[#allocation2 + $0xf4] sm:$0xf] %v419
      %484 = vst [vmem:[#allocation2 + $0xf8] sm:$0xf] %v420
      %v485 = vld [vmem:[#allocation2] sm:$0x8]
      %v486 = vld [vmem:[#allocation2 + $0x4] sm:$0xf]
      %v487 = vld [vmem:[#allocation2 + $0x8] sm:$0xf]
      %v488 = vld [vmem:[#allocation2 + $0x10] sm:$0x8]
      %v489 = vld [vmem:[#allocation2 + $0x14] sm:$0xf]
      %v490 = vld [vmem:[#allocation2 + $0x18] sm:$0xf]
      %v491 = vld [vmem:[#allocation2 + $0x20] sm:$0x8]
      %v492 = vld [vmem:[#allocation2 + $0x24] sm:$0xf]
      %v493 = vld [vmem:[#allocation2 + $0x28] sm:$0xf]
      %v494 = vld [vmem:[#allocation2 + $0x30] sm:$0x8]
      %v495 = vld [vmem:[#allocation2 + $0x34] sm:$0xf]
      %v496 = vld [vmem:[#allocation2 + $0x38] sm:$0xf]
      %v497 = vld [vmem:[#allocation2 + $0x40] sm:$0x8]
      %v498 = vld [vmem:[#allocation2 + $0x44] sm:$0xf]
      %v499 = vld [vmem:[#allocation2 + $0x48] sm:$0xf]
      %v500 = vld [vmem:[#allocation2 + $0x50] sm:$0x8]
      %v501 = vld [vmem:[#allocation2 + $0x54] sm:$0xf]
      %v502 = vld [vmem:[#allocation2 + $0x58] sm:$0xf]
      %v503 = vld [vmem:[#allocation2 + $0x60] sm:$0x8]
      %v504 = vld [vmem:[#allocation2 + $0x64] sm:$0xf]
      %v505 = vld [vmem:[#allocation2 + $0x68] sm:$0xf]
      %v506 = vld [vmem:[#allocation2 + $0x70] sm:$0x8]
      %v507 = vld [vmem:[#allocation2 + $0x74] sm:$0xf]
      %v508 = vld [vmem:[#allocation2 + $0x78] sm:$0xf]
      %v509 = vld [vmem:[#allocation2 + $0x80] sm:$0x8]
      %v510 = vld [vmem:[#allocation2 + $0x84] sm:$0xf]
      %v511 = vld [vmem:[#allocation2 + $0x88] sm:$0xf]
      %v512 = vld [vmem:[#allocation2 + $0x90] sm:$0x8]
      %v513 = vld [vmem:[#allocation2 + $0x94] sm:$0xf]
      %v514 = vld [vmem:[#allocation2 + $0x98] sm:$0xf]
      %v515 = vld [vmem:[#allocation2 + $0xa0] sm:$0x8]
      %v516 = vld [vmem:[#allocation2 + $0xa4] sm:$0xf]
      %v517 = vld [vmem:[#allocation2 + $0xa8] sm:$0xf]
      %v518 = vld [vmem:[#allocation2 + $0xb0] sm:$0x8]
      %v519 = vld [vmem:[#allocation2 + $0xb4] sm:$0xf]
      %v520 = vld [vmem:[#allocation2 + $0xb8] sm:$0xf]
      %v521 = vld [vmem:[#allocation2 + $0xc0] sm:$0x8]
      %v522 = vld [vmem:[#allocation2 + $0xc4] sm:$0xf]
      %v523 = vld [vmem:[#allocation2 + $0xc8] sm:$0xf]
      %v524 = vld [vmem:[#allocation2 + $0xd0] sm:$0x8]
      %v525 = vld [vmem:[#allocation2 + $0xd4] sm:$0xf]
      %v526 = vld [vmem:[#allocation2 + $0xd8] sm:$0xf]
      %v527 = vld [vmem:[#allocation2 + $0xe0] sm:$0x8]
      %v528 = vld [vmem:[#allocation2 + $0xe4] sm:$0xf]
      %v529 = vld [vmem:[#allocation2 + $0xe8] sm:$0xf]
      %v530 = vld [vmem:[#allocation2 + $0xf0] sm:$0x8]
      %v531 = vld [vmem:[#allocation2 + $0xf4] sm:$0xf]
      %v532 = vld [vmem:[#allocation2 + $0xf8] sm:$0xf]
      %vm533 = vsmask.f32 4368
      %vm534 = vmor %vm235, %vm533
      %v536 = vshrl.u32 %v485, 16
      %v538 = vrot.slane %v536, 7
      %v539 = vrot.slane %v538, 4
      %v541 = vshrl.u32 %v486, 16
      %v543 = vrot.slane %v541, 7
      %v544 = vshll.u32 %v486, 16
      %v546 = vor.u32 %v543, %v544
      %v547 = vsel %vm534, %v539, %v546
      %v548 = vrot.slane %v543, 4
      %v550 = vshrl.u32 %v487, 16
      %v552 = vrot.slane %v550, 7
      %v553 = vshll.u32 %v487, 16
      %v555 = vor.u32 %v552, %v553
      %v556 = vsel %vm534, %v548, %v555
      %v558 = vshrl.u32 %v488, 16
      %v560 = vrot.slane %v558, 7
      %v561 = vrot.slane %v560, 4
      %v563 = vshrl.u32 %v489, 16
      %v565 = vrot.slane %v563, 7
      %v566 = vshll.u32 %v489, 16
      %v568 = vor.u32 %v565, %v566
      %v569 = vsel %vm534, %v561, %v568
      %v570 = vrot.slane %v565, 4
      %v572 = vshrl.u32 %v490, 16
      %v574 = vrot.slane %v572, 7
      %v575 = vshll.u32 %v490, 16
      %v577 = vor.u32 %v574, %v575
      %v578 = vsel %vm534, %v570, %v577
      %v580 = vshrl.u32 %v491, 16
      %v582 = vrot.slane %v580, 7
      %v583 = vrot.slane %v582, 4
      %v585 = vshrl.u32 %v492, 16
      %v587 = vrot.slane %v585, 7
      %v588 = vshll.u32 %v492, 16
      %v590 = vor.u32 %v587, %v588
      %v591 = vsel %vm534, %v583, %v590
      %v592 = vrot.slane %v587, 4
      %v594 = vshrl.u32 %v493, 16
      %v596 = vrot.slane %v594, 7
      %v597 = vshll.u32 %v493, 16
      %v599 = vor.u32 %v596, %v597
      %v600 = vsel %vm534, %v592, %v599
      %v602 = vshrl.u32 %v494, 16
      %v604 = vrot.slane %v602, 7
      %v605 = vrot.slane %v604, 4
      %v607 = vshrl.u32 %v495, 16
      %v609 = vrot.slane %v607, 7
      %v610 = vshll.u32 %v495, 16
      %v612 = vor.u32 %v609, %v610
      %v613 = vsel %vm534, %v605, %v612
      %v614 = vrot.slane %v609, 4
      %v616 = vshrl.u32 %v496, 16
      %v618 = vrot.slane %v616, 7
      %v619 = vshll.u32 %v496, 16
      %v621 = vor.u32 %v618, %v619
      %v622 = vsel %vm534, %v614, %v621
      %v624 = vshrl.u32 %v497, 16
      %v626 = vrot.slane %v624, 7
      %v627 = vrot.slane %v626, 4
      %v629 = vshrl.u32 %v498, 16
      %v631 = vrot.slane %v629, 7
      %v632 = vshll.u32 %v498, 16
      %v634 = vor.u32 %v631, %v632
      %v635 = vsel %vm534, %v627, %v634
      %v636 = vrot.slane %v631, 4
      %v638 = vshrl.u32 %v499, 16
      %v640 = vrot.slane %v638, 7
      %v641 = vshll.u32 %v499, 16
      %v643 = vor.u32 %v640, %v641
      %v644 = vsel %vm534, %v636, %v643
      %v646 = vshrl.u32 %v500, 16
      %v648 = vrot.slane %v646, 7
      %v649 = vrot.slane %v648, 4
      %v651 = vshrl.u32 %v501, 16
      %v653 = vrot.slane %v651, 7
      %v654 = vshll.u32 %v501, 16
      %v656 = vor.u32 %v653, %v654
      %v657 = vsel %vm534, %v649, %v656
      %v658 = vrot.slane %v653, 4
      %v660 = vshrl.u32 %v502, 16
      %v662 = vrot.slane %v660, 7
      %v663 = vshll.u32 %v502, 16
      %v665 = vor.u32 %v662, %v663
      %v666 = vsel %vm534, %v658, %v665
      %v668 = vshrl.u32 %v503, 16
      %v670 = vrot.slane %v668, 7
      %v671 = vrot.slane %v670, 4
      %v673 = vshrl.u32 %v504, 16
      %v675 = vrot.slane %v673, 7
      %v676 = vshll.u32 %v504, 16
      %v678 = vor.u32 %v675, %v676
      %v679 = vsel %vm534, %v671, %v678
      %v680 = vrot.slane %v675, 4
      %v682 = vshrl.u32 %v505, 16
      %v684 = vrot.slane %v682, 7
      %v685 = vshll.u32 %v505, 16
      %v687 = vor.u32 %v684, %v685
      %v688 = vsel %vm534, %v680, %v687
      %v690 = vshrl.u32 %v506, 16
      %v692 = vrot.slane %v690, 7
      %v693 = vrot.slane %v692, 4
      %v695 = vshrl.u32 %v507, 16
      %v697 = vrot.slane %v695, 7
      %v698 = vshll.u32 %v507, 16
      %v700 = vor.u32 %v697, %v698
      %v701 = vsel %vm534, %v693, %v700
      %v702 = vrot.slane %v697, 4
      %v704 = vshrl.u32 %v508, 16
      %v706 = vrot.slane %v704, 7
      %v707 = vshll.u32 %v508, 16
      %v709 = vor.u32 %v706, %v707
      %v710 = vsel %vm534, %v702, %v709
      %v712 = vshrl.u32 %v509, 16
      %v714 = vrot.slane %v712, 7
      %v715 = vrot.slane %v714, 4
      %v717 = vshrl.u32 %v510, 16
      %v719 = vrot.slane %v717, 7
      %v720 = vshll.u32 %v510, 16
      %v722 = vor.u32 %v719, %v720
      %v723 = vsel %vm534, %v715, %v722
      %v724 = vrot.slane %v719, 4
      %v726 = vshrl.u32 %v511, 16
      %v728 = vrot.slane %v726, 7
      %v729 = vshll.u32 %v511, 16
      %v731 = vor.u32 %v728, %v729
      %v732 = vsel %vm534, %v724, %v731
      %v734 = vshrl.u32 %v512, 16
      %v736 = vrot.slane %v734, 7
      %v737 = vrot.slane %v736, 4
      %v739 = vshrl.u32 %v513, 16
      %v741 = vrot.slane %v739, 7
      %v742 = vshll.u32 %v513, 16
      %v744 = vor.u32 %v741, %v742
      %v745 = vsel %vm534, %v737, %v744
      %v746 = vrot.slane %v741, 4
      %v748 = vshrl.u32 %v514, 16
      %v750 = vrot.slane %v748, 7
      %v751 = vshll.u32 %v514, 16
      %v753 = vor.u32 %v750, %v751
      %v754 = vsel %vm534, %v746, %v753
      %v756 = vshrl.u32 %v515, 16
      %v758 = vrot.slane %v756, 7
      %v759 = vrot.slane %v758, 4
      %v761 = vshrl.u32 %v516, 16
      %v763 = vrot.slane %v761, 7
      %v764 = vshll.u32 %v516, 16
      %v766 = vor.u32 %v763, %v764
      %v767 = vsel %vm534, %v759, %v766
      %v768 = vrot.slane %v763, 4
      %v770 = vshrl.u32 %v517, 16
      %v772 = vrot.slane %v770, 7
      %v773 = vshll.u32 %v517, 16
      %v775 = vor.u32 %v772, %v773
      %v776 = vsel %vm534, %v768, %v775
      %v778 = vshrl.u32 %v518, 16
      %v780 = vrot.slane %v778, 7
      %v781 = vrot.slane %v780, 4
      %v783 = vshrl.u32 %v519, 16
      %v785 = vrot.slane %v783, 7
      %v786 = vshll.u32 %v519, 16
      %v788 = vor.u32 %v785, %v786
      %v789 = vsel %vm534, %v781, %v788
      %v790 = vrot.slane %v785, 4
      %v792 = vshrl.u32 %v520, 16
      %v794 = vrot.slane %v792, 7
      %v795 = vshll.u32 %v520, 16
      %v797 = vor.u32 %v794, %v795
      %v798 = vsel %vm534, %v790, %v797
      %v800 = vshrl.u32 %v521, 16
      %v802 = vrot.slane %v800, 7
      %v803 = vrot.slane %v802, 4
      %v805 = vshrl.u32 %v522, 16
      %v807 = vrot.slane %v805, 7
      %v808 = vshll.u32 %v522, 16
      %v810 = vor.u32 %v807, %v808
      %v811 = vsel %vm534, %v803, %v810
      %v812 = vrot.slane %v807, 4
      %v814 = vshrl.u32 %v523, 16
      %v816 = vrot.slane %v814, 7
      %v817 = vshll.u32 %v523, 16
      %v819 = vor.u32 %v816, %v817
      %v820 = vsel %vm534, %v812, %v819
      %v822 = vshrl.u32 %v524, 16
      %v824 = vrot.slane %v822, 7
      %v825 = vrot.slane %v824, 4
      %v827 = vshrl.u32 %v525, 16
      %v829 = vrot.slane %v827, 7
      %v830 = vshll.u32 %v525, 16
      %v832 = vor.u32 %v829, %v830
      %v833 = vsel %vm534, %v825, %v832
      %v834 = vrot.slane %v829, 4
      %v836 = vshrl.u32 %v526, 16
      %v838 = vrot.slane %v836, 7
      %v839 = vshll.u32 %v526, 16
      %v841 = vor.u32 %v838, %v839
      %v842 = vsel %vm534, %v834, %v841
      %v844 = vshrl.u32 %v527, 16
      %v846 = vrot.slane %v844, 7
      %v847 = vrot.slane %v846, 4
      %v849 = vshrl.u32 %v528, 16
      %v851 = vrot.slane %v849, 7
      %v852 = vshll.u32 %v528, 16
      %v854 = vor.u32 %v851, %v852
      %v855 = vsel %vm534, %v847, %v854
      %v856 = vrot.slane %v851, 4
      %v858 = vshrl.u32 %v529, 16
      %v860 = vrot.slane %v858, 7
      %v861 = vshll.u32 %v529, 16
      %v863 = vor.u32 %v860, %v861
      %v864 = vsel %vm534, %v856, %v863
      %v866 = vshrl.u32 %v530, 16
      %v868 = vrot.slane %v866, 7
      %v869 = vrot.slane %v868, 4
      %v871 = vshrl.u32 %v531, 16
      %v873 = vrot.slane %v871, 7
      %v874 = vshll.u32 %v531, 16
      %v876 = vor.u32 %v873, %v874
      %v877 = vsel %vm534, %v869, %v876
      %v878 = vrot.slane %v873, 4
      %v880 = vshrl.u32 %v532, 16
      %v882 = vrot.slane %v880, 7
      %v883 = vshll.u32 %v532, 16
      %v885 = vor.u32 %v882, %v883
      %v886 = vsel %vm534, %v878, %v885
      %919 = vst [vmem:[#allocation3 + $0x18] sm:$0xf] %v547
      %920 = vst [vmem:[#allocation3 + $0x24] sm:$0xf] %v556
      %921 = vst [vmem:[#allocation3 + $0x30] sm:$0xf] %v569
      %922 = vst [vmem:[#allocation3 + $0x3c] sm:$0xf] %v578
      %923 = vst [vmem:[#allocation3 + $0x48] sm:$0xf] %v591
      %924 = vst [vmem:[#allocation3 + $0x54] sm:$0xf] %v600
      %925 = vst [vmem:[#allocation3 + $0x60] sm:$0xf] %v613
      %926 = vst [vmem:[#allocation3 + $0x6c] sm:$0xf] %v622
      %927 = vst [vmem:[#allocation3 + $0x78] sm:$0xf] %v635
      %928 = vst [vmem:[#allocation3 + $0x84] sm:$0xf] %v644
      %929 = vst [vmem:[#allocation3 + $0x90] sm:$0xf] %v657
      %930 = vst [vmem:[#allocation3 + $0x9c] sm:$0xf] %v666
      %931 = vst [vmem:[#allocation3 + $0xa8] sm:$0xf] %v679
      %932 = vst [vmem:[#allocation3 + $0xb4] sm:$0xf] %v688
      %933 = vst [vmem:[#allocation3 + $0xc0] sm:$0xf] %v701
      %934 = vst [vmem:[#allocation3 + $0xcc] sm:$0xf] %v710
      %935 = vst [vmem:[#allocation3 + $0xd8] sm:$0xf] %v723
      %936 = vst [vmem:[#allocation3 + $0xe4] sm:$0xf] %v732
      %937 = vst [vmem:[#allocation3 + $0xf0] sm:$0xf] %v745
      %938 = vst [vmem:[#allocation3 + $0xfc] sm:$0xf] %v754
      %939 = vst [vmem:[#allocation3 + $0x108] sm:$0xf] %v767
      %940 = vst [vmem:[#allocation3 + $0x114] sm:$0xf] %v776
      %941 = vst [vmem:[#allocation3 + $0x120] sm:$0xf] %v789
      %942 = vst [vmem:[#allocation3 + $0x12c] sm:$0xf] %v798
      %943 = vst [vmem:[#allocation3 + $0x138] sm:$0xf] %v811
      %944 = vst [vmem:[#allocation3 + $0x144] sm:$0xf] %v820
      %945 = vst [vmem:[#allocation3 + $0x150] sm:$0xf] %v833
      %946 = vst [vmem:[#allocation3 + $0x15c] sm:$0xf] %v842
      %947 = vst [vmem:[#allocation3 + $0x168] sm:$0xf] %v855
      %948 = vst [vmem:[#allocation3 + $0x174] sm:$0xf] %v864
      %949 = vst [vmem:[#allocation3 + $0x180] sm:$0xf] %v877
      %950 = vst [vmem:[#allocation3 + $0x18c] sm:$0xf] %v886
      %v951 = vld [vmem:[#allocation2 + $0x4] sm:$0xf]
      %v952 = vld [vmem:[#allocation2 + $0x8] sm:$0xf]
      %v953 = vld [vmem:[#allocation2 + $0x14] sm:$0xf]
      %v954 = vld [vmem:[#allocation2 + $0x18] sm:$0xf]
      %v955 = vld [vmem:[#allocation2 + $0x24] sm:$0xf]
      %v956 = vld [vmem:[#allocation2 + $0x28] sm:$0xf]
      %v957 = vld [vmem:[#allocation2 + $0x34] sm:$0xf]
      %v958 = vld [vmem:[#allocation2 + $0x38] sm:$0xf]
      %v959 = vld [vmem:[#allocation2 + $0x44] sm:$0xf]
      %v960 = vld [vmem:[#allocation2 + $0x48] sm:$0xf]
      %v961 = vld [vmem:[#allocation2 + $0x54] sm:$0xf]
      %v962 = vld [vmem:[#allocation2 + $0x58] sm:$0xf]
      %v963 = vld [vmem:[#allocation2 + $0x64] sm:$0xf]
      %v964 = vld [vmem:[#allocation2 + $0x68] sm:$0xf]
      %v965 = vld [vmem:[#allocation2 + $0x74] sm:$0xf]
      %v966 = vld [vmem:[#allocation2 + $0x78] sm:$0xf]
      %v967 = vld [vmem:[#allocation2 + $0x84] sm:$0xf]
      %v968 = vld [vmem:[#allocation2 + $0x88] sm:$0xf]
      %v969 = vld [vmem:[#allocation2 + $0x94] sm:$0xf]
      %v970 = vld [vmem:[#allocation2 + $0x98] sm:$0xf]
      %v971 = vld [vmem:[#allocation2 + $0xa4] sm:$0xf]
      %v972 = vld [vmem:[#allocation2 + $0xa8] sm:$0xf]
      %v973 = vld [vmem:[#allocation2 + $0xb4] sm:$0xf]
      %v974 = vld [vmem:[#allocation2 + $0xb8] sm:$0xf]
      %v975 = vld [vmem:[#allocation2 + $0xc4] sm:$0xf]
      %v976 = vld [vmem:[#allocation2 + $0xc8] sm:$0xf]
      %v977 = vld [vmem:[#allocation2 + $0xd4] sm:$0xf]
      %v978 = vld [vmem:[#allocation2 + $0xd8] sm:$0xf]
      %v979 = vld [vmem:[#allocation2 + $0xe4] sm:$0xf]
      %v980 = vld [vmem:[#allocation2 + $0xe8] sm:$0xf]
      %v981 = vld [vmem:[#allocation2 + $0xf4] sm:$0xf]
      %v982 = vld [vmem:[#allocation2 + $0xf8] sm:$0xf]
      %983 = vst [vmem:[#allocation3 + $0x1c] sm:$0xf] %v951
      %984 = vst [vmem:[#allocation3 + $0x28] sm:$0xf] %v952
      %985 = vst [vmem:[#allocation3 + $0x34] sm:$0xf] %v953
      %986 = vst [vmem:[#allocation3 + $0x40] sm:$0xf] %v954
      %987 = vst [vmem:[#allocation3 + $0x4c] sm:$0xf] %v955
      %988 = vst [vmem:[#allocation3 + $0x58] sm:$0xf] %v956
      %989 = vst [vmem:[#allocation3 + $0x64] sm:$0xf] %v957
      %990 = vst [vmem:[#allocation3 + $0x70] sm:$0xf] %v958
      %991 = vst [vmem:[#allocation3 + $0x7c] sm:$0xf] %v959
      %992 = vst [vmem:[#allocation3 + $0x88] sm:$0xf] %v960
      %993 = vst [vmem:[#allocation3 + $0x94] sm:$0xf] %v961
      %994 = vst [vmem:[#allocation3 + $0xa0] sm:$0xf] %v962
      %995 = vst [vmem:[#allocation3 + $0xac] sm:$0xf] %v963
      %996 = vst [vmem:[#allocation3 + $0xb8] sm:$0xf] %v964
      %997 = vst [vmem:[#allocation3 + $0xc4] sm:$0xf] %v965
      %998 = vst [vmem:[#allocation3 + $0xd0] sm:$0xf] %v966
      %999 = vst [vmem:[#allocation3 + $0xdc] sm:$0xf] %v967
      %1000 = vst [vmem:[#allocation3 + $0xe8] sm:$0xf] %v968
      %1001 = vst [vmem:[#allocation3 + $0xf4] sm:$0xf] %v969
      %1002 = vst [vmem:[#allocation3 + $0x100] sm:$0xf] %v970
      %1003 = vst [vmem:[#allocation3 + $0x10c] sm:$0xf] %v971
      %1004 = vst [vmem:[#allocation3 + $0x118] sm:$0xf] %v972
      %1005 = vst [vmem:[#allocation3 + $0x124] sm:$0xf] %v973
      %1006 = vst [vmem:[#allocation3 + $0x130] sm:$0xf] %v974
      %1007 = vst [vmem:[#allocation3 + $0x13c] sm:$0xf] %v975
      %1008 = vst [vmem:[#allocation3 + $0x148] sm:$0xf] %v976
      %1009 = vst [vmem:[#allocation3 + $0x154] sm:$0xf] %v977
      %1010 = vst [vmem:[#allocation3 + $0x160] sm:$0xf] %v978
      %1011 = vst [vmem:[#allocation3 + $0x16c] sm:$0xf] %v979
      %1012 = vst [vmem:[#allocation3 + $0x178] sm:$0xf] %v980
      %1013 = vst [vmem:[#allocation3 + $0x184] sm:$0xf] %v981
      %1014 = vst [vmem:[#allocation3 + $0x190] sm:$0xf] %v982
      %v1015 = vld [vmem:[#allocation2 + $0x4] sm:$0xf]
      %v1016 = vld [vmem:[#allocation2 + $0x8] sm:$0xf]
      %v1017 = vld [vmem:[#allocation2 + $0xc] sm:$0x1]
      %v1018 = vld [vmem:[#allocation2 + $0x14] sm:$0xf]
      %v1019 = vld [vmem:[#allocation2 + $0x18] sm:$0xf]
      %v1020 = vld [vmem:[#allocation2 + $0x1c] sm:$0x1]
      %v1021 = vld [vmem:[#allocation2 + $0x24] sm:$0xf]
      %v1022 = vld [vmem:[#allocation2 + $0x28] sm:$0xf]
      %v1023 = vld [vmem:[#allocation2 + $0x2c] sm:$0x1]
      %v1024 = vld [vmem:[#allocation2 + $0x34] sm:$0xf]
      %v1025 = vld [vmem:[#allocation2 + $0x38] sm:$0xf]
      %v1026 = vld [vmem:[#allocation2 + $0x3c] sm:$0x1]
      %v1027 = vld [vmem:[#allocation2 + $0x44] sm:$0xf]
      %v1028 = vld [vmem:[#allocation2 + $0x48] sm:$0xf]
      %v1029 = vld [vmem:[#allocation2 + $0x4c] sm:$0x1]
      %v1030 = vld [vmem:[#allocation2 + $0x54] sm:$0xf]
      %v1031 = vld [vmem:[#allocation2 + $0x58] sm:$0xf]
      %v1032 = vld [vmem:[#allocation2 + $0x5c] sm:$0x1]
      %v1033 = vld [vmem:[#allocation2 + $0x64] sm:$0xf]
      %v1034 = vld [vmem:[#allocation2 + $0x68] sm:$0xf]
      %v1035 = vld [vmem:[#allocation2 + $0x6c] sm:$0x1]
      %v1036 = vld [vmem:[#allocation2 + $0x74] sm:$0xf]
      %v1037 = vld [vmem:[#allocation2 + $0x78] sm:$0xf]
      %v1038 = vld [vmem:[#allocation2 + $0x7c] sm:$0x1]
      %v1039 = vld [vmem:[#allocation2 + $0x84] sm:$0xf]
      %v1040 = vld [vmem:[#allocation2 + $0x88] sm:$0xf]
      %v1041 = vld [vmem:[#allocation2 + $0x8c] sm:$0x1]
      %v1042 = vld [vmem:[#allocation2 + $0x94] sm:$0xf]
      %v1043 = vld [vmem:[#allocation2 + $0x98] sm:$0xf]
      %v1044 = vld [vmem:[#allocation2 + $0x9c] sm:$0x1]
      %v1045 = vld [vmem:[#allocation2 + $0xa4] sm:$0xf]
      %v1046 = vld [vmem:[#allocation2 + $0xa8] sm:$0xf]
      %v1047 = vld [vmem:[#allocation2 + $0xac] sm:$0x1]
      %v1048 = vld [vmem:[#allocation2 + $0xb4] sm:$0xf]
      %v1049 = vld [vmem:[#allocation2 + $0xb8] sm:$0xf]
      %v1050 = vld [vmem:[#allocation2 + $0xbc] sm:$0x1]
      %v1051 = vld [vmem:[#allocation2 + $0xc4] sm:$0xf]
      %v1052 = vld [vmem:[#allocation2 + $0xc8] sm:$0xf]
      %v1053 = vld [vmem:[#allocation2 + $0xcc] sm:$0x1]
      %v1054 = vld [vmem:[#allocation2 + $0xd4] sm:$0xf]
      %v1055 = vld [vmem:[#allocation2 + $0xd8] sm:$0xf]
      %v1056 = vld [vmem:[#allocation2 + $0xdc] sm:$0x1]
      %v1057 = vld [vmem:[#allocation2 + $0xe4] sm:$0xf]
      %v1058 = vld [vmem:[#allocation2 + $0xe8] sm:$0xf]
      %v1059 = vld [vmem:[#allocation2 + $0xec] sm:$0x1]
      %v1060 = vld [vmem:[#allocation2 + $0xf4] sm:$0xf]
      %v1061 = vld [vmem:[#allocation2 + $0xf8] sm:$0xf]
      %v1062 = vld [vmem:[#allocation2 + $0xfc] sm:$0x1]
      %vm1063 = vsmask.f32 3328
      %vm1064 = vsmask.f32 7440
      %vm1065 = vmor %vm1063, %vm1064
      %v1067 = vshrl.u32 %v1015, 16
      %v1069 = vrot.slane %v1067, 4
      %v1070 = vshll.u32 %v1015, 16
      %v1072 = vrot.slane %v1070, 5
      %v1073 = vor.u32 %v1069, %v1072
      %v1074 = vrot.slane %v1073, 4
      %v1076 = vshll.u32 %v1016, 16
      %v1078 = vrot.slane %v1076, 5
      %v1079 = vsel %vm1065, %v1074, %v1078
      %v1080 = vshrl.u32 %v1016, 16
      %v1082 = vrot.slane %v1080, 4
      %v1083 = vor.u32 %v1082, %v1078
      %v1084 = vrot.slane %v1083, 4
      %v1086 = vshll.u32 %v1017, 16
      %v1088 = vrot.slane %v1086, 5
      %v1089 = vsel %vm1065, %v1084, %v1088
      %v1091 = vshrl.u32 %v1018, 16
      %v1093 = vrot.slane %v1091, 4
      %v1094 = vshll.u32 %v1018, 16
      %v1096 = vrot.slane %v1094, 5
      %v1097 = vor.u32 %v1093, %v1096
      %v1098 = vrot.slane %v1097, 4
      %v1100 = vshll.u32 %v1019, 16
      %v1102 = vrot.slane %v1100, 5
      %v1103 = vsel %vm1065, %v1098, %v1102
      %v1104 = vshrl.u32 %v1019, 16
      %v1106 = vrot.slane %v1104, 4
      %v1107 = vor.u32 %v1106, %v1102
      %v1108 = vrot.slane %v1107, 4
      %v1110 = vshll.u32 %v1020, 16
      %v1112 = vrot.slane %v1110, 5
      %v1113 = vsel %vm1065, %v1108, %v1112
      %v1115 = vshrl.u32 %v1021, 16
      %v1117 = vrot.slane %v1115, 4
      %v1118 = vshll.u32 %v1021, 16
      %v1120 = vrot.slane %v1118, 5
      %v1121 = vor.u32 %v1117, %v1120
      %v1122 = vrot.slane %v1121, 4
      %v1124 = vshll.u32 %v1022, 16
      %v1126 = vrot.slane %v1124, 5
      %v1127 = vsel %vm1065, %v1122, %v1126
      %v1128 = vshrl.u32 %v1022, 16
      %v1130 = vrot.slane %v1128, 4
      %v1131 = vor.u32 %v1130, %v1126
      %v1132 = vrot.slane %v1131, 4
      %v1134 = vshll.u32 %v1023, 16
      %v1136 = vrot.slane %v1134, 5
      %v1137 = vsel %vm1065, %v1132, %v1136
      %v1139 = vshrl.u32 %v1024, 16
      %v1141 = vrot.slane %v1139, 4
      %v1142 = vshll.u32 %v1024, 16
      %v1144 = vrot.slane %v1142, 5
      %v1145 = vor.u32 %v1141, %v1144
      %v1146 = vrot.slane %v1145, 4
      %v1148 = vshll.u32 %v1025, 16
      %v1150 = vrot.slane %v1148, 5
      %v1151 = vsel %vm1065, %v1146, %v1150
      %v1152 = vshrl.u32 %v1025, 16
      %v1154 = vrot.slane %v1152, 4
      %v1155 = vor.u32 %v1154, %v1150
      %v1156 = vrot.slane %v1155, 4
      %v1158 = vshll.u32 %v1026, 16
      %v1160 = vrot.slane %v1158, 5
      %v1161 = vsel %vm1065, %v1156, %v1160
      %v1163 = vshrl.u32 %v1027, 16
      %v1165 = vrot.slane %v1163, 4
      %v1166 = vshll.u32 %v1027, 16
      %v1168 = vrot.slane %v1166, 5
      %v1169 = vor.u32 %v1165, %v1168
      %v1170 = vrot.slane %v1169, 4
      %v1172 = vshll.u32 %v1028, 16
      %v1174 = vrot.slane %v1172, 5
      %v1175 = vsel %vm1065, %v1170, %v1174
      %v1176 = vshrl.u32 %v1028, 16
      %v1178 = vrot.slane %v1176, 4
      %v1179 = vor.u32 %v1178, %v1174
      %v1180 = vrot.slane %v1179, 4
      %v1182 = vshll.u32 %v1029, 16
      %v1184 = vrot.slane %v1182, 5
      %v1185 = vsel %vm1065, %v1180, %v1184
      %v1187 = vshrl.u32 %v1030, 16
      %v1189 = vrot.slane %v1187, 4
      %v1190 = vshll.u32 %v1030, 16
      %v1192 = vrot.slane %v1190, 5
      %v1193 = vor.u32 %v1189, %v1192
      %v1194 = vrot.slane %v1193, 4
      %v1196 = vshll.u32 %v1031, 16
      %v1198 = vrot.slane %v1196, 5
      %v1199 = vsel %vm1065, %v1194, %v1198
      %v1200 = vshrl.u32 %v1031, 16
      %v1202 = vrot.slane %v1200, 4
      %v1203 = vor.u32 %v1202, %v1198
      %v1204 = vrot.slane %v1203, 4
      %v1206 = vshll.u32 %v1032, 16
      %v1208 = vrot.slane %v1206, 5
      %v1209 = vsel %vm1065, %v1204, %v1208
      %v1211 = vshrl.u32 %v1033, 16
      %v1213 = vrot.slane %v1211, 4
      %v1214 = vshll.u32 %v1033, 16
      %v1216 = vrot.slane %v1214, 5
      %v1217 = vor.u32 %v1213, %v1216
      %v1218 = vrot.slane %v1217, 4
      %v1220 = vshll.u32 %v1034, 16
      %v1222 = vrot.slane %v1220, 5
      %v1223 = vsel %vm1065, %v1218, %v1222
      %v1224 = vshrl.u32 %v1034, 16
      %v1226 = vrot.slane %v1224, 4
      %v1227 = vor.u32 %v1226, %v1222
      %v1228 = vrot.slane %v1227, 4
      %v1230 = vshll.u32 %v1035, 16
      %v1232 = vrot.slane %v1230, 5
      %v1233 = vsel %vm1065, %v1228, %v1232
      %v1235 = vshrl.u32 %v1036, 16
      %v1237 = vrot.slane %v1235, 4
      %v1238 = vshll.u32 %v1036, 16
      %v1240 = vrot.slane %v1238, 5
      %v1241 = vor.u32 %v1237, %v1240
      %v1242 = vrot.slane %v1241, 4
      %v1244 = vshll.u32 %v1037, 16
      %v1246 = vrot.slane %v1244, 5
      %v1247 = vsel %vm1065, %v1242, %v1246
      %v1248 = vshrl.u32 %v1037, 16
      %v1250 = vrot.slane %v1248, 4
      %v1251 = vor.u32 %v1250, %v1246
      %v1252 = vrot.slane %v1251, 4
      %v1254 = vshll.u32 %v1038, 16
      %v1256 = vrot.slane %v1254, 5
      %v1257 = vsel %vm1065, %v1252, %v1256
      %v1259 = vshrl.u32 %v1039, 16
      %v1261 = vrot.slane %v1259, 4
      %v1262 = vshll.u32 %v1039, 16
      %v1264 = vrot.slane %v1262, 5
      %v1265 = vor.u32 %v1261, %v1264
      %v1266 = vrot.slane %v1265, 4
      %v1268 = vshll.u32 %v1040, 16
      %v1270 = vrot.slane %v1268, 5
      %v1271 = vsel %vm1065, %v1266, %v1270
      %v1272 = vshrl.u32 %v1040, 16
      %v1274 = vrot.slane %v1272, 4
      %v1275 = vor.u32 %v1274, %v1270
      %v1276 = vrot.slane %v1275, 4
      %v1278 = vshll.u32 %v1041, 16
      %v1280 = vrot.slane %v1278, 5
      %v1281 = vsel %vm1065, %v1276, %v1280
      %v1283 = vshrl.u32 %v1042, 16
      %v1285 = vrot.slane %v1283, 4
      %v1286 = vshll.u32 %v1042, 16
      %v1288 = vrot.slane %v1286, 5
      %v1289 = vor.u32 %v1285, %v1288
      %v1290 = vrot.slane %v1289, 4
      %v1292 = vshll.u32 %v1043, 16
      %v1294 = vrot.slane %v1292, 5
      %v1295 = vsel %vm1065, %v1290, %v1294
      %v1296 = vshrl.u32 %v1043, 16
      %v1298 = vrot.slane %v1296, 4
      %v1299 = vor.u32 %v1298, %v1294
      %v1300 = vrot.slane %v1299, 4
      %v1302 = vshll.u32 %v1044, 16
      %v1304 = vrot.slane %v1302, 5
      %v1305 = vsel %vm1065, %v1300, %v1304
      %v1307 = vshrl.u32 %v1045, 16
      %v1309 = vrot.slane %v1307, 4
      %v1310 = vshll.u32 %v1045, 16
      %v1312 = vrot.slane %v1310, 5
      %v1313 = vor.u32 %v1309, %v1312
      %v1314 = vrot.slane %v1313, 4
      %v1316 = vshll.u32 %v1046, 16
      %v1318 = vrot.slane %v1316, 5
      %v1319 = vsel %vm1065, %v1314, %v1318
      %v1320 = vshrl.u32 %v1046, 16
      %v1322 = vrot.slane %v1320, 4
      %v1323 = vor.u32 %v1322, %v1318
      %v1324 = vrot.slane %v1323, 4
      %v1326 = vshll.u32 %v1047, 16
      %v1328 = vrot.slane %v1326, 5
      %v1329 = vsel %vm1065, %v1324, %v1328
      %v1331 = vshrl.u32 %v1048, 16
      %v1333 = vrot.slane %v1331, 4
      %v1334 = vshll.u32 %v1048, 16
      %v1336 = vrot.slane %v1334, 5
      %v1337 = vor.u32 %v1333, %v1336
      %v1338 = vrot.slane %v1337, 4
      %v1340 = vshll.u32 %v1049, 16
      %v1342 = vrot.slane %v1340, 5
      %v1343 = vsel %vm1065, %v1338, %v1342
      %v1344 = vshrl.u32 %v1049, 16
      %v1346 = vrot.slane %v1344, 4
      %v1347 = vor.u32 %v1346, %v1342
      %v1348 = vrot.slane %v1347, 4
      %v1350 = vshll.u32 %v1050, 16
      %v1352 = vrot.slane %v1350, 5
      %v1353 = vsel %vm1065, %v1348, %v1352
      %v1355 = vshrl.u32 %v1051, 16
      %v1357 = vrot.slane %v1355, 4
      %v1358 = vshll.u32 %v1051, 16
      %v1360 = vrot.slane %v1358, 5
      %v1361 = vor.u32 %v1357, %v1360
      %v1362 = vrot.slane %v1361, 4
      %v1364 = vshll.u32 %v1052, 16
      %v1366 = vrot.slane %v1364, 5
      %v1367 = vsel %vm1065, %v1362, %v1366
      %v1368 = vshrl.u32 %v1052, 16
      %v1370 = vrot.slane %v1368, 4
      %v1371 = vor.u32 %v1370, %v1366
      %v1372 = vrot.slane %v1371, 4
      %v1374 = vshll.u32 %v1053, 16
      %v1376 = vrot.slane %v1374, 5
      %v1377 = vsel %vm1065, %v1372, %v1376
      %v1379 = vshrl.u32 %v1054, 16
      %v1381 = vrot.slane %v1379, 4
      %v1382 = vshll.u32 %v1054, 16
      %v1384 = vrot.slane %v1382, 5
      %v1385 = vor.u32 %v1381, %v1384
      %v1386 = vrot.slane %v1385, 4
      %v1388 = vshll.u32 %v1055, 16
      %v1390 = vrot.slane %v1388, 5
      %v1391 = vsel %vm1065, %v1386, %v1390
      %v1392 = vshrl.u32 %v1055, 16
      %v1394 = vrot.slane %v1392, 4
      %v1395 = vor.u32 %v1394, %v1390
      %v1396 = vrot.slane %v1395, 4
      %v1398 = vshll.u32 %v1056, 16
      %v1400 = vrot.slane %v1398, 5
      %v1401 = vsel %vm1065, %v1396, %v1400
      %v1403 = vshrl.u32 %v1057, 16
      %v1405 = vrot.slane %v1403, 4
      %v1406 = vshll.u32 %v1057, 16
      %v1408 = vrot.slane %v1406, 5
      %v1409 = vor.u32 %v1405, %v1408
      %v1410 = vrot.slane %v1409, 4
      %v1412 = vshll.u32 %v1058, 16
      %v1414 = vrot.slane %v1412, 5
      %v1415 = vsel %vm1065, %v1410, %v1414
      %v1416 = vshrl.u32 %v1058, 16
      %v1418 = vrot.slane %v1416, 4
      %v1419 = vor.u32 %v1418, %v1414
      %v1420 = vrot.slane %v1419, 4
      %v1422 = vshll.u32 %v1059, 16
      %v1424 = vrot.slane %v1422, 5
      %v1425 = vsel %vm1065, %v1420, %v1424
      %v1427 = vshrl.u32 %v1060, 16
      %v1429 = vrot.slane %v1427, 4
      %v1430 = vshll.u32 %v1060, 16
      %v1432 = vrot.slane %v1430, 5
      %v1433 = vor.u32 %v1429, %v1432
      %v1434 = vrot.slane %v1433, 4
      %v1436 = vshll.u32 %v1061, 16
      %v1438 = vrot.slane %v1436, 5
      %v1439 = vsel %vm1065, %v1434, %v1438
      %v1440 = vshrl.u32 %v1061, 16
      %v1442 = vrot.slane %v1440, 4
      %v1443 = vor.u32 %v1442, %v1438
      %v1444 = vrot.slane %v1443, 4
      %v1446 = vshll.u32 %v1062, 16
      %v1448 = vrot.slane %v1446, 5
      %v1449 = vsel %vm1065, %v1444, %v1448
      %1482 = vst [vmem:[#allocation3 + $0x20] sm:$0xf] %v1079
      %1483 = vst [vmem:[#allocation3 + $0x2c] sm:$0xf] %v1089
      %1484 = vst [vmem:[#allocation3 + $0x38] sm:$0xf] %v1103
      %1485 = vst [vmem:[#allocation3 + $0x44] sm:$0xf] %v1113
      %1486 = vst [vmem:[#allocation3 + $0x50] sm:$0xf] %v1127
      %1487 = vst [vmem:[#allocation3 + $0x5c] sm:$0xf] %v1137
      %1488 = vst [vmem:[#allocation3 + $0x68] sm:$0xf] %v1151
      %1489 = vst [vmem:[#allocation3 + $0x74] sm:$0xf] %v1161
      %1490 = vst [vmem:[#allocation3 + $0x80] sm:$0xf] %v1175
      %1491 = vst [vmem:[#allocation3 + $0x8c] sm:$0xf] %v1185
      %1492 = vst [vmem:[#allocation3 + $0x98] sm:$0xf] %v1199
      %1493 = vst [vmem:[#allocation3 + $0xa4] sm:$0xf] %v1209
      %1494 = vst [vmem:[#allocation3 + $0xb0] sm:$0xf] %v1223
      %1495 = vst [vmem:[#allocation3 + $0xbc] sm:$0xf] %v1233
      %1496 = vst [vmem:[#allocation3 + $0xc8] sm:$0xf] %v1247
      %1497 = vst [vmem:[#allocation3 + $0xd4] sm:$0xf] %v1257
      %1498 = vst [vmem:[#allocation3 + $0xe0] sm:$0xf] %v1271
      %1499 = vst [vmem:[#allocation3 + $0xec] sm:$0xf] %v1281
      %1500 = vst [vmem:[#allocation3 + $0xf8] sm:$0xf] %v1295
      %1501 = vst [vmem:[#allocation3 + $0x104] sm:$0xf] %v1305
      %1502 = vst [vmem:[#allocation3 + $0x110] sm:$0xf] %v1319
      %1503 = vst [vmem:[#allocation3 + $0x11c] sm:$0xf] %v1329
      %1504 = vst [vmem:[#allocation3 + $0x128] sm:$0xf] %v1343
      %1505 = vst [vmem:[#allocation3 + $0x134] sm:$0xf] %v1353
      %1506 = vst [vmem:[#allocation3 + $0x140] sm:$0xf] %v1367
      %1507 = vst [vmem:[#allocation3 + $0x14c] sm:$0xf] %v1377
      %1508 = vst [vmem:[#allocation3 + $0x158] sm:$0xf] %v1391
      %1509 = vst [vmem:[#allocation3 + $0x164] sm:$0xf] %v1401
      %1510 = vst [vmem:[#allocation3 + $0x170] sm:$0xf] %v1415
      %1511 = vst [vmem:[#allocation3 + $0x17c] sm:$0xf] %v1425
      %1512 = vst [vmem:[#allocation3 + $0x188] sm:$0xf] %v1439
      %1513 = vst [vmem:[#allocation3 + $0x194] sm:$0xf] %v1449
      %v1514 = vld [vmem:[#allocation3] sm:$0xff]
      %v1515 = vld [vmem:[#allocation3 + $0x8] sm:$0xf]
      %v1516 = vld [vmem:[#allocation3 + $0xc] sm:$0xff]
      %v1517 = vld [vmem:[#allocation3 + $0x14] sm:$0xf]
      %v1518 = vld [vmem:[#allocation3 + $0x18] sm:$0xff]
      %v1519 = vld [vmem:[#allocation3 + $0x20] sm:$0xf]
      %v1520 = vld [vmem:[#allocation3 + $0x24] sm:$0xff]
      %v1521 = vld [vmem:[#allocation3 + $0x2c] sm:$0xf]
      %v1522 = vld [vmem:[#allocation3 + $0x30] sm:$0xff]
      %v1523 = vld [vmem:[#allocation3 + $0x38] sm:$0xf]
      %v1524 = vld [vmem:[#allocation3 + $0x3c] sm:$0xff]
      %v1525 = vld [vmem:[#allocation3 + $0x44] sm:$0xf]
      %v1526 = vld [vmem:[#allocation3 + $0x48] sm:$0xff]
      %v1527 = vld [vmem:[#allocation3 + $0x50] sm:$0xf]
      %v1528 = vld [vmem:[#allocation3 + $0x54] sm:$0xff]
      %v1529 = vld [vmem:[#allocation3 + $0x5c] sm:$0xf]
      %v1530 = vld [vmem:[#allocation3 + $0x60] sm:$0xff]
      %v1531 = vld [vmem:[#allocation3 + $0x68] sm:$0xf]
      %v1532 = vld [vmem:[#allocation3 + $0x6c] sm:$0xff]
      %v1533 = vld [vmem:[#allocation3 + $0x74] sm:$0xf]
      %v1534 = vld [vmem:[#allocation3 + $0x78] sm:$0xff]
      %v1535 = vld [vmem:[#allocation3 + $0x80] sm:$0xf]
      %v1536 = vld [vmem:[#allocation3 + $0x84] sm:$0xff]
      %v1537 = vld [vmem:[#allocation3 + $0x8c] sm:$0xf]
      %v1538 = vld [vmem:[#allocation3 + $0x90] sm:$0xff]
      %v1539 = vld [vmem:[#allocation3 + $0x98] sm:$0xf]
      %v1540 = vld [vmem:[#allocation3 + $0x9c] sm:$0xff]
      %v1541 = vld [vmem:[#allocation3 + $0xa4] sm:$0xf]
      %v1542 = vld [vmem:[#allocation3 + $0xa8] sm:$0xff]
      %v1543 = vld [vmem:[#allocation3 + $0xb0] sm:$0xf]
      %v1544 = vld [vmem:[#allocation3 + $0xb4] sm:$0xff]
      %v1545 = vld [vmem:[#allocation3 + $0xbc] sm:$0xf]
      %v1546 = vld [vmem:[#allocation3 + $0xc0] sm:$0xff]
      %v1547 = vld [vmem:[#allocation3 + $0xc8] sm:$0xf]
      %v1548 = vld [vmem:[#allocation3 + $0xcc] sm:$0xff]
      %v1549 = vld [vmem:[#allocation3 + $0xd4] sm:$0xf]
      %v1550 = vld [vmem:[#allocation3 + $0xd8] sm:$0xff]
      %v1551 = vld [vmem:[#allocation3 + $0xe0] sm:$0xf]
      %v1552 = vld [vmem:[#allocation3 + $0xe4] sm:$0xff]
      %v1553 = vld [vmem:[#allocation3 + $0xec] sm:$0xf]
      %v1554 = vld [vmem:[#allocation3 + $0xf0] sm:$0xff]
      %v1555 = vld [vmem:[#allocation3 + $0xf8] sm:$0xf]
      %v1556 = vld [vmem:[#allocation3 + $0xfc] sm:$0xff]
      %v1557 = vld [vmem:[#allocation3 + $0x104] sm:$0xf]
      %v1558 = vld [vmem:[#allocation3 + $0x108] sm:$0xff]
      %v1559 = vld [vmem:[#allocation3 + $0x110] sm:$0xf]
      %v1560 = vld [vmem:[#allocation3 + $0x114] sm:$0xff]
      %v1561 = vld [vmem:[#allocation3 + $0x11c] sm:$0xf]
      %v1562 = vld [vmem:[#allocation3 + $0x120] sm:$0xff]
      %v1563 = vld [vmem:[#allocation3 + $0x128] sm:$0xf]
      %v1564 = vld [vmem:[#allocation3 + $0x12c] sm:$0xff]
      %v1565 = vld [vmem:[#allocation3 + $0x134] sm:$0xf]
      %v1566 = vld [vmem:[#allocation3 + $0x138] sm:$0xff]
      %v1567 = vld [vmem:[#allocation3 + $0x140] sm:$0xf]
      %v1568 = vld [vmem:[#allocation3 + $0x144] sm:$0xff]
      %v1569 = vld [vmem:[#allocation3 + $0x14c] sm:$0xf]
      %v1570 = vld [vmem:[#allocation3 + $0x150] sm:$0xff]
      %v1571 = vld [vmem:[#allocation3 + $0x158] sm:$0xf]
      %v1572 = vld [vmem:[#allocation3 + $0x15c] sm:$0xff]
      %v1573 = vld [vmem:[#allocation3 + $0x164] sm:$0xf]
      %v1574 = vld [vmem:[#allocation3 + $0x168] sm:$0xff]
      %v1575 = vld [vmem:[#allocation3 + $0x170] sm:$0xf]
      %v1576 = vld [vmem:[#allocation3 + $0x174] sm:$0xff]
      %v1577 = vld [vmem:[#allocation3 + $0x17c] sm:$0xf]
      %v1578 = vld [vmem:[%s1] sm:$0xf]
      %v1579 = vld [vmem:[%s1 + $0x4] sm:$0xf]
      %v1580 = vld [vmem:[%s1 + $0x8] sm:$0xf]
      %v1581 = vld [vmem:[%s1 + $0xc] sm:$0xf]
      %v1582 = vld [vmem:[%s1 + $0x10] sm:$0xf]
      %v1583 = vld [vmem:[%s1 + $0x14] sm:$0xf]
      %v1584 = vld [vmem:[%s1 + $0x18] sm:$0xf]
      %v1585 = vld [vmem:[%s1 + $0x1c] sm:$0xf]
      %v1586 = vld [vmem:[%s1 + $0x20] sm:$0xf]
      %v1587 = vld [vmem:[%s1 + $0x24] sm:$0xf]
      %v1588 = vld [vmem:[%s1 + $0x28] sm:$0xf]
      %v1589 = vld [vmem:[%s1 + $0x2c] sm:$0xf]
      %v1590 = vld [vmem:[%s1 + $0x30] sm:$0xf]
      %v1591 = vld [vmem:[%s1 + $0x34] sm:$0xf]
      %v1592 = vld [vmem:[%s1 + $0x38] sm:$0xf]
      %v1593 = vld [vmem:[%s1 + $0x3c] sm:$0xf]
      %v1594 = vld [vmem:[%s1 + $0x40] sm:$0xf]
      %v1595 = vld [vmem:[%s1 + $0x44] sm:$0xf]
      %v1596 = vld [vmem:[%s1 + $0x48] sm:$0xf]
      %v1597 = vld [vmem:[%s1 + $0x4c] sm:$0xf]
      %v1598 = vld [vmem:[%s1 + $0x50] sm:$0xf]
      %v1599 = vld [vmem:[%s1 + $0x54] sm:$0xf]
      %v1600 = vld [vmem:[%s1 + $0x58] sm:$0xf]
      %v1601 = vld [vmem:[%s1 + $0x5c] sm:$0xf]
      %v1602 = vld [vmem:[%s1 + $0x60] sm:$0xf]
      %v1603 = vld [vmem:[%s1 + $0x64] sm:$0xf]
      %v1604 = vld [vmem:[%s1 + $0x68] sm:$0xf]
      %v1605 = vld [vmem:[%s1 + $0x6c] sm:$0xf]
      %v1606 = vld [vmem:[%s1 + $0x70] sm:$0xf]
      %v1607 = vld [vmem:[%s1 + $0x74] sm:$0xf]
      %v1608 = vld [vmem:[%s1 + $0x78] sm:$0xf]
      %v1609 = vld [vmem:[%s1 + $0x7c] sm:$0xf]
      %v1610 = vld [vmem:[%s1 + $0x80] sm:$0xf]
      %v1611 = vld [vmem:[%s1 + $0x84] sm:$0xf]
      %v1612 = vld [vmem:[%s1 + $0x88] sm:$0xf]
      %v1613 = vld [vmem:[%s1 + $0x8c] sm:$0xf]
      %v1614 = vld [vmem:[%s1 + $0x90] sm:$0xf]
      %v1615 = vld [vmem:[%s1 + $0x94] sm:$0xf]
      %v1616 = vld [vmem:[%s1 + $0x98] sm:$0xf]
      %v1617 = vld [vmem:[%s1 + $0x9c] sm:$0xf]
      %v1618 = vld [vmem:[%s1 + $0xa0] sm:$0xf]
      %v1619 = vld [vmem:[%s1 + $0xa4] sm:$0xf]
      %v1620 = vld [vmem:[%s1 + $0xa8] sm:$0xf]
      %v1621 = vld [vmem:[%s1 + $0xac] sm:$0xf]
      %v1622 = vld [vmem:[%s1 + $0xb0] sm:$0xf]
      %v1623 = vld [vmem:[%s1 + $0xb4] sm:$0xf]
      %v1624 = vld [vmem:[%s1 + $0xb8] sm:$0xf]
      %v1625 = vld [vmem:[%s1 + $0xbc] sm:$0xf]
      %v1626 = vld [vmem:[#allocation3 + $0x180] sm:$0xff]
      %v1627 = vld [vmem:[#allocation3 + $0x188] sm:$0xf]
      %v1628 = vld [vmem:[#allocation3 + $0x18c] sm:$0xff]
      %v1629 = vld [vmem:[#allocation3 + $0x194] sm:$0xf]
      %s1630 = scalar_lea.vmem %s1, 192
      %v1631 = vld [vmem:[%s1630] sm:$0xf]
      %v1632 = vld [vmem:[%s1630 + $0x4] sm:$0xf]
      %v1633 = vld [vmem:[%s1630 + $0x8] sm:$0xf]
      %v1634 = vld [vmem:[%s1630 + $0xc] sm:$0xf]
      %v1635 = vld [vmem:[%s1630 + $0x10] sm:$0xf]
      %v1636 = vld [vmem:[%s1630 + $0x14] sm:$0xf]
      %v1637 = vld [vmem:[%s1630 + $0x18] sm:$0xf]
      %v1638 = vld [vmem:[%s1630 + $0x1c] sm:$0xf]
      %v1639 = vld [vmem:[%s1630 + $0x20] sm:$0xf]
      %v1640 = vld [vmem:[%s1630 + $0x24] sm:$0xf]
      %v1641 = vld [vmem:[%s1630 + $0x28] sm:$0xf]
      %v1642 = vld [vmem:[%s1630 + $0x2c] sm:$0xf]
      %v1643 = vld [vmem:[%s1630 + $0x30] sm:$0xf]
      %v1644 = vld [vmem:[%s1630 + $0x34] sm:$0xf]
      %v1645 = vld [vmem:[%s1630 + $0x38] sm:$0xf]
      %v1646 = vld [vmem:[%s1630 + $0x3c] sm:$0xf]
      %v1647 = vld [vmem:[%s1630 + $0x40] sm:$0xf]
      %v1648 = vld [vmem:[%s1630 + $0x44] sm:$0xf]
      %v1649 = vld [vmem:[%s1630 + $0x48] sm:$0xf]
      %v1650 = vld [vmem:[%s1630 + $0x4c] sm:$0xf]
      %v1651 = vld [vmem:[%s1630 + $0x50] sm:$0xf]
      %v1652 = vld [vmem:[%s1630 + $0x54] sm:$0xf]
      %v1653 = vld [vmem:[%s1630 + $0x58] sm:$0xf]
      %v1654 = vld [vmem:[%s1630 + $0x5c] sm:$0xf]
      %v1655 = vld [vmem:[%s1630 + $0x60] sm:$0xf]
      %v1656 = vld [vmem:[%s1630 + $0x64] sm:$0xf]
      %v1657 = vld [vmem:[%s1630 + $0x68] sm:$0xf]
      %v1658 = vld [vmem:[%s1630 + $0x6c] sm:$0xf]
      %v1659 = vld [vmem:[%s1630 + $0x70] sm:$0xf]
      %v1660 = vld [vmem:[%s1630 + $0x74] sm:$0xf]
      %v1661 = vld [vmem:[%s1630 + $0x78] sm:$0xf]
      %v1662 = vld [vmem:[%s1630 + $0x7c] sm:$0xf]
      %v1663 = vld [vmem:[%s1630 + $0x80] sm:$0xf]
      %v1664 = vld [vmem:[%s1630 + $0x84] sm:$0xf]
      %v1665 = vld [vmem:[%s1630 + $0x88] sm:$0xf]
      %v1666 = vld [vmem:[%s1630 + $0x8c] sm:$0xf]
      %v1667 = vld [vmem:[%s1630 + $0x90] sm:$0xf]
      %v1668 = vld [vmem:[%s1630 + $0x94] sm:$0xf]
      %v1669 = vld [vmem:[%s1630 + $0x98] sm:$0xf]
      %v1670 = vld [vmem:[%s1630 + $0x9c] sm:$0xf]
      %v1671 = vld [vmem:[%s1630 + $0xa0] sm:$0xf]
      %v1672 = vld [vmem:[%s1630 + $0xa4] sm:$0xf]
      %v1673 = vld [vmem:[%s1630 + $0xa8] sm:$0xf]
      %v1674 = vld [vmem:[%s1630 + $0xac] sm:$0xf]
      %v1675 = vld [vmem:[%s1630 + $0xb0] sm:$0xf]
      %v1676 = vld [vmem:[%s1630 + $0xb4] sm:$0xf]
      %v1677 = vld [vmem:[%s1630 + $0xb8] sm:$0xf]
      %v1678 = vld [vmem:[%s1630 + $0xbc] sm:$0xf]
      %v1743 = vunpack.c.l.b16 %v1518
      %v1744 = vunpack.c.h.b16 %v1518
      %v1745 = vunpack.c.l.b16 %v1519
      %v1746 = vunpack.c.l.b16 %v1520
      %v1747 = vunpack.c.h.b16 %v1520
      %v1748 = vunpack.c.l.b16 %v1521
      %v1749 = vunpack.c.l.b16 %v1522
      %v1750 = vunpack.c.h.b16 %v1522
      %v1751 = vunpack.c.l.b16 %v1523
      %v1752 = vunpack.c.l.b16 %v1524
      %v1753 = vunpack.c.h.b16 %v1524
      %v1754 = vunpack.c.l.b16 %v1525
      %v1755 = vunpack.c.l.b16 %v1526
      %v1756 = vunpack.c.h.b16 %v1526
      %v1757 = vunpack.c.l.b16 %v1527
      %v1758 = vunpack.c.l.b16 %v1528
      %v1759 = vunpack.c.h.b16 %v1528
      %v1760 = vunpack.c.l.b16 %v1529
      %v1761 = vunpack.c.l.b16 %v1530
      %v1762 = vunpack.c.h.b16 %v1530
      %v1763 = vunpack.c.l.b16 %v1531
      %v1764 = vunpack.c.l.b16 %v1532
      %v1765 = vunpack.c.h.b16 %v1532
      %v1766 = vunpack.c.l.b16 %v1533
      %v1767 = vunpack.c.l.b16 %v1534
      %v1768 = vunpack.c.h.b16 %v1534
      %v1769 = vunpack.c.l.b16 %v1535
      %v1770 = vunpack.c.l.b16 %v1536
      %v1771 = vunpack.c.h.b16 %v1536
      %v1772 = vunpack.c.l.b16 %v1537
      %v1773 = vunpack.c.l.b16 %v1538
      %v1774 = vunpack.c.h.b16 %v1538
      %v1775 = vunpack.c.l.b16 %v1539
      %v1776 = vunpack.c.l.b16 %v1540
      %v1777 = vunpack.c.h.b16 %v1540
      %v1778 = vunpack.c.l.b16 %v1541
      %v1779 = vunpack.c.l.b16 %v1542
      %v1780 = vunpack.c.h.b16 %v1542
      %v1781 = vunpack.c.l.b16 %v1543
      %v1782 = vunpack.c.l.b16 %v1544
      %v1783 = vunpack.c.h.b16 %v1544
      %v1784 = vunpack.c.l.b16 %v1545
      %v1785 = vunpack.c.l.b16 %v1546
      %v1786 = vunpack.c.h.b16 %v1546
      %v1787 = vunpack.c.l.b16 %v1547
      %v1788 = vunpack.c.l.b16 %v1548
      %v1789 = vunpack.c.h.b16 %v1548
      %v1790 = vunpack.c.l.b16 %v1549
      %v1791 = vunpack.c.l.b16 %v1550
      %v1792 = vunpack.c.h.b16 %v1550
      %v1793 = vunpack.c.l.b16 %v1551
      %v1794 = vunpack.c.l.b16 %v1552
      %v1795 = vunpack.c.h.b16 %v1552
      %v1796 = vunpack.c.l.b16 %v1553
      %v1797 = vunpack.c.l.b16 %v1554
      %v1798 = vunpack.c.h.b16 %v1554
      %v1799 = vunpack.c.l.b16 %v1555
      %v1800 = vunpack.c.l.b16 %v1556
      %v1801 = vunpack.c.h.b16 %v1556
      %v1802 = vunpack.c.l.b16 %v1557
      %v1803 = vunpack.c.l.b16 %v1558
      %v1804 = vunpack.c.h.b16 %v1558
      %v1805 = vunpack.c.l.b16 %v1559
      %v1806 = vunpack.c.l.b16 %v1560
      %v1807 = vunpack.c.h.b16 %v1560
      %v1808 = vunpack.c.l.b16 %v1561
      %v1809 = vunpack.c.l.b16 %v1562
      %v1810 = vunpack.c.h.b16 %v1562
      %v1811 = vunpack.c.l.b16 %v1563
      %v1812 = vunpack.c.l.b16 %v1564
      %v1813 = vunpack.c.h.b16 %v1564
      %v1814 = vunpack.c.l.b16 %v1565
      %v1815 = vunpack.c.l.b16 %v1566
      %v1816 = vunpack.c.h.b16 %v1566
      %v1817 = vunpack.c.l.b16 %v1567
      %v1818 = vunpack.c.l.b16 %v1568
      %v1819 = vunpack.c.h.b16 %v1568
      %v1820 = vunpack.c.l.b16 %v1569
      %v1821 = vunpack.c.l.b16 %v1570
      %v1822 = vunpack.c.h.b16 %v1570
      %v1823 = vunpack.c.l.b16 %v1571
      %v1824 = vunpack.c.l.b16 %v1572
      %v1825 = vunpack.c.h.b16 %v1572
      %v1826 = vunpack.c.l.b16 %v1573
      %v1827 = vunpack.c.l.b16 %v1574
      %v1828 = vunpack.c.h.b16 %v1574
      %v1829 = vunpack.c.l.b16 %v1575
      %v1830 = vunpack.c.l.b16 %v1576
      %v1831 = vunpack.c.h.b16 %v1576
      %v1832 = vunpack.c.l.b16 %v1577
      %v1833 = vunpack.c.l.b16 %v1626
      %v1834 = vunpack.c.h.b16 %v1626
      %v1835 = vunpack.c.l.b16 %v1627
      %v1836 = vunpack.c.l.b16 %v1628
      %v1837 = vunpack.c.h.b16 %v1628
      %v1838 = vunpack.c.l.b16 %v1629
      %v1839 = vpack.c.b16 %v1746, %v1743
      %v1840 = vpack.c.b16 %v1747, %v1744
      %v1841 = vpack.c.b16 %v1748, %v1745
      %v1842 = vpack.c.b16 %v1752, %v1749
      %v1843 = vpack.c.b16 %v1753, %v1750
      %v1844 = vpack.c.b16 %v1754, %v1751
      %v1845 = vpack.c.b16 %v1758, %v1755
      %v1846 = vpack.c.b16 %v1759, %v1756
      %v1847 = vpack.c.b16 %v1760, %v1757
      %v1848 = vpack.c.b16 %v1764, %v1761
      %v1849 = vpack.c.b16 %v1765, %v1762
      %v1850 = vpack.c.b16 %v1766, %v1763
      %v1851 = vpack.c.b16 %v1770, %v1767
      %v1852 = vpack.c.b16 %v1771, %v1768
      %v1853 = vpack.c.b16 %v1772, %v1769
      %v1854 = vpack.c.b16 %v1776, %v1773
      %v1855 = vpack.c.b16 %v1777, %v1774
      %v1856 = vpack.c.b16 %v1778, %v1775
      %v1857 = vpack.c.b16 %v1782, %v1779
      %v1858 = vpack.c.b16 %v1783, %v1780
      %v1859 = vpack.c.b16 %v1784, %v1781
      %v1860 = vpack.c.b16 %v1788, %v1785
      %v1861 = vpack.c.b16 %v1789, %v1786
      %v1862 = vpack.c.b16 %v1790, %v1787
      %v1863 = vpack.c.b16 %v1794, %v1791
      %v1864 = vpack.c.b16 %v1795, %v1792
      %v1865 = vpack.c.b16 %v1796, %v1793
      %v1866 = vpack.c.b16 %v1800, %v1797
      %v1867 = vpack.c.b16 %v1801, %v1798
      %v1868 = vpack.c.b16 %v1802, %v1799
      %v1869 = vpack.c.b16 %v1806, %v1803
      %v1870 = vpack.c.b16 %v1807, %v1804
      %v1871 = vpack.c.b16 %v1808, %v1805
      %v1872 = vpack.c.b16 %v1812, %v1809
      %v1873 = vpack.c.b16 %v1813, %v1810
      %v1874 = vpack.c.b16 %v1814, %v1811
      %v1875 = vpack.c.b16 %v1818, %v1815
      %v1876 = vpack.c.b16 %v1819, %v1816
      %v1877 = vpack.c.b16 %v1820, %v1817
      %v1878 = vpack.c.b16 %v1824, %v1821
      %v1879 = vpack.c.b16 %v1825, %v1822
      %v1880 = vpack.c.b16 %v1826, %v1823
      %v1881 = vpack.c.b16 %v1830, %v1827
      %v1882 = vpack.c.b16 %v1831, %v1828
      %v1883 = vpack.c.b16 %v1832, %v1829
      %v1884 = vpack.c.b16 %v1836, %v1833
      %v1885 = vpack.c.b16 %v1837, %v1834
      %v1886 = vpack.c.b16 %v1838, %v1835
      %v1983 = vunpack.c.l.b16 %v1631
      %v1984 = vunpack.c.l.b16 %v1632
      %v1985 = vunpack.c.l.b16 %v1633
      %v1986 = vunpack.c.l.b16 %v1634
      %v1987 = vunpack.c.l.b16 %v1635
      %v1988 = vunpack.c.l.b16 %v1636
      %v1989 = vunpack.c.l.b16 %v1637
      %v1990 = vunpack.c.l.b16 %v1638
      %v1991 = vunpack.c.l.b16 %v1639
      %v1992 = vunpack.c.l.b16 %v1640
      %v1993 = vunpack.c.l.b16 %v1641
      %v1994 = vunpack.c.l.b16 %v1642
      %v1995 = vunpack.c.l.b16 %v1643
      %v1996 = vunpack.c.l.b16 %v1644
      %v1997 = vunpack.c.l.b16 %v1645
      %v1998 = vunpack.c.l.b16 %v1646
      %v1999 = vunpack.c.l.b16 %v1647
      %v2000 = vunpack.c.l.b16 %v1648
      %v2001 = vunpack.c.l.b16 %v1649
      %v2002 = vunpack.c.l.b16 %v1650
      %v2003 = vunpack.c.l.b16 %v1651
      %v2004 = vunpack.c.l.b16 %v1652
      %v2005 = vunpack.c.l.b16 %v1653
      %v2006 = vunpack.c.l.b16 %v1654
      %v2007 = vunpack.c.l.b16 %v1655
      %v2008 = vunpack.c.l.b16 %v1656
      %v2009 = vunpack.c.l.b16 %v1657
      %v2010 = vunpack.c.l.b16 %v1658
      %v2011 = vunpack.c.l.b16 %v1659
      %v2012 = vunpack.c.l.b16 %v1660
      %v2013 = vunpack.c.l.b16 %v1661
      %v2014 = vunpack.c.l.b16 %v1662
      %v2015 = vunpack.c.l.b16 %v1663
      %v2016 = vunpack.c.l.b16 %v1664
      %v2017 = vunpack.c.l.b16 %v1665
      %v2018 = vunpack.c.l.b16 %v1666
      %v2019 = vunpack.c.l.b16 %v1667
      %v2020 = vunpack.c.l.b16 %v1668
      %v2021 = vunpack.c.l.b16 %v1669
      %v2022 = vunpack.c.l.b16 %v1670
      %v2023 = vunpack.c.l.b16 %v1671
      %v2024 = vunpack.c.l.b16 %v1672
      %v2025 = vunpack.c.l.b16 %v1673
      %v2026 = vunpack.c.l.b16 %v1674
      %v2027 = vunpack.c.l.b16 %v1675
      %v2028 = vunpack.c.l.b16 %v1676
      %v2029 = vunpack.c.l.b16 %v1677
      %v2030 = vunpack.c.l.b16 %v1678
      %v2031 = vpack.c.b16 %v1984, %v1983
      %v2032 = vpack.c.b16 %v1986, %v1985
      %v2033 = vpack.c.b16 %v1988, %v1987
      %v2034 = vpack.c.b16 %v1990, %v1989
      %v2035 = vpack.c.b16 %v1992, %v1991
      %v2036 = vpack.c.b16 %v1994, %v1993
      %v2037 = vpack.c.b16 %v1996, %v1995
      %v2038 = vpack.c.b16 %v1998, %v1997
      %v2039 = vpack.c.b16 %v2000, %v1999
      %v2040 = vpack.c.b16 %v2002, %v2001
      %v2041 = vpack.c.b16 %v2004, %v2003
      %v2042 = vpack.c.b16 %v2006, %v2005
      %v2043 = vpack.c.b16 %v2008, %v2007
      %v2044 = vpack.c.b16 %v2010, %v2009
      %v2045 = vpack.c.b16 %v2012, %v2011
      %v2046 = vpack.c.b16 %v2014, %v2013
      %v2047 = vpack.c.b16 %v2016, %v2015
      %v2048 = vpack.c.b16 %v2018, %v2017
      %v2049 = vpack.c.b16 %v2020, %v2019
      %v2050 = vpack.c.b16 %v2022, %v2021
      %v2051 = vpack.c.b16 %v2024, %v2023
      %v2052 = vpack.c.b16 %v2026, %v2025
      %v2053 = vpack.c.b16 %v2028, %v2027
      %v2054 = vpack.c.b16 %v2030, %v2029
      %2079 = vmatprep.subr.bf16.mxu0 0
      %2080 = vmatpush1.bf16.msra.mxu0 %v2038
      %2081 = vmatprep.subr.bf16.mxu0 0
      %2082 = vmatpush1.bf16.msra.mxu0 %v2037
      %2083 = vmatprep.subr.bf16.mxu0 0
      %2084 = vmatpush1.bf16.msra.mxu0 %v2036
      %2085 = vmatprep.subr.bf16.mxu0 0
      %2086 = vmatpush1.bf16.msra.mxu0 %v2035
      %2087 = vmatprep.subr.bf16.mxu0 0
      %2088 = vmatpush1.bf16.msra.mxu0 %v2034
      %2089 = vmatprep.subr.bf16.mxu0 0
      %2090 = vmatpush1.bf16.msra.mxu0 %v2033
      %2091 = vmatprep.subr.bf16.mxu0 0
      %2092 = vmatpush1.bf16.msra.mxu0 %v2032
      %2093 = vmatprep.subr.bf16.mxu0 0
      %2094 = vmatpush1.bf16.msra.mxu0 %v2031
      %2095 = vmatprep.subr.bf16.mxu0 0
      %2096 = vmatpush2.bf16.msra.mxu0 %v2046
      %2097 = vmatprep.subr.bf16.mxu0 0
      %2098 = vmatpush2.bf16.msra.mxu0 %v2045
      %2099 = vmatprep.subr.bf16.mxu0 0
      %2100 = vmatpush2.bf16.msra.mxu0 %v2044
      %2101 = vmatprep.subr.bf16.mxu0 0
      %2102 = vmatpush2.bf16.msra.mxu0 %v2043
      %2103 = vmatprep.subr.bf16.mxu0 0
      %2104 = vmatpush2.bf16.msra.mxu0 %v2042
      %2105 = vmatprep.subr.bf16.mxu0 0
      %2106 = vmatpush2.bf16.msra.mxu0 %v2041
      %2107 = vmatprep.subr.bf16.mxu0 0
      %2108 = vmatpush2.bf16.msra.mxu0 %v2040
      %2109 = vmatprep.subr.bf16.mxu0 0
      %2110 = vmatpush2.bf16.msra.mxu0 %v2039
      %2111 = vmatprep.mubr.bf16.mxu0 %v1840
      %2112 = vmatmul.mubr.bf16.gmra.mxu0 %v1839
      %v2113 = vpop.f32.mrf.mxu0
      %v2114 = vadd.f32 0.0, %v2113
      %v2115 = vpop.f32.mrf.mxu0
      %v2116 = vpop.f32.mrf.mxu0
      %v2117 = vadd.f32 0.0, %v2116
      %v2118 = vpop.f32.mrf.mxu0
      %2119 = vmatprep.mubr.bf16.mxu0 %v1843
      %2120 = vmatmul.mubr.bf16.gmra.mxu0 %v1842
      %v2121 = vpop.f32.mrf.mxu0
      %v2122 = vadd.f32 0.0, %v2121
      %v2123 = vpop.f32.mrf.mxu0
      %v2124 = vpop.f32.mrf.mxu0
      %v2125 = vadd.f32 0.0, %v2124
      %v2126 = vpop.f32.mrf.mxu0
      %2127 = vmatprep.mubr.bf16.mxu0 %v1846
      %2128 = vmatmul.mubr.bf16.gmra.mxu0 %v1845
      %v2129 = vpop.f32.mrf.mxu0
      %v2130 = vadd.f32 0.0, %v2129
      %v2131 = vpop.f32.mrf.mxu0
      %v2132 = vpop.f32.mrf.mxu0
      %v2133 = vadd.f32 0.0, %v2132
      %v2134 = vpop.f32.mrf.mxu0
      %2135 = vmatprep.mubr.bf16.mxu0 %v1849
      %2136 = vmatmul.mubr.bf16.gmra.mxu0 %v1848
      %v2137 = vpop.f32.mrf.mxu0
      %v2138 = vadd.f32 0.0, %v2137
      %v2139 = vpop.f32.mrf.mxu0
      %v2140 = vpop.f32.mrf.mxu0
      %v2141 = vadd.f32 0.0, %v2140
      %v2142 = vpop.f32.mrf.mxu0
      %2143 = vmatprep.mubr.bf16.mxu0 %v1852
      %2144 = vmatmul.mubr.bf16.gmra.mxu0 %v1851
      %v2145 = vpop.f32.mrf.mxu0
      %v2146 = vadd.f32 0.0, %v2145
      %v2147 = vpop.f32.mrf.mxu0
      %v2148 = vpop.f32.mrf.mxu0
      %v2149 = vadd.f32 0.0, %v2148
      %v2150 = vpop.f32.mrf.mxu0
      %2151 = vmatprep.mubr.bf16.mxu0 %v1855
      %2152 = vmatmul.mubr.bf16.gmra.mxu0 %v1854
      %v2153 = vpop.f32.mrf.mxu0
      %v2154 = vadd.f32 0.0, %v2153
      %v2155 = vpop.f32.mrf.mxu0
      %v2156 = vpop.f32.mrf.mxu0
      %v2157 = vadd.f32 0.0, %v2156
      %v2158 = vpop.f32.mrf.mxu0
      %2159 = vmatprep.mubr.bf16.mxu0 %v1858
      %2160 = vmatmul.mubr.bf16.gmra.mxu0 %v1857
      %v2161 = vpop.f32.mrf.mxu0
      %v2162 = vadd.f32 0.0, %v2161
      %v2163 = vpop.f32.mrf.mxu0
      %v2164 = vpop.f32.mrf.mxu0
      %v2165 = vadd.f32 0.0, %v2164
      %v2166 = vpop.f32.mrf.mxu0
      %2167 = vmatprep.mubr.bf16.mxu0 %v1861
      %2168 = vmatmul.mubr.bf16.gmra.mxu0 %v1860
      %v2169 = vpop.f32.mrf.mxu0
      %v2170 = vadd.f32 0.0, %v2169
      %v2171 = vpop.f32.mrf.mxu0
      %v2172 = vpop.f32.mrf.mxu0
      %v2173 = vadd.f32 0.0, %v2172
      %v2174 = vpop.f32.mrf.mxu0
      %2175 = vmatprep.mubr.bf16.mxu0 %v1864
      %2176 = vmatmul.mubr.bf16.gmra.mxu0 %v1863
      %v2177 = vpop.f32.mrf.mxu0
      %v2178 = vadd.f32 0.0, %v2177
      %v2179 = vpop.f32.mrf.mxu0
      %v2180 = vpop.f32.mrf.mxu0
      %v2181 = vadd.f32 0.0, %v2180
      %v2182 = vpop.f32.mrf.mxu0
      %2183 = vmatprep.mubr.bf16.mxu0 %v1867
      %2184 = vmatmul.mubr.bf16.gmra.mxu0 %v1866
      %v2185 = vpop.f32.mrf.mxu0
      %v2186 = vadd.f32 0.0, %v2185
      %v2187 = vpop.f32.mrf.mxu0
      %v2188 = vpop.f32.mrf.mxu0
      %v2189 = vadd.f32 0.0, %v2188
      %v2190 = vpop.f32.mrf.mxu0
      %2191 = vmatprep.mubr.bf16.mxu0 %v1870
      %2192 = vmatmul.mubr.bf16.gmra.mxu0 %v1869
      %v2193 = vpop.f32.mrf.mxu0
      %v2194 = vadd.f32 0.0, %v2193
      %v2195 = vpop.f32.mrf.mxu0
      %v2196 = vpop.f32.mrf.mxu0
      %v2197 = vadd.f32 0.0, %v2196
      %v2198 = vpop.f32.mrf.mxu0
      %2199 = vmatprep.mubr.bf16.mxu0 %v1873
      %2200 = vmatmul.mubr.bf16.gmra.mxu0 %v1872
      %v2201 = vpop.f32.mrf.mxu0
      %v2202 = vadd.f32 0.0, %v2201
      %v2203 = vpop.f32.mrf.mxu0
      %v2204 = vpop.f32.mrf.mxu0
      %v2205 = vadd.f32 0.0, %v2204
      %v2206 = vpop.f32.mrf.mxu0
      %2207 = vmatprep.mubr.bf16.mxu0 %v1876
      %2208 = vmatmul.mubr.bf16.gmra.mxu0 %v1875
      %v2209 = vpop.f32.mrf.mxu0
      %v2210 = vadd.f32 0.0, %v2209
      %v2211 = vpop.f32.mrf.mxu0
      %v2212 = vpop.f32.mrf.mxu0
      %v2213 = vadd.f32 0.0, %v2212
      %v2214 = vpop.f32.mrf.mxu0
      %2215 = vmatprep.mubr.bf16.mxu0 %v1879
      %2216 = vmatmul.mubr.bf16.gmra.mxu0 %v1878
      %v2217 = vpop.f32.mrf.mxu0
      %v2218 = vadd.f32 0.0, %v2217
      %v2219 = vpop.f32.mrf.mxu0
      %v2220 = vpop.f32.mrf.mxu0
      %v2221 = vadd.f32 0.0, %v2220
      %v2222 = vpop.f32.mrf.mxu0
      %2223 = vmatprep.mubr.bf16.mxu0 %v1882
      %2224 = vmatmul.mubr.bf16.gmra.mxu0 %v1881
      %v2225 = vpop.f32.mrf.mxu0
      %v2226 = vadd.f32 0.0, %v2225
      %v2227 = vpop.f32.mrf.mxu0
      %v2228 = vpop.f32.mrf.mxu0
      %v2229 = vadd.f32 0.0, %v2228
      %v2230 = vpop.f32.mrf.mxu0
      %2231 = vmatprep.mubr.bf16.mxu0 %v1885
      %2232 = vmatmul.mubr.bf16.gmra.mxu0 %v1884
      %v2233 = vpop.f32.mrf.mxu0
      %v2234 = vadd.f32 0.0, %v2233
      %v2235 = vpop.f32.mrf.mxu0
      %v2236 = vpop.f32.mrf.mxu0
      %v2237 = vadd.f32 0.0, %v2236
      %v2238 = vpop.f32.mrf.mxu0
      %2239 = vdwg.mxu0
      %2240 = vmatprep.subr.bf16.mxu0 0
      %2241 = vmatpush1.bf16.msra.mxu0 %v2054
      %2242 = vmatprep.subr.bf16.mxu0 0
      %2243 = vmatpush1.bf16.msra.mxu0 %v2053
      %2244 = vmatprep.subr.bf16.mxu0 0
      %2245 = vmatpush1.bf16.msra.mxu0 %v2052
      %2246 = vmatprep.subr.bf16.mxu0 0
      %2247 = vmatpush1.bf16.msra.mxu0 %v2051
      %2248 = vmatprep.subr.bf16.mxu0 0
      %2249 = vmatpush1.bf16.msra.mxu0 %v2050
      %2250 = vmatprep.subr.bf16.mxu0 0
      %2251 = vmatpush1.bf16.msra.mxu0 %v2049
      %2252 = vmatprep.subr.bf16.mxu0 0
      %2253 = vmatpush1.bf16.msra.mxu0 %v2048
      %2254 = vmatprep.subr.bf16.mxu0 0
      %2255 = vmatpush1.bf16.msra.mxu0 %v2047
      %2256 = vmatprep.subr.bf16.mxu0 0
      %2257 = vmatpush2.bf16.msra.mxu0 0
      %2258 = vmatprep.subr.bf16.mxu0 0
      %2259 = vmatpush2.bf16.msra.mxu0 0
      %2260 = vmatprep.subr.bf16.mxu0 0
      %2261 = vmatpush2.bf16.msra.mxu0 0
      %2262 = vmatprep.subr.bf16.mxu0 0
      %2263 = vmatpush2.bf16.msra.mxu0 0
      %2264 = vmatprep.subr.bf16.mxu0 0
      %2265 = vmatpush2.bf16.msra.mxu0 0
      %2266 = vmatprep.subr.bf16.mxu0 0
      %2267 = vmatpush2.bf16.msra.mxu0 0
      %2268 = vmatprep.subr.bf16.mxu0 0
      %2269 = vmatpush2.bf16.msra.mxu0 0
      %2270 = vmatprep.subr.bf16.mxu0 0
      %2271 = vmatpush2.bf16.msra.mxu0 0
      %2272 = vmatprep.mubr.bf16.mxu0 0
      %2273 = vmatmul.mubr.bf16.gmra.mxu0 %v1841
      %v2274 = vpop.f32.mrf.mxu0
      %v2275 = vadd.f32 %v2114, %v2274
      %v2276 = vpop.f32.mrf.mxu0
      %v2277 = vpop.f32.mrf.mxu0
      %v2278 = vadd.f32 %v2117, %v2277
      %v2279 = vpop.f32.mrf.mxu0
      %2280 = vmatprep.mubr.bf16.mxu0 0
      %2281 = vmatmul.mubr.bf16.gmra.mxu0 %v1844
      %v2282 = vpop.f32.mrf.mxu0
      %v2283 = vadd.f32 %v2122, %v2282
      %v2284 = vpop.f32.mrf.mxu0
      %v2285 = vpop.f32.mrf.mxu0
      %v2286 = vadd.f32 %v2125, %v2285
      %v2287 = vpop.f32.mrf.mxu0
      %2288 = vmatprep.mubr.bf16.mxu0 0
      %2289 = vmatmul.mubr.bf16.gmra.mxu0 %v1847
      %v2290 = vpop.f32.mrf.mxu0
      %v2291 = vadd.f32 %v2130, %v2290
      %v2292 = vpop.f32.mrf.mxu0
      %v2293 = vpop.f32.mrf.mxu0
      %v2294 = vadd.f32 %v2133, %v2293
      %v2295 = vpop.f32.mrf.mxu0
      %2296 = vmatprep.mubr.bf16.mxu0 0
      %2297 = vmatmul.mubr.bf16.gmra.mxu0 %v1850
      %v2298 = vpop.f32.mrf.mxu0
      %v2299 = vadd.f32 %v2138, %v2298
      %v2300 = vpop.f32.mrf.mxu0
      %v2301 = vpop.f32.mrf.mxu0
      %v2302 = vadd.f32 %v2141, %v2301
      %v2303 = vpop.f32.mrf.mxu0
      %2304 = vmatprep.mubr.bf16.mxu0 0
      %2305 = vmatmul.mubr.bf16.gmra.mxu0 %v1853
      %v2306 = vpop.f32.mrf.mxu0
      %v2307 = vadd.f32 %v2146, %v2306
      %v2308 = vpop.f32.mrf.mxu0
      %v2309 = vpop.f32.mrf.mxu0
      %v2310 = vadd.f32 %v2149, %v2309
      %v2311 = vpop.f32.mrf.mxu0
      %2312 = vmatprep.mubr.bf16.mxu0 0
      %2313 = vmatmul.mubr.bf16.gmra.mxu0 %v1856
      %v2314 = vpop.f32.mrf.mxu0
      %v2315 = vadd.f32 %v2154, %v2314
      %v2316 = vpop.f32.mrf.mxu0
      %v2317 = vpop.f32.mrf.mxu0
      %v2318 = vadd.f32 %v2157, %v2317
      %v2319 = vpop.f32.mrf.mxu0
      %2320 = vmatprep.mubr.bf16.mxu0 0
      %2321 = vmatmul.mubr.bf16.gmra.mxu0 %v1859
      %v2322 = vpop.f32.mrf.mxu0
      %v2323 = vadd.f32 %v2162, %v2322
      %v2324 = vpop.f32.mrf.mxu0
      %v2325 = vpop.f32.mrf.mxu0
      %v2326 = vadd.f32 %v2165, %v2325
      %v2327 = vpop.f32.mrf.mxu0
      %2328 = vmatprep.mubr.bf16.mxu0 0
      %2329 = vmatmul.mubr.bf16.gmra.mxu0 %v1862
      %v2330 = vpop.f32.mrf.mxu0
      %v2331 = vadd.f32 %v2170, %v2330
      %v2332 = vpop.f32.mrf.mxu0
      %v2333 = vpop.f32.mrf.mxu0
      %v2334 = vadd.f32 %v2173, %v2333
      %v2335 = vpop.f32.mrf.mxu0
      %2336 = vmatprep.mubr.bf16.mxu0 0
      %2337 = vmatmul.mubr.bf16.gmra.mxu0 %v1865
      %v2338 = vpop.f32.mrf.mxu0
      %v2339 = vadd.f32 %v2178, %v2338
      %v2340 = vpop.f32.mrf.mxu0
      %v2341 = vpop.f32.mrf.mxu0
      %v2342 = vadd.f32 %v2181, %v2341
      %v2343 = vpop.f32.mrf.mxu0
      %2344 = vmatprep.mubr.bf16.mxu0 0
      %2345 = vmatmul.mubr.bf16.gmra.mxu0 %v1868
      %v2346 = vpop.f32.mrf.mxu0
      %v2347 = vadd.f32 %v2186, %v2346
      %v2348 = vpop.f32.mrf.mxu0
      %v2349 = vpop.f32.mrf.mxu0
      %v2350 = vadd.f32 %v2189, %v2349
      %v2351 = vpop.f32.mrf.mxu0
      %2352 = vmatprep.mubr.bf16.mxu0 0
      %2353 = vmatmul.mubr.bf16.gmra.mxu0 %v1871
      %v2354 = vpop.f32.mrf.mxu0
      %v2355 = vadd.f32 %v2194, %v2354
      %v2356 = vpop.f32.mrf.mxu0
      %v2357 = vpop.f32.mrf.mxu0
      %v2358 = vadd.f32 %v2197, %v2357
      %v2359 = vpop.f32.mrf.mxu0
      %2360 = vmatprep.mubr.bf16.mxu0 0
      %2361 = vmatmul.mubr.bf16.gmra.mxu0 %v1874
      %v2362 = vpop.f32.mrf.mxu0
      %v2363 = vadd.f32 %v2202, %v2362
      %v2364 = vpop.f32.mrf.mxu0
      %v2365 = vpop.f32.mrf.mxu0
      %v2366 = vadd.f32 %v2205, %v2365
      %v2367 = vpop.f32.mrf.mxu0
      %2368 = vmatprep.mubr.bf16.mxu0 0
      %2369 = vmatmul.mubr.bf16.gmra.mxu0 %v1877
      %v2370 = vpop.f32.mrf.mxu0
      %v2371 = vadd.f32 %v2210, %v2370
      %v2372 = vpop.f32.mrf.mxu0
      %v2373 = vpop.f32.mrf.mxu0
      %v2374 = vadd.f32 %v2213, %v2373
      %v2375 = vpop.f32.mrf.mxu0
      %2376 = vmatprep.mubr.bf16.mxu0 0
      %2377 = vmatmul.mubr.bf16.gmra.mxu0 %v1880
      %v2378 = vpop.f32.mrf.mxu0
      %v2379 = vadd.f32 %v2218, %v2378
      %v2380 = vpop.f32.mrf.mxu0
      %v2381 = vpop.f32.mrf.mxu0
      %v2382 = vadd.f32 %v2221, %v2381
      %v2383 = vpop.f32.mrf.mxu0
      %2384 = vmatprep.mubr.bf16.mxu0 0
      %2385 = vmatmul.mubr.bf16.gmra.mxu0 %v1883
      %v2386 = vpop.f32.mrf.mxu0
      %v2387 = vadd.f32 %v2226, %v2386
      %v2388 = vpop.f32.mrf.mxu0
      %v2389 = vpop.f32.mrf.mxu0
      %v2390 = vadd.f32 %v2229, %v2389
      %v2391 = vpop.f32.mrf.mxu0
      %2392 = vmatprep.mubr.bf16.mxu0 0
      %2393 = vmatmul.mubr.bf16.gmra.mxu0 %v1886
      %v2394 = vpop.f32.mrf.mxu0
      %v2395 = vadd.f32 %v2234, %v2394
      %v2396 = vpop.f32.mrf.mxu0
      %v2397 = vpop.f32.mrf.mxu0
      %v2398 = vadd.f32 %v2237, %v2397
      %v2399 = vpop.f32.mrf.mxu0
      %2400 = vdwg.mxu0
      %v2405 = vunpack.c.l.b16 %v1514
      %v2406 = vunpack.c.h.b16 %v1514
      %v2407 = vunpack.c.l.b16 %v1515
      %v2408 = vunpack.c.l.b16 %v1516
      %v2409 = vunpack.c.h.b16 %v1516
      %v2410 = vunpack.c.l.b16 %v1517
      %v2411 = vpack.c.b16 %v2408, %v2405
      %v2412 = vpack.c.b16 %v2409, %v2406
      %v2413 = vpack.c.b16 %v2410, %v2407
      %v2465 = vunpack.c.l.b16 %v1578
      %v2466 = vunpack.c.l.b16 %v1579
      %v2467 = vunpack.c.l.b16 %v1580
      %v2468 = vunpack.c.l.b16 %v1581
      %v2469 = vunpack.c.l.b16 %v1582
      %v2470 = vunpack.c.l.b16 %v1583
      %v2471 = vunpack.c.l.b16 %v1584
      %v2472 = vunpack.c.l.b16 %v1585
      %v2473 = vunpack.c.l.b16 %v1586
      %v2474 = vunpack.c.l.b16 %v1587
      %v2475 = vunpack.c.l.b16 %v1588
      %v2476 = vunpack.c.l.b16 %v1589
      %v2477 = vunpack.c.l.b16 %v1590
      %v2478 = vunpack.c.l.b16 %v1591
      %v2479 = vunpack.c.l.b16 %v1592
      %v2480 = vunpack.c.l.b16 %v1593
      %v2481 = vunpack.c.l.b16 %v1594
      %v2482 = vunpack.c.l.b16 %v1595
      %v2483 = vunpack.c.l.b16 %v1596
      %v2484 = vunpack.c.l.b16 %v1597
      %v2485 = vunpack.c.l.b16 %v1598
      %v2486 = vunpack.c.l.b16 %v1599
      %v2487 = vunpack.c.l.b16 %v1600
      %v2488 = vunpack.c.l.b16 %v1601
      %v2489 = vunpack.c.l.b16 %v1602
      %v2490 = vunpack.c.l.b16 %v1603
      %v2491 = vunpack.c.l.b16 %v1604
      %v2492 = vunpack.c.l.b16 %v1605
      %v2493 = vunpack.c.l.b16 %v1606
      %v2494 = vunpack.c.l.b16 %v1607
      %v2495 = vunpack.c.l.b16 %v1608
      %v2496 = vunpack.c.l.b16 %v1609
      %v2497 = vunpack.c.l.b16 %v1610
      %v2498 = vunpack.c.l.b16 %v1611
      %v2499 = vunpack.c.l.b16 %v1612
      %v2500 = vunpack.c.l.b16 %v1613
      %v2501 = vunpack.c.l.b16 %v1614
      %v2502 = vunpack.c.l.b16 %v1615
      %v2503 = vunpack.c.l.b16 %v1616
      %v2504 = vunpack.c.l.b16 %v1617
      %v2505 = vunpack.c.l.b16 %v1618
      %v2506 = vunpack.c.l.b16 %v1619
      %v2507 = vunpack.c.l.b16 %v1620
      %v2508 = vunpack.c.l.b16 %v1621
      %v2509 = vunpack.c.l.b16 %v1622
      %v2510 = vunpack.c.l.b16 %v1623
      %v2511 = vunpack.c.l.b16 %v1624
      %v2512 = vunpack.c.l.b16 %v1625
      %v2513 = vpack.c.b16 %v2466, %v2465
      %v2514 = vpack.c.b16 %v2468, %v2467
      %v2515 = vpack.c.b16 %v2470, %v2469
      %v2516 = vpack.c.b16 %v2472, %v2471
      %v2517 = vpack.c.b16 %v2474, %v2473
      %v2518 = vpack.c.b16 %v2476, %v2475
      %v2519 = vpack.c.b16 %v2478, %v2477
      %v2520 = vpack.c.b16 %v2480, %v2479
      %v2521 = vpack.c.b16 %v2482, %v2481
      %v2522 = vpack.c.b16 %v2484, %v2483
      %v2523 = vpack.c.b16 %v2486, %v2485
      %v2524 = vpack.c.b16 %v2488, %v2487
      %v2525 = vpack.c.b16 %v2490, %v2489
      %v2526 = vpack.c.b16 %v2492, %v2491
      %v2527 = vpack.c.b16 %v2494, %v2493
      %v2528 = vpack.c.b16 %v2496, %v2495
      %v2529 = vpack.c.b16 %v2498, %v2497
      %v2530 = vpack.c.b16 %v2500, %v2499
      %v2531 = vpack.c.b16 %v2502, %v2501
      %v2532 = vpack.c.b16 %v2504, %v2503
      %v2533 = vpack.c.b16 %v2506, %v2505
      %v2534 = vpack.c.b16 %v2508, %v2507
      %v2535 = vpack.c.b16 %v2510, %v2509
      %v2536 = vpack.c.b16 %v2512, %v2511
      %2561 = vmatprep.subr.bf16.mxu0 0
      %2562 = vmatpush1.bf16.msra.mxu0 %v2520
      %2563 = vmatprep.subr.bf16.mxu0 0
      %2564 = vmatpush1.bf16.msra.mxu0 %v2519
      %2565 = vmatprep.subr.bf16.mxu0 0
      %2566 = vmatpush1.bf16.msra.mxu0 %v2518
      %2567 = vmatprep.subr.bf16.mxu0 0
      %2568 = vmatpush1.bf16.msra.mxu0 %v2517
      %2569 = vmatprep.subr.bf16.mxu0 0
      %2570 = vmatpush1.bf16.msra.mxu0 %v2516
      %2571 = vmatprep.subr.bf16.mxu0 0
      %2572 = vmatpush1.bf16.msra.mxu0 %v2515
      %2573 = vmatprep.subr.bf16.mxu0 0
      %2574 = vmatpush1.bf16.msra.mxu0 %v2514
      %2575 = vmatprep.subr.bf16.mxu0 0
      %2576 = vmatpush1.bf16.msra.mxu0 %v2513
      %2577 = vmatprep.subr.bf16.mxu0 0
      %2578 = vmatpush2.bf16.msra.mxu0 %v2528
      %2579 = vmatprep.subr.bf16.mxu0 0
      %2580 = vmatpush2.bf16.msra.mxu0 %v2527
      %2581 = vmatprep.subr.bf16.mxu0 0
      %2582 = vmatpush2.bf16.msra.mxu0 %v2526
      %2583 = vmatprep.subr.bf16.mxu0 0
      %2584 = vmatpush2.bf16.msra.mxu0 %v2525
      %2585 = vmatprep.subr.bf16.mxu0 0
      %2586 = vmatpush2.bf16.msra.mxu0 %v2524
      %2587 = vmatprep.subr.bf16.mxu0 0
      %2588 = vmatpush2.bf16.msra.mxu0 %v2523
      %2589 = vmatprep.subr.bf16.mxu0 0
      %2590 = vmatpush2.bf16.msra.mxu0 %v2522
      %2591 = vmatprep.subr.bf16.mxu0 0
      %2592 = vmatpush2.bf16.msra.mxu0 %v2521
      %2593 = vmatprep.mubr.bf16.mxu0 %v2412
      %2594 = vmatmul.mubr.bf16.gmra.mxu0 %v2411
      %v2595 = vpop.f32.mrf.mxu0
      %v2596 = vadd.f32 %v2275, %v2595
      %v2597 = vpop.f32.mrf.mxu0
      %v2598 = vpop.f32.mrf.mxu0
      %v2599 = vadd.f32 %v2278, %v2598
      %v2600 = vpop.f32.mrf.mxu0
      %2601 = vmatprep.mubr.bf16.mxu0 %v1840
      %2602 = vmatmul.mubr.bf16.gmra.mxu0 %v1839
      %v2603 = vpop.f32.mrf.mxu0
      %v2604 = vadd.f32 %v2283, %v2603
      %v2605 = vpop.f32.mrf.mxu0
      %v2606 = vpop.f32.mrf.mxu0
      %v2607 = vadd.f32 %v2286, %v2606
      %v2608 = vpop.f32.mrf.mxu0
      %2609 = vmatprep.mubr.bf16.mxu0 %v1843
      %2610 = vmatmul.mubr.bf16.gmra.mxu0 %v1842
      %v2611 = vpop.f32.mrf.mxu0
      %v2612 = vadd.f32 %v2291, %v2611
      %v2613 = vpop.f32.mrf.mxu0
      %v2614 = vpop.f32.mrf.mxu0
      %v2615 = vadd.f32 %v2294, %v2614
      %v2616 = vpop.f32.mrf.mxu0
      %2617 = vmatprep.mubr.bf16.mxu0 %v1846
      %2618 = vmatmul.mubr.bf16.gmra.mxu0 %v1845
      %v2619 = vpop.f32.mrf.mxu0
      %v2620 = vadd.f32 %v2299, %v2619
      %v2621 = vpop.f32.mrf.mxu0
      %v2622 = vpop.f32.mrf.mxu0
      %v2623 = vadd.f32 %v2302, %v2622
      %v2624 = vpop.f32.mrf.mxu0
      %2625 = vmatprep.mubr.bf16.mxu0 %v1849
      %2626 = vmatmul.mubr.bf16.gmra.mxu0 %v1848
      %v2627 = vpop.f32.mrf.mxu0
      %v2628 = vadd.f32 %v2307, %v2627
      %v2629 = vpop.f32.mrf.mxu0
      %v2630 = vpop.f32.mrf.mxu0
      %v2631 = vadd.f32 %v2310, %v2630
      %v2632 = vpop.f32.mrf.mxu0
      %2633 = vmatprep.mubr.bf16.mxu0 %v1852
      %2634 = vmatmul.mubr.bf16.gmra.mxu0 %v1851
      %v2635 = vpop.f32.mrf.mxu0
      %v2636 = vadd.f32 %v2315, %v2635
      %v2637 = vpop.f32.mrf.mxu0
      %v2638 = vpop.f32.mrf.mxu0
      %v2639 = vadd.f32 %v2318, %v2638
      %v2640 = vpop.f32.mrf.mxu0
      %2641 = vmatprep.mubr.bf16.mxu0 %v1855
      %2642 = vmatmul.mubr.bf16.gmra.mxu0 %v1854
      %v2643 = vpop.f32.mrf.mxu0
      %v2644 = vadd.f32 %v2323, %v2643
      %v2645 = vpop.f32.mrf.mxu0
      %v2646 = vpop.f32.mrf.mxu0
      %v2647 = vadd.f32 %v2326, %v2646
      %v2648 = vpop.f32.mrf.mxu0
      %2649 = vmatprep.mubr.bf16.mxu0 %v1858
      %2650 = vmatmul.mubr.bf16.gmra.mxu0 %v1857
      %v2651 = vpop.f32.mrf.mxu0
      %v2652 = vadd.f32 %v2331, %v2651
      %v2653 = vpop.f32.mrf.mxu0
      %v2654 = vpop.f32.mrf.mxu0
      %v2655 = vadd.f32 %v2334, %v2654
      %v2656 = vpop.f32.mrf.mxu0
      %2657 = vmatprep.mubr.bf16.mxu0 %v1861
      %2658 = vmatmul.mubr.bf16.gmra.mxu0 %v1860
      %v2659 = vpop.f32.mrf.mxu0
      %v2660 = vadd.f32 %v2339, %v2659
      %v2661 = vpop.f32.mrf.mxu0
      %v2662 = vpop.f32.mrf.mxu0
      %v2663 = vadd.f32 %v2342, %v2662
      %v2664 = vpop.f32.mrf.mxu0
      %2665 = vmatprep.mubr.bf16.mxu0 %v1864
      %2666 = vmatmul.mubr.bf16.gmra.mxu0 %v1863
      %v2667 = vpop.f32.mrf.mxu0
      %v2668 = vadd.f32 %v2347, %v2667
      %v2669 = vpop.f32.mrf.mxu0
      %v2670 = vpop.f32.mrf.mxu0
      %v2671 = vadd.f32 %v2350, %v2670
      %v2672 = vpop.f32.mrf.mxu0
      %2673 = vmatprep.mubr.bf16.mxu0 %v1867
      %2674 = vmatmul.mubr.bf16.gmra.mxu0 %v1866
      %v2675 = vpop.f32.mrf.mxu0
      %v2676 = vadd.f32 %v2355, %v2675
      %v2677 = vpop.f32.mrf.mxu0
      %v2678 = vpop.f32.mrf.mxu0
      %v2679 = vadd.f32 %v2358, %v2678
      %v2680 = vpop.f32.mrf.mxu0
      %2681 = vmatprep.mubr.bf16.mxu0 %v1870
      %2682 = vmatmul.mubr.bf16.gmra.mxu0 %v1869
      %v2683 = vpop.f32.mrf.mxu0
      %v2684 = vadd.f32 %v2363, %v2683
      %v2685 = vpop.f32.mrf.mxu0
      %v2686 = vpop.f32.mrf.mxu0
      %v2687 = vadd.f32 %v2366, %v2686
      %v2688 = vpop.f32.mrf.mxu0
      %2689 = vmatprep.mubr.bf16.mxu0 %v1873
      %2690 = vmatmul.mubr.bf16.gmra.mxu0 %v1872
      %v2691 = vpop.f32.mrf.mxu0
      %v2692 = vadd.f32 %v2371, %v2691
      %v2693 = vpop.f32.mrf.mxu0
      %v2694 = vpop.f32.mrf.mxu0
      %v2695 = vadd.f32 %v2374, %v2694
      %v2696 = vpop.f32.mrf.mxu0
      %2697 = vmatprep.mubr.bf16.mxu0 %v1876
      %2698 = vmatmul.mubr.bf16.gmra.mxu0 %v1875
      %v2699 = vpop.f32.mrf.mxu0
      %v2700 = vadd.f32 %v2379, %v2699
      %v2701 = vpop.f32.mrf.mxu0
      %v2702 = vpop.f32.mrf.mxu0
      %v2703 = vadd.f32 %v2382, %v2702
      %v2704 = vpop.f32.mrf.mxu0
      %2705 = vmatprep.mubr.bf16.mxu0 %v1879
      %2706 = vmatmul.mubr.bf16.gmra.mxu0 %v1878
      %v2707 = vpop.f32.mrf.mxu0
      %v2708 = vadd.f32 %v2387, %v2707
      %v2709 = vpop.f32.mrf.mxu0
      %v2710 = vpop.f32.mrf.mxu0
      %v2711 = vadd.f32 %v2390, %v2710
      %v2712 = vpop.f32.mrf.mxu0
      %2713 = vmatprep.mubr.bf16.mxu0 %v1882
      %2714 = vmatmul.mubr.bf16.gmra.mxu0 %v1881
      %v2715 = vpop.f32.mrf.mxu0
      %v2716 = vadd.f32 %v2395, %v2715
      %v2717 = vpop.f32.mrf.mxu0
      %v2718 = vpop.f32.mrf.mxu0
      %v2719 = vadd.f32 %v2398, %v2718
      %v2720 = vpop.f32.mrf.mxu0
      %2721 = vdwg.mxu0
      %2722 = vmatprep.subr.bf16.mxu0 0
      %2723 = vmatpush1.bf16.msra.mxu0 %v2536
      %2724 = vmatprep.subr.bf16.mxu0 0
      %2725 = vmatpush1.bf16.msra.mxu0 %v2535
      %2726 = vmatprep.subr.bf16.mxu0 0
      %2727 = vmatpush1.bf16.msra.mxu0 %v2534
      %2728 = vmatprep.subr.bf16.mxu0 0
      %2729 = vmatpush1.bf16.msra.mxu0 %v2533
      %2730 = vmatprep.subr.bf16.mxu0 0
      %2731 = vmatpush1.bf16.msra.mxu0 %v2532
      %2732 = vmatprep.subr.bf16.mxu0 0
      %2733 = vmatpush1.bf16.msra.mxu0 %v2531
      %2734 = vmatprep.subr.bf16.mxu0 0
      %2735 = vmatpush1.bf16.msra.mxu0 %v2530
      %2736 = vmatprep.subr.bf16.mxu0 0
      %2737 = vmatpush1.bf16.msra.mxu0 %v2529
      %2738 = vmatprep.subr.bf16.mxu0 0
      %2739 = vmatpush2.bf16.msra.mxu0 0
      %2740 = vmatprep.subr.bf16.mxu0 0
      %2741 = vmatpush2.bf16.msra.mxu0 0
      %2742 = vmatprep.subr.bf16.mxu0 0
      %2743 = vmatpush2.bf16.msra.mxu0 0
      %2744 = vmatprep.subr.bf16.mxu0 0
      %2745 = vmatpush2.bf16.msra.mxu0 0
      %2746 = vmatprep.subr.bf16.mxu0 0
      %2747 = vmatpush2.bf16.msra.mxu0 0
      %2748 = vmatprep.subr.bf16.mxu0 0
      %2749 = vmatpush2.bf16.msra.mxu0 0
      %2750 = vmatprep.subr.bf16.mxu0 0
      %2751 = vmatpush2.bf16.msra.mxu0 0
      %2752 = vmatprep.subr.bf16.mxu0 0
      %2753 = vmatpush2.bf16.msra.mxu0 0
      %2754 = vmatprep.mubr.bf16.mxu0 0
      %2755 = vmatmul.mubr.bf16.gmra.mxu0 %v2413
      %v2756 = vpop.f32.mrf.mxu0
      %v2757 = vadd.f32 %v2596, %v2756
      %v2758 = vpop.f32.mrf.mxu0
      %v2759 = vpop.f32.mrf.mxu0
      %v2760 = vadd.f32 %v2599, %v2759
      %v2761 = vpop.f32.mrf.mxu0
      %2762 = vmatprep.mubr.bf16.mxu0 0
      %2763 = vmatmul.mubr.bf16.gmra.mxu0 %v1841
      %v2764 = vpop.f32.mrf.mxu0
      %v2765 = vadd.f32 %v2604, %v2764
      %v2766 = vpop.f32.mrf.mxu0
      %v2767 = vpop.f32.mrf.mxu0
      %v2768 = vadd.f32 %v2607, %v2767
      %v2769 = vpop.f32.mrf.mxu0
      %2770 = vmatprep.mubr.bf16.mxu0 0
      %2771 = vmatmul.mubr.bf16.gmra.mxu0 %v1844
      %v2772 = vpop.f32.mrf.mxu0
      %v2773 = vadd.f32 %v2612, %v2772
      %v2774 = vpop.f32.mrf.mxu0
      %v2775 = vpop.f32.mrf.mxu0
      %v2776 = vadd.f32 %v2615, %v2775
      %v2777 = vpop.f32.mrf.mxu0
      %2778 = vmatprep.mubr.bf16.mxu0 0
      %2779 = vmatmul.mubr.bf16.gmra.mxu0 %v1847
      %v2780 = vpop.f32.mrf.mxu0
      %v2781 = vadd.f32 %v2620, %v2780
      %v2782 = vpop.f32.mrf.mxu0
      %v2783 = vpop.f32.mrf.mxu0
      %v2784 = vadd.f32 %v2623, %v2783
      %v2785 = vpop.f32.mrf.mxu0
      %2786 = vmatprep.mubr.bf16.mxu0 0
      %2787 = vmatmul.mubr.bf16.gmra.mxu0 %v1850
      %v2788 = vpop.f32.mrf.mxu0
      %v2789 = vadd.f32 %v2628, %v2788
      %v2790 = vpop.f32.mrf.mxu0
      %v2791 = vpop.f32.mrf.mxu0
      %v2792 = vadd.f32 %v2631, %v2791
      %v2793 = vpop.f32.mrf.mxu0
      %2794 = vmatprep.mubr.bf16.mxu0 0
      %2795 = vmatmul.mubr.bf16.gmra.mxu0 %v1853
      %v2796 = vpop.f32.mrf.mxu0
      %v2797 = vadd.f32 %v2636, %v2796
      %v2798 = vpop.f32.mrf.mxu0
      %v2799 = vpop.f32.mrf.mxu0
      %v2800 = vadd.f32 %v2639, %v2799
      %v2801 = vpop.f32.mrf.mxu0
      %2802 = vmatprep.mubr.bf16.mxu0 0
      %2803 = vmatmul.mubr.bf16.gmra.mxu0 %v1856
      %v2804 = vpop.f32.mrf.mxu0
      %v2805 = vadd.f32 %v2644, %v2804
      %v2806 = vpop.f32.mrf.mxu0
      %v2807 = vpop.f32.mrf.mxu0
      %v2808 = vadd.f32 %v2647, %v2807
      %v2809 = vpop.f32.mrf.mxu0
      %2810 = vmatprep.mubr.bf16.mxu0 0
      %2811 = vmatmul.mubr.bf16.gmra.mxu0 %v1859
      %v2812 = vpop.f32.mrf.mxu0
      %v2813 = vadd.f32 %v2652, %v2812
      %v2814 = vpop.f32.mrf.mxu0
      %v2815 = vpop.f32.mrf.mxu0
      %v2816 = vadd.f32 %v2655, %v2815
      %v2817 = vpop.f32.mrf.mxu0
      %2818 = vmatprep.mubr.bf16.mxu0 0
      %2819 = vmatmul.mubr.bf16.gmra.mxu0 %v1862
      %v2820 = vpop.f32.mrf.mxu0
      %v2821 = vadd.f32 %v2660, %v2820
      %v2822 = vpop.f32.mrf.mxu0
      %v2823 = vpop.f32.mrf.mxu0
      %v2824 = vadd.f32 %v2663, %v2823
      %v2825 = vpop.f32.mrf.mxu0
      %2826 = vmatprep.mubr.bf16.mxu0 0
      %2827 = vmatmul.mubr.bf16.gmra.mxu0 %v1865
      %v2828 = vpop.f32.mrf.mxu0
      %v2829 = vadd.f32 %v2668, %v2828
      %v2830 = vpop.f32.mrf.mxu0
      %v2831 = vpop.f32.mrf.mxu0
      %v2832 = vadd.f32 %v2671, %v2831
      %v2833 = vpop.f32.mrf.mxu0
      %2834 = vmatprep.mubr.bf16.mxu0 0
      %2835 = vmatmul.mubr.bf16.gmra.mxu0 %v1868
      %v2836 = vpop.f32.mrf.mxu0
      %v2837 = vadd.f32 %v2676, %v2836
      %v2838 = vpop.f32.mrf.mxu0
      %v2839 = vpop.f32.mrf.mxu0
      %v2840 = vadd.f32 %v2679, %v2839
      %v2841 = vpop.f32.mrf.mxu0
      %2842 = vmatprep.mubr.bf16.mxu0 0
      %2843 = vmatmul.mubr.bf16.gmra.mxu0 %v1871
      %v2844 = vpop.f32.mrf.mxu0
      %v2845 = vadd.f32 %v2684, %v2844
      %v2846 = vpop.f32.mrf.mxu0
      %v2847 = vpop.f32.mrf.mxu0
      %v2848 = vadd.f32 %v2687, %v2847
      %v2849 = vpop.f32.mrf.mxu0
      %2850 = vmatprep.mubr.bf16.mxu0 0
      %2851 = vmatmul.mubr.bf16.gmra.mxu0 %v1874
      %v2852 = vpop.f32.mrf.mxu0
      %v2853 = vadd.f32 %v2692, %v2852
      %v2854 = vpop.f32.mrf.mxu0
      %v2855 = vpop.f32.mrf.mxu0
      %v2856 = vadd.f32 %v2695, %v2855
      %v2857 = vpop.f32.mrf.mxu0
      %2858 = vmatprep.mubr.bf16.mxu0 0
      %2859 = vmatmul.mubr.bf16.gmra.mxu0 %v1877
      %v2860 = vpop.f32.mrf.mxu0
      %v2861 = vadd.f32 %v2700, %v2860
      %v2862 = vpop.f32.mrf.mxu0
      %v2863 = vpop.f32.mrf.mxu0
      %v2864 = vadd.f32 %v2703, %v2863
      %v2865 = vpop.f32.mrf.mxu0
      %2866 = vmatprep.mubr.bf16.mxu0 0
      %2867 = vmatmul.mubr.bf16.gmra.mxu0 %v1880
      %v2868 = vpop.f32.mrf.mxu0
      %v2869 = vadd.f32 %v2708, %v2868
      %v2870 = vpop.f32.mrf.mxu0
      %v2871 = vpop.f32.mrf.mxu0
      %v2872 = vadd.f32 %v2711, %v2871
      %v2873 = vpop.f32.mrf.mxu0
      %2874 = vmatprep.mubr.bf16.mxu0 0
      %2875 = vmatmul.mubr.bf16.gmra.mxu0 %v1883
      %v2876 = vpop.f32.mrf.mxu0
      %v2877 = vadd.f32 %v2716, %v2876
      %v2878 = vpop.f32.mrf.mxu0
      %v2879 = vpop.f32.mrf.mxu0
      %v2880 = vadd.f32 %v2719, %v2879
      %v2881 = vpop.f32.mrf.mxu0
      %2882 = vdwg.mxu0
      %v2883 = vld [vmem:[#allocation3 + $0x30] sm:$0xff]
      %v2884 = vld [vmem:[#allocation3 + $0x38] sm:$0xf]
      %v2885 = vld [vmem:[#allocation3 + $0x3c] sm:$0xff]
      %v2886 = vld [vmem:[#allocation3 + $0x44] sm:$0xf]
      %v2887 = vld [vmem:[#allocation3 + $0x48] sm:$0xff]
      %v2888 = vld [vmem:[#allocation3 + $0x50] sm:$0xf]
      %v2889 = vld [vmem:[#allocation3 + $0x54] sm:$0xff]
      %v2890 = vld [vmem:[#allocation3 + $0x5c] sm:$0xf]
      %v2891 = vld [vmem:[#allocation3 + $0x60] sm:$0xff]
      %v2892 = vld [vmem:[#allocation3 + $0x68] sm:$0xf]
      %v2893 = vld [vmem:[#allocation3 + $0x6c] sm:$0xff]
      %v2894 = vld [vmem:[#allocation3 + $0x74] sm:$0xf]
      %v2895 = vld [vmem:[#allocation3 + $0x78] sm:$0xff]
      %v2896 = vld [vmem:[#allocation3 + $0x80] sm:$0xf]
      %v2897 = vld [vmem:[#allocation3 + $0x84] sm:$0xff]
      %v2898 = vld [vmem:[#allocation3 + $0x8c] sm:$0xf]
      %v2899 = vld [vmem:[#allocation3 + $0x90] sm:$0xff]
      %v2900 = vld [vmem:[#allocation3 + $0x98] sm:$0xf]
      %v2901 = vld [vmem:[#allocation3 + $0x9c] sm:$0xff]
      %v2902 = vld [vmem:[#allocation3 + $0xa4] sm:$0xf]
      %v2903 = vld [vmem:[#allocation3 + $0xa8] sm:$0xff]
      %v2904 = vld [vmem:[#allocation3 + $0xb0] sm:$0xf]
      %v2905 = vld [vmem:[#allocation3 + $0xb4] sm:$0xff]
      %v2906 = vld [vmem:[#allocation3 + $0xbc] sm:$0xf]
      %v2907 = vld [vmem:[#allocation3 + $0xc0] sm:$0xff]
      %v2908 = vld [vmem:[#allocation3 + $0xc8] sm:$0xf]
      %v2909 = vld [vmem:[#allocation3 + $0xcc] sm:$0xff]
      %v2910 = vld [vmem:[#allocation3 + $0xd4] sm:$0xf]
      %v2911 = vld [vmem:[#allocation3 + $0xd8] sm:$0xff]
      %v2912 = vld [vmem:[#allocation3 + $0xe0] sm:$0xf]
      %v2913 = vld [vmem:[#allocation3 + $0xe4] sm:$0xff]
      %v2914 = vld [vmem:[#allocation3 + $0xec] sm:$0xf]
      %v2915 = vld [vmem:[#allocation3 + $0xf0] sm:$0xff]
      %v2916 = vld [vmem:[#allocation3 + $0xf8] sm:$0xf]
      %v2917 = vld [vmem:[#allocation3 + $0xfc] sm:$0xff]
      %v2918 = vld [vmem:[#allocation3 + $0x104] sm:$0xf]
      %v2919 = vld [vmem:[#allocation3 + $0x108] sm:$0xff]
      %v2920 = vld [vmem:[#allocation3 + $0x110] sm:$0xf]
      %v2921 = vld [vmem:[#allocation3 + $0x114] sm:$0xff]
      %v2922 = vld [vmem:[#allocation3 + $0x11c] sm:$0xf]
      %v2923 = vld [vmem:[#allocation3 + $0x120] sm:$0xff]
      %v2924 = vld [vmem:[#allocation3 + $0x128] sm:$0xf]
      %v2925 = vld [vmem:[#allocation3 + $0x12c] sm:$0xff]
      %v2926 = vld [vmem:[#allocation3 + $0x134] sm:$0xf]
      %v2927 = vld [vmem:[#allocation3 + $0x138] sm:$0xff]
      %v2928 = vld [vmem:[#allocation3 + $0x140] sm:$0xf]
      %v2929 = vld [vmem:[#allocation3 + $0x144] sm:$0xff]
      %v2930 = vld [vmem:[#allocation3 + $0x14c] sm:$0xf]
      %v2931 = vld [vmem:[#allocation3 + $0x150] sm:$0xff]
      %v2932 = vld [vmem:[#allocation3 + $0x158] sm:$0xf]
      %v2933 = vld [vmem:[#allocation3 + $0x15c] sm:$0xff]
      %v2934 = vld [vmem:[#allocation3 + $0x164] sm:$0xf]
      %v2935 = vld [vmem:[#allocation3 + $0x168] sm:$0xff]
      %v2936 = vld [vmem:[#allocation3 + $0x170] sm:$0xf]
      %v2937 = vld [vmem:[#allocation3 + $0x174] sm:$0xff]
      %v2938 = vld [vmem:[#allocation3 + $0x17c] sm:$0xf]
      %v2939 = vld [vmem:[#allocation3 + $0x180] sm:$0xff]
      %v2940 = vld [vmem:[#allocation3 + $0x188] sm:$0xf]
      %v2941 = vld [vmem:[#allocation3 + $0x18c] sm:$0xff]
      %v2942 = vld [vmem:[#allocation3 + $0x194] sm:$0xf]
      %v2943 = vld [vmem:[#allocation3 + $0x198] sm:$0xff]
      %v2944 = vld [vmem:[#allocation3 + $0x1a0] sm:$0xf]
      %v2945 = vld [vmem:[#allocation3 + $0x1a4] sm:$0xff]
      %v2946 = vld [vmem:[#allocation3 + $0x1ac] sm:$0xf]
      %s2947 = scalar_lea.vmem %s1, 384
      %v2948 = vld [vmem:[%s2947] sm:$0xf]
      %v2949 = vld [vmem:[%s2947 + $0x4] sm:$0xf]
      %v2950 = vld [vmem:[%s2947 + $0x8] sm:$0xf]
      %v2951 = vld [vmem:[%s2947 + $0xc] sm:$0xf]
      %v2952 = vld [vmem:[%s2947 + $0x10] sm:$0xf]
      %v2953 = vld [vmem:[%s2947 + $0x14] sm:$0xf]
      %v2954 = vld [vmem:[%s2947 + $0x18] sm:$0xf]
      %v2955 = vld [vmem:[%s2947 + $0x1c] sm:$0xf]
      %v2956 = vld [vmem:[%s2947 + $0x20] sm:$0xf]
      %v2957 = vld [vmem:[%s2947 + $0x24] sm:$0xf]
      %v2958 = vld [vmem:[%s2947 + $0x28] sm:$0xf]
      %v2959 = vld [vmem:[%s2947 + $0x2c] sm:$0xf]
      %v2960 = vld [vmem:[%s2947 + $0x30] sm:$0xf]
      %v2961 = vld [vmem:[%s2947 + $0x34] sm:$0xf]
      %v2962 = vld [vmem:[%s2947 + $0x38] sm:$0xf]
      %v2963 = vld [vmem:[%s2947 + $0x3c] sm:$0xf]
      %v2964 = vld [vmem:[%s2947 + $0x40] sm:$0xf]
      %v2965 = vld [vmem:[%s2947 + $0x44] sm:$0xf]
      %v2966 = vld [vmem:[%s2947 + $0x48] sm:$0xf]
      %v2967 = vld [vmem:[%s2947 + $0x4c] sm:$0xf]
      %v2968 = vld [vmem:[%s2947 + $0x50] sm:$0xf]
      %v2969 = vld [vmem:[%s2947 + $0x54] sm:$0xf]
      %v2970 = vld [vmem:[%s2947 + $0x58] sm:$0xf]
      %v2971 = vld [vmem:[%s2947 + $0x5c] sm:$0xf]
      %v2972 = vld [vmem:[%s2947 + $0x60] sm:$0xf]
      %v2973 = vld [vmem:[%s2947 + $0x64] sm:$0xf]
      %v2974 = vld [vmem:[%s2947 + $0x68] sm:$0xf]
      %v2975 = vld [vmem:[%s2947 + $0x6c] sm:$0xf]
      %v2976 = vld [vmem:[%s2947 + $0x70] sm:$0xf]
      %v2977 = vld [vmem:[%s2947 + $0x74] sm:$0xf]
      %v2978 = vld [vmem:[%s2947 + $0x78] sm:$0xf]
      %v2979 = vld [vmem:[%s2947 + $0x7c] sm:$0xf]
      %v2980 = vld [vmem:[%s2947 + $0x80] sm:$0xf]
      %v2981 = vld [vmem:[%s2947 + $0x84] sm:$0xf]
      %v2982 = vld [vmem:[%s2947 + $0x88] sm:$0xf]
      %v2983 = vld [vmem:[%s2947 + $0x8c] sm:$0xf]
      %v2984 = vld [vmem:[%s2947 + $0x90] sm:$0xf]
      %v2985 = vld [vmem:[%s2947 + $0x94] sm:$0xf]
      %v2986 = vld [vmem:[%s2947 + $0x98] sm:$0xf]
      %v2987 = vld [vmem:[%s2947 + $0x9c] sm:$0xf]
      %v2988 = vld [vmem:[%s2947 + $0xa0] sm:$0xf]
      %v2989 = vld [vmem:[%s2947 + $0xa4] sm:$0xf]
      %v2990 = vld [vmem:[%s2947 + $0xa8] sm:$0xf]
      %v2991 = vld [vmem:[%s2947 + $0xac] sm:$0xf]
      %v2992 = vld [vmem:[%s2947 + $0xb0] sm:$0xf]
      %v2993 = vld [vmem:[%s2947 + $0xb4] sm:$0xf]
      %v2994 = vld [vmem:[%s2947 + $0xb8] sm:$0xf]
      %v2995 = vld [vmem:[%s2947 + $0xbc] sm:$0xf]
      %v3060 = vunpack.c.l.b16 %v2883
      %v3061 = vunpack.c.h.b16 %v2883
      %v3062 = vunpack.c.l.b16 %v2884
      %v3063 = vunpack.c.l.b16 %v2885
      %v3064 = vunpack.c.h.b16 %v2885
      %v3065 = vunpack.c.l.b16 %v2886
      %v3066 = vunpack.c.l.b16 %v2887
      %v3067 = vunpack.c.h.b16 %v2887
      %v3068 = vunpack.c.l.b16 %v2888
      %v3069 = vunpack.c.l.b16 %v2889
      %v3070 = vunpack.c.h.b16 %v2889
      %v3071 = vunpack.c.l.b16 %v2890
      %v3072 = vunpack.c.l.b16 %v2891
      %v3073 = vunpack.c.h.b16 %v2891
      %v3074 = vunpack.c.l.b16 %v2892
      %v3075 = vunpack.c.l.b16 %v2893
      %v3076 = vunpack.c.h.b16 %v2893
      %v3077 = vunpack.c.l.b16 %v2894
      %v3078 = vunpack.c.l.b16 %v2895
      %v3079 = vunpack.c.h.b16 %v2895
      %v3080 = vunpack.c.l.b16 %v2896
      %v3081 = vunpack.c.l.b16 %v2897
      %v3082 = vunpack.c.h.b16 %v2897
      %v3083 = vunpack.c.l.b16 %v2898
      %v3084 = vunpack.c.l.b16 %v2899
      %v3085 = vunpack.c.h.b16 %v2899
      %v3086 = vunpack.c.l.b16 %v2900
      %v3087 = vunpack.c.l.b16 %v2901
      %v3088 = vunpack.c.h.b16 %v2901
      %v3089 = vunpack.c.l.b16 %v2902
      %v3090 = vunpack.c.l.b16 %v2903
      %v3091 = vunpack.c.h.b16 %v2903
      %v3092 = vunpack.c.l.b16 %v2904
      %v3093 = vunpack.c.l.b16 %v2905
      %v3094 = vunpack.c.h.b16 %v2905
      %v3095 = vunpack.c.l.b16 %v2906
      %v3096 = vunpack.c.l.b16 %v2907
      %v3097 = vunpack.c.h.b16 %v2907
      %v3098 = vunpack.c.l.b16 %v2908
      %v3099 = vunpack.c.l.b16 %v2909
      %v3100 = vunpack.c.h.b16 %v2909
      %v3101 = vunpack.c.l.b16 %v2910
      %v3102 = vunpack.c.l.b16 %v2911
      %v3103 = vunpack.c.h.b16 %v2911
      %v3104 = vunpack.c.l.b16 %v2912
      %v3105 = vunpack.c.l.b16 %v2913
      %v3106 = vunpack.c.h.b16 %v2913
      %v3107 = vunpack.c.l.b16 %v2914
      %v3108 = vunpack.c.l.b16 %v2915
      %v3109 = vunpack.c.h.b16 %v2915
      %v3110 = vunpack.c.l.b16 %v2916
      %v3111 = vunpack.c.l.b16 %v2917
      %v3112 = vunpack.c.h.b16 %v2917
      %v3113 = vunpack.c.l.b16 %v2918
      %v3114 = vunpack.c.l.b16 %v2919
      %v3115 = vunpack.c.h.b16 %v2919
      %v3116 = vunpack.c.l.b16 %v2920
      %v3117 = vunpack.c.l.b16 %v2921
      %v3118 = vunpack.c.h.b16 %v2921
      %v3119 = vunpack.c.l.b16 %v2922
      %v3120 = vunpack.c.l.b16 %v2923
      %v3121 = vunpack.c.h.b16 %v2923
      %v3122 = vunpack.c.l.b16 %v2924
      %v3123 = vunpack.c.l.b16 %v2925
      %v3124 = vunpack.c.h.b16 %v2925
      %v3125 = vunpack.c.l.b16 %v2926
      %v3126 = vunpack.c.l.b16 %v2927
      %v3127 = vunpack.c.h.b16 %v2927
      %v3128 = vunpack.c.l.b16 %v2928
      %v3129 = vunpack.c.l.b16 %v2929
      %v3130 = vunpack.c.h.b16 %v2929
      %v3131 = vunpack.c.l.b16 %v2930
      %v3132 = vunpack.c.l.b16 %v2931
      %v3133 = vunpack.c.h.b16 %v2931
      %v3134 = vunpack.c.l.b16 %v2932
      %v3135 = vunpack.c.l.b16 %v2933
      %v3136 = vunpack.c.h.b16 %v2933
      %v3137 = vunpack.c.l.b16 %v2934
      %v3138 = vunpack.c.l.b16 %v2935
      %v3139 = vunpack.c.h.b16 %v2935
      %v3140 = vunpack.c.l.b16 %v2936
      %v3141 = vunpack.c.l.b16 %v2937
      %v3142 = vunpack.c.h.b16 %v2937
      %v3143 = vunpack.c.l.b16 %v2938
      %v3144 = vunpack.c.l.b16 %v2939
      %v3145 = vunpack.c.h.b16 %v2939
      %v3146 = vunpack.c.l.b16 %v2940
      %v3147 = vunpack.c.l.b16 %v2941
      %v3148 = vunpack.c.h.b16 %v2941
      %v3149 = vunpack.c.l.b16 %v2942
      %v3150 = vunpack.c.l.b16 %v2943
      %v3151 = vunpack.c.h.b16 %v2943
      %v3152 = vunpack.c.l.b16 %v2944
      %v3153 = vunpack.c.l.b16 %v2945
      %v3154 = vunpack.c.h.b16 %v2945
      %v3155 = vunpack.c.l.b16 %v2946
      %v3156 = vpack.c.b16 %v3063, %v3060
      %v3157 = vpack.c.b16 %v3064, %v3061
      %v3158 = vpack.c.b16 %v3065, %v3062
      %v3159 = vpack.c.b16 %v3069, %v3066
      %v3160 = vpack.c.b16 %v3070, %v3067
      %v3161 = vpack.c.b16 %v3071, %v3068
      %v3162 = vpack.c.b16 %v3075, %v3072
      %v3163 = vpack.c.b16 %v3076, %v3073
      %v3164 = vpack.c.b16 %v3077, %v3074
      %v3165 = vpack.c.b16 %v3081, %v3078
      %v3166 = vpack.c.b16 %v3082, %v3079
      %v3167 = vpack.c.b16 %v3083, %v3080
      %v3168 = vpack.c.b16 %v3087, %v3084
      %v3169 = vpack.c.b16 %v3088, %v3085
      %v3170 = vpack.c.b16 %v3089, %v3086
      %v3171 = vpack.c.b16 %v3093, %v3090
      %v3172 = vpack.c.b16 %v3094, %v3091
      %v3173 = vpack.c.b16 %v3095, %v3092
      %v3174 = vpack.c.b16 %v3099, %v3096
      %v3175 = vpack.c.b16 %v3100, %v3097
      %v3176 = vpack.c.b16 %v3101, %v3098
      %v3177 = vpack.c.b16 %v3105, %v3102
      %v3178 = vpack.c.b16 %v3106, %v3103
      %v3179 = vpack.c.b16 %v3107, %v3104
      %v3180 = vpack.c.b16 %v3111, %v3108
      %v3181 = vpack.c.b16 %v3112, %v3109
      %v3182 = vpack.c.b16 %v3113, %v3110
      %v3183 = vpack.c.b16 %v3117, %v3114
      %v3184 = vpack.c.b16 %v3118, %v3115
      %v3185 = vpack.c.b16 %v3119, %v3116
      %v3186 = vpack.c.b16 %v3123, %v3120
      %v3187 = vpack.c.b16 %v3124, %v3121
      %v3188 = vpack.c.b16 %v3125, %v3122
      %v3189 = vpack.c.b16 %v3129, %v3126
      %v3190 = vpack.c.b16 %v3130, %v3127
      %v3191 = vpack.c.b16 %v3131, %v3128
      %v3192 = vpack.c.b16 %v3135, %v3132
      %v3193 = vpack.c.b16 %v3136, %v3133
      %v3194 = vpack.c.b16 %v3137, %v3134
      %v3195 = vpack.c.b16 %v3141, %v3138
      %v3196 = vpack.c.b16 %v3142, %v3139
      %v3197 = vpack.c.b16 %v3143, %v3140
      %v3198 = vpack.c.b16 %v3147, %v3144
      %v3199 = vpack.c.b16 %v3148, %v3145
      %v3200 = vpack.c.b16 %v3149, %v3146
      %v3201 = vpack.c.b16 %v3153, %v3150
      %v3202 = vpack.c.b16 %v3154, %v3151
      %v3203 = vpack.c.b16 %v3155, %v3152
      %v3300 = vunpack.c.l.b16 %v2948
      %v3301 = vunpack.c.l.b16 %v2949
      %v3302 = vunpack.c.l.b16 %v2950
      %v3303 = vunpack.c.l.b16 %v2951
      %v3304 = vunpack.c.l.b16 %v2952
      %v3305 = vunpack.c.l.b16 %v2953
      %v3306 = vunpack.c.l.b16 %v2954
      %v3307 = vunpack.c.l.b16 %v2955
      %v3308 = vunpack.c.l.b16 %v2956
      %v3309 = vunpack.c.l.b16 %v2957
      %v3310 = vunpack.c.l.b16 %v2958
      %v3311 = vunpack.c.l.b16 %v2959
      %v3312 = vunpack.c.l.b16 %v2960
      %v3313 = vunpack.c.l.b16 %v2961
      %v3314 = vunpack.c.l.b16 %v2962
      %v3315 = vunpack.c.l.b16 %v2963
      %v3316 = vunpack.c.l.b16 %v2964
      %v3317 = vunpack.c.l.b16 %v2965
      %v3318 = vunpack.c.l.b16 %v2966
      %v3319 = vunpack.c.l.b16 %v2967
      %v3320 = vunpack.c.l.b16 %v2968
      %v3321 = vunpack.c.l.b16 %v2969
      %v3322 = vunpack.c.l.b16 %v2970
      %v3323 = vunpack.c.l.b16 %v2971
      %v3324 = vunpack.c.l.b16 %v2972
      %v3325 = vunpack.c.l.b16 %v2973
      %v3326 = vunpack.c.l.b16 %v2974
      %v3327 = vunpack.c.l.b16 %v2975
      %v3328 = vunpack.c.l.b16 %v2976
      %v3329 = vunpack.c.l.b16 %v2977
      %v3330 = vunpack.c.l.b16 %v2978
      %v3331 = vunpack.c.l.b16 %v2979
      %v3332 = vunpack.c.l.b16 %v2980
      %v3333 = vunpack.c.l.b16 %v2981
      %v3334 = vunpack.c.l.b16 %v2982
      %v3335 = vunpack.c.l.b16 %v2983
      %v3336 = vunpack.c.l.b16 %v2984
      %v3337 = vunpack.c.l.b16 %v2985
      %v3338 = vunpack.c.l.b16 %v2986
      %v3339 = vunpack.c.l.b16 %v2987
      %v3340 = vunpack.c.l.b16 %v2988
      %v3341 = vunpack.c.l.b16 %v2989
      %v3342 = vunpack.c.l.b16 %v2990
      %v3343 = vunpack.c.l.b16 %v2991
      %v3344 = vunpack.c.l.b16 %v2992
      %v3345 = vunpack.c.l.b16 %v2993
      %v3346 = vunpack.c.l.b16 %v2994
      %v3347 = vunpack.c.l.b16 %v2995
      %v3348 = vpack.c.b16 %v3301, %v3300
      %v3349 = vpack.c.b16 %v3303, %v3302
      %v3350 = vpack.c.b16 %v3305, %v3304
      %v3351 = vpack.c.b16 %v3307, %v3306
      %v3352 = vpack.c.b16 %v3309, %v3308
      %v3353 = vpack.c.b16 %v3311, %v3310
      %v3354 = vpack.c.b16 %v3313, %v3312
      %v3355 = vpack.c.b16 %v3315, %v3314
      %v3356 = vpack.c.b16 %v3317, %v3316
      %v3357 = vpack.c.b16 %v3319, %v3318
      %v3358 = vpack.c.b16 %v3321, %v3320
      %v3359 = vpack.c.b16 %v3323, %v3322
      %v3360 = vpack.c.b16 %v3325, %v3324
      %v3361 = vpack.c.b16 %v3327, %v3326
      %v3362 = vpack.c.b16 %v3329, %v3328
      %v3363 = vpack.c.b16 %v3331, %v3330
      %v3364 = vpack.c.b16 %v3333, %v3332
      %v3365 = vpack.c.b16 %v3335, %v3334
      %v3366 = vpack.c.b16 %v3337, %v3336
      %v3367 = vpack.c.b16 %v3339, %v3338
      %v3368 = vpack.c.b16 %v3341, %v3340
      %v3369 = vpack.c.b16 %v3343, %v3342
      %v3370 = vpack.c.b16 %v3345, %v3344
      %v3371 = vpack.c.b16 %v3347, %v3346
      %3396 = vmatprep.subr.bf16.mxu0 0
      %3397 = vmatpush1.bf16.msra.mxu0 %v3355
      %3398 = vmatprep.subr.bf16.mxu0 0
      %3399 = vmatpush1.bf16.msra.mxu0 %v3354
      %3400 = vmatprep.subr.bf16.mxu0 0
      %3401 = vmatpush1.bf16.msra.mxu0 %v3353
      %3402 = vmatprep.subr.bf16.mxu0 0
      %3403 = vmatpush1.bf16.msra.mxu0 %v3352
      %3404 = vmatprep.subr.bf16.mxu0 0
      %3405 = vmatpush1.bf16.msra.mxu0 %v3351
      %3406 = vmatprep.subr.bf16.mxu0 0
      %3407 = vmatpush1.bf16.msra.mxu0 %v3350
      %3408 = vmatprep.subr.bf16.mxu0 0
      %3409 = vmatpush1.bf16.msra.mxu0 %v3349
      %3410 = vmatprep.subr.bf16.mxu0 0
      %3411 = vmatpush1.bf16.msra.mxu0 %v3348
      %3412 = vmatprep.subr.bf16.mxu0 0
      %3413 = vmatpush2.bf16.msra.mxu0 %v3363
      %3414 = vmatprep.subr.bf16.mxu0 0
      %3415 = vmatpush2.bf16.msra.mxu0 %v3362
      %3416 = vmatprep.subr.bf16.mxu0 0
      %3417 = vmatpush2.bf16.msra.mxu0 %v3361
      %3418 = vmatprep.subr.bf16.mxu0 0
      %3419 = vmatpush2.bf16.msra.mxu0 %v3360
      %3420 = vmatprep.subr.bf16.mxu0 0
      %3421 = vmatpush2.bf16.msra.mxu0 %v3359
      %3422 = vmatprep.subr.bf16.mxu0 0
      %3423 = vmatpush2.bf16.msra.mxu0 %v3358
      %3424 = vmatprep.subr.bf16.mxu0 0
      %3425 = vmatpush2.bf16.msra.mxu0 %v3357
      %3426 = vmatprep.subr.bf16.mxu0 0
      %3427 = vmatpush2.bf16.msra.mxu0 %v3356
      %3428 = vmatprep.mubr.bf16.mxu0 %v3157
      %3429 = vmatmul.mubr.bf16.gmra.mxu0 %v3156
      %v3430 = vpop.f32.mrf.mxu0
      %v3431 = vadd.f32 0.0, %v3430
      %v3432 = vpop.f32.mrf.mxu0
      %v3433 = vpop.f32.mrf.mxu0
      %v3434 = vadd.f32 0.0, %v3433
      %v3435 = vpop.f32.mrf.mxu0
      %3436 = vmatprep.mubr.bf16.mxu0 %v3160
      %3437 = vmatmul.mubr.bf16.gmra.mxu0 %v3159
      %v3438 = vpop.f32.mrf.mxu0
      %v3439 = vadd.f32 0.0, %v3438
      %v3440 = vpop.f32.mrf.mxu0
      %v3441 = vpop.f32.mrf.mxu0
      %v3442 = vadd.f32 0.0, %v3441
      %v3443 = vpop.f32.mrf.mxu0
      %3444 = vmatprep.mubr.bf16.mxu0 %v3163
      %3445 = vmatmul.mubr.bf16.gmra.mxu0 %v3162
      %v3446 = vpop.f32.mrf.mxu0
      %v3447 = vadd.f32 0.0, %v3446
      %v3448 = vpop.f32.mrf.mxu0
      %v3449 = vpop.f32.mrf.mxu0
      %v3450 = vadd.f32 0.0, %v3449
      %v3451 = vpop.f32.mrf.mxu0
      %3452 = vmatprep.mubr.bf16.mxu0 %v3166
      %3453 = vmatmul.mubr.bf16.gmra.mxu0 %v3165
      %v3454 = vpop.f32.mrf.mxu0
      %v3455 = vadd.f32 0.0, %v3454
      %v3456 = vpop.f32.mrf.mxu0
      %v3457 = vpop.f32.mrf.mxu0
      %v3458 = vadd.f32 0.0, %v3457
      %v3459 = vpop.f32.mrf.mxu0
      %3460 = vmatprep.mubr.bf16.mxu0 %v3169
      %3461 = vmatmul.mubr.bf16.gmra.mxu0 %v3168
      %v3462 = vpop.f32.mrf.mxu0
      %v3463 = vadd.f32 0.0, %v3462
      %v3464 = vpop.f32.mrf.mxu0
      %v3465 = vpop.f32.mrf.mxu0
      %v3466 = vadd.f32 0.0, %v3465
      %v3467 = vpop.f32.mrf.mxu0
      %3468 = vmatprep.mubr.bf16.mxu0 %v3172
      %3469 = vmatmul.mubr.bf16.gmra.mxu0 %v3171
      %v3470 = vpop.f32.mrf.mxu0
      %v3471 = vadd.f32 0.0, %v3470
      %v3472 = vpop.f32.mrf.mxu0
      %v3473 = vpop.f32.mrf.mxu0
      %v3474 = vadd.f32 0.0, %v3473
      %v3475 = vpop.f32.mrf.mxu0
      %3476 = vmatprep.mubr.bf16.mxu0 %v3175
      %3477 = vmatmul.mubr.bf16.gmra.mxu0 %v3174
      %v3478 = vpop.f32.mrf.mxu0
      %v3479 = vadd.f32 0.0, %v3478
      %v3480 = vpop.f32.mrf.mxu0
      %v3481 = vpop.f32.mrf.mxu0
      %v3482 = vadd.f32 0.0, %v3481
      %v3483 = vpop.f32.mrf.mxu0
      %3484 = vmatprep.mubr.bf16.mxu0 %v3178
      %3485 = vmatmul.mubr.bf16.gmra.mxu0 %v3177
      %v3486 = vpop.f32.mrf.mxu0
      %v3487 = vadd.f32 0.0, %v3486
      %v3488 = vpop.f32.mrf.mxu0
      %v3489 = vpop.f32.mrf.mxu0
      %v3490 = vadd.f32 0.0, %v3489
      %v3491 = vpop.f32.mrf.mxu0
      %3492 = vmatprep.mubr.bf16.mxu0 %v3181
      %3493 = vmatmul.mubr.bf16.gmra.mxu0 %v3180
      %v3494 = vpop.f32.mrf.mxu0
      %v3495 = vadd.f32 0.0, %v3494
      %v3496 = vpop.f32.mrf.mxu0
      %v3497 = vpop.f32.mrf.mxu0
      %v3498 = vadd.f32 0.0, %v3497
      %v3499 = vpop.f32.mrf.mxu0
      %3500 = vmatprep.mubr.bf16.mxu0 %v3184
      %3501 = vmatmul.mubr.bf16.gmra.mxu0 %v3183
      %v3502 = vpop.f32.mrf.mxu0
      %v3503 = vadd.f32 0.0, %v3502
      %v3504 = vpop.f32.mrf.mxu0
      %v3505 = vpop.f32.mrf.mxu0
      %v3506 = vadd.f32 0.0, %v3505
      %v3507 = vpop.f32.mrf.mxu0
      %3508 = vmatprep.mubr.bf16.mxu0 %v3187
      %3509 = vmatmul.mubr.bf16.gmra.mxu0 %v3186
      %v3510 = vpop.f32.mrf.mxu0
      %v3511 = vadd.f32 0.0, %v3510
      %v3512 = vpop.f32.mrf.mxu0
      %v3513 = vpop.f32.mrf.mxu0
      %v3514 = vadd.f32 0.0, %v3513
      %v3515 = vpop.f32.mrf.mxu0
      %3516 = vmatprep.mubr.bf16.mxu0 %v3190
      %3517 = vmatmul.mubr.bf16.gmra.mxu0 %v3189
      %v3518 = vpop.f32.mrf.mxu0
      %v3519 = vadd.f32 0.0, %v3518
      %v3520 = vpop.f32.mrf.mxu0
      %v3521 = vpop.f32.mrf.mxu0
      %v3522 = vadd.f32 0.0, %v3521
      %v3523 = vpop.f32.mrf.mxu0
      %3524 = vmatprep.mubr.bf16.mxu0 %v3193
      %3525 = vmatmul.mubr.bf16.gmra.mxu0 %v3192
      %v3526 = vpop.f32.mrf.mxu0
      %v3527 = vadd.f32 0.0, %v3526
      %v3528 = vpop.f32.mrf.mxu0
      %v3529 = vpop.f32.mrf.mxu0
      %v3530 = vadd.f32 0.0, %v3529
      %v3531 = vpop.f32.mrf.mxu0
      %3532 = vmatprep.mubr.bf16.mxu0 %v3196
      %3533 = vmatmul.mubr.bf16.gmra.mxu0 %v3195
      %v3534 = vpop.f32.mrf.mxu0
      %v3535 = vadd.f32 0.0, %v3534
      %v3536 = vpop.f32.mrf.mxu0
      %v3537 = vpop.f32.mrf.mxu0
      %v3538 = vadd.f32 0.0, %v3537
      %v3539 = vpop.f32.mrf.mxu0
      %3540 = vmatprep.mubr.bf16.mxu0 %v3199
      %3541 = vmatmul.mubr.bf16.gmra.mxu0 %v3198
      %v3542 = vpop.f32.mrf.mxu0
      %v3543 = vadd.f32 0.0, %v3542
      %v3544 = vpop.f32.mrf.mxu0
      %v3545 = vpop.f32.mrf.mxu0
      %v3546 = vadd.f32 0.0, %v3545
      %v3547 = vpop.f32.mrf.mxu0
      %3548 = vmatprep.mubr.bf16.mxu0 %v3202
      %3549 = vmatmul.mubr.bf16.gmra.mxu0 %v3201
      %v3550 = vpop.f32.mrf.mxu0
      %v3551 = vadd.f32 0.0, %v3550
      %v3552 = vpop.f32.mrf.mxu0
      %v3553 = vpop.f32.mrf.mxu0
      %v3554 = vadd.f32 0.0, %v3553
      %v3555 = vpop.f32.mrf.mxu0
      %3556 = vdwg.mxu0
      %3557 = vmatprep.subr.bf16.mxu0 0
      %3558 = vmatpush1.bf16.msra.mxu0 %v3371
      %3559 = vmatprep.subr.bf16.mxu0 0
      %3560 = vmatpush1.bf16.msra.mxu0 %v3370
      %3561 = vmatprep.subr.bf16.mxu0 0
      %3562 = vmatpush1.bf16.msra.mxu0 %v3369
      %3563 = vmatprep.subr.bf16.mxu0 0
      %3564 = vmatpush1.bf16.msra.mxu0 %v3368
      %3565 = vmatprep.subr.bf16.mxu0 0
      %3566 = vmatpush1.bf16.msra.mxu0 %v3367
      %3567 = vmatprep.subr.bf16.mxu0 0
      %3568 = vmatpush1.bf16.msra.mxu0 %v3366
      %3569 = vmatprep.subr.bf16.mxu0 0
      %3570 = vmatpush1.bf16.msra.mxu0 %v3365
      %3571 = vmatprep.subr.bf16.mxu0 0
      %3572 = vmatpush1.bf16.msra.mxu0 %v3364
      %3573 = vmatprep.subr.bf16.mxu0 0
      %3574 = vmatpush2.bf16.msra.mxu0 0
      %3575 = vmatprep.subr.bf16.mxu0 0
      %3576 = vmatpush2.bf16.msra.mxu0 0
      %3577 = vmatprep.subr.bf16.mxu0 0
      %3578 = vmatpush2.bf16.msra.mxu0 0
      %3579 = vmatprep.subr.bf16.mxu0 0
      %3580 = vmatpush2.bf16.msra.mxu0 0
      %3581 = vmatprep.subr.bf16.mxu0 0
      %3582 = vmatpush2.bf16.msra.mxu0 0
      %3583 = vmatprep.subr.bf16.mxu0 0
      %3584 = vmatpush2.bf16.msra.mxu0 0
      %3585 = vmatprep.subr.bf16.mxu0 0
      %3586 = vmatpush2.bf16.msra.mxu0 0
      %3587 = vmatprep.subr.bf16.mxu0 0
      %3588 = vmatpush2.bf16.msra.mxu0 0
      %3589 = vmatprep.mubr.bf16.mxu0 0
      %3590 = vmatmul.mubr.bf16.gmra.mxu0 %v3158
      %v3591 = vpop.f32.mrf.mxu0
      %v3592 = vadd.f32 %v3431, %v3591
      %v3593 = vpop.f32.mrf.mxu0
      %v3594 = vpop.f32.mrf.mxu0
      %v3595 = vadd.f32 %v3434, %v3594
      %v3596 = vpop.f32.mrf.mxu0
      %3597 = vmatprep.mubr.bf16.mxu0 0
      %3598 = vmatmul.mubr.bf16.gmra.mxu0 %v3161
      %v3599 = vpop.f32.mrf.mxu0
      %v3600 = vadd.f32 %v3439, %v3599
      %v3601 = vpop.f32.mrf.mxu0
      %v3602 = vpop.f32.mrf.mxu0
      %v3603 = vadd.f32 %v3442, %v3602
      %v3604 = vpop.f32.mrf.mxu0
      %3605 = vmatprep.mubr.bf16.mxu0 0
      %3606 = vmatmul.mubr.bf16.gmra.mxu0 %v3164
      %v3607 = vpop.f32.mrf.mxu0
      %v3608 = vadd.f32 %v3447, %v3607
      %v3609 = vpop.f32.mrf.mxu0
      %v3610 = vpop.f32.mrf.mxu0
      %v3611 = vadd.f32 %v3450, %v3610
      %v3612 = vpop.f32.mrf.mxu0
      %3613 = vmatprep.mubr.bf16.mxu0 0
      %3614 = vmatmul.mubr.bf16.gmra.mxu0 %v3167
      %v3615 = vpop.f32.mrf.mxu0
      %v3616 = vadd.f32 %v3455, %v3615
      %v3617 = vpop.f32.mrf.mxu0
      %v3618 = vpop.f32.mrf.mxu0
      %v3619 = vadd.f32 %v3458, %v3618
      %v3620 = vpop.f32.mrf.mxu0
      %3621 = vmatprep.mubr.bf16.mxu0 0
      %3622 = vmatmul.mubr.bf16.gmra.mxu0 %v3170
      %v3623 = vpop.f32.mrf.mxu0
      %v3624 = vadd.f32 %v3463, %v3623
      %v3625 = vpop.f32.mrf.mxu0
      %v3626 = vpop.f32.mrf.mxu0
      %v3627 = vadd.f32 %v3466, %v3626
      %v3628 = vpop.f32.mrf.mxu0
      %3629 = vmatprep.mubr.bf16.mxu0 0
      %3630 = vmatmul.mubr.bf16.gmra.mxu0 %v3173
      %v3631 = vpop.f32.mrf.mxu0
      %v3632 = vadd.f32 %v3471, %v3631
      %v3633 = vpop.f32.mrf.mxu0
      %v3634 = vpop.f32.mrf.mxu0
      %v3635 = vadd.f32 %v3474, %v3634
      %v3636 = vpop.f32.mrf.mxu0
      %3637 = vmatprep.mubr.bf16.mxu0 0
      %3638 = vmatmul.mubr.bf16.gmra.mxu0 %v3176
      %v3639 = vpop.f32.mrf.mxu0
      %v3640 = vadd.f32 %v3479, %v3639
      %v3641 = vpop.f32.mrf.mxu0
      %v3642 = vpop.f32.mrf.mxu0
      %v3643 = vadd.f32 %v3482, %v3642
      %v3644 = vpop.f32.mrf.mxu0
      %3645 = vmatprep.mubr.bf16.mxu0 0
      %3646 = vmatmul.mubr.bf16.gmra.mxu0 %v3179
      %v3647 = vpop.f32.mrf.mxu0
      %v3648 = vadd.f32 %v3487, %v3647
      %v3649 = vpop.f32.mrf.mxu0
      %v3650 = vpop.f32.mrf.mxu0
      %v3651 = vadd.f32 %v3490, %v3650
      %v3652 = vpop.f32.mrf.mxu0
      %3653 = vmatprep.mubr.bf16.mxu0 0
      %3654 = vmatmul.mubr.bf16.gmra.mxu0 %v3182
      %v3655 = vpop.f32.mrf.mxu0
      %v3656 = vadd.f32 %v3495, %v3655
      %v3657 = vpop.f32.mrf.mxu0
      %v3658 = vpop.f32.mrf.mxu0
      %v3659 = vadd.f32 %v3498, %v3658
      %v3660 = vpop.f32.mrf.mxu0
      %3661 = vmatprep.mubr.bf16.mxu0 0
      %3662 = vmatmul.mubr.bf16.gmra.mxu0 %v3185
      %v3663 = vpop.f32.mrf.mxu0
      %v3664 = vadd.f32 %v3503, %v3663
      %v3665 = vpop.f32.mrf.mxu0
      %v3666 = vpop.f32.mrf.mxu0
      %v3667 = vadd.f32 %v3506, %v3666
      %v3668 = vpop.f32.mrf.mxu0
      %3669 = vmatprep.mubr.bf16.mxu0 0
      %3670 = vmatmul.mubr.bf16.gmra.mxu0 %v3188
      %v3671 = vpop.f32.mrf.mxu0
      %v3672 = vadd.f32 %v3511, %v3671
      %v3673 = vpop.f32.mrf.mxu0
      %v3674 = vpop.f32.mrf.mxu0
      %v3675 = vadd.f32 %v3514, %v3674
      %v3676 = vpop.f32.mrf.mxu0
      %3677 = vmatprep.mubr.bf16.mxu0 0
      %3678 = vmatmul.mubr.bf16.gmra.mxu0 %v3191
      %v3679 = vpop.f32.mrf.mxu0
      %v3680 = vadd.f32 %v3519, %v3679
      %v3681 = vpop.f32.mrf.mxu0
      %v3682 = vpop.f32.mrf.mxu0
      %v3683 = vadd.f32 %v3522, %v3682
      %v3684 = vpop.f32.mrf.mxu0
      %3685 = vmatprep.mubr.bf16.mxu0 0
      %3686 = vmatmul.mubr.bf16.gmra.mxu0 %v3194
      %v3687 = vpop.f32.mrf.mxu0
      %v3688 = vadd.f32 %v3527, %v3687
      %v3689 = vpop.f32.mrf.mxu0
      %v3690 = vpop.f32.mrf.mxu0
      %v3691 = vadd.f32 %v3530, %v3690
      %v3692 = vpop.f32.mrf.mxu0
      %3693 = vmatprep.mubr.bf16.mxu0 0
      %3694 = vmatmul.mubr.bf16.gmra.mxu0 %v3197
      %v3695 = vpop.f32.mrf.mxu0
      %v3696 = vadd.f32 %v3535, %v3695
      %v3697 = vpop.f32.mrf.mxu0
      %v3698 = vpop.f32.mrf.mxu0
      %v3699 = vadd.f32 %v3538, %v3698
      %v3700 = vpop.f32.mrf.mxu0
      %3701 = vmatprep.mubr.bf16.mxu0 0
      %3702 = vmatmul.mubr.bf16.gmra.mxu0 %v3200
      %v3703 = vpop.f32.mrf.mxu0
      %v3704 = vadd.f32 %v3543, %v3703
      %v3705 = vpop.f32.mrf.mxu0
      %v3706 = vpop.f32.mrf.mxu0
      %v3707 = vadd.f32 %v3546, %v3706
      %v3708 = vpop.f32.mrf.mxu0
      %3709 = vmatprep.mubr.bf16.mxu0 0
      %3710 = vmatmul.mubr.bf16.gmra.mxu0 %v3203
      %v3711 = vpop.f32.mrf.mxu0
      %v3712 = vadd.f32 %v3551, %v3711
      %v3713 = vpop.f32.mrf.mxu0
      %v3714 = vpop.f32.mrf.mxu0
      %v3715 = vadd.f32 %v3554, %v3714
      %v3716 = vpop.f32.mrf.mxu0
      %3717 = vdwg.mxu0
      %v3718 = vadd.f32 %v2757, %v3592
      %v3719 = vadd.f32 %v2760, %v3595
      %v3720 = vadd.f32 %v2765, %v3600
      %v3721 = vadd.f32 %v2768, %v3603
      %v3722 = vadd.f32 %v2773, %v3608
      %v3723 = vadd.f32 %v2776, %v3611
      %v3724 = vadd.f32 %v2781, %v3616
      %v3725 = vadd.f32 %v2784, %v3619
      %v3726 = vadd.f32 %v2789, %v3624
      %v3727 = vadd.f32 %v2792, %v3627
      %v3728 = vadd.f32 %v2797, %v3632
      %v3729 = vadd.f32 %v2800, %v3635
      %v3730 = vadd.f32 %v2805, %v3640
      %v3731 = vadd.f32 %v2808, %v3643
      %v3732 = vadd.f32 %v2813, %v3648
      %v3733 = vadd.f32 %v2816, %v3651
      %v3734 = vadd.f32 %v2821, %v3656
      %v3735 = vadd.f32 %v2824, %v3659
      %v3736 = vadd.f32 %v2829, %v3664
      %v3737 = vadd.f32 %v2832, %v3667
      %v3738 = vadd.f32 %v2837, %v3672
      %v3739 = vadd.f32 %v2840, %v3675
      %v3740 = vadd.f32 %v2845, %v3680
      %v3741 = vadd.f32 %v2848, %v3683
      %v3742 = vadd.f32 %v2853, %v3688
      %v3743 = vadd.f32 %v2856, %v3691
      %v3744 = vadd.f32 %v2861, %v3696
      %v3745 = vadd.f32 %v2864, %v3699
      %v3746 = vadd.f32 %v2869, %v3704
      %v3747 = vadd.f32 %v2872, %v3707
      %v3748 = vadd.f32 %v2877, %v3712
      %v3749 = vadd.f32 %v2880, %v3715
      %v3750 = vpack.c.bf16 %v3719, %v3718
      %v3751 = vpack.c.bf16 %v3721, %v3720
      %v3752 = vpack.c.bf16 %v3723, %v3722
      %v3753 = vpack.c.bf16 %v3725, %v3724
      %v3754 = vpack.c.bf16 %v3727, %v3726
      %v3755 = vpack.c.bf16 %v3729, %v3728
      %v3756 = vpack.c.bf16 %v3731, %v3730
      %v3757 = vpack.c.bf16 %v3733, %v3732
      %v3758 = vpack.c.bf16 %v3735, %v3734
      %v3759 = vpack.c.bf16 %v3737, %v3736
      %v3760 = vpack.c.bf16 %v3739, %v3738
      %v3761 = vpack.c.bf16 %v3741, %v3740
      %v3762 = vpack.c.bf16 %v3743, %v3742
      %v3763 = vpack.c.bf16 %v3745, %v3744
      %v3764 = vpack.c.bf16 %v3747, %v3746
      %v3765 = vpack.c.bf16 %v3749, %v3748
      %v3782 = vunpack.c.l.b16 %v3750
      %v3783 = vunpack.c.h.b16 %v3750
      %v3784 = vunpack.c.l.b16 %v3751
      %v3785 = vunpack.c.h.b16 %v3751
      %v3786 = vunpack.c.l.b16 %v3752
      %v3787 = vunpack.c.h.b16 %v3752
      %v3788 = vunpack.c.l.b16 %v3753
      %v3789 = vunpack.c.h.b16 %v3753
      %v3790 = vunpack.c.l.b16 %v3754
      %v3791 = vunpack.c.h.b16 %v3754
      %v3792 = vunpack.c.l.b16 %v3755
      %v3793 = vunpack.c.h.b16 %v3755
      %v3794 = vunpack.c.l.b16 %v3756
      %v3795 = vunpack.c.h.b16 %v3756
      %v3796 = vunpack.c.l.b16 %v3757
      %v3797 = vunpack.c.h.b16 %v3757
      %v3798 = vunpack.c.l.b16 %v3758
      %v3799 = vunpack.c.h.b16 %v3758
      %v3800 = vunpack.c.l.b16 %v3759
      %v3801 = vunpack.c.h.b16 %v3759
      %v3802 = vunpack.c.l.b16 %v3760
      %v3803 = vunpack.c.h.b16 %v3760
      %v3804 = vunpack.c.l.b16 %v3761
      %v3805 = vunpack.c.h.b16 %v3761
      %v3806 = vunpack.c.l.b16 %v3762
      %v3807 = vunpack.c.h.b16 %v3762
      %v3808 = vunpack.c.l.b16 %v3763
      %v3809 = vunpack.c.h.b16 %v3763
      %v3810 = vunpack.c.l.b16 %v3764
      %v3811 = vunpack.c.h.b16 %v3764
      %v3812 = vunpack.c.l.b16 %v3765
      %v3813 = vunpack.c.h.b16 %v3765
      %v3814 = vpack.c.b16 %v3782, %v3782
      %v3815 = vpack.c.b16 %v3783, %v3783
      %v3816 = vpack.c.b16 %v3784, %v3784
      %v3817 = vpack.c.b16 %v3785, %v3785
      %v3818 = vpack.c.b16 %v3786, %v3786
      %v3819 = vpack.c.b16 %v3787, %v3787
      %v3820 = vpack.c.b16 %v3788, %v3788
      %v3821 = vpack.c.b16 %v3789, %v3789
      %v3822 = vpack.c.b16 %v3790, %v3790
      %v3823 = vpack.c.b16 %v3791, %v3791
      %v3824 = vpack.c.b16 %v3792, %v3792
      %v3825 = vpack.c.b16 %v3793, %v3793
      %v3826 = vpack.c.b16 %v3794, %v3794
      %v3827 = vpack.c.b16 %v3795, %v3795
      %v3828 = vpack.c.b16 %v3796, %v3796
      %v3829 = vpack.c.b16 %v3797, %v3797
      %v3830 = vpack.c.b16 %v3798, %v3798
      %v3831 = vpack.c.b16 %v3799, %v3799
      %v3832 = vpack.c.b16 %v3800, %v3800
      %v3833 = vpack.c.b16 %v3801, %v3801
      %v3834 = vpack.c.b16 %v3802, %v3802
      %v3835 = vpack.c.b16 %v3803, %v3803
      %v3836 = vpack.c.b16 %v3804, %v3804
      %v3837 = vpack.c.b16 %v3805, %v3805
      %v3838 = vpack.c.b16 %v3806, %v3806
      %v3839 = vpack.c.b16 %v3807, %v3807
      %v3840 = vpack.c.b16 %v3808, %v3808
      %v3841 = vpack.c.b16 %v3809, %v3809
      %v3842 = vpack.c.b16 %v3810, %v3810
      %v3843 = vpack.c.b16 %v3811, %v3811
      %v3844 = vpack.c.b16 %v3812, %v3812
      %v3845 = vpack.c.b16 %v3813, %v3813
      %3878 = vst [vmem:[%s177] sm:$0xf] %v3814
      %3879 = vst [vmem:[%s177 + $0x4] sm:$0xf] %v3815
      %3880 = vst [vmem:[%s177 + $0x8] sm:$0xf] %v3816
      %3881 = vst [vmem:[%s177 + $0xc] sm:$0xf] %v3817
      %3882 = vst [vmem:[%s177 + $0x10] sm:$0xf] %v3818
      %3883 = vst [vmem:[%s177 + $0x14] sm:$0xf] %v3819
      %3884 = vst [vmem:[%s177 + $0x18] sm:$0xf] %v3820
      %3885 = vst [vmem:[%s177 + $0x1c] sm:$0xf] %v3821
      %3886 = vst [vmem:[%s177 + $0x20] sm:$0xf] %v3822
      %3887 = vst [vmem:[%s177 + $0x24] sm:$0xf] %v3823
      %3888 = vst [vmem:[%s177 + $0x28] sm:$0xf] %v3824
      %3889 = vst [vmem:[%s177 + $0x2c] sm:$0xf] %v3825
      %3890 = vst [vmem:[%s177 + $0x30] sm:$0xf] %v3826
      %3891 = vst [vmem:[%s177 + $0x34] sm:$0xf] %v3827
      %3892 = vst [vmem:[%s177 + $0x38] sm:$0xf] %v3828
      %3893 = vst [vmem:[%s177 + $0x3c] sm:$0xf] %v3829
      %3894 = vst [vmem:[%s177 + $0x40] sm:$0xf] %v3830
      %3895 = vst [vmem:[%s177 + $0x44] sm:$0xf] %v3831
      %3896 = vst [vmem:[%s177 + $0x48] sm:$0xf] %v3832
      %3897 = vst [vmem:[%s177 + $0x4c] sm:$0xf] %v3833
      %3898 = vst [vmem:[%s177 + $0x50] sm:$0xf] %v3834
      %3899 = vst [vmem:[%s177 + $0x54] sm:$0xf] %v3835
      %3900 = vst [vmem:[%s177 + $0x58] sm:$0xf] %v3836
      %3901 = vst [vmem:[%s177 + $0x5c] sm:$0xf] %v3837
      %3902 = vst [vmem:[%s177 + $0x60] sm:$0xf] %v3838
      %3903 = vst [vmem:[%s177 + $0x64] sm:$0xf] %v3839
      %3904 = vst [vmem:[%s177 + $0x68] sm:$0xf] %v3840
      %3905 = vst [vmem:[%s177 + $0x6c] sm:$0xf] %v3841
      %3906 = vst [vmem:[%s177 + $0x70] sm:$0xf] %v3842
      %3907 = vst [vmem:[%s177 + $0x74] sm:$0xf] %v3843
      %3908 = vst [vmem:[%s177 + $0x78] sm:$0xf] %v3844
      %3909 = vst [vmem:[%s177 + $0x7c] sm:$0xf] %v3845
      %v3910 = vadd.f32 %v3718, %v3719
      %v3911 = vadd.f32 %v3910, %v3720
      %v3912 = vadd.f32 %v3911, %v3721
      %v3913 = vadd.f32 %v3912, %v3722
      %v3914 = vadd.f32 %v3913, %v3723
      %v3915 = vadd.f32 %v3914, %v3724
      %v3916 = vadd.f32 %v3915, %v3725
      %v3917 = vadd.f32 %v3916, %v3726
      %v3918 = vadd.f32 %v3917, %v3727
      %v3919 = vadd.f32 %v3918, %v3728
      %v3920 = vadd.f32 %v3919, %v3729
      %v3921 = vadd.f32 %v3920, %v3730
      %v3922 = vadd.f32 %v3921, %v3731
      %v3923 = vadd.f32 %v3922, %v3732
      %v3924 = vadd.f32 %v3923, %v3733
      %v3925 = vadd.f32 %v3924, %v3734
      %v3926 = vadd.f32 %v3925, %v3735
      %v3927 = vadd.f32 %v3926, %v3736
      %v3928 = vadd.f32 %v3927, %v3737
      %v3929 = vadd.f32 %v3928, %v3738
      %v3930 = vadd.f32 %v3929, %v3739
      %v3931 = vadd.f32 %v3930, %v3740
      %v3932 = vadd.f32 %v3931, %v3741
      %v3933 = vadd.f32 %v3932, %v3742
      %v3934 = vadd.f32 %v3933, %v3743
      %v3935 = vadd.f32 %v3934, %v3744
      %v3936 = vadd.f32 %v3935, %v3745
      %v3937 = vadd.f32 %v3936, %v3746
      %v3938 = vadd.f32 %v3937, %v3747
      %v3939 = vadd.f32 %v3938, %v3748
      %v3940 = vadd.f32 %v3939, %v3749
      %v3941 = vrot.slane %v3940, 4
      %v3942 = vadd.f32 %v3940, %v3941
      %v3943 = vrot.slane %v3942, 2
      %v3944 = vadd.f32 %v3942, %v3943
      %v3945 = vrot.slane %v3944, 1
      %v3946 = vadd.f32 %v3944, %v3945
      %v3947 = vmul.f32 %v3718, %v3718
      %v3948 = vmul.f32 %v3719, %v3719
      %v3949 = vmul.f32 %v3720, %v3720
      %v3950 = vmul.f32 %v3721, %v3721
      %v3951 = vmul.f32 %v3722, %v3722
      %v3952 = vmul.f32 %v3723, %v3723
      %v3953 = vmul.f32 %v3724, %v3724
      %v3954 = vmul.f32 %v3725, %v3725
      %v3955 = vmul.f32 %v3726, %v3726
      %v3956 = vmul.f32 %v3727, %v3727
      %v3957 = vmul.f32 %v3728, %v3728
      %v3958 = vmul.f32 %v3729, %v3729
      %v3959 = vmul.f32 %v3730, %v3730
      %v3960 = vmul.f32 %v3731, %v3731
      %v3961 = vmul.f32 %v3732, %v3732
      %v3962 = vmul.f32 %v3733, %v3733
      %v3963 = vmul.f32 %v3734, %v3734
      %v3964 = vmul.f32 %v3735, %v3735
      %v3965 = vmul.f32 %v3736, %v3736
      %v3966 = vmul.f32 %v3737, %v3737
      %v3967 = vmul.f32 %v3738, %v3738
      %v3968 = vmul.f32 %v3739, %v3739
      %v3969 = vmul.f32 %v3740, %v3740
      %v3970 = vmul.f32 %v3741, %v3741
      %v3971 = vmul.f32 %v3742, %v3742
      %v3972 = vmul.f32 %v3743, %v3743
      %v3973 = vmul.f32 %v3744, %v3744
      %v3974 = vmul.f32 %v3745, %v3745
      %v3975 = vmul.f32 %v3746, %v3746
      %v3976 = vmul.f32 %v3747, %v3747
      %v3977 = vmul.f32 %v3748, %v3748
      %v3978 = vmul.f32 %v3749, %v3749
      %v3979 = vadd.f32 %v3947, %v3948
      %v3980 = vadd.f32 %v3979, %v3949
      %v3981 = vadd.f32 %v3980, %v3950
      %v3982 = vadd.f32 %v3981, %v3951
      %v3983 = vadd.f32 %v3982, %v3952
      %v3984 = vadd.f32 %v3983, %v3953
      %v3985 = vadd.f32 %v3984, %v3954
      %v3986 = vadd.f32 %v3985, %v3955
      %v3987 = vadd.f32 %v3986, %v3956
      %v3988 = vadd.f32 %v3987, %v3957
      %v3989 = vadd.f32 %v3988, %v3958
      %v3990 = vadd.f32 %v3989, %v3959
      %v3991 = vadd.f32 %v3990, %v3960
      %v3992 = vadd.f32 %v3991, %v3961
      %v3993 = vadd.f32 %v3992, %v3962
      %v3994 = vadd.f32 %v3993, %v3963
      %v3995 = vadd.f32 %v3994, %v3964
      %v3996 = vadd.f32 %v3995, %v3965
      %v3997 = vadd.f32 %v3996, %v3966
      %v3998 = vadd.f32 %v3997, %v3967
      %v3999 = vadd.f32 %v3998, %v3968
      %v4000 = vadd.f32 %v3999, %v3969
      %v4001 = vadd.f32 %v4000, %v3970
      %v4002 = vadd.f32 %v4001, %v3971
      %v4003 = vadd.f32 %v4002, %v3972
      %v4004 = vadd.f32 %v4003, %v3973
      %v4005 = vadd.f32 %v4004, %v3974
      %v4006 = vadd.f32 %v4005, %v3975
      %v4007 = vadd.f32 %v4006, %v3976
      %v4008 = vadd.f32 %v4007, %v3977
      %v4009 = vadd.f32 %v4008, %v3978
      %v4010 = vrot.slane %v4009, 4
      %v4011 = vadd.f32 %v4009, %v4010
      %v4012 = vrot.slane %v4011, 2
      %v4013 = vadd.f32 %v4011, %v4012
      %v4014 = vrot.slane %v4013, 1
      %v4015 = vadd.f32 %v4013, %v4014
      %vm4016 = vcmask 1040384
      %v4017 = vsel %vm4016, %v3946, %v4015
      %4018 = vst [vmem:[%s181] sm:$0x3] %v4017
      %p4019 = scmp.lt.s32.totalorder %s15, 1
      %s4020 = scalar_select %p4019, %s15, 1
      %s4021 = smul.addr %s4020, 32
      %s4022 = smul.addr %s4021, 4
      %s4023 = scalar_lea.vmem %s2, %s4022
      %p4024 = scmp.lt.s32.totalorder %s15, 1
      %s4025 = scalar_select %p4024, %s15, 1
      %s4026 = smul.addr %s4025, 2
      %s4027 = scalar_lea.vmem %s3, %s4026
      // Predicated region
      $region29: #{basicblock_forward.3} parent=27 // pred_check
        %p4028 = pneg %p80
      $region30: #{basicblock_forward.3} parent=27 // pred_check_branch
        %4030 = sbr.rel (%p4028) target = $region32
      $region31: #{basicblock_forward.3} parent=27 // pred_region
        _
      $region32: #{basicblock_forward.3} parent=27 // pred_fallthru
        _
      // Predicated region
      $region33: #{basicblock_forward.3} parent=27 // pred_check
        %p4031 = pneg %p106
      $region34: #{basicblock_forward.3} parent=27 // pred_check_branch
        %4033 = sbr.rel (%p4031) target = $region36
      $region35: #{basicblock_forward.3} parent=27 // pred_region
        _
      $region36: #{basicblock_forward.3} parent=27 // pred_fallthru
        _
    $region28: #{basicblock_forward.3} parent=5 // pred_fallthru
      _
    %p4034 = scmp.le.s32.totalorder 2, %s10
    // Predicated region
    $region37: #{basicblock_forward.3} parent=5 // pred_check
      %p4035 = pneg %p4034
    $region38: #{basicblock_forward.3} parent=5 // pred_check_branch
      %4037 = sbr.rel (%p4035) target = $region40
    $region39: #{basicblock_forward.3} parent=5 // pred_region
      %s4038 = ssub.s32 %s10, 2
      // Predicated region
      $region41: #{basicblock_forward.3} parent=39 // pred_check
        %p4039 = pneg %p86
      $region42: #{basicblock_forward.3} parent=39 // pred_check_branch
        %4041 = sbr.rel (%p4039) target = $region44
      $region43: #{basicblock_forward.3} parent=39 // pred_region
        %p4042 = scmp.lt.s32.totalorder %s16, 1
        %s4043 = scalar_select %p4042, %s16, 1
        %s4044 = smul.addr %s4043, 32
        %s4045 = smul.addr %s4044, 4
        %s4046 = scalar_lea.vmem %s2, %s4045
      $region44: #{basicblock_forward.3} parent=39 // pred_fallthru
        _
      // Predicated region
      $region45: #{basicblock_forward.3} parent=39 // pred_check
        %p4047 = pneg %p112
      $region46: #{basicblock_forward.3} parent=39 // pred_check_branch
        %4049 = sbr.rel (%p4047) target = $region48
      $region47: #{basicblock_forward.3} parent=39 // pred_region
        %p4050 = scmp.lt.s32.totalorder %s16, 1
        %s4051 = scalar_select %p4050, %s16, 1
        %s4052 = smul.addr %s4051, 2
        %s4053 = scalar_lea.vmem %s3, %s4052
      $region48: #{basicblock_forward.3} parent=39 // pred_fallthru
        _
    $region40: #{basicblock_forward.3} parent=5 // pred_fallthru
      _
  $region6: #{basicblock_forward.3} parent=0 // loop_footer
    %s14 = sadd.s32 1, %s10
  $region7: #{basicblock_forward.3} parent=0 // loop_footer_branch
    %9 = sbr.rel target = $region3
  $region8: #{basicblock_forward.3} parent=0 // loop_exit
    _

</llo_original>
